<compile_context>
chip_gen: v7x
topology: tpu7x:2x2x1
jax: 0.10.0
libtpu: 0.0.40
codegen_flags: <defaults>
</compile_context>

<pallas_src>
import functools
import math

import jax
import jax.numpy as jnp
from jax import lax
from jax.experimental import pallas as pl
from jax.experimental.pallas import tpu as pltpu


# ---------------------------------------------------------------------------
# Kernel 1: Conv1d(k=5, pad=2) + BatchNorm (eval, folded to scale/shift) + ReLU
#   Input is pre-padded along time in the wrapper: xp (B, T+4, D).
#   Conv weight layout: (K, D_in, D_out). Conv == sum of K shifted matmuls.
# ---------------------------------------------------------------------------
def _conv_bn_relu_kernel(xp_ref, w_ref, b_ref, scale_ref, shift_ref, o_ref, *, T, K):
    xp = xp_ref[...].astype(jnp.float32)                       # (T+K-1, D_in)
    d_out = w_ref.shape[2]
    acc = jnp.zeros((T, d_out), jnp.float32)
    for k in range(K):                                         # 5 shifted MXU matmuls
        acc = acc + jnp.dot(xp[k:k + T, :], w_ref[k],
                            preferred_element_type=jnp.float32)
    y = acc + b_ref[...]                                       # conv bias        (1, D)
    y = y * scale_ref[...] + shift_ref[...]                    # folded batchnorm (eval stats)
    y = jnp.maximum(y, 0.0)                                    # relu
    # TODO(synk): dropout after each conv block is identity (eval-mode forward).
    o_ref[...] = y.astype(o_ref.dtype)


def conv_bn_relu(x, w, b, scale, shift):
    """x: (B, T, D); w: (K, D, D); b/scale/shift: (D,). Returns (B, T, D)."""
    B, T, D = x.shape
    K = w.shape[0]
    pad = (K - 1) // 2
    xp = jnp.pad(x, ((0, 0), (pad, pad), (0, 0)))              # (B, T+K-1, D)

    kernel = functools.partial(_conv_bn_relu_kernel, T=T, K=K)
    return pl.pallas_call(
        kernel,
        out_shape=jax.ShapeDtypeStruct((B, T, D), x.dtype),
        grid=(B,),
        in_specs=[
            pl.BlockSpec((None, T + K - 1, D), lambda bidx: (bidx, 0, 0)),  # per-batch slab
            pl.BlockSpec((K, D, D), lambda bidx: (0, 0, 0)),                # resident weights
            pl.BlockSpec((1, D), lambda bidx: (0, 0)),
            pl.BlockSpec((1, D), lambda bidx: (0, 0)),
            pl.BlockSpec((1, D), lambda bidx: (0, 0)),
        ],
        out_specs=pl.BlockSpec((None, T, D), lambda bidx: (bidx, 0, 0)),
        compiler_params=pltpu.CompilerParams(dimension_semantics=("parallel",)),
    )(xp, w, b.reshape(1, D), scale.reshape(1, D), shift.reshape(1, D))


# ---------------------------------------------------------------------------
# Kernel 2: prenet projection (Linear) + PositionalEncoding (x + alpha * pe)
# ---------------------------------------------------------------------------
def _proj_posenc_kernel(alpha_ref, x_ref, w_ref, b_ref, pe_ref, o_ref):
    x = x_ref[...].astype(jnp.float32)                         # (T, D)
    y = jnp.dot(x, w_ref[...], preferred_element_type=jnp.float32) + b_ref[...]
    y = y + alpha_ref[0] * pe_ref[...]
    # TODO(synk): pos_dropout is identity (eval-mode forward).
    o_ref[...] = y.astype(o_ref.dtype)


def proj_posenc(x, w, b, alpha, pe):
    B, T, D = x.shape
    return pl.pallas_call(
        _proj_posenc_kernel,
        out_shape=jax.ShapeDtypeStruct((B, T, D), x.dtype),
        grid=(B,),
        in_specs=[
            pl.BlockSpec(memory_space=pltpu.MemorySpace.SMEM),              # alpha (1,)
            pl.BlockSpec((None, T, D), lambda bidx: (bidx, 0, 0)),
            pl.BlockSpec((D, D), lambda bidx: (0, 0)),
            pl.BlockSpec((1, D), lambda bidx: (0, 0)),
            pl.BlockSpec((T, D), lambda bidx: (0, 0)),
        ],
        out_specs=pl.BlockSpec((None, T, D), lambda bidx: (bidx, 0, 0)),
        compiler_params=pltpu.CompilerParams(dimension_semantics=("parallel",)),
    )(alpha, x, w, b.reshape(1, D), pe)


# ---------------------------------------------------------------------------
# Kernel 3: one full TransformerEncoderLayer (batch_first, post-norm, relu)
#   Per-head weights:  wq/wk/wv (H, D, dh), wo (H, dh, D)  -> no lane slicing.
# ---------------------------------------------------------------------------
def _encoder_layer_kernel(x_ref, wq_ref, bq_ref, wk_ref, bk_ref, wv_ref, bv_ref,
                          wo_ref, bo_ref, w1_ref, b1_ref, w2_ref, b2_ref,
                          g1_ref, c1_ref, g2_ref, c2_ref, o_ref, *, nhead, eps):
    x = x_ref[...].astype(jnp.float32)                         # (T, D)
    T, D = x.shape
    dh = D // nhead
    inv_sqrt_dh = 1.0 / math.sqrt(dh)

    # --- multi-head self-attention (no key-padding mask; demo passes None) ---
    attn = jnp.zeros((T, D), jnp.float32)
    for h in range(nhead):
        qh = jnp.dot(x, wq_ref[h], preferred_element_type=jnp.float32) + bq_ref[h]
        kh = jnp.dot(x, wk_ref[h], preferred_element_type=jnp.float32) + bk_ref[h]
        vh = jnp.dot(x, wv_ref[h], preferred_element_type=jnp.float32) + bv_ref[h]
        s = lax.dot_general(qh, kh, (((1,), (1,)), ((), ())),
                            preferred_element_type=jnp.float32) * inv_sqrt_dh  # (T, T)
        s = s - jnp.max(s, axis=-1, keepdims=True)
        e = jnp.exp(s)
        p = e / jnp.sum(e, axis=-1, keepdims=True)
        oh = jnp.dot(p, vh, preferred_element_type=jnp.float32)                # (T, dh)
        attn = attn + jnp.dot(oh, wo_ref[h], preferred_element_type=jnp.float32)
    attn = attn + bo_ref[...]
    # TODO(synk): attention/FFN dropouts are identity (eval-mode forward);
    #             src_key_padding_mask is not supported in-kernel (demo uses None).

    # --- residual + LayerNorm 1 (post-norm) ---
    y = x + attn
    mu = jnp.mean(y, axis=-1, keepdims=True)
    var = jnp.mean(jnp.square(y - mu), axis=-1, keepdims=True)
    y = (y - mu) * lax.rsqrt(var + eps)
    y = y * g1_ref[...] + c1_ref[...]

    # --- feed-forward (relu) + residual + LayerNorm 2 ---
    h1 = jnp.dot(y, w1_ref[...], preferred_element_type=jnp.float32) + b1_ref[...]
    h1 = jnp.maximum(h1, 0.0)
    ff = jnp.dot(h1, w2_ref[...], preferred_element_type=jnp.float32) + b2_ref[...]
    z = y + ff
    mu2 = jnp.mean(z, axis=-1, keepdims=True)
    var2 = jnp.mean(jnp.square(z - mu2), axis=-1, keepdims=True)
    z = (z - mu2) * lax.rsqrt(var2 + eps)
    z = z * g2_ref[...] + c2_ref[...]

    o_ref[...] = z.astype(o_ref.dtype)


def transformer_encoder_layer(x, lp, *, nhead, eps=1e-5):
    B, T, D = x.shape
    dff = lp["w1"].shape[1]
    dh = D // nhead
    kernel = functools.partial(_encoder_layer_kernel, nhead=nhead, eps=eps)

    def full(shape):
        return pl.BlockSpec(shape, lambda bidx: (0,) * len(shape))

    flops = 2 * B * T * D * (4 * D + 2 * dff) + 4 * B * nhead * T * T * dh
    bytes_accessed = 4 * (2 * B * T * D + 4 * D * D + 2 * D * dff + 10 * D + dff)

    return pl.pallas_call(
        kernel,
        out_shape=jax.ShapeDtypeStruct((B, T, D), x.dtype),
        grid=(B,),
        in_specs=[
            pl.BlockSpec((None, T, D), lambda bidx: (bidx, 0, 0)),
            full(lp["wq"].shape), full(lp["bq"].shape),
            full(lp["wk"].shape), full(lp["bk"].shape),
            full(lp["wv"].shape), full(lp["bv"].shape),
            full(lp["wo"].shape), full(lp["bo"].shape),
            full(lp["w1"].shape), full(lp["b1"].shape),
            full(lp["w2"].shape), full(lp["b2"].shape),
            full(lp["g1"].shape), full(lp["c1"].shape),
            full(lp["g2"].shape), full(lp["c2"].shape),
        ],
        out_specs=pl.BlockSpec((None, T, D), lambda bidx: (bidx, 0, 0)),
        compiler_params=pltpu.CompilerParams(dimension_semantics=("parallel",)),
        cost_estimate=pl.CostEstimate(flops=int(flops),
                                      transcendentals=int(B * nhead * T * T),
                                      bytes_accessed=int(bytes_accessed)),
    )(x, lp["wq"], lp["bq"], lp["wk"], lp["bk"], lp["wv"], lp["bv"],
      lp["wo"], lp["bo"], lp["w1"], lp["b1"], lp["w2"], lp["b2"],
      lp["g1"], lp["c1"], lp["g2"], lp["c2"])


# ---------------------------------------------------------------------------
# Full Encoder forward (eval mode)
# ---------------------------------------------------------------------------
def positional_encoding_table(max_len, d_model):
    position = jnp.arange(max_len, dtype=jnp.float32)[:, None]
    div_term = jnp.exp(jnp.arange(0, d_model, 2, dtype=jnp.float32)
                       * (-math.log(10000.0) / d_model))
    pe = jnp.zeros((max_len, d_model), jnp.float32)
    pe = pe.at[:, 0::2].set(jnp.sin(position * div_term))
    pe = pe.at[:, 1::2].set(jnp.cos(position * div_term))
    return pe


def encoder_forward(src, params, *, nhead):
    # TODO(synk): nn.Embedding row gather is data-dependent; done in plain JAX here
    #             (a Pallas version would need a manual DMA gather for no benefit at this size).
    x = params["embed"][src]                                   # (B, T, D)

    for i in (1, 2, 3):                                        # EncoderPrenet conv stack
        c = params[f"conv{i}"]
        x = conv_bn_relu(x, c["w"], c["b"], c["scale"], c["shift"])

    T = src.shape[1]
    x = proj_posenc(x, params["proj_w"], params["proj_b"],
                    params["alpha"], params["pe"][:T])         # projection + pos-enc

    for lp in params["layers"]:                                # TransformerEncoder
        x = transformer_encoder_layer(x, lp, nhead=nhead)
    return x


# ---------------------------------------------------------------------------
# Pure-JAX reference (same eval-mode math) for correctness checking.
# ---------------------------------------------------------------------------
def _layer_norm_ref(x, g, c, eps):
    mu = jnp.mean(x, axis=-1, keepdims=True)
    var = jnp.mean(jnp.square(x - mu), axis=-1, keepdims=True)
    return (x - mu) * lax.rsqrt(var + eps) * g + c


def _layer_ref(x, lp, *, nhead, eps=1e-5):
    B, T, D = x.shape
    dh = D // nhead
    hi = lax.Precision.HIGHEST
    attn = jnp.zeros_like(x)
    for h in range(nhead):
        q = jnp.einsum("btd,de->bte", x, lp["wq"][h], precision=hi) + lp["bq"][h]
        k = jnp.einsum("btd,de->bte", x, lp["wk"][h], precision=hi) + lp["bk"][h]
        v = jnp.einsum("btd,de->bte", x, lp["wv"][h], precision=hi) + lp["bv"][h]
        s = jnp.einsum("bqe,bke->bqk", q, k, precision=hi) / math.sqrt(dh)
        p = jax.nn.softmax(s, axis=-1)
        o = jnp.einsum("bqk,bke->bqe", p, v, precision=hi)
        attn = attn + jnp.einsum("bte,ed->btd", o, lp["wo"][h], precision=hi)
    attn = attn + lp["bo"][0]
    y = _layer_norm_ref(x + attn, lp["g1"][0], lp["c1"][0], eps)
    h1 = jnp.maximum(jnp.einsum("btd,df->btf", y, lp["w1"], precision=hi) + lp["b1"][0], 0.0)
    ff = jnp.einsum("btf,fd->btd", h1, lp["w2"], precision=hi) + lp["b2"][0]
    return _layer_norm_ref(y + ff, lp["g2"][0], lp["c2"][0], eps)


def reference_forward(src, params, *, nhead):
    x = params["embed"][src]
    for i in (1, 2, 3):
        c = params[f"conv{i}"]
        y = lax.conv_general_dilated(x, c["w"], window_strides=(1,), padding=((2, 2),),
                                     dimension_numbers=("NWC", "WIO", "NWC"),
                                     precision=lax.Precision.HIGHEST)
        y = (y + c["b"]) * c["scale"] + c["shift"]
        x = jnp.maximum(y, 0.0)
    T = src.shape[1]
    x = jnp.einsum("btd,de->bte", x, params["proj_w"],
                   precision=lax.Precision.HIGHEST) + params["proj_b"]
    x = x + params["alpha"][0] * params["pe"][:T]
    for lp in params["layers"]:
        x = _layer_ref(x, lp, nhead=nhead)
    return x


# ---------------------------------------------------------------------------
if __name__ == "__main__":
    # Small shapes consistent with the module: B=2, T=8, embed_dim=128 (lane-dense),
    # nhead=4, dim_feedforward=256, num_layers=2, vocab (len(symbols)) = 40.
    B, T = 2, 8
    D, NHEAD, DFF, NUM_LAYERS = 128, 4, 256, 2
    VOCAB, KSIZE, MAX_LEN = 40, 5, 64
    DH = D // NHEAD

    key = jax.random.PRNGKey(0)
    ks = iter(jax.random.split(key, 64))

    def nrm(shape, s=0.05):
        return s * jax.random.normal(next(ks), shape, jnp.float32)

    embed = 0.3 * jax.random.normal(next(ks), (VOCAB, D), jnp.float32)
    embed = embed.at[0].set(0.0)                               # padding_idx = 0

    def conv_params():
        return dict(w=nrm((KSIZE, D, D)), b=nrm((D,), 0.02),
                    scale=1.0 + nrm((D,), 0.1), shift=nrm((D,), 0.02))

    def layer_params():
        return dict(
            wq=nrm((NHEAD, D, DH)), bq=nrm((NHEAD, 1, DH), 0.02),
            wk=nrm((NHEAD, D, DH)), bk=nrm((NHEAD, 1, DH), 0.02),
            wv=nrm((NHEAD, D, DH)), bv=nrm((NHEAD, 1, DH), 0.02),
            wo=nrm((NHEAD, DH, D)), bo=nrm((1, D), 0.02),
            w1=nrm((D, DFF)), b1=nrm((1, DFF), 0.02),
            w2=nrm((DFF, D)), b2=nrm((1, D), 0.02),
            g1=1.0 + nrm((1, D), 0.1), c1=nrm((1, D), 0.02),
            g2=1.0 + nrm((1, D), 0.1), c2=nrm((1, D), 0.02),
        )

    params = dict(
        embed=embed,
        conv1=conv_params(), conv2=conv_params(), conv3=conv_params(),
        proj_w=nrm((D, D)), proj_b=nrm((D,), 0.02),
        alpha=jnp.ones((1,), jnp.float32),
        pe=positional_encoding_table(MAX_LEN, D),
        layers=[layer_params() for _ in range(NUM_LAYERS)],
    )

    src = jax.random.randint(next(ks), (B, T), 0, VOCAB, dtype=jnp.int32)

    fwd = jax.jit(functools.partial(encoder_forward, nhead=NHEAD))
    memory = jax.block_until_ready(fwd(src, params))
    assert memory.shape == (B, T, D)

    ref = jax.block_until_ready(reference_forward(src, params, nhead=NHEAD))
    assert jnp.allclose(memory, ref, atol=1e-3, rtol=1e-3), (
        "Pallas encoder output mismatch vs pure-JAX reference")

    print("KERNEL_OK")
</pallas_src>

<mosaic_0001>
module attributes {stable_mosaic.version = 11 : i64} {
  func.func @_conv_bn_relu_kernel(%arg0: i32, %arg1: memref<1x12x128xf32, #tpu.memory_space<vmem>>, %arg2: memref<5x128x128xf32, #tpu.memory_space<vmem>>, %arg3: memref<1x128xf32, #tpu.memory_space<vmem>>, %arg4: memref<1x128xf32, #tpu.memory_space<vmem>>, %arg5: memref<1x128xf32, #tpu.memory_space<vmem>>, %arg6: memref<1x8x128xf32, #tpu.memory_space<vmem>>) attributes {dimension_semantics = [#tpu.dimension_semantics<parallel>], iteration_bounds = array<i64: 2>, scalar_prefetch = 0 : i64, scratch_operands = 0 : i64, tpu.core_type = #tpu.core_type<tc>, window_params = [{transform_indices = @transform_0, window_bounds = array<i64: 1, 12, 128>}, {pipeline_mode = #tpu.pipeline_mode<synchronous>, transform_indices = @transform_1, window_bounds = array<i64: 5, 128, 128>}, {pipeline_mode = #tpu.pipeline_mode<synchronous>, transform_indices = @transform_2, window_bounds = array<i64: 1, 128>}, {pipeline_mode = #tpu.pipeline_mode<synchronous>, transform_indices = @transform_3, window_bounds = array<i64: 1, 128>}, {pipeline_mode = #tpu.pipeline_mode<synchronous>, transform_indices = @transform_4, window_bounds = array<i64: 1, 128>}, {transform_indices = @transform_5, window_bounds = array<i64: 1, 8, 128>}]} {
    %c0 = arith.constant 0 : index
    %c0_0 = arith.constant 0 : index
    %c0_1 = arith.constant 0 : index
    %0 = vector.load %arg1[%c0, %c0_0, %c0_1] : memref<1x12x128xf32, #tpu.memory_space<vmem>>, vector<1x12x128xf32>
    %1 = vector.shape_cast %0 : vector<1x12x128xf32> to vector<12x128xf32>
    %cst = arith.constant 0.000000e+00 : f32
    %2 = vector.broadcast %cst : f32 to vector<8x128xf32>
    %3 = vector.extract_strided_slice %1 {offsets = [0, 0], sizes = [8, 128], strides = [1, 1]} : vector<12x128xf32> to vector<8x128xf32>
    %c0_2 = arith.constant 0 : index
    %c0_3 = arith.constant 0 : index
    %c0_4 = arith.constant 0 : index
    %4 = vector.load %arg2[%c0_2, %c0_3, %c0_4] : memref<5x128x128xf32, #tpu.memory_space<vmem>>, vector<1x128x128xf32>
    %5 = vector.shape_cast %4 : vector<1x128x128xf32> to vector<128x128xf32>
    %cst_5 = arith.constant dense<0.000000e+00> : vector<8x128xf32>
    %6 = tpu.matmul %3, %5, %cst_5 {dimension_numbers = #tpu.dot_dimension_numbers<[1], [0], [0], [1], [0, 0, 1, 1], [], []>} : vector<8x128xf32>, vector<128x128xf32>, vector<8x128xf32> -> vector<8x128xf32>
    %7 = arith.addf %2, %6 : vector<8x128xf32>
    %8 = vector.extract_strided_slice %1 {offsets = [1, 0], sizes = [8, 128], strides = [1, 1]} : vector<12x128xf32> to vector<8x128xf32>
    %c1 = arith.constant 1 : index
    %c0_6 = arith.constant 0 : index
    %c0_7 = arith.constant 0 : index
    %9 = vector.load %arg2[%c1, %c0_6, %c0_7] : memref<5x128x128xf32, #tpu.memory_space<vmem>>, vector<1x128x128xf32>
    %10 = vector.shape_cast %9 : vector<1x128x128xf32> to vector<128x128xf32>
    %cst_8 = arith.constant dense<0.000000e+00> : vector<8x128xf32>
    %11 = tpu.matmul %8, %10, %cst_8 {dimension_numbers = #tpu.dot_dimension_numbers<[1], [0], [0], [1], [0, 0, 1, 1], [], []>} : vector<8x128xf32>, vector<128x128xf32>, vector<8x128xf32> -> vector<8x128xf32>
    %12 = arith.addf %7, %11 : vector<8x128xf32>
    %13 = vector.extract_strided_slice %1 {offsets = [2, 0], sizes = [8, 128], strides = [1, 1]} : vector<12x128xf32> to vector<8x128xf32>
    %c2 = arith.constant 2 : index
    %c0_9 = arith.constant 0 : index
    %c0_10 = arith.constant 0 : index
    %14 = vector.load %arg2[%c2, %c0_9, %c0_10] : memref<5x128x128xf32, #tpu.memory_space<vmem>>, vector<1x128x128xf32>
    %15 = vector.shape_cast %14 : vector<1x128x128xf32> to vector<128x128xf32>
    %cst_11 = arith.constant dense<0.000000e+00> : vector<8x128xf32>
    %16 = tpu.matmul %13, %15, %cst_11 {dimension_numbers = #tpu.dot_dimension_numbers<[1], [0], [0], [1], [0, 0, 1, 1], [], []>} : vector<8x128xf32>, vector<128x128xf32>, vector<8x128xf32> -> vector<8x128xf32>
    %17 = arith.addf %12, %16 : vector<8x128xf32>
    %18 = vector.extract_strided_slice %1 {offsets = [3, 0], sizes = [8, 128], strides = [1, 1]} : vector<12x128xf32> to vector<8x128xf32>
    %c3 = arith.constant 3 : index
    %c0_12 = arith.constant 0 : index
    %c0_13 = arith.constant 0 : index
    %19 = vector.load %arg2[%c3, %c0_12, %c0_13] : memref<5x128x128xf32, #tpu.memory_space<vmem>>, vector<1x128x128xf32>
    %20 = vector.shape_cast %19 : vector<1x128x128xf32> to vector<128x128xf32>
    %cst_14 = arith.constant dense<0.000000e+00> : vector<8x128xf32>
    %21 = tpu.matmul %18, %20, %cst_14 {dimension_numbers = #tpu.dot_dimension_numbers<[1], [0], [0], [1], [0, 0, 1, 1], [], []>} : vector<8x128xf32>, vector<128x128xf32>, vector<8x128xf32> -> vector<8x128xf32>
    %22 = arith.addf %17, %21 : vector<8x128xf32>
    %23 = vector.extract_strided_slice %1 {offsets = [4, 0], sizes = [8, 128], strides = [1, 1]} : vector<12x128xf32> to vector<8x128xf32>
    %c4 = arith.constant 4 : index
    %c0_15 = arith.constant 0 : index
    %c0_16 = arith.constant 0 : index
    %24 = vector.load %arg2[%c4, %c0_15, %c0_16] : memref<5x128x128xf32, #tpu.memory_space<vmem>>, vector<1x128x128xf32>
    %25 = vector.shape_cast %24 : vector<1x128x128xf32> to vector<128x128xf32>
    %cst_17 = arith.constant dense<0.000000e+00> : vector<8x128xf32>
    %26 = tpu.matmul %23, %25, %cst_17 {dimension_numbers = #tpu.dot_dimension_numbers<[1], [0], [0], [1], [0, 0, 1, 1], [], []>} : vector<8x128xf32>, vector<128x128xf32>, vector<8x128xf32> -> vector<8x128xf32>
    %27 = arith.addf %22, %26 : vector<8x128xf32>
    %c0_18 = arith.constant 0 : index
    %c0_19 = arith.constant 0 : index
    %28 = vector.load %arg3[%c0_18, %c0_19] : memref<1x128xf32, #tpu.memory_space<vmem>>, vector<1x128xf32>
    %29 = vector.broadcast %28 : vector<1x128xf32> to vector<8x128xf32>
    %30 = arith.addf %27, %29 : vector<8x128xf32>
    %c0_20 = arith.constant 0 : index
    %c0_21 = arith.constant 0 : index
    %31 = vector.load %arg4[%c0_20, %c0_21] : memref<1x128xf32, #tpu.memory_space<vmem>>, vector<1x128xf32>
    %32 = vector.broadcast %31 : vector<1x128xf32> to vector<8x128xf32>
    %33 = arith.mulf %30, %32 : vector<8x128xf32>
    %c0_22 = arith.constant 0 : index
    %c0_23 = arith.constant 0 : index
    %34 = vector.load %arg5[%c0_22, %c0_23] : memref<1x128xf32, #tpu.memory_space<vmem>>, vector<1x128xf32>
    %35 = vector.broadcast %34 : vector<1x128xf32> to vector<8x128xf32>
    %36 = arith.addf %33, %35 : vector<8x128xf32>
    %cst_24 = arith.constant 0.000000e+00 : f32
    %37 = vector.broadcast %cst_24 : f32 to vector<8x128xf32>
    %38 = arith.maximumf %36, %37 : vector<8x128xf32>
    %c0_25 = arith.constant 0 : index
    %c0_26 = arith.constant 0 : index
    %c0_27 = arith.constant 0 : index
    %39 = vector.load %arg6[%c0_25, %c0_26, %c0_27] : memref<1x8x128xf32, #tpu.memory_space<vmem>>, vector<1x8x128xf32>
    %40 = vector.shape_cast %39 : vector<1x8x128xf32> to vector<8x128xf32>
    %41 = vector.shape_cast %38 : vector<8x128xf32> to vector<1x8x128xf32>
    tpu.vector_store %arg6[%c0_25, %c0_26, %c0_27], %41 {strides = array<i32>} : memref<1x8x128xf32, #tpu.memory_space<vmem>>, vector<1x8x128xf32>,
    return
  }
  func.func @transform_0(%arg0: i32) -> (i32, i32, i32) {
    %c0_i32 = arith.constant 0 : i32
    %c0_i32_0 = arith.constant 0 : i32
    %c0_i32_1 = arith.constant 0 : i32
    return %arg0, %c0_i32, %c0_i32_0 : i32, i32, i32
  }
  func.func @transform_1(%arg0: i32) -> (i32, i32, i32) {
    %c0_i32 = arith.constant 0 : i32
    %c0_i32_0 = arith.constant 0 : i32
    %c0_i32_1 = arith.constant 0 : i32
    %c0_i32_2 = arith.constant 0 : i32
    return %c0_i32, %c0_i32_0, %c0_i32_1 : i32, i32, i32
  }
  func.func @transform_2(%arg0: i32) -> (i32, i32) {
    %c0_i32 = arith.constant 0 : i32
    %c0_i32_0 = arith.constant 0 : i32
    %c0_i32_1 = arith.constant 0 : i32
    return %c0_i32, %c0_i32_0 : i32, i32
  }
  func.func @transform_3(%arg0: i32) -> (i32, i32) {
    %c0_i32 = arith.constant 0 : i32
    %c0_i32_0 = arith.constant 0 : i32
    %c0_i32_1 = arith.constant 0 : i32
    return %c0_i32, %c0_i32_0 : i32, i32
  }
  func.func @transform_4(%arg0: i32) -> (i32, i32) {
    %c0_i32 = arith.constant 0 : i32
    %c0_i32_0 = arith.constant 0 : i32
    %c0_i32_1 = arith.constant 0 : i32
    return %c0_i32, %c0_i32_0 : i32, i32
  }
  func.func @transform_5(%arg0: i32) -> (i32, i32, i32) {
    %c0_i32 = arith.constant 0 : i32
    %c0_i32_0 = arith.constant 0 : i32
    %c0_i32_1 = arith.constant 0 : i32
    return %arg0, %c0_i32, %c0_i32_0 : i32, i32, i32
  }
}

module attributes {stable_mosaic.version = 11 : i64} {
  func.func @_proj_posenc_kernel(%arg0: i32, %arg1: memref<1xf32, #tpu.memory_space<smem>>, %arg2: memref<1x8x128xf32, #tpu.memory_space<vmem>>, %arg3: memref<128x128xf32, #tpu.memory_space<vmem>>, %arg4: memref<1x128xf32, #tpu.memory_space<vmem>>, %arg5: memref<8x128xf32, #tpu.memory_space<vmem>>, %arg6: memref<1x8x128xf32, #tpu.memory_space<vmem>>) attributes {dimension_semantics = [#tpu.dimension_semantics<parallel>], iteration_bounds = array<i64: 2>, scalar_prefetch = 0 : i64, scratch_operands = 0 : i64, tpu.core_type = #tpu.core_type<tc>, window_params = [{transform_indices = @transform_0, window_bounds = array<i64: 1>}, {transform_indices = @transform_1, window_bounds = array<i64: 1, 8, 128>}, {pipeline_mode = #tpu.pipeline_mode<synchronous>, transform_indices = @transform_2, window_bounds = array<i64: 128, 128>}, {pipeline_mode = #tpu.pipeline_mode<synchronous>, transform_indices = @transform_3, window_bounds = array<i64: 1, 128>}, {pipeline_mode = #tpu.pipeline_mode<synchronous>, transform_indices = @transform_4, window_bounds = array<i64: 8, 128>}, {transform_indices = @transform_5, window_bounds = array<i64: 1, 8, 128>}]} {
    %c0 = arith.constant 0 : index
    %c0_0 = arith.constant 0 : index
    %c0_1 = arith.constant 0 : index
    %0 = vector.load %arg2[%c0, %c0_0, %c0_1] : memref<1x8x128xf32, #tpu.memory_space<vmem>>, vector<1x8x128xf32>
    %1 = vector.shape_cast %0 : vector<1x8x128xf32> to vector<8x128xf32>
    %c0_2 = arith.constant 0 : index
    %c0_3 = arith.constant 0 : index
    %2 = vector.load %arg3[%c0_2, %c0_3] : memref<128x128xf32, #tpu.memory_space<vmem>>, vector<128x128xf32>
    %cst = arith.constant dense<0.000000e+00> : vector<8x128xf32>
    %3 = tpu.matmul %1, %2, %cst {dimension_numbers = #tpu.dot_dimension_numbers<[1], [0], [0], [1], [0, 0, 1, 1], [], []>} : vector<8x128xf32>, vector<128x128xf32>, vector<8x128xf32> -> vector<8x128xf32>
    %c0_4 = arith.constant 0 : index
    %c0_5 = arith.constant 0 : index
    %4 = vector.load %arg4[%c0_4, %c0_5] : memref<1x128xf32, #tpu.memory_space<vmem>>, vector<1x128xf32>
    %5 = vector.broadcast %4 : vector<1x128xf32> to vector<8x128xf32>
    %6 = arith.addf %3, %5 : vector<8x128xf32>
    %c0_6 = arith.constant 0 : index
    %7 = memref.load %arg1[%c0_6] : memref<1xf32, #tpu.memory_space<smem>>
    %c0_7 = arith.constant 0 : index
    %c0_8 = arith.constant 0 : index
    %8 = vector.load %arg5[%c0_7, %c0_8] : memref<8x128xf32, #tpu.memory_space<vmem>>, vector<8x128xf32>
    %9 = vector.broadcast %7 : f32 to vector<8x128xf32>
    %10 = arith.mulf %9, %8 : vector<8x128xf32>
    %11 = arith.addf %6, %10 : vector<8x128xf32>
    %c0_9 = arith.constant 0 : index
    %c0_10 = arith.constant 0 : index
    %c0_11 = arith.constant 0 : index
    %12 = vector.load %arg6[%c0_9, %c0_10, %c0_11] : memref<1x8x128xf32, #tpu.memory_space<vmem>>, vector<1x8x128xf32>
    %13 = vector.shape_cast %12 : vector<1x8x128xf32> to vector<8x128xf32>
    %14 = vector.shape_cast %11 : vector<8x128xf32> to vector<1x8x128xf32>
    tpu.vector_store %arg6[%c0_9, %c0_10, %c0_11], %14 {strides = array<i32>} : memref<1x8x128xf32, #tpu.memory_space<vmem>>, vector<1x8x128xf32>,
    return
  }
  func.func @transform_0(%arg0: i32) -> i32 {
    %c0_i32 = arith.constant 0 : i32
    %c0_i32_0 = arith.constant 0 : i32
    return %c0_i32 : i32
  }
  func.func @transform_1(%arg0: i32) -> (i32, i32, i32) {
    %c0_i32 = arith.constant 0 : i32
    %c0_i32_0 = arith.constant 0 : i32
    %c0_i32_1 = arith.constant 0 : i32
    return %arg0, %c0_i32, %c0_i32_0 : i32, i32, i32
  }
  func.func @transform_2(%arg0: i32) -> (i32, i32) {
    %c0_i32 = arith.constant 0 : i32
    %c0_i32_0 = arith.constant 0 : i32
    %c0_i32_1 = arith.constant 0 : i32
    return %c0_i32, %c0_i32_0 : i32, i32
  }
  func.func @transform_3(%arg0: i32) -> (i32, i32) {
    %c0_i32 = arith.constant 0 : i32
    %c0_i32_0 = arith.constant 0 : i32
    %c0_i32_1 = arith.constant 0 : i32
    return %c0_i32, %c0_i32_0 : i32, i32
  }
  func.func @transform_4(%arg0: i32) -> (i32, i32) {
    %c0_i32 = arith.constant 0 : i32
    %c0_i32_0 = arith.constant 0 : i32
    %c0_i32_1 = arith.constant 0 : i32
    return %c0_i32, %c0_i32_0 : i32, i32
  }
  func.func @transform_5(%arg0: i32) -> (i32, i32, i32) {
    %c0_i32 = arith.constant 0 : i32
    %c0_i32_0 = arith.constant 0 : i32
    %c0_i32_1 = arith.constant 0 : i32
    return %arg0, %c0_i32, %c0_i32_0 : i32, i32, i32
  }
}

module attributes {stable_mosaic.version = 11 : i64} {
  func.func @_conv_bn_relu_kernel(%arg0: i32, %arg1: memref<1x12x128xf32, #tpu.memory_space<vmem>>, %arg2: memref<5x128x128xf32, #tpu.memory_space<vmem>>, %arg3: memref<1x128xf32, #tpu.memory_space<vmem>>, %arg4: memref<1x128xf32, #tpu.memory_space<vmem>>, %arg5: memref<1x128xf32, #tpu.memory_space<vmem>>, %arg6: memref<1x8x128xf32, #tpu.memory_space<vmem>>) attributes {dimension_semantics = [#tpu.dimension_semantics<parallel>], iteration_bounds = array<i64: 2>, scalar_prefetch = 0 : i64, scratch_operands = 0 : i64, tpu.core_type = #tpu.core_type<tc>, window_params = [{transform_indices = @transform_0, window_bounds = array<i64: 1, 12, 128>}, {pipeline_mode = #tpu.pipeline_mode<synchronous>, transform_indices = @transform_1, window_bounds = array<i64: 5, 128, 128>}, {pipeline_mode = #tpu.pipeline_mode<synchronous>, transform_indices = @transform_2, window_bounds = array<i64: 1, 128>}, {pipeline_mode = #tpu.pipeline_mode<synchronous>, transform_indices = @transform_3, window_bounds = array<i64: 1, 128>}, {pipeline_mode = #tpu.pipeline_mode<synchronous>, transform_indices = @transform_4, window_bounds = array<i64: 1, 128>}, {transform_indices = @transform_5, window_bounds = array<i64: 1, 8, 128>}]} {
    %c0 = arith.constant 0 : index
    %c0_0 = arith.constant 0 : index
    %c0_1 = arith.constant 0 : index
    %0 = vector.load %arg1[%c0, %c0_0, %c0_1] : memref<1x12x128xf32, #tpu.memory_space<vmem>>, vector<1x12x128xf32>
    %1 = vector.shape_cast %0 : vector<1x12x128xf32> to vector<12x128xf32>
    %cst = arith.constant 0.000000e+00 : f32
    %2 = vector.broadcast %cst : f32 to vector<8x128xf32>
    %3 = vector.extract_strided_slice %1 {offsets = [0, 0], sizes = [8, 128], strides = [1, 1]} : vector<12x128xf32> to vector<8x128xf32>
    %c0_2 = arith.constant 0 : index
    %c0_3 = arith.constant 0 : index
    %c0_4 = arith.constant 0 : index
    %4 = vector.load %arg2[%c0_2, %c0_3, %c0_4] : memref<5x128x128xf32, #tpu.memory_space<vmem>>, vector<1x128x128xf32>
    %5 = vector.shape_cast %4 : vector<1x128x128xf32> to vector<128x128xf32>
    %cst_5 = arith.constant dense<0.000000e+00> : vector<8x128xf32>
    %6 = tpu.matmul %3, %5, %cst_5 {dimension_numbers = #tpu.dot_dimension_numbers<[1], [0], [0], [1], [0, 0, 1, 1], [], []>} : vector<8x128xf32>, vector<128x128xf32>, vector<8x128xf32> -> vector<8x128xf32>
    %7 = arith.addf %2, %6 : vector<8x128xf32>
    %8 = vector.extract_strided_slice %1 {offsets = [1, 0], sizes = [8, 128], strides = [1, 1]} : vector<12x128xf32> to vector<8x128xf32>
    %c1 = arith.constant 1 : index
    %c0_6 = arith.constant 0 : index
    %c0_7 = arith.constant 0 : index
    %9 = vector.load %arg2[%c1, %c0_6, %c0_7] : memref<5x128x128xf32, #tpu.memory_space<vmem>>, vector<1x128x128xf32>
    %10 = vector.shape_cast %9 : vector<1x128x128xf32> to vector<128x128xf32>
    %cst_8 = arith.constant dense<0.000000e+00> : vector<8x128xf32>
    %11 = tpu.matmul %8, %10, %cst_8 {dimension_numbers = #tpu.dot_dimension_numbers<[1], [0], [0], [1], [0, 0, 1, 1], [], []>} : vector<8x128xf32>, vector<128x128xf32>, vector<8x128xf32> -> vector<8x128xf32>
    %12 = arith.addf %7, %11 : vector<8x128xf32>
    %13 = vector.extract_strided_slice %1 {offsets = [2, 0], sizes = [8, 128], strides = [1, 1]} : vector<12x128xf32> to vector<8x128xf32>
    %c2 = arith.constant 2 : index
    %c0_9 = arith.constant 0 : index
    %c0_10 = arith.constant 0 : index
    %14 = vector.load %arg2[%c2, %c0_9, %c0_10] : memref<5x128x128xf32, #tpu.memory_space<vmem>>, vector<1x128x128xf32>
    %15 = vector.shape_cast %14 : vector<1x128x128xf32> to vector<128x128xf32>
    %cst_11 = arith.constant dense<0.000000e+00> : vector<8x128xf32>
    %16 = tpu.matmul %13, %15, %cst_11 {dimension_numbers = #tpu.dot_dimension_numbers<[1], [0], [0], [1], [0, 0, 1, 1], [], []>} : vector<8x128xf32>, vector<128x128xf32>, vector<8x128xf32> -> vector<8x128xf32>
    %17 = arith.addf %12, %16 : vector<8x128xf32>
    %18 = vector.extract_strided_slice %1 {offsets = [3, 0], sizes = [8, 128], strides = [1, 1]} : vector<12x128xf32> to vector<8x128xf32>
    %c3 = arith.constant 3 : index
    %c0_12 = arith.constant 0 : index
    %c0_13 = arith.constant 0 : index
    %19 = vector.load %arg2[%c3, %c0_12, %c0_13] : memref<5x128x128xf32, #tpu.memory_space<vmem>>, vector<1x128x128xf32>
    %20 = vector.shape_cast %19 : vector<1x128x128xf32> to vector<128x128xf32>
    %cst_14 = arith.constant dense<0.000000e+00> : vector<8x128xf32>
    %21 = tpu.matmul %18, %20, %cst_14 {dimension_numbers = #tpu.dot_dimension_numbers<[1], [0], [0], [1], [0, 0, 1, 1], [], []>} : vector<8x128xf32>, vector<128x128xf32>, vector<8x128xf32> -> vector<8x128xf32>
    %22 = arith.addf %17, %21 : vector<8x128xf32>
    %23 = vector.extract_strided_slice %1 {offsets = [4, 0], sizes = [8, 128], strides = [1, 1]} : vector<12x128xf32> to vector<8x128xf32>
    %c4 = arith.constant 4 : index
    %c0_15 = arith.constant 0 : index
    %c0_16 = arith.constant 0 : index
    %24 = vector.load %arg2[%c4, %c0_15, %c0_16] : memref<5x128x128xf32, #tpu.memory_space<vmem>>, vector<1x128x128xf32>
    %25 = vector.shape_cast %24 : vector<1x128x128xf32> to vector<128x128xf32>
    %cst_17 = arith.constant dense<0.000000e+00> : vector<8x128xf32>
    %26 = tpu.matmul %23, %25, %cst_17 {dimension_numbers = #tpu.dot_dimension_numbers<[1], [0], [0], [1], [0, 0, 1, 1], [], []>} : vector<8x128xf32>, vector<128x128xf32>, vector<8x128xf32> -> vector<8x128xf32>
    %27 = arith.addf %22, %26 : vector<8x128xf32>
    %c0_18 = arith.constant 0 : index
    %c0_19 = arith.constant 0 : index
    %28 = vector.load %arg3[%c0_18, %c0_19] : memref<1x128xf32, #tpu.memory_space<vmem>>, vector<1x128xf32>
    %29 = vector.broadcast %28 : vector<1x128xf32> to vector<8x128xf32>
    %30 = arith.addf %27, %29 : vector<8x128xf32>
    %c0_20 = arith.constant 0 : index
    %c0_21 = arith.constant 0 : index
    %31 = vector.load %arg4[%c0_20, %c0_21] : memref<1x128xf32, #tpu.memory_space<vmem>>, vector<1x128xf32>
    %32 = vector.broadcast %31 : vector<1x128xf32> to vector<8x128xf32>
    %33 = arith.mulf %30, %32 : vector<8x128xf32>
    %c0_22 = arith.constant 0 : index
    %c0_23 = arith.constant 0 : index
    %34 = vector.load %arg5[%c0_22, %c0_23] : memref<1x128xf32, #tpu.memory_space<vmem>>, vector<1x128xf32>
    %35 = vector.broadcast %34 : vector<1x128xf32> to vector<8x128xf32>
    %36 = arith.addf %33, %35 : vector<8x128xf32>
    %cst_24 = arith.constant 0.000000e+00 : f32
    %37 = vector.broadcast %cst_24 : f32 to vector<8x128xf32>
    %38 = arith.maximumf %36, %37 : vector<8x128xf32>
    %c0_25 = arith.constant 0 : index
    %c0_26 = arith.constant 0 : index
    %c0_27 = arith.constant 0 : index
    %39 = vector.load %arg6[%c0_25, %c0_26, %c0_27] : memref<1x8x128xf32, #tpu.memory_space<vmem>>, vector<1x8x128xf32>
    %40 = vector.shape_cast %39 : vector<1x8x128xf32> to vector<8x128xf32>
    %41 = vector.shape_cast %38 : vector<8x128xf32> to vector<1x8x128xf32>
    tpu.vector_store %arg6[%c0_25, %c0_26, %c0_27], %41 {strides = array<i32>} : memref<1x8x128xf32, #tpu.memory_space<vmem>>, vector<1x8x128xf32>,
    return
  }
  func.func @transform_0(%arg0: i32) -> (i32, i32, i32) {
    %c0_i32 = arith.constant 0 : i32
    %c0_i32_0 = arith.constant 0 : i32
    %c0_i32_1 = arith.constant 0 : i32
    return %arg0, %c0_i32, %c0_i32_0 : i32, i32, i32
  }
  func.func @transform_1(%arg0: i32) -> (i32, i32, i32) {
    %c0_i32 = arith.constant 0 : i32
    %c0_i32_0 = arith.constant 0 : i32
    %c0_i32_1 = arith.constant 0 : i32
    %c0_i32_2 = arith.constant 0 : i32
    return %c0_i32, %c0_i32_0, %c0_i32_1 : i32, i32, i32
  }
  func.func @transform_2(%arg0: i32) -> (i32, i32) {
    %c0_i32 = arith.constant 0 : i32
    %c0_i32_0 = arith.constant 0 : i32
    %c0_i32_1 = arith.constant 0 : i32
    return %c0_i32, %c0_i32_0 : i32, i32
  }
  func.func @transform_3(%arg0: i32) -> (i32, i32) {
    %c0_i32 = arith.constant 0 : i32
    %c0_i32_0 = arith.constant 0 : i32
    %c0_i32_1 = arith.constant 0 : i32
    return %c0_i32, %c0_i32_0 : i32, i32
  }
  func.func @transform_4(%arg0: i32) -> (i32, i32) {
    %c0_i32 = arith.constant 0 : i32
    %c0_i32_0 = arith.constant 0 : i32
    %c0_i32_1 = arith.constant 0 : i32
    return %c0_i32, %c0_i32_0 : i32, i32
  }
  func.func @transform_5(%arg0: i32) -> (i32, i32, i32) {
    %c0_i32 = arith.constant 0 : i32
    %c0_i32_0 = arith.constant 0 : i32
    %c0_i32_1 = arith.constant 0 : i32
    return %arg0, %c0_i32, %c0_i32_0 : i32, i32, i32
  }
}

module attributes {stable_mosaic.version = 11 : i64} {
  func.func @_encoder_layer_kernel(%arg0: i32, %arg1: memref<1x8x128xf32, #tpu.memory_space<vmem>>, %arg2: memref<4x128x32xf32, #tpu.memory_space<vmem>>, %arg3: memref<4x1x32xf32, #tpu.memory_space<vmem>>, %arg4: memref<4x128x32xf32, #tpu.memory_space<vmem>>, %arg5: memref<4x1x32xf32, #tpu.memory_space<vmem>>, %arg6: memref<4x128x32xf32, #tpu.memory_space<vmem>>, %arg7: memref<4x1x32xf32, #tpu.memory_space<vmem>>, %arg8: memref<4x32x128xf32, #tpu.memory_space<vmem>>, %arg9: memref<1x128xf32, #tpu.memory_space<vmem>>, %arg10: memref<128x256xf32, #tpu.memory_space<vmem>>, %arg11: memref<1x256xf32, #tpu.memory_space<vmem>>, %arg12: memref<256x128xf32, #tpu.memory_space<vmem>>, %arg13: memref<1x128xf32, #tpu.memory_space<vmem>>, %arg14: memref<1x128xf32, #tpu.memory_space<vmem>>, %arg15: memref<1x128xf32, #tpu.memory_space<vmem>>, %arg16: memref<1x128xf32, #tpu.memory_space<vmem>>, %arg17: memref<1x128xf32, #tpu.memory_space<vmem>>, %arg18: memref<1x8x128xf32, #tpu.memory_space<vmem>>) attributes {dimension_semantics = [#tpu.dimension_semantics<parallel>], iteration_bounds = array<i64: 2>, scalar_prefetch = 0 : i64, scratch_operands = 0 : i64, tpu.core_type = #tpu.core_type<tc>, window_params = [{transform_indices = @transform_0, window_bounds = array<i64: 1, 8, 128>}, {pipeline_mode = #tpu.pipeline_mode<synchronous>, transform_indices = @transform_1, window_bounds = array<i64: 4, 128, 32>}, {pipeline_mode = #tpu.pipeline_mode<synchronous>, transform_indices = @transform_2, window_bounds = array<i64: 4, 1, 32>}, {pipeline_mode = #tpu.pipeline_mode<synchronous>, transform_indices = @transform_3, window_bounds = array<i64: 4, 128, 32>}, {pipeline_mode = #tpu.pipeline_mode<synchronous>, transform_indices = @transform_4, window_bounds = array<i64: 4, 1, 32>}, {pipeline_mode = #tpu.pipeline_mode<synchronous>, transform_indices = @transform_5, window_bounds = array<i64: 4, 128, 32>}, {pipeline_mode = #tpu.pipeline_mode<synchronous>, transform_indices = @transform_6, window_bounds = array<i64: 4, 1, 32>}, {pipeline_mode = #tpu.pipeline_mode<synchronous>, transform_indices = @transform_7, window_bounds = array<i64: 4, 32, 128>}, {pipeline_mode = #tpu.pipeline_mode<synchronous>, transform_indices = @transform_8, window_bounds = array<i64: 1, 128>}, {pipeline_mode = #tpu.pipeline_mode<synchronous>, transform_indices = @transform_9, window_bounds = array<i64: 128, 256>}, {pipeline_mode = #tpu.pipeline_mode<synchronous>, transform_indices = @transform_10, window_bounds = array<i64: 1, 256>}, {pipeline_mode = #tpu.pipeline_mode<synchronous>, transform_indices = @transform_11, window_bounds = array<i64: 256, 128>}, {pipeline_mode = #tpu.pipeline_mode<synchronous>, transform_indices = @transform_12, window_bounds = array<i64: 1, 128>}, {pipeline_mode = #tpu.pipeline_mode<synchronous>, transform_indices = @transform_13, window_bounds = array<i64: 1, 128>}, {pipeline_mode = #tpu.pipeline_mode<synchronous>, transform_indices = @transform_14, window_bounds = array<i64: 1, 128>}, {pipeline_mode = #tpu.pipeline_mode<synchronous>, transform_indices = @transform_15, window_bounds = array<i64: 1, 128>}, {pipeline_mode = #tpu.pipeline_mode<synchronous>, transform_indices = @transform_16, window_bounds = array<i64: 1, 128>}, {transform_indices = @transform_17, window_bounds = array<i64: 1, 8, 128>}]} {
    %c0 = arith.constant 0 : index
    %c0_0 = arith.constant 0 : index
    %c0_1 = arith.constant 0 : index
    %0 = vector.load %arg1[%c0, %c0_0, %c0_1] : memref<1x8x128xf32, #tpu.memory_space<vmem>>, vector<1x8x128xf32>
    %1 = vector.shape_cast %0 : vector<1x8x128xf32> to vector<8x128xf32>
    %cst = arith.constant 0.000000e+00 : f32
    %2 = vector.broadcast %cst : f32 to vector<8x128xf32>
    %c0_2 = arith.constant 0 : index
    %c0_3 = arith.constant 0 : index
    %c0_4 = arith.constant 0 : index
    %3 = vector.load %arg2[%c0_2, %c0_3, %c0_4] : memref<4x128x32xf32, #tpu.memory_space<vmem>>, vector<1x128x32xf32>
    %4 = vector.shape_cast %3 : vector<1x128x32xf32> to vector<128x32xf32>
    %cst_5 = arith.constant dense<0.000000e+00> : vector<8x32xf32>
    %5 = tpu.matmul %1, %4, %cst_5 {dimension_numbers = #tpu.dot_dimension_numbers<[1], [0], [0], [1], [0, 0, 1, 1], [], []>} : vector<8x128xf32>, vector<128x32xf32>, vector<8x32xf32> -> vector<8x32xf32>
    %c0_6 = arith.constant 0 : index
    %c0_7 = arith.constant 0 : index
    %c0_8 = arith.constant 0 : index
    %6 = vector.load %arg3[%c0_6, %c0_7, %c0_8] : memref<4x1x32xf32, #tpu.memory_space<vmem>>, vector<1x1x32xf32>
    %7 = vector.shape_cast %6 : vector<1x1x32xf32> to vector<1x32xf32>
    %8 = vector.broadcast %7 : vector<1x32xf32> to vector<8x32xf32>
    %9 = arith.addf %5, %8 : vector<8x32xf32>
    %c0_9 = arith.constant 0 : index
    %c0_10 = arith.constant 0 : index
    %c0_11 = arith.constant 0 : index
    %10 = vector.load %arg4[%c0_9, %c0_10, %c0_11] : memref<4x128x32xf32, #tpu.memory_space<vmem>>, vector<1x128x32xf32>
    %11 = vector.shape_cast %10 : vector<1x128x32xf32> to vector<128x32xf32>
    %cst_12 = arith.constant dense<0.000000e+00> : vector<8x32xf32>
    %12 = tpu.matmul %1, %11, %cst_12 {dimension_numbers = #tpu.dot_dimension_numbers<[1], [0], [0], [1], [0, 0, 1, 1], [], []>} : vector<8x128xf32>, vector<128x32xf32>, vector<8x32xf32> -> vector<8x32xf32>
    %c0_13 = arith.constant 0 : index
    %c0_14 = arith.constant 0 : index
    %c0_15 = arith.constant 0 : index
    %13 = vector.load %arg5[%c0_13, %c0_14, %c0_15] : memref<4x1x32xf32, #tpu.memory_space<vmem>>, vector<1x1x32xf32>
    %14 = vector.shape_cast %13 : vector<1x1x32xf32> to vector<1x32xf32>
    %15 = vector.broadcast %14 : vector<1x32xf32> to vector<8x32xf32>
    %16 = arith.addf %12, %15 : vector<8x32xf32>
    %c0_16 = arith.constant 0 : index
    %c0_17 = arith.constant 0 : index
    %c0_18 = arith.constant 0 : index
    %17 = vector.load %arg6[%c0_16, %c0_17, %c0_18] : memref<4x128x32xf32, #tpu.memory_space<vmem>>, vector<1x128x32xf32>
    %18 = vector.shape_cast %17 : vector<1x128x32xf32> to vector<128x32xf32>
    %cst_19 = arith.constant dense<0.000000e+00> : vector<8x32xf32>
    %19 = tpu.matmul %1, %18, %cst_19 {dimension_numbers = #tpu.dot_dimension_numbers<[1], [0], [0], [1], [0, 0, 1, 1], [], []>} : vector<8x128xf32>, vector<128x32xf32>, vector<8x32xf32> -> vector<8x32xf32>
    %c0_20 = arith.constant 0 : index
    %c0_21 = arith.constant 0 : index
    %c0_22 = arith.constant 0 : index
    %20 = vector.load %arg7[%c0_20, %c0_21, %c0_22] : memref<4x1x32xf32, #tpu.memory_space<vmem>>, vector<1x1x32xf32>
    %21 = vector.shape_cast %20 : vector<1x1x32xf32> to vector<1x32xf32>
    %22 = vector.broadcast %21 : vector<1x32xf32> to vector<8x32xf32>
    %23 = arith.addf %19, %22 : vector<8x32xf32>
    %cst_23 = arith.constant dense<0.000000e+00> : vector<8x8xf32>
    %24 = tpu.matmul %9, %16, %cst_23 {dimension_numbers = #tpu.dot_dimension_numbers<[1], [1], [0], [0], [0, 0, 1, 0], [], []>} : vector<8x32xf32>, vector<8x32xf32>, vector<8x8xf32> -> vector<8x8xf32>
    %cst_24 = arith.constant 0.176776692 : f32
    %25 = vector.broadcast %cst_24 : f32 to vector<8x8xf32>
    %26 = arith.mulf %24, %25 : vector<8x8xf32>
    %cst_25 = arith.constant dense<0xFF800000> : vector<8xf32>
    %27 = vector.multi_reduction <maximumf>, %26, %cst_25 [1] : vector<8x8xf32> to vector<8xf32>
    %28 = vector.shape_cast %27 : vector<8xf32> to vector<8x1xf32>
    %29 = vector.broadcast %28 : vector<8x1xf32> to vector<8x8xf32>
    %30 = arith.subf %26, %29 : vector<8x8xf32>
    %31 = math.exp %30 : vector<8x8xf32>
    %cst_26 = arith.constant dense<0.000000e+00> : vector<8xf32>
    %32 = vector.multi_reduction <add>, %31, %cst_26 [1] : vector<8x8xf32> to vector<8xf32>
    %33 = vector.shape_cast %32 : vector<8xf32> to vector<8x1xf32>
    %34 = vector.broadcast %33 : vector<8x1xf32> to vector<8x8xf32>
    %35 = arith.divf %31, %34 : vector<8x8xf32>
    %cst_27 = arith.constant dense<0.000000e+00> : vector<8x32xf32>
    %36 = tpu.matmul %35, %23, %cst_27 {dimension_numbers = #tpu.dot_dimension_numbers<[1], [0], [0], [1], [0, 0, 1, 1], [], []>} : vector<8x8xf32>, vector<8x32xf32>, vector<8x32xf32> -> vector<8x32xf32>
    %c0_28 = arith.constant 0 : index
    %c0_29 = arith.constant 0 : index
    %c0_30 = arith.constant 0 : index
    %37 = vector.load %arg8[%c0_28, %c0_29, %c0_30] : memref<4x32x128xf32, #tpu.memory_space<vmem>>, vector<1x32x128xf32>
    %38 = vector.shape_cast %37 : vector<1x32x128xf32> to vector<32x128xf32>
    %cst_31 = arith.constant dense<0.000000e+00> : vector<8x128xf32>
    %39 = tpu.matmul %36, %38, %cst_31 {dimension_numbers = #tpu.dot_dimension_numbers<[1], [0], [0], [1], [0, 0, 1, 1], [], []>} : vector<8x32xf32>, vector<32x128xf32>, vector<8x128xf32> -> vector<8x128xf32>
    %40 = arith.addf %2, %39 : vector<8x128xf32>
    %c1 = arith.constant 1 : index
    %c0_32 = arith.constant 0 : index
    %c0_33 = arith.constant 0 : index
    %41 = vector.load %arg2[%c1, %c0_32, %c0_33] : memref<4x128x32xf32, #tpu.memory_space<vmem>>, vector<1x128x32xf32>
    %42 = vector.shape_cast %41 : vector<1x128x32xf32> to vector<128x32xf32>
    %cst_34 = arith.constant dense<0.000000e+00> : vector<8x32xf32>
    %43 = tpu.matmul %1, %42, %cst_34 {dimension_numbers = #tpu.dot_dimension_numbers<[1], [0], [0], [1], [0, 0, 1, 1], [], []>} : vector<8x128xf32>, vector<128x32xf32>, vector<8x32xf32> -> vector<8x32xf32>
    %c1_35 = arith.constant 1 : index
    %c0_36 = arith.constant 0 : index
    %c0_37 = arith.constant 0 : index
    %44 = vector.load %arg3[%c1_35, %c0_36, %c0_37] : memref<4x1x32xf32, #tpu.memory_space<vmem>>, vector<1x1x32xf32>
    %45 = vector.shape_cast %44 : vector<1x1x32xf32> to vector<1x32xf32>
    %46 = vector.broadcast %45 : vector<1x32xf32> to vector<8x32xf32>
    %47 = arith.addf %43, %46 : vector<8x32xf32>
    %c1_38 = arith.constant 1 : index
    %c0_39 = arith.constant 0 : index
    %c0_40 = arith.constant 0 : index
    %48 = vector.load %arg4[%c1_38, %c0_39, %c0_40] : memref<4x128x32xf32, #tpu.memory_space<vmem>>, vector<1x128x32xf32>
    %49 = vector.shape_cast %48 : vector<1x128x32xf32> to vector<128x32xf32>
    %cst_41 = arith.constant dense<0.000000e+00> : vector<8x32xf32>
    %50 = tpu.matmul %1, %49, %cst_41 {dimension_numbers = #tpu.dot_dimension_numbers<[1], [0], [0], [1], [0, 0, 1, 1], [], []>} : vector<8x128xf32>, vector<128x32xf32>, vector<8x32xf32> -> vector<8x32xf32>
    %c1_42 = arith.constant 1 : index
    %c0_43 = arith.constant 0 : index
    %c0_44 = arith.constant 0 : index
    %51 = vector.load %arg5[%c1_42, %c0_43, %c0_44] : memref<4x1x32xf32, #tpu.memory_space<vmem>>, vector<1x1x32xf32>
    %52 = vector.shape_cast %51 : vector<1x1x32xf32> to vector<1x32xf32>
    %53 = vector.broadcast %52 : vector<1x32xf32> to vector<8x32xf32>
    %54 = arith.addf %50, %53 : vector<8x32xf32>
    %c1_45 = arith.constant 1 : index
    %c0_46 = arith.constant 0 : index
    %c0_47 = arith.constant 0 : index
    %55 = vector.load %arg6[%c1_45, %c0_46, %c0_47] : memref<4x128x32xf32, #tpu.memory_space<vmem>>, vector<1x128x32xf32>
    %56 = vector.shape_cast %55 : vector<1x128x32xf32> to vector<128x32xf32>
    %cst_48 = arith.constant dense<0.000000e+00> : vector<8x32xf32>
    %57 = tpu.matmul %1, %56, %cst_48 {dimension_numbers = #tpu.dot_dimension_numbers<[1], [0], [0], [1], [0, 0, 1, 1], [], []>} : vector<8x128xf32>, vector<128x32xf32>, vector<8x32xf32> -> vector<8x32xf32>
    %c1_49 = arith.constant 1 : index
    %c0_50 = arith.constant 0 : index
    %c0_51 = arith.constant 0 : index
    %58 = vector.load %arg7[%c1_49, %c0_50, %c0_51] : memref<4x1x32xf32, #tpu.memory_space<vmem>>, vector<1x1x32xf32>
    %59 = vector.shape_cast %58 : vector<1x1x32xf32> to vector<1x32xf32>
    %60 = vector.broadcast %59 : vector<1x32xf32> to vector<8x32xf32>
    %61 = arith.addf %57, %60 : vector<8x32xf32>
    %cst_52 = arith.constant dense<0.000000e+00> : vector<8x8xf32>
    %62 = tpu.matmul %47, %54, %cst_52 {dimension_numbers = #tpu.dot_dimension_numbers<[1], [1], [0], [0], [0, 0, 1, 0], [], []>} : vector<8x32xf32>, vector<8x32xf32>, vector<8x8xf32> -> vector<8x8xf32>
    %cst_53 = arith.constant 0.176776692 : f32
    %63 = vector.broadcast %cst_53 : f32 to vector<8x8xf32>
    %64 = arith.mulf %62, %63 : vector<8x8xf32>
    %cst_54 = arith.constant dense<0xFF800000> : vector<8xf32>
    %65 = vector.multi_reduction <maximumf>, %64, %cst_54 [1] : vector<8x8xf32> to vector<8xf32>
    %66 = vector.shape_cast %65 : vector<8xf32> to vector<8x1xf32>
    %67 = vector.broadcast %66 : vector<8x1xf32> to vector<8x8xf32>
    %68 = arith.subf %64, %67 : vector<8x8xf32>
    %69 = math.exp %68 : vector<8x8xf32>
    %cst_55 = arith.constant dense<0.000000e+00> : vector<8xf32>
    %70 = vector.multi_reduction <add>, %69, %cst_55 [1] : vector<8x8xf32> to vector<8xf32>
    %71 = vector.shape_cast %70 : vector<8xf32> to vector<8x1xf32>
    %72 = vector.broadcast %71 : vector<8x1xf32> to vector<8x8xf32>
    %73 = arith.divf %69, %72 : vector<8x8xf32>
    %cst_56 = arith.constant dense<0.000000e+00> : vector<8x32xf32>
    %74 = tpu.matmul %73, %61, %cst_56 {dimension_numbers = #tpu.dot_dimension_numbers<[1], [0], [0], [1], [0, 0, 1, 1], [], []>} : vector<8x8xf32>, vector<8x32xf32>, vector<8x32xf32> -> vector<8x32xf32>
    %c1_57 = arith.constant 1 : index
    %c0_58 = arith.constant 0 : index
    %c0_59 = arith.constant 0 : index
    %75 = vector.load %arg8[%c1_57, %c0_58, %c0_59] : memref<4x32x128xf32, #tpu.memory_space<vmem>>, vector<1x32x128xf32>
    %76 = vector.shape_cast %75 : vector<1x32x128xf32> to vector<32x128xf32>
    %cst_60 = arith.constant dense<0.000000e+00> : vector<8x128xf32>
    %77 = tpu.matmul %74, %76, %cst_60 {dimension_numbers = #tpu.dot_dimension_numbers<[1], [0], [0], [1], [0, 0, 1, 1], [], []>} : vector<8x32xf32>, vector<32x128xf32>, vector<8x128xf32> -> vector<8x128xf32>
    %78 = arith.addf %40, %77 : vector<8x128xf32>
    %c2 = arith.constant 2 : index
    %c0_61 = arith.constant 0 : index
    %c0_62 = arith.constant 0 : index
    %79 = vector.load %arg2[%c2, %c0_61, %c0_62] : memref<4x128x32xf32, #tpu.memory_space<vmem>>, vector<1x128x32xf32>
    %80 = vector.shape_cast %79 : vector<1x128x32xf32> to vector<128x32xf32>
    %cst_63 = arith.constant dense<0.000000e+00> : vector<8x32xf32>
    %81 = tpu.matmul %1, %80, %cst_63 {dimension_numbers = #tpu.dot_dimension_numbers<[1], [0], [0], [1], [0, 0, 1, 1], [], []>} : vector<8x128xf32>, vector<128x32xf32>, vector<8x32xf32> -> vector<8x32xf32>
    %c2_64 = arith.constant 2 : index
    %c0_65 = arith.constant 0 : index
    %c0_66 = arith.constant 0 : index
    %82 = vector.load %arg3[%c2_64, %c0_65, %c0_66] : memref<4x1x32xf32, #tpu.memory_space<vmem>>, vector<1x1x32xf32>
    %83 = vector.shape_cast %82 : vector<1x1x32xf32> to vector<1x32xf32>
    %84 = vector.broadcast %83 : vector<1x32xf32> to vector<8x32xf32>
    %85 = arith.addf %81, %84 : vector<8x32xf32>
    %c2_67 = arith.constant 2 : index
    %c0_68 = arith.constant 0 : index
    %c0_69 = arith.constant 0 : index
    %86 = vector.load %arg4[%c2_67, %c0_68, %c0_69] : memref<4x128x32xf32, #tpu.memory_space<vmem>>, vector<1x128x32xf32>
    %87 = vector.shape_cast %86 : vector<1x128x32xf32> to vector<128x32xf32>
    %cst_70 = arith.constant dense<0.000000e+00> : vector<8x32xf32>
    %88 = tpu.matmul %1, %87, %cst_70 {dimension_numbers = #tpu.dot_dimension_numbers<[1], [0], [0], [1], [0, 0, 1, 1], [], []>} : vector<8x128xf32>, vector<128x32xf32>, vector<8x32xf32> -> vector<8x32xf32>
    %c2_71 = arith.constant 2 : index
    %c0_72 = arith.constant 0 : index
    %c0_73 = arith.constant 0 : index
    %89 = vector.load %arg5[%c2_71, %c0_72, %c0_73] : memref<4x1x32xf32, #tpu.memory_space<vmem>>, vector<1x1x32xf32>
    %90 = vector.shape_cast %89 : vector<1x1x32xf32> to vector<1x32xf32>
    %91 = vector.broadcast %90 : vector<1x32xf32> to vector<8x32xf32>
    %92 = arith.addf %88, %91 : vector<8x32xf32>
    %c2_74 = arith.constant 2 : index
    %c0_75 = arith.constant 0 : index
    %c0_76 = arith.constant 0 : index
    %93 = vector.load %arg6[%c2_74, %c0_75, %c0_76] : memref<4x128x32xf32, #tpu.memory_space<vmem>>, vector<1x128x32xf32>
    %94 = vector.shape_cast %93 : vector<1x128x32xf32> to vector<128x32xf32>
    %cst_77 = arith.constant dense<0.000000e+00> : vector<8x32xf32>
    %95 = tpu.matmul %1, %94, %cst_77 {dimension_numbers = #tpu.dot_dimension_numbers<[1], [0], [0], [1], [0, 0, 1, 1], [], []>} : vector<8x128xf32>, vector<128x32xf32>, vector<8x32xf32> -> vector<8x32xf32>
    %c2_78 = arith.constant 2 : index
    %c0_79 = arith.constant 0 : index
    %c0_80 = arith.constant 0 : index
    %96 = vector.load %arg7[%c2_78, %c0_79, %c0_80] : memref<4x1x32xf32, #tpu.memory_space<vmem>>, vector<1x1x32xf32>
    %97 = vector.shape_cast %96 : vector<1x1x32xf32> to vector<1x32xf32>
    %98 = vector.broadcast %97 : vector<1x32xf32> to vector<8x32xf32>
    %99 = arith.addf %95, %98 : vector<8x32xf32>
    %cst_81 = arith.constant dense<0.000000e+00> : vector<8x8xf32>
    %100 = tpu.matmul %85, %92, %cst_81 {dimension_numbers = #tpu.dot_dimension_numbers<[1], [1], [0], [0], [0, 0, 1, 0], [], []>} : vector<8x32xf32>, vector<8x32xf32>, vector<8x8xf32> -> vector<8x8xf32>
    %cst_82 = arith.constant 0.176776692 : f32
    %101 = vector.broadcast %cst_82 : f32 to vector<8x8xf32>
    %102 = arith.mulf %100, %101 : vector<8x8xf32>
    %cst_83 = arith.constant dense<0xFF800000> : vector<8xf32>
    %103 = vector.multi_reduction <maximumf>, %102, %cst_83 [1] : vector<8x8xf32> to vector<8xf32>
    %104 = vector.shape_cast %103 : vector<8xf32> to vector<8x1xf32>
    %105 = vector.broadcast %104 : vector<8x1xf32> to vector<8x8xf32>
    %106 = arith.subf %102, %105 : vector<8x8xf32>
    %107 = math.exp %106 : vector<8x8xf32>
    %cst_84 = arith.constant dense<0.000000e+00> : vector<8xf32>
    %108 = vector.multi_reduction <add>, %107, %cst_84 [1] : vector<8x8xf32> to vector<8xf32>
    %109 = vector.shape_cast %108 : vector<8xf32> to vector<8x1xf32>
    %110 = vector.broadcast %109 : vector<8x1xf32> to vector<8x8xf32>
    %111 = arith.divf %107, %110 : vector<8x8xf32>
    %cst_85 = arith.constant dense<0.000000e+00> : vector<8x32xf32>
    %112 = tpu.matmul %111, %99, %cst_85 {dimension_numbers = #tpu.dot_dimension_numbers<[1], [0], [0], [1], [0, 0, 1, 1], [], []>} : vector<8x8xf32>, vector<8x32xf32>, vector<8x32xf32> -> vector<8x32xf32>
    %c2_86 = arith.constant 2 : index
    %c0_87 = arith.constant 0 : index
    %c0_88 = arith.constant 0 : index
    %113 = vector.load %arg8[%c2_86, %c0_87, %c0_88] : memref<4x32x128xf32, #tpu.memory_space<vmem>>, vector<1x32x128xf32>
    %114 = vector.shape_cast %113 : vector<1x32x128xf32> to vector<32x128xf32>
    %cst_89 = arith.constant dense<0.000000e+00> : vector<8x128xf32>
    %115 = tpu.matmul %112, %114, %cst_89 {dimension_numbers = #tpu.dot_dimension_numbers<[1], [0], [0], [1], [0, 0, 1, 1], [], []>} : vector<8x32xf32>, vector<32x128xf32>, vector<8x128xf32> -> vector<8x128xf32>
    %116 = arith.addf %78, %115 : vector<8x128xf32>
    %c3 = arith.constant 3 : index
    %c0_90 = arith.constant 0 : index
    %c0_91 = arith.constant 0 : index
    %117 = vector.load %arg2[%c3, %c0_90, %c0_91] : memref<4x128x32xf32, #tpu.memory_space<vmem>>, vector<1x128x32xf32>
    %118 = vector.shape_cast %117 : vector<1x128x32xf32> to vector<128x32xf32>
    %cst_92 = arith.constant dense<0.000000e+00> : vector<8x32xf32>
    %119 = tpu.matmul %1, %118, %cst_92 {dimension_numbers = #tpu.dot_dimension_numbers<[1], [0], [0], [1], [0, 0, 1, 1], [], []>} : vector<8x128xf32>, vector<128x32xf32>, vector<8x32xf32> -> vector<8x32xf32>
    %c3_93 = arith.constant 3 : index
    %c0_94 = arith.constant 0 : index
    %c0_95 = arith.constant 0 : index
    %120 = vector.load %arg3[%c3_93, %c0_94, %c0_95] : memref<4x1x32xf32, #tpu.memory_space<vmem>>, vector<1x1x32xf32>
    %121 = vector.shape_cast %120 : vector<1x1x32xf32> to vector<1x32xf32>
    %122 = vector.broadcast %121 : vector<1x32xf32> to vector<8x32xf32>
    %123 = arith.addf %119, %122 : vector<8x32xf32>
    %c3_96 = arith.constant 3 : index
    %c0_97 = arith.constant 0 : index
    %c0_98 = arith.constant 0 : index
    %124 = vector.load %arg4[%c3_96, %c0_97, %c0_98] : memref<4x128x32xf32, #tpu.memory_space<vmem>>, vector<1x128x32xf32>
    %125 = vector.shape_cast %124 : vector<1x128x32xf32> to vector<128x32xf32>
    %cst_99 = arith.constant dense<0.000000e+00> : vector<8x32xf32>
    %126 = tpu.matmul %1, %125, %cst_99 {dimension_numbers = #tpu.dot_dimension_numbers<[1], [0], [0], [1], [0, 0, 1, 1], [], []>} : vector<8x128xf32>, vector<128x32xf32>, vector<8x32xf32> -> vector<8x32xf32>
    %c3_100 = arith.constant 3 : index
    %c0_101 = arith.constant 0 : index
    %c0_102 = arith.constant 0 : index
    %127 = vector.load %arg5[%c3_100, %c0_101, %c0_102] : memref<4x1x32xf32, #tpu.memory_space<vmem>>, vector<1x1x32xf32>
    %128 = vector.shape_cast %127 : vector<1x1x32xf32> to vector<1x32xf32>
    %129 = vector.broadcast %128 : vector<1x32xf32> to vector<8x32xf32>
    %130 = arith.addf %126, %129 : vector<8x32xf32>
    %c3_103 = arith.constant 3 : index
    %c0_104 = arith.constant 0 : index
    %c0_105 = arith.constant 0 : index
    %131 = vector.load %arg6[%c3_103, %c0_104, %c0_105] : memref<4x128x32xf32, #tpu.memory_space<vmem>>, vector<1x128x32xf32>
    %132 = vector.shape_cast %131 : vector<1x128x32xf32> to vector<128x32xf32>
    %cst_106 = arith.constant dense<0.000000e+00> : vector<8x32xf32>
    %133 = tpu.matmul %1, %132, %cst_106 {dimension_numbers = #tpu.dot_dimension_numbers<[1], [0], [0], [1], [0, 0, 1, 1], [], []>} : vector<8x128xf32>, vector<128x32xf32>, vector<8x32xf32> -> vector<8x32xf32>
    %c3_107 = arith.constant 3 : index
    %c0_108 = arith.constant 0 : index
    %c0_109 = arith.constant 0 : index
    %134 = vector.load %arg7[%c3_107, %c0_108, %c0_109] : memref<4x1x32xf32, #tpu.memory_space<vmem>>, vector<1x1x32xf32>
    %135 = vector.shape_cast %134 : vector<1x1x32xf32> to vector<1x32xf32>
    %136 = vector.broadcast %135 : vector<1x32xf32> to vector<8x32xf32>
    %137 = arith.addf %133, %136 : vector<8x32xf32>
    %cst_110 = arith.constant dense<0.000000e+00> : vector<8x8xf32>
    %138 = tpu.matmul %123, %130, %cst_110 {dimension_numbers = #tpu.dot_dimension_numbers<[1], [1], [0], [0], [0, 0, 1, 0], [], []>} : vector<8x32xf32>, vector<8x32xf32>, vector<8x8xf32> -> vector<8x8xf32>
    %cst_111 = arith.constant 0.176776692 : f32
    %139 = vector.broadcast %cst_111 : f32 to vector<8x8xf32>
    %140 = arith.mulf %138, %139 : vector<8x8xf32>
    %cst_112 = arith.constant dense<0xFF800000> : vector<8xf32>
    %141 = vector.multi_reduction <maximumf>, %140, %cst_112 [1] : vector<8x8xf32> to vector<8xf32>
    %142 = vector.shape_cast %141 : vector<8xf32> to vector<8x1xf32>
    %143 = vector.broadcast %142 : vector<8x1xf32> to vector<8x8xf32>
    %144 = arith.subf %140, %143 : vector<8x8xf32>
    %145 = math.exp %144 : vector<8x8xf32>
    %cst_113 = arith.constant dense<0.000000e+00> : vector<8xf32>
    %146 = vector.multi_reduction <add>, %145, %cst_113 [1] : vector<8x8xf32> to vector<8xf32>
    %147 = vector.shape_cast %146 : vector<8xf32> to vector<8x1xf32>
    %148 = vector.broadcast %147 : vector<8x1xf32> to vector<8x8xf32>
    %149 = arith.divf %145, %148 : vector<8x8xf32>
    %cst_114 = arith.constant dense<0.000000e+00> : vector<8x32xf32>
    %150 = tpu.matmul %149, %137, %cst_114 {dimension_numbers = #tpu.dot_dimension_numbers<[1], [0], [0], [1], [0, 0, 1, 1], [], []>} : vector<8x8xf32>, vector<8x32xf32>, vector<8x32xf32> -> vector<8x32xf32>
    %c3_115 = arith.constant 3 : index
    %c0_116 = arith.constant 0 : index
    %c0_117 = arith.constant 0 : index
    %151 = vector.load %arg8[%c3_115, %c0_116, %c0_117] : memref<4x32x128xf32, #tpu.memory_space<vmem>>, vector<1x32x128xf32>
    %152 = vector.shape_cast %151 : vector<1x32x128xf32> to vector<32x128xf32>
    %cst_118 = arith.constant dense<0.000000e+00> : vector<8x128xf32>
    %153 = tpu.matmul %150, %152, %cst_118 {dimension_numbers = #tpu.dot_dimension_numbers<[1], [0], [0], [1], [0, 0, 1, 1], [], []>} : vector<8x32xf32>, vector<32x128xf32>, vector<8x128xf32> -> vector<8x128xf32>
    %154 = arith.addf %116, %153 : vector<8x128xf32>
    %c0_119 = arith.constant 0 : index
    %c0_120 = arith.constant 0 : index
    %155 = vector.load %arg9[%c0_119, %c0_120] : memref<1x128xf32, #tpu.memory_space<vmem>>, vector<1x128xf32>
    %156 = vector.broadcast %155 : vector<1x128xf32> to vector<8x128xf32>
    %157 = arith.addf %154, %156 : vector<8x128xf32>
    %158 = arith.addf %1, %157 : vector<8x128xf32>
    %cst_121 = arith.constant dense<0.000000e+00> : vector<8xf32>
    %159 = vector.multi_reduction <add>, %158, %cst_121 [1] : vector<8x128xf32> to vector<8xf32>
    %160 = vector.shape_cast %159 : vector<8xf32> to vector<8x1xf32>
    %cst_122 = arith.constant 1.280000e+02 : f32
    %161 = vector.broadcast %cst_122 : f32 to vector<8x1xf32>
    %162 = arith.divf %160, %161 : vector<8x1xf32>
    %163 = vector.broadcast %162 : vector<8x1xf32> to vector<8x128xf32>
    %164 = arith.subf %158, %163 : vector<8x128xf32>
    %165 = arith.mulf %164, %164 : vector<8x128xf32>
    %cst_123 = arith.constant dense<0.000000e+00> : vector<8xf32>
    %166 = vector.multi_reduction <add>, %165, %cst_123 [1] : vector<8x128xf32> to vector<8xf32>
    %167 = vector.shape_cast %166 : vector<8xf32> to vector<8x1xf32>
    %cst_124 = arith.constant 1.280000e+02 : f32
    %168 = vector.broadcast %cst_124 : f32 to vector<8x1xf32>
    %169 = arith.divf %167, %168 : vector<8x1xf32>
    %170 = vector.broadcast %162 : vector<8x1xf32> to vector<8x128xf32>
    %171 = arith.subf %158, %170 : vector<8x128xf32>
    %cst_125 = arith.constant 9.99999974E-6 : f32
    %172 = vector.broadcast %cst_125 : f32 to vector<8x1xf32>
    %173 = arith.addf %169, %172 : vector<8x1xf32>
    %174 = math.rsqrt %173 : vector<8x1xf32>
    %175 = vector.broadcast %174 : vector<8x1xf32> to vector<8x128xf32>
    %176 = arith.mulf %171, %175 : vector<8x128xf32>
    %c0_126 = arith.constant 0 : index
    %c0_127 = arith.constant 0 : index
    %177 = vector.load %arg14[%c0_126, %c0_127] : memref<1x128xf32, #tpu.memory_space<vmem>>, vector<1x128xf32>
    %178 = vector.broadcast %177 : vector<1x128xf32> to vector<8x128xf32>
    %179 = arith.mulf %176, %178 : vector<8x128xf32>
    %c0_128 = arith.constant 0 : index
    %c0_129 = arith.constant 0 : index
    %180 = vector.load %arg15[%c0_128, %c0_129] : memref<1x128xf32, #tpu.memory_space<vmem>>, vector<1x128xf32>
    %181 = vector.broadcast %180 : vector<1x128xf32> to vector<8x128xf32>
    %182 = arith.addf %179, %181 : vector<8x128xf32>
    %c0_130 = arith.constant 0 : index
    %c0_131 = arith.constant 0 : index
    %183 = vector.load %arg10[%c0_130, %c0_131] : memref<128x256xf32, #tpu.memory_space<vmem>>, vector<128x256xf32>
    %cst_132 = arith.constant dense<0.000000e+00> : vector<8x256xf32>
    %184 = tpu.matmul %182, %183, %cst_132 {dimension_numbers = #tpu.dot_dimension_numbers<[1], [0], [0], [1], [0, 0, 1, 1], [], []>} : vector<8x128xf32>, vector<128x256xf32>, vector<8x256xf32> -> vector<8x256xf32>
    %c0_133 = arith.constant 0 : index
    %c0_134 = arith.constant 0 : index
    %185 = vector.load %arg11[%c0_133, %c0_134] : memref<1x256xf32, #tpu.memory_space<vmem>>, vector<1x256xf32>
    %186 = vector.broadcast %185 : vector<1x256xf32> to vector<8x256xf32>
    %187 = arith.addf %184, %186 : vector<8x256xf32>
    %cst_135 = arith.constant 0.000000e+00 : f32
    %188 = vector.broadcast %cst_135 : f32 to vector<8x256xf32>
    %189 = arith.maximumf %187, %188 : vector<8x256xf32>
    %c0_136 = arith.constant 0 : index
    %c0_137 = arith.constant 0 : index
    %190 = vector.load %arg12[%c0_136, %c0_137] : memref<256x128xf32, #tpu.memory_space<vmem>>, vector<256x128xf32>
    %cst_138 = arith.constant dense<0.000000e+00> : vector<8x128xf32>
    %191 = tpu.matmul %189, %190, %cst_138 {dimension_numbers = #tpu.dot_dimension_numbers<[1], [0], [0], [1], [0, 0, 1, 1], [], []>} : vector<8x256xf32>, vector<256x128xf32>, vector<8x128xf32> -> vector<8x128xf32>
    %c0_139 = arith.constant 0 : index
    %c0_140 = arith.constant 0 : index
    %192 = vector.load %arg13[%c0_139, %c0_140] : memref<1x128xf32, #tpu.memory_space<vmem>>, vector<1x128xf32>
    %193 = vector.broadcast %192 : vector<1x128xf32> to vector<8x128xf32>
    %194 = arith.addf %191, %193 : vector<8x128xf32>
    %195 = arith.addf %182, %194 : vector<8x128xf32>
    %cst_141 = arith.constant dense<0.000000e+00> : vector<8xf32>
    %196 = vector.multi_reduction <add>, %195, %cst_141 [1] : vector<8x128xf32> to vector<8xf32>
    %197 = vector.shape_cast %196 : vector<8xf32> to vector<8x1xf32>
    %cst_142 = arith.constant 1.280000e+02 : f32
    %198 = vector.broadcast %cst_142 : f32 to vector<8x1xf32>
    %199 = arith.divf %197, %198 : vector<8x1xf32>
    %200 = vector.broadcast %199 : vector<8x1xf32> to vector<8x128xf32>
    %201 = arith.subf %195, %200 : vector<8x128xf32>
    %202 = arith.mulf %201, %201 : vector<8x128xf32>
    %cst_143 = arith.constant dense<0.000000e+00> : vector<8xf32>
    %203 = vector.multi_reduction <add>, %202, %cst_143 [1] : vector<8x128xf32> to vector<8xf32>
    %204 = vector.shape_cast %203 : vector<8xf32> to vector<8x1xf32>
    %cst_144 = arith.constant 1.280000e+02 : f32
    %205 = vector.broadcast %cst_144 : f32 to vector<8x1xf32>
    %206 = arith.divf %204, %205 : vector<8x1xf32>
    %207 = vector.broadcast %199 : vector<8x1xf32> to vector<8x128xf32>
    %208 = arith.subf %195, %207 : vector<8x128xf32>
    %cst_145 = arith.constant 9.99999974E-6 : f32
    %209 = vector.broadcast %cst_145 : f32 to vector<8x1xf32>
    %210 = arith.addf %206, %209 : vector<8x1xf32>
    %211 = math.rsqrt %210 : vector<8x1xf32>
    %212 = vector.broadcast %211 : vector<8x1xf32> to vector<8x128xf32>
    %213 = arith.mulf %208, %212 : vector<8x128xf32>
    %c0_146 = arith.constant 0 : index
    %c0_147 = arith.constant 0 : index
    %214 = vector.load %arg16[%c0_146, %c0_147] : memref<1x128xf32, #tpu.memory_space<vmem>>, vector<1x128xf32>
    %215 = vector.broadcast %214 : vector<1x128xf32> to vector<8x128xf32>
    %216 = arith.mulf %213, %215 : vector<8x128xf32>
    %c0_148 = arith.constant 0 : index
    %c0_149 = arith.constant 0 : index
    %217 = vector.load %arg17[%c0_148, %c0_149] : memref<1x128xf32, #tpu.memory_space<vmem>>, vector<1x128xf32>
    %218 = vector.broadcast %217 : vector<1x128xf32> to vector<8x128xf32>
    %219 = arith.addf %216, %218 : vector<8x128xf32>
    %c0_150 = arith.constant 0 : index
    %c0_151 = arith.constant 0 : index
    %c0_152 = arith.constant 0 : index
    %220 = vector.load %arg18[%c0_150, %c0_151, %c0_152] : memref<1x8x128xf32, #tpu.memory_space<vmem>>, vector<1x8x128xf32>
    %221 = vector.shape_cast %220 : vector<1x8x128xf32> to vector<8x128xf32>
    %222 = vector.shape_cast %219 : vector<8x128xf32> to vector<1x8x128xf32>
    tpu.vector_store %arg18[%c0_150, %c0_151, %c0_152], %222 {strides = array<i32>} : memref<1x8x128xf32, #tpu.memory_space<vmem>>, vector<1x8x128xf32>,
    return
  }
  func.func @transform_0(%arg0: i32) -> (i32, i32, i32) {
    %c0_i32 = arith.constant 0 : i32
    %c0_i32_0 = arith.constant 0 : i32
    %c0_i32_1 = arith.constant 0 : i32
    return %arg0, %c0_i32, %c0_i32_0 : i32, i32, i32
  }
  func.func @transform_1(%arg0: i32) -> (i32, i32, i32) {
    %c0_i32 = arith.constant 0 : i32
    %c0_i32_0 = arith.constant 0 : i32
    %c0_i32_1 = arith.constant 0 : i32
    %c0_i32_2 = arith.constant 0 : i32
    return %c0_i32, %c0_i32_0, %c0_i32_1 : i32, i32, i32
  }
  func.func @transform_2(%arg0: i32) -> (i32, i32, i32) {
    %c0_i32 = arith.constant 0 : i32
    %c0_i32_0 = arith.constant 0 : i32
    %c0_i32_1 = arith.constant 0 : i32
    %c0_i32_2 = arith.constant 0 : i32
    return %c0_i32, %c0_i32_0, %c0_i32_1 : i32, i32, i32
  }
  func.func @transform_3(%arg0: i32) -> (i32, i32, i32) {
    %c0_i32 = arith.constant 0 : i32
    %c0_i32_0 = arith.constant 0 : i32
    %c0_i32_1 = arith.constant 0 : i32
    %c0_i32_2 = arith.constant 0 : i32
    return %c0_i32, %c0_i32_0, %c0_i32_1 : i32, i32, i32
  }
  func.func @transform_4(%arg0: i32) -> (i32, i32, i32) {
    %c0_i32 = arith.constant 0 : i32
    %c0_i32_0 = arith.constant 0 : i32
    %c0_i32_1 = arith.constant 0 : i32
    %c0_i32_2 = arith.constant 0 : i32
    return %c0_i32, %c0_i32_0, %c0_i32_1 : i32, i32, i32
  }
  func.func @transform_5(%arg0: i32) -> (i32, i32, i32) {
    %c0_i32 = arith.constant 0 : i32
    %c0_i32_0 = arith.constant 0 : i32
    %c0_i32_1 = arith.constant 0 : i32
    %c0_i32_2 = arith.constant 0 : i32
    return %c0_i32, %c0_i32_0, %c0_i32_1 : i32, i32, i32
  }
  func.func @transform_6(%arg0: i32) -> (i32, i32, i32) {
    %c0_i32 = arith.constant 0 : i32
    %c0_i32_0 = arith.constant 0 : i32
    %c0_i32_1 = arith.constant 0 : i32
    %c0_i32_2 = arith.constant 0 : i32
    return %c0_i32, %c0_i32_0, %c0_i32_1 : i32, i32, i32
  }
  func.func @transform_7(%arg0: i32) -> (i32, i32, i32) {
    %c0_i32 = arith.constant 0 : i32
    %c0_i32_0 = arith.constant 0 : i32
    %c0_i32_1 = arith.constant 0 : i32
    %c0_i32_2 = arith.constant 0 : i32
    return %c0_i32, %c0_i32_0, %c0_i32_1 : i32, i32, i32
  }
  func.func @transform_8(%arg0: i32) -> (i32, i32) {
    %c0_i32 = arith.constant 0 : i32
    %c0_i32_0 = arith.constant 0 : i32
    %c0_i32_1 = arith.constant 0 : i32
    return %c0_i32, %c0_i32_0 : i32, i32
  }
  func.func @transform_9(%arg0: i32) -> (i32, i32) {
    %c0_i32 = arith.constant 0 : i32
    %c0_i32_0 = arith.constant 0 : i32
    %c0_i32_1 = arith.constant 0 : i32
    return %c0_i32, %c0_i32_0 : i32, i32
  }
  func.func @transform_10(%arg0: i32) -> (i32, i32) {
    %c0_i32 = arith.constant 0 : i32
    %c0_i32_0 = arith.constant 0 : i32
    %c0_i32_1 = arith.constant 0 : i32
    return %c0_i32, %c0_i32_0 : i32, i32
  }
  func.func @transform_11(%arg0: i32) -> (i32, i32) {
    %c0_i32 = arith.constant 0 : i32
    %c0_i32_0 = arith.constant 0 : i32
    %c0_i32_1 = arith.constant 0 : i32
    return %c0_i32, %c0_i32_0 : i32, i32
  }
  func.func @transform_12(%arg0: i32) -> (i32, i32) {
    %c0_i32 = arith.constant 0 : i32
    %c0_i32_0 = arith.constant 0 : i32
    %c0_i32_1 = arith.constant 0 : i32
    return %c0_i32, %c0_i32_0 : i32, i32
  }
  func.func @transform_13(%arg0: i32) -> (i32, i32) {
    %c0_i32 = arith.constant 0 : i32
    %c0_i32_0 = arith.constant 0 : i32
    %c0_i32_1 = arith.constant 0 : i32
    return %c0_i32, %c0_i32_0 : i32, i32
  }
  func.func @transform_14(%arg0: i32) -> (i32, i32) {
    %c0_i32 = arith.constant 0 : i32
    %c0_i32_0 = arith.constant 0 : i32
    %c0_i32_1 = arith.constant 0 : i32
    return %c0_i32, %c0_i32_0 : i32, i32
  }
  func.func @transform_15(%arg0: i32) -> (i32, i32) {
    %c0_i32 = arith.constant 0 : i32
    %c0_i32_0 = arith.constant 0 : i32
    %c0_i32_1 = arith.constant 0 : i32
    return %c0_i32, %c0_i32_0 : i32, i32
  }
  func.func @transform_16(%arg0: i32) -> (i32, i32) {
    %c0_i32 = arith.constant 0 : i32
    %c0_i32_0 = arith.constant 0 : i32
    %c0_i32_1 = arith.constant 0 : i32
    return %c0_i32, %c0_i32_0 : i32, i32
  }
  func.func @transform_17(%arg0: i32) -> (i32, i32, i32) {
    %c0_i32 = arith.constant 0 : i32
    %c0_i32_0 = arith.constant 0 : i32
    %c0_i32_1 = arith.constant 0 : i32
    return %arg0, %c0_i32, %c0_i32_0 : i32, i32, i32
  }
}

module attributes {stable_mosaic.version = 11 : i64} {
  func.func @_encoder_layer_kernel(%arg0: i32, %arg1: memref<1x8x128xf32, #tpu.memory_space<vmem>>, %arg2: memref<4x128x32xf32, #tpu.memory_space<vmem>>, %arg3: memref<4x1x32xf32, #tpu.memory_space<vmem>>, %arg4: memref<4x128x32xf32, #tpu.memory_space<vmem>>, %arg5: memref<4x1x32xf32, #tpu.memory_space<vmem>>, %arg6: memref<4x128x32xf32, #tpu.memory_space<vmem>>, %arg7: memref<4x1x32xf32, #tpu.memory_space<vmem>>, %arg8: memref<4x32x128xf32, #tpu.memory_space<vmem>>, %arg9: memref<1x128xf32, #tpu.memory_space<vmem>>, %arg10: memref<128x256xf32, #tpu.memory_space<vmem>>, %arg11: memref<1x256xf32, #tpu.memory_space<vmem>>, %arg12: memref<256x128xf32, #tpu.memory_space<vmem>>, %arg13: memref<1x128xf32, #tpu.memory_space<vmem>>, %arg14: memref<1x128xf32, #tpu.memory_space<vmem>>, %arg15: memref<1x128xf32, #tpu.memory_space<vmem>>, %arg16: memref<1x128xf32, #tpu.memory_space<vmem>>, %arg17: memref<1x128xf32, #tpu.memory_space<vmem>>, %arg18: memref<1x8x128xf32, #tpu.memory_space<vmem>>) attributes {dimension_semantics = [#tpu.dimension_semantics<parallel>], iteration_bounds = array<i64: 2>, scalar_prefetch = 0 : i64, scratch_operands = 0 : i64, tpu.core_type = #tpu.core_type<tc>, window_params = [{transform_indices = @transform_0, window_bounds = array<i64: 1, 8, 128>}, {pipeline_mode = #tpu.pipeline_mode<synchronous>, transform_indices = @transform_1, window_bounds = array<i64: 4, 128, 32>}, {pipeline_mode = #tpu.pipeline_mode<synchronous>, transform_indices = @transform_2, window_bounds = array<i64: 4, 1, 32>}, {pipeline_mode = #tpu.pipeline_mode<synchronous>, transform_indices = @transform_3, window_bounds = array<i64: 4, 128, 32>}, {pipeline_mode = #tpu.pipeline_mode<synchronous>, transform_indices = @transform_4, window_bounds = array<i64: 4, 1, 32>}, {pipeline_mode = #tpu.pipeline_mode<synchronous>, transform_indices = @transform_5, window_bounds = array<i64: 4, 128, 32>}, {pipeline_mode = #tpu.pipeline_mode<synchronous>, transform_indices = @transform_6, window_bounds = array<i64: 4, 1, 32>}, {pipeline_mode = #tpu.pipeline_mode<synchronous>, transform_indices = @transform_7, window_bounds = array<i64: 4, 32, 128>}, {pipeline_mode = #tpu.pipeline_mode<synchronous>, transform_indices = @transform_8, window_bounds = array<i64: 1, 128>}, {pipeline_mode = #tpu.pipeline_mode<synchronous>, transform_indices = @transform_9, window_bounds = array<i64: 128, 256>}, {pipeline_mode = #tpu.pipeline_mode<synchronous>, transform_indices = @transform_10, window_bounds = array<i64: 1, 256>}, {pipeline_mode = #tpu.pipeline_mode<synchronous>, transform_indices = @transform_11, window_bounds = array<i64: 256, 128>}, {pipeline_mode = #tpu.pipeline_mode<synchronous>, transform_indices = @transform_12, window_bounds = array<i64: 1, 128>}, {pipeline_mode = #tpu.pipeline_mode<synchronous>, transform_indices = @transform_13, window_bounds = array<i64: 1, 128>}, {pipeline_mode = #tpu.pipeline_mode<synchronous>, transform_indices = @transform_14, window_bounds = array<i64: 1, 128>}, {pipeline_mode = #tpu.pipeline_mode<synchronous>, transform_indices = @transform_15, window_bounds = array<i64: 1, 128>}, {pipeline_mode = #tpu.pipeline_mode<synchronous>, transform_indices = @transform_16, window_bounds = array<i64: 1, 128>}, {transform_indices = @transform_17, window_bounds = array<i64: 1, 8, 128>}]} {
    %c0 = arith.constant 0 : index
    %c0_0 = arith.constant 0 : index
    %c0_1 = arith.constant 0 : index
    %0 = vector.load %arg1[%c0, %c0_0, %c0_1] : memref<1x8x128xf32, #tpu.memory_space<vmem>>, vector<1x8x128xf32>
    %1 = vector.shape_cast %0 : vector<1x8x128xf32> to vector<8x128xf32>
    %cst = arith.constant 0.000000e+00 : f32
    %2 = vector.broadcast %cst : f32 to vector<8x128xf32>
    %c0_2 = arith.constant 0 : index
    %c0_3 = arith.constant 0 : index
    %c0_4 = arith.constant 0 : index
    %3 = vector.load %arg2[%c0_2, %c0_3, %c0_4] : memref<4x128x32xf32, #tpu.memory_space<vmem>>, vector<1x128x32xf32>
    %4 = vector.shape_cast %3 : vector<1x128x32xf32> to vector<128x32xf32>
    %cst_5 = arith.constant dense<0.000000e+00> : vector<8x32xf32>
    %5 = tpu.matmul %1, %4, %cst_5 {dimension_numbers = #tpu.dot_dimension_numbers<[1], [0], [0], [1], [0, 0, 1, 1], [], []>} : vector<8x128xf32>, vector<128x32xf32>, vector<8x32xf32> -> vector<8x32xf32>
    %c0_6 = arith.constant 0 : index
    %c0_7 = arith.constant 0 : index
    %c0_8 = arith.constant 0 : index
    %6 = vector.load %arg3[%c0_6, %c0_7, %c0_8] : memref<4x1x32xf32, #tpu.memory_space<vmem>>, vector<1x1x32xf32>
    %7 = vector.shape_cast %6 : vector<1x1x32xf32> to vector<1x32xf32>
    %8 = vector.broadcast %7 : vector<1x32xf32> to vector<8x32xf32>
    %9 = arith.addf %5, %8 : vector<8x32xf32>
    %c0_9 = arith.constant 0 : index
    %c0_10 = arith.constant 0 : index
    %c0_11 = arith.constant 0 : index
    %10 = vector.load %arg4[%c0_9, %c0_10, %c0_11] : memref<4x128x32xf32, #tpu.memory_space<vmem>>, vector<1x128x32xf32>
    %11 = vector.shape_cast %10 : vector<1x128x32xf32> to vector<128x32xf32>
    %cst_12 = arith.constant dense<0.000000e+00> : vector<8x32xf32>
    %12 = tpu.matmul %1, %11, %cst_12 {dimension_numbers = #tpu.dot_dimension_numbers<[1], [0], [0], [1], [0, 0, 1, 1], [], []>} : vector<8x128xf32>, vector<128x32xf32>, vector<8x32xf32> -> vector<8x32xf32>
    %c0_13 = arith.constant 0 : index
    %c0_14 = arith.constant 0 : index
    %c0_15 = arith.constant 0 : index
    %13 = vector.load %arg5[%c0_13, %c0_14, %c0_15] : memref<4x1x32xf32, #tpu.memory_space<vmem>>, vector<1x1x32xf32>
    %14 = vector.shape_cast %13 : vector<1x1x32xf32> to vector<1x32xf32>
    %15 = vector.broadcast %14 : vector<1x32xf32> to vector<8x32xf32>
    %16 = arith.addf %12, %15 : vector<8x32xf32>
    %c0_16 = arith.constant 0 : index
    %c0_17 = arith.constant 0 : index
    %c0_18 = arith.constant 0 : index
    %17 = vector.load %arg6[%c0_16, %c0_17, %c0_18] : memref<4x128x32xf32, #tpu.memory_space<vmem>>, vector<1x128x32xf32>
    %18 = vector.shape_cast %17 : vector<1x128x32xf32> to vector<128x32xf32>
    %cst_19 = arith.constant dense<0.000000e+00> : vector<8x32xf32>
    %19 = tpu.matmul %1, %18, %cst_19 {dimension_numbers = #tpu.dot_dimension_numbers<[1], [0], [0], [1], [0, 0, 1, 1], [], []>} : vector<8x128xf32>, vector<128x32xf32>, vector<8x32xf32> -> vector<8x32xf32>
    %c0_20 = arith.constant 0 : index
    %c0_21 = arith.constant 0 : index
    %c0_22 = arith.constant 0 : index
    %20 = vector.load %arg7[%c0_20, %c0_21, %c0_22] : memref<4x1x32xf32, #tpu.memory_space<vmem>>, vector<1x1x32xf32>
    %21 = vector.shape_cast %20 : vector<1x1x32xf32> to vector<1x32xf32>
    %22 = vector.broadcast %21 : vector<1x32xf32> to vector<8x32xf32>
    %23 = arith.addf %19, %22 : vector<8x32xf32>
    %cst_23 = arith.constant dense<0.000000e+00> : vector<8x8xf32>
    %24 = tpu.matmul %9, %16, %cst_23 {dimension_numbers = #tpu.dot_dimension_numbers<[1], [1], [0], [0], [0, 0, 1, 0], [], []>} : vector<8x32xf32>, vector<8x32xf32>, vector<8x8xf32> -> vector<8x8xf32>
    %cst_24 = arith.constant 0.176776692 : f32
    %25 = vector.broadcast %cst_24 : f32 to vector<8x8xf32>
    %26 = arith.mulf %24, %25 : vector<8x8xf32>
    %cst_25 = arith.constant dense<0xFF800000> : vector<8xf32>
    %27 = vector.multi_reduction <maximumf>, %26, %cst_25 [1] : vector<8x8xf32> to vector<8xf32>
    %28 = vector.shape_cast %27 : vector<8xf32> to vector<8x1xf32>
    %29 = vector.broadcast %28 : vector<8x1xf32> to vector<8x8xf32>
    %30 = arith.subf %26, %29 : vector<8x8xf32>
    %31 = math.exp %30 : vector<8x8xf32>
    %cst_26 = arith.constant dense<0.000000e+00> : vector<8xf32>
    %32 = vector.multi_reduction <add>, %31, %cst_26 [1] : vector<8x8xf32> to vector<8xf32>
    %33 = vector.shape_cast %32 : vector<8xf32> to vector<8x1xf32>
    %34 = vector.broadcast %33 : vector<8x1xf32> to vector<8x8xf32>
    %35 = arith.divf %31, %34 : vector<8x8xf32>
    %cst_27 = arith.constant dense<0.000000e+00> : vector<8x32xf32>
    %36 = tpu.matmul %35, %23, %cst_27 {dimension_numbers = #tpu.dot_dimension_numbers<[1], [0], [0], [1], [0, 0, 1, 1], [], []>} : vector<8x8xf32>, vector<8x32xf32>, vector<8x32xf32> -> vector<8x32xf32>
    %c0_28 = arith.constant 0 : index
    %c0_29 = arith.constant 0 : index
    %c0_30 = arith.constant 0 : index
    %37 = vector.load %arg8[%c0_28, %c0_29, %c0_30] : memref<4x32x128xf32, #tpu.memory_space<vmem>>, vector<1x32x128xf32>
    %38 = vector.shape_cast %37 : vector<1x32x128xf32> to vector<32x128xf32>
    %cst_31 = arith.constant dense<0.000000e+00> : vector<8x128xf32>
    %39 = tpu.matmul %36, %38, %cst_31 {dimension_numbers = #tpu.dot_dimension_numbers<[1], [0], [0], [1], [0, 0, 1, 1], [], []>} : vector<8x32xf32>, vector<32x128xf32>, vector<8x128xf32> -> vector<8x128xf32>
    %40 = arith.addf %2, %39 : vector<8x128xf32>
    %c1 = arith.constant 1 : index
    %c0_32 = arith.constant 0 : index
    %c0_33 = arith.constant 0 : index
    %41 = vector.load %arg2[%c1, %c0_32, %c0_33] : memref<4x128x32xf32, #tpu.memory_space<vmem>>, vector<1x128x32xf32>
    %42 = vector.shape_cast %41 : vector<1x128x32xf32> to vector<128x32xf32>
    %cst_34 = arith.constant dense<0.000000e+00> : vector<8x32xf32>
    %43 = tpu.matmul %1, %42, %cst_34 {dimension_numbers = #tpu.dot_dimension_numbers<[1], [0], [0], [1], [0, 0, 1, 1], [], []>} : vector<8x128xf32>, vector<128x32xf32>, vector<8x32xf32> -> vector<8x32xf32>
    %c1_35 = arith.constant 1 : index
    %c0_36 = arith.constant 0 : index
    %c0_37 = arith.constant 0 : index
    %44 = vector.load %arg3[%c1_35, %c0_36, %c0_37] : memref<4x1x32xf32, #tpu.memory_space<vmem>>, vector<1x1x32xf32>
    %45 = vector.shape_cast %44 : vector<1x1x32xf32> to vector<1x32xf32>
    %46 = vector.broadcast %45 : vector<1x32xf32> to vector<8x32xf32>
    %47 = arith.addf %43, %46 : vector<8x32xf32>
    %c1_38 = arith.constant 1 : index
    %c0_39 = arith.constant 0 : index
    %c0_40 = arith.constant 0 : index
    %48 = vector.load %arg4[%c1_38, %c0_39, %c0_40] : memref<4x128x32xf32, #tpu.memory_space<vmem>>, vector<1x128x32xf32>
    %49 = vector.shape_cast %48 : vector<1x128x32xf32> to vector<128x32xf32>
    %cst_41 = arith.constant dense<0.000000e+00> : vector<8x32xf32>
    %50 = tpu.matmul %1, %49, %cst_41 {dimension_numbers = #tpu.dot_dimension_numbers<[1], [0], [0], [1], [0, 0, 1, 1], [], []>} : vector<8x128xf32>, vector<128x32xf32>, vector<8x32xf32> -> vector<8x32xf32>
    %c1_42 = arith.constant 1 : index
    %c0_43 = arith.constant 0 : index
    %c0_44 = arith.constant 0 : index
    %51 = vector.load %arg5[%c1_42, %c0_43, %c0_44] : memref<4x1x32xf32, #tpu.memory_space<vmem>>, vector<1x1x32xf32>
    %52 = vector.shape_cast %51 : vector<1x1x32xf32> to vector<1x32xf32>
    %53 = vector.broadcast %52 : vector<1x32xf32> to vector<8x32xf32>
    %54 = arith.addf %50, %53 : vector<8x32xf32>
    %c1_45 = arith.constant 1 : index
    %c0_46 = arith.constant 0 : index
    %c0_47 = arith.constant 0 : index
    %55 = vector.load %arg6[%c1_45, %c0_46, %c0_47] : memref<4x128x32xf32, #tpu.memory_space<vmem>>, vector<1x128x32xf32>
    %56 = vector.shape_cast %55 : vector<1x128x32xf32> to vector<128x32xf32>
    %cst_48 = arith.constant dense<0.000000e+00> : vector<8x32xf32>
    %57 = tpu.matmul %1, %56, %cst_48 {dimension_numbers = #tpu.dot_dimension_numbers<[1], [0], [0], [1], [0, 0, 1, 1], [], []>} : vector<8x128xf32>, vector<128x32xf32>, vector<8x32xf32> -> vector<8x32xf32>
    %c1_49 = arith.constant 1 : index
    %c0_50 = arith.constant 0 : index
    %c0_51 = arith.constant 0 : index
    %58 = vector.load %arg7[%c1_49, %c0_50, %c0_51] : memref<4x1x32xf32, #tpu.memory_space<vmem>>, vector<1x1x32xf32>
    %59 = vector.shape_cast %58 : vector<1x1x32xf32> to vector<1x32xf32>
    %60 = vector.broadcast %59 : vector<1x32xf32> to vector<8x32xf32>
    %61 = arith.addf %57, %60 : vector<8x32xf32>
    %cst_52 = arith.constant dense<0.000000e+00> : vector<8x8xf32>
    %62 = tpu.matmul %47, %54, %cst_52 {dimension_numbers = #tpu.dot_dimension_numbers<[1], [1], [0], [0], [0, 0, 1, 0], [], []>} : vector<8x32xf32>, vector<8x32xf32>, vector<8x8xf32> -> vector<8x8xf32>
    %cst_53 = arith.constant 0.176776692 : f32
    %63 = vector.broadcast %cst_53 : f32 to vector<8x8xf32>
    %64 = arith.mulf %62, %63 : vector<8x8xf32>
    %cst_54 = arith.constant dense<0xFF800000> : vector<8xf32>
    %65 = vector.multi_reduction <maximumf>, %64, %cst_54 [1] : vector<8x8xf32> to vector<8xf32>
    %66 = vector.shape_cast %65 : vector<8xf32> to vector<8x1xf32>
    %67 = vector.broadcast %66 : vector<8x1xf32> to vector<8x8xf32>
    %68 = arith.subf %64, %67 : vector<8x8xf32>
    %69 = math.exp %68 : vector<8x8xf32>
    %cst_55 = arith.constant dense<0.000000e+00> : vector<8xf32>
    %70 = vector.multi_reduction <add>, %69, %cst_55 [1] : vector<8x8xf32> to vector<8xf32>
    %71 = vector.shape_cast %70 : vector<8xf32> to vector<8x1xf32>
    %72 = vector.broadcast %71 : vector<8x1xf32> to vector<8x8xf32>
    %73 = arith.divf %69, %72 : vector<8x8xf32>
    %cst_56 = arith.constant dense<0.000000e+00> : vector<8x32xf32>
    %74 = tpu.matmul %73, %61, %cst_56 {dimension_numbers = #tpu.dot_dimension_numbers<[1], [0], [0], [1], [0, 0, 1, 1], [], []>} : vector<8x8xf32>, vector<8x32xf32>, vector<8x32xf32> -> vector<8x32xf32>
    %c1_57 = arith.constant 1 : index
    %c0_58 = arith.constant 0 : index
    %c0_59 = arith.constant 0 : index
    %75 = vector.load %arg8[%c1_57, %c0_58, %c0_59] : memref<4x32x128xf32, #tpu.memory_space<vmem>>, vector<1x32x128xf32>
    %76 = vector.shape_cast %75 : vector<1x32x128xf32> to vector<32x128xf32>
    %cst_60 = arith.constant dense<0.000000e+00> : vector<8x128xf32>
    %77 = tpu.matmul %74, %76, %cst_60 {dimension_numbers = #tpu.dot_dimension_numbers<[1], [0], [0], [1], [0, 0, 1, 1], [], []>} : vector<8x32xf32>, vector<32x128xf32>, vector<8x128xf32> -> vector<8x128xf32>
    %78 = arith.addf %40, %77 : vector<8x128xf32>
    %c2 = arith.constant 2 : index
    %c0_61 = arith.constant 0 : index
    %c0_62 = arith.constant 0 : index
    %79 = vector.load %arg2[%c2, %c0_61, %c0_62] : memref<4x128x32xf32, #tpu.memory_space<vmem>>, vector<1x128x32xf32>
    %80 = vector.shape_cast %79 : vector<1x128x32xf32> to vector<128x32xf32>
    %cst_63 = arith.constant dense<0.000000e+00> : vector<8x32xf32>
    %81 = tpu.matmul %1, %80, %cst_63 {dimension_numbers = #tpu.dot_dimension_numbers<[1], [0], [0], [1], [0, 0, 1, 1], [], []>} : vector<8x128xf32>, vector<128x32xf32>, vector<8x32xf32> -> vector<8x32xf32>
    %c2_64 = arith.constant 2 : index
    %c0_65 = arith.constant 0 : index
    %c0_66 = arith.constant 0 : index
    %82 = vector.load %arg3[%c2_64, %c0_65, %c0_66] : memref<4x1x32xf32, #tpu.memory_space<vmem>>, vector<1x1x32xf32>
    %83 = vector.shape_cast %82 : vector<1x1x32xf32> to vector<1x32xf32>
    %84 = vector.broadcast %83 : vector<1x32xf32> to vector<8x32xf32>
    %85 = arith.addf %81, %84 : vector<8x32xf32>
    %c2_67 = arith.constant 2 : index
    %c0_68 = arith.constant 0 : index
    %c0_69 = arith.constant 0 : index
    %86 = vector.load %arg4[%c2_67, %c0_68, %c0_69] : memref<4x128x32xf32, #tpu.memory_space<vmem>>, vector<1x128x32xf32>
    %87 = vector.shape_cast %86 : vector<1x128x32xf32> to vector<128x32xf32>
    %cst_70 = arith.constant dense<0.000000e+00> : vector<8x32xf32>
    %88 = tpu.matmul %1, %87, %cst_70 {dimension_numbers = #tpu.dot_dimension_numbers<[1], [0], [0], [1], [0, 0, 1, 1], [], []>} : vector<8x128xf32>, vector<128x32xf32>, vector<8x32xf32> -> vector<8x32xf32>
    %c2_71 = arith.constant 2 : index
    %c0_72 = arith.constant 0 : index
    %c0_73 = arith.constant 0 : index
    %89 = vector.load %arg5[%c2_71, %c0_72, %c0_73] : memref<4x1x32xf32, #tpu.memory_space<vmem>>, vector<1x1x32xf32>
    %90 = vector.shape_cast %89 : vector<1x1x32xf32> to vector<1x32xf32>
    %91 = vector.broadcast %90 : vector<1x32xf32> to vector<8x32xf32>
    %92 = arith.addf %88, %91 : vector<8x32xf32>
    %c2_74 = arith.constant 2 : index
    %c0_75 = arith.constant 0 : index
    %c0_76 = arith.constant 0 : index
    %93 = vector.load %arg6[%c2_74, %c0_75, %c0_76] : memref<4x128x32xf32, #tpu.memory_space<vmem>>, vector<1x128x32xf32>
    %94 = vector.shape_cast %93 : vector<1x128x32xf32> to vector<128x32xf32>
    %cst_77 = arith.constant dense<0.000000e+00> : vector<8x32xf32>
    %95 = tpu.matmul %1, %94, %cst_77 {dimension_numbers = #tpu.dot_dimension_numbers<[1], [0], [0], [1], [0, 0, 1, 1], [], []>} : vector<8x128xf32>, vector<128x32xf32>, vector<8x32xf32> -> vector<8x32xf32>
    %c2_78 = arith.constant 2 : index
    %c0_79 = arith.constant 0 : index
    %c0_80 = arith.constant 0 : index
    %96 = vector.load %arg7[%c2_78, %c0_79, %c0_80] : memref<4x1x32xf32, #tpu.memory_space<vmem>>, vector<1x1x32xf32>
    %97 = vector.shape_cast %96 : vector<1x1x32xf32> to vector<1x32xf32>
    %98 = vector.broadcast %97 : vector<1x32xf32> to vector<8x32xf32>
    %99 = arith.addf %95, %98 : vector<8x32xf32>
    %cst_81 = arith.constant dense<0.000000e+00> : vector<8x8xf32>
    %100 = tpu.matmul %85, %92, %cst_81 {dimension_numbers = #tpu.dot_dimension_numbers<[1], [1], [0], [0], [0, 0, 1, 0], [], []>} : vector<8x32xf32>, vector<8x32xf32>, vector<8x8xf32> -> vector<8x8xf32>
    %cst_82 = arith.constant 0.176776692 : f32
    %101 = vector.broadcast %cst_82 : f32 to vector<8x8xf32>
    %102 = arith.mulf %100, %101 : vector<8x8xf32>
    %cst_83 = arith.constant dense<0xFF800000> : vector<8xf32>
    %103 = vector.multi_reduction <maximumf>, %102, %cst_83 [1] : vector<8x8xf32> to vector<8xf32>
    %104 = vector.shape_cast %103 : vector<8xf32> to vector<8x1xf32>
    %105 = vector.broadcast %104 : vector<8x1xf32> to vector<8x8xf32>
    %106 = arith.subf %102, %105 : vector<8x8xf32>
    %107 = math.exp %106 : vector<8x8xf32>
    %cst_84 = arith.constant dense<0.000000e+00> : vector<8xf32>
    %108 = vector.multi_reduction <add>, %107, %cst_84 [1] : vector<8x8xf32> to vector<8xf32>
    %109 = vector.shape_cast %108 : vector<8xf32> to vector<8x1xf32>
    %110 = vector.broadcast %109 : vector<8x1xf32> to vector<8x8xf32>
    %111 = arith.divf %107, %110 : vector<8x8xf32>
    %cst_85 = arith.constant dense<0.000000e+00> : vector<8x32xf32>
    %112 = tpu.matmul %111, %99, %cst_85 {dimension_numbers = #tpu.dot_dimension_numbers<[1], [0], [0], [1], [0, 0, 1, 1], [], []>} : vector<8x8xf32>, vector<8x32xf32>, vector<8x32xf32> -> vector<8x32xf32>
    %c2_86 = arith.constant 2 : index
    %c0_87 = arith.constant 0 : index
    %c0_88 = arith.constant 0 : index
    %113 = vector.load %arg8[%c2_86, %c0_87, %c0_88] : memref<4x32x128xf32, #tpu.memory_space<vmem>>, vector<1x32x128xf32>
    %114 = vector.shape_cast %113 : vector<1x32x128xf32> to vector<32x128xf32>
    %cst_89 = arith.constant dense<0.000000e+00> : vector<8x128xf32>
    %115 = tpu.matmul %112, %114, %cst_89 {dimension_numbers = #tpu.dot_dimension_numbers<[1], [0], [0], [1], [0, 0, 1, 1], [], []>} : vector<8x32xf32>, vector<32x128xf32>, vector<8x128xf32> -> vector<8x128xf32>
    %116 = arith.addf %78, %115 : vector<8x128xf32>
    %c3 = arith.constant 3 : index
    %c0_90 = arith.constant 0 : index
    %c0_91 = arith.constant 0 : index
    %117 = vector.load %arg2[%c3, %c0_90, %c0_91] : memref<4x128x32xf32, #tpu.memory_space<vmem>>, vector<1x128x32xf32>
    %118 = vector.shape_cast %117 : vector<1x128x32xf32> to vector<128x32xf32>
    %cst_92 = arith.constant dense<0.000000e+00> : vector<8x32xf32>
    %119 = tpu.matmul %1, %118, %cst_92 {dimension_numbers = #tpu.dot_dimension_numbers<[1], [0], [0], [1], [0, 0, 1, 1], [], []>} : vector<8x128xf32>, vector<128x32xf32>, vector<8x32xf32> -> vector<8x32xf32>
    %c3_93 = arith.constant 3 : index
    %c0_94 = arith.constant 0 : index
    %c0_95 = arith.constant 0 : index
    %120 = vector.load %arg3[%c3_93, %c0_94, %c0_95] : memref<4x1x32xf32, #tpu.memory_space<vmem>>, vector<1x1x32xf32>
    %121 = vector.shape_cast %120 : vector<1x1x32xf32> to vector<1x32xf32>
    %122 = vector.broadcast %121 : vector<1x32xf32> to vector<8x32xf32>
    %123 = arith.addf %119, %122 : vector<8x32xf32>
    %c3_96 = arith.constant 3 : index
    %c0_97 = arith.constant 0 : index
    %c0_98 = arith.constant 0 : index
    %124 = vector.load %arg4[%c3_96, %c0_97, %c0_98] : memref<4x128x32xf32, #tpu.memory_space<vmem>>, vector<1x128x32xf32>
    %125 = vector.shape_cast %124 : vector<1x128x32xf32> to vector<128x32xf32>
    %cst_99 = arith.constant dense<0.000000e+00> : vector<8x32xf32>
    %126 = tpu.matmul %1, %125, %cst_99 {dimension_numbers = #tpu.dot_dimension_numbers<[1], [0], [0], [1], [0, 0, 1, 1], [], []>} : vector<8x128xf32>, vector<128x32xf32>, vector<8x32xf32> -> vector<8x32xf32>
    %c3_100 = arith.constant 3 : index
    %c0_101 = arith.constant 0 : index
    %c0_102 = arith.constant 0 : index
    %127 = vector.load %arg5[%c3_100, %c0_101, %c0_102] : memref<4x1x32xf32, #tpu.memory_space<vmem>>, vector<1x1x32xf32>
    %128 = vector.shape_cast %127 : vector<1x1x32xf32> to vector<1x32xf32>
    %129 = vector.broadcast %128 : vector<1x32xf32> to vector<8x32xf32>
    %130 = arith.addf %126, %129 : vector<8x32xf32>
    %c3_103 = arith.constant 3 : index
    %c0_104 = arith.constant 0 : index
    %c0_105 = arith.constant 0 : index
    %131 = vector.load %arg6[%c3_103, %c0_104, %c0_105] : memref<4x128x32xf32, #tpu.memory_space<vmem>>, vector<1x128x32xf32>
    %132 = vector.shape_cast %131 : vector<1x128x32xf32> to vector<128x32xf32>
    %cst_106 = arith.constant dense<0.000000e+00> : vector<8x32xf32>
    %133 = tpu.matmul %1, %132, %cst_106 {dimension_numbers = #tpu.dot_dimension_numbers<[1], [0], [0], [1], [0, 0, 1, 1], [], []>} : vector<8x128xf32>, vector<128x32xf32>, vector<8x32xf32> -> vector<8x32xf32>
    %c3_107 = arith.constant 3 : index
    %c0_108 = arith.constant 0 : index
    %c0_109 = arith.constant 0 : index
    %134 = vector.load %arg7[%c3_107, %c0_108, %c0_109] : memref<4x1x32xf32, #tpu.memory_space<vmem>>, vector<1x1x32xf32>
    %135 = vector.shape_cast %134 : vector<1x1x32xf32> to vector<1x32xf32>
    %136 = vector.broadcast %135 : vector<1x32xf32> to vector<8x32xf32>
    %137 = arith.addf %133, %136 : vector<8x32xf32>
    %cst_110 = arith.constant dense<0.000000e+00> : vector<8x8xf32>
    %138 = tpu.matmul %123, %130, %cst_110 {dimension_numbers = #tpu.dot_dimension_numbers<[1], [1], [0], [0], [0, 0, 1, 0], [], []>} : vector<8x32xf32>, vector<8x32xf32>, vector<8x8xf32> -> vector<8x8xf32>
    %cst_111 = arith.constant 0.176776692 : f32
    %139 = vector.broadcast %cst_111 : f32 to vector<8x8xf32>
    %140 = arith.mulf %138, %139 : vector<8x8xf32>
    %cst_112 = arith.constant dense<0xFF800000> : vector<8xf32>
    %141 = vector.multi_reduction <maximumf>, %140, %cst_112 [1] : vector<8x8xf32> to vector<8xf32>
    %142 = vector.shape_cast %141 : vector<8xf32> to vector<8x1xf32>
    %143 = vector.broadcast %142 : vector<8x1xf32> to vector<8x8xf32>
    %144 = arith.subf %140, %143 : vector<8x8xf32>
    %145 = math.exp %144 : vector<8x8xf32>
    %cst_113 = arith.constant dense<0.000000e+00> : vector<8xf32>
    %146 = vector.multi_reduction <add>, %145, %cst_113 [1] : vector<8x8xf32> to vector<8xf32>
    %147 = vector.shape_cast %146 : vector<8xf32> to vector<8x1xf32>
    %148 = vector.broadcast %147 : vector<8x1xf32> to vector<8x8xf32>
    %149 = arith.divf %145, %148 : vector<8x8xf32>
    %cst_114 = arith.constant dense<0.000000e+00> : vector<8x32xf32>
    %150 = tpu.matmul %149, %137, %cst_114 {dimension_numbers = #tpu.dot_dimension_numbers<[1], [0], [0], [1], [0, 0, 1, 1], [], []>} : vector<8x8xf32>, vector<8x32xf32>, vector<8x32xf32> -> vector<8x32xf32>
    %c3_115 = arith.constant 3 : index
    %c0_116 = arith.constant 0 : index
    %c0_117 = arith.constant 0 : index
    %151 = vector.load %arg8[%c3_115, %c0_116, %c0_117] : memref<4x32x128xf32, #tpu.memory_space<vmem>>, vector<1x32x128xf32>
    %152 = vector.shape_cast %151 : vector<1x32x128xf32> to vector<32x128xf32>
    %cst_118 = arith.constant dense<0.000000e+00> : vector<8x128xf32>
    %153 = tpu.matmul %150, %152, %cst_118 {dimension_numbers = #tpu.dot_dimension_numbers<[1], [0], [0], [1], [0, 0, 1, 1], [], []>} : vector<8x32xf32>, vector<32x128xf32>, vector<8x128xf32> -> vector<8x128xf32>
    %154 = arith.addf %116, %153 : vector<8x128xf32>
    %c0_119 = arith.constant 0 : index
    %c0_120 = arith.constant 0 : index
    %155 = vector.load %arg9[%c0_119, %c0_120] : memref<1x128xf32, #tpu.memory_space<vmem>>, vector<1x128xf32>
    %156 = vector.broadcast %155 : vector<1x128xf32> to vector<8x128xf32>
    %157 = arith.addf %154, %156 : vector<8x128xf32>
    %158 = arith.addf %1, %157 : vector<8x128xf32>
    %cst_121 = arith.constant dense<0.000000e+00> : vector<8xf32>
    %159 = vector.multi_reduction <add>, %158, %cst_121 [1] : vector<8x128xf32> to vector<8xf32>
    %160 = vector.shape_cast %159 : vector<8xf32> to vector<8x1xf32>
    %cst_122 = arith.constant 1.280000e+02 : f32
    %161 = vector.broadcast %cst_122 : f32 to vector<8x1xf32>
    %162 = arith.divf %160, %161 : vector<8x1xf32>
    %163 = vector.broadcast %162 : vector<8x1xf32> to vector<8x128xf32>
    %164 = arith.subf %158, %163 : vector<8x128xf32>
    %165 = arith.mulf %164, %164 : vector<8x128xf32>
    %cst_123 = arith.constant dense<0.000000e+00> : vector<8xf32>
    %166 = vector.multi_reduction <add>, %165, %cst_123 [1] : vector<8x128xf32> to vector<8xf32>
    %167 = vector.shape_cast %166 : vector<8xf32> to vector<8x1xf32>
    %cst_124 = arith.constant 1.280000e+02 : f32
    %168 = vector.broadcast %cst_124 : f32 to vector<8x1xf32>
    %169 = arith.divf %167, %168 : vector<8x1xf32>
    %170 = vector.broadcast %162 : vector<8x1xf32> to vector<8x128xf32>
    %171 = arith.subf %158, %170 : vector<8x128xf32>
    %cst_125 = arith.constant 9.99999974E-6 : f32
    %172 = vector.broadcast %cst_125 : f32 to vector<8x1xf32>
    %173 = arith.addf %169, %172 : vector<8x1xf32>
    %174 = math.rsqrt %173 : vector<8x1xf32>
    %175 = vector.broadcast %174 : vector<8x1xf32> to vector<8x128xf32>
    %176 = arith.mulf %171, %175 : vector<8x128xf32>
    %c0_126 = arith.constant 0 : index
    %c0_127 = arith.constant 0 : index
    %177 = vector.load %arg14[%c0_126, %c0_127] : memref<1x128xf32, #tpu.memory_space<vmem>>, vector<1x128xf32>
    %178 = vector.broadcast %177 : vector<1x128xf32> to vector<8x128xf32>
    %179 = arith.mulf %176, %178 : vector<8x128xf32>
    %c0_128 = arith.constant 0 : index
    %c0_129 = arith.constant 0 : index
    %180 = vector.load %arg15[%c0_128, %c0_129] : memref<1x128xf32, #tpu.memory_space<vmem>>, vector<1x128xf32>
    %181 = vector.broadcast %180 : vector<1x128xf32> to vector<8x128xf32>
    %182 = arith.addf %179, %181 : vector<8x128xf32>
    %c0_130 = arith.constant 0 : index
    %c0_131 = arith.constant 0 : index
    %183 = vector.load %arg10[%c0_130, %c0_131] : memref<128x256xf32, #tpu.memory_space<vmem>>, vector<128x256xf32>
    %cst_132 = arith.constant dense<0.000000e+00> : vector<8x256xf32>
    %184 = tpu.matmul %182, %183, %cst_132 {dimension_numbers = #tpu.dot_dimension_numbers<[1], [0], [0], [1], [0, 0, 1, 1], [], []>} : vector<8x128xf32>, vector<128x256xf32>, vector<8x256xf32> -> vector<8x256xf32>
    %c0_133 = arith.constant 0 : index
    %c0_134 = arith.constant 0 : index
    %185 = vector.load %arg11[%c0_133, %c0_134] : memref<1x256xf32, #tpu.memory_space<vmem>>, vector<1x256xf32>
    %186 = vector.broadcast %185 : vector<1x256xf32> to vector<8x256xf32>
    %187 = arith.addf %184, %186 : vector<8x256xf32>
    %cst_135 = arith.constant 0.000000e+00 : f32
    %188 = vector.broadcast %cst_135 : f32 to vector<8x256xf32>
    %189 = arith.maximumf %187, %188 : vector<8x256xf32>
    %c0_136 = arith.constant 0 : index
    %c0_137 = arith.constant 0 : index
    %190 = vector.load %arg12[%c0_136, %c0_137] : memref<256x128xf32, #tpu.memory_space<vmem>>, vector<256x128xf32>
    %cst_138 = arith.constant dense<0.000000e+00> : vector<8x128xf32>
    %191 = tpu.matmul %189, %190, %cst_138 {dimension_numbers = #tpu.dot_dimension_numbers<[1], [0], [0], [1], [0, 0, 1, 1], [], []>} : vector<8x256xf32>, vector<256x128xf32>, vector<8x128xf32> -> vector<8x128xf32>
    %c0_139 = arith.constant 0 : index
    %c0_140 = arith.constant 0 : index
    %192 = vector.load %arg13[%c0_139, %c0_140] : memref<1x128xf32, #tpu.memory_space<vmem>>, vector<1x128xf32>
    %193 = vector.broadcast %192 : vector<1x128xf32> to vector<8x128xf32>
    %194 = arith.addf %191, %193 : vector<8x128xf32>
    %195 = arith.addf %182, %194 : vector<8x128xf32>
    %cst_141 = arith.constant dense<0.000000e+00> : vector<8xf32>
    %196 = vector.multi_reduction <add>, %195, %cst_141 [1] : vector<8x128xf32> to vector<8xf32>
    %197 = vector.shape_cast %196 : vector<8xf32> to vector<8x1xf32>
    %cst_142 = arith.constant 1.280000e+02 : f32
    %198 = vector.broadcast %cst_142 : f32 to vector<8x1xf32>
    %199 = arith.divf %197, %198 : vector<8x1xf32>
    %200 = vector.broadcast %199 : vector<8x1xf32> to vector<8x128xf32>
    %201 = arith.subf %195, %200 : vector<8x128xf32>
    %202 = arith.mulf %201, %201 : vector<8x128xf32>
    %cst_143 = arith.constant dense<0.000000e+00> : vector<8xf32>
    %203 = vector.multi_reduction <add>, %202, %cst_143 [1] : vector<8x128xf32> to vector<8xf32>
    %204 = vector.shape_cast %203 : vector<8xf32> to vector<8x1xf32>
    %cst_144 = arith.constant 1.280000e+02 : f32
    %205 = vector.broadcast %cst_144 : f32 to vector<8x1xf32>
    %206 = arith.divf %204, %205 : vector<8x1xf32>
    %207 = vector.broadcast %199 : vector<8x1xf32> to vector<8x128xf32>
    %208 = arith.subf %195, %207 : vector<8x128xf32>
    %cst_145 = arith.constant 9.99999974E-6 : f32
    %209 = vector.broadcast %cst_145 : f32 to vector<8x1xf32>
    %210 = arith.addf %206, %209 : vector<8x1xf32>
    %211 = math.rsqrt %210 : vector<8x1xf32>
    %212 = vector.broadcast %211 : vector<8x1xf32> to vector<8x128xf32>
    %213 = arith.mulf %208, %212 : vector<8x128xf32>
    %c0_146 = arith.constant 0 : index
    %c0_147 = arith.constant 0 : index
    %214 = vector.load %arg16[%c0_146, %c0_147] : memref<1x128xf32, #tpu.memory_space<vmem>>, vector<1x128xf32>
    %215 = vector.broadcast %214 : vector<1x128xf32> to vector<8x128xf32>
    %216 = arith.mulf %213, %215 : vector<8x128xf32>
    %c0_148 = arith.constant 0 : index
    %c0_149 = arith.constant 0 : index
    %217 = vector.load %arg17[%c0_148, %c0_149] : memref<1x128xf32, #tpu.memory_space<vmem>>, vector<1x128xf32>
    %218 = vector.broadcast %217 : vector<1x128xf32> to vector<8x128xf32>
    %219 = arith.addf %216, %218 : vector<8x128xf32>
    %c0_150 = arith.constant 0 : index
    %c0_151 = arith.constant 0 : index
    %c0_152 = arith.constant 0 : index
    %220 = vector.load %arg18[%c0_150, %c0_151, %c0_152] : memref<1x8x128xf32, #tpu.memory_space<vmem>>, vector<1x8x128xf32>
    %221 = vector.shape_cast %220 : vector<1x8x128xf32> to vector<8x128xf32>
    %222 = vector.shape_cast %219 : vector<8x128xf32> to vector<1x8x128xf32>
    tpu.vector_store %arg18[%c0_150, %c0_151, %c0_152], %222 {strides = array<i32>} : memref<1x8x128xf32, #tpu.memory_space<vmem>>, vector<1x8x128xf32>,
    return
  }
  func.func @transform_0(%arg0: i32) -> (i32, i32, i32) {
    %c0_i32 = arith.constant 0 : i32
    %c0_i32_0 = arith.constant 0 : i32
    %c0_i32_1 = arith.constant 0 : i32
    return %arg0, %c0_i32, %c0_i32_0 : i32, i32, i32
  }
  func.func @transform_1(%arg0: i32) -> (i32, i32, i32) {
    %c0_i32 = arith.constant 0 : i32
    %c0_i32_0 = arith.constant 0 : i32
    %c0_i32_1 = arith.constant 0 : i32
    %c0_i32_2 = arith.constant 0 : i32
    return %c0_i32, %c0_i32_0, %c0_i32_1 : i32, i32, i32
  }
  func.func @transform_2(%arg0: i32) -> (i32, i32, i32) {
    %c0_i32 = arith.constant 0 : i32
    %c0_i32_0 = arith.constant 0 : i32
    %c0_i32_1 = arith.constant 0 : i32
    %c0_i32_2 = arith.constant 0 : i32
    return %c0_i32, %c0_i32_0, %c0_i32_1 : i32, i32, i32
  }
  func.func @transform_3(%arg0: i32) -> (i32, i32, i32) {
    %c0_i32 = arith.constant 0 : i32
    %c0_i32_0 = arith.constant 0 : i32
    %c0_i32_1 = arith.constant 0 : i32
    %c0_i32_2 = arith.constant 0 : i32
    return %c0_i32, %c0_i32_0, %c0_i32_1 : i32, i32, i32
  }
  func.func @transform_4(%arg0: i32) -> (i32, i32, i32) {
    %c0_i32 = arith.constant 0 : i32
    %c0_i32_0 = arith.constant 0 : i32
    %c0_i32_1 = arith.constant 0 : i32
    %c0_i32_2 = arith.constant 0 : i32
    return %c0_i32, %c0_i32_0, %c0_i32_1 : i32, i32, i32
  }
  func.func @transform_5(%arg0: i32) -> (i32, i32, i32) {
    %c0_i32 = arith.constant 0 : i32
    %c0_i32_0 = arith.constant 0 : i32
    %c0_i32_1 = arith.constant 0 : i32
    %c0_i32_2 = arith.constant 0 : i32
    return %c0_i32, %c0_i32_0, %c0_i32_1 : i32, i32, i32
  }
  func.func @transform_6(%arg0: i32) -> (i32, i32, i32) {
    %c0_i32 = arith.constant 0 : i32
    %c0_i32_0 = arith.constant 0 : i32
    %c0_i32_1 = arith.constant 0 : i32
    %c0_i32_2 = arith.constant 0 : i32
    return %c0_i32, %c0_i32_0, %c0_i32_1 : i32, i32, i32
  }
  func.func @transform_7(%arg0: i32) -> (i32, i32, i32) {
    %c0_i32 = arith.constant 0 : i32
    %c0_i32_0 = arith.constant 0 : i32
    %c0_i32_1 = arith.constant 0 : i32
    %c0_i32_2 = arith.constant 0 : i32
    return %c0_i32, %c0_i32_0, %c0_i32_1 : i32, i32, i32
  }
  func.func @transform_8(%arg0: i32) -> (i32, i32) {
    %c0_i32 = arith.constant 0 : i32
    %c0_i32_0 = arith.constant 0 : i32
    %c0_i32_1 = arith.constant 0 : i32
    return %c0_i32, %c0_i32_0 : i32, i32
  }
  func.func @transform_9(%arg0: i32) -> (i32, i32) {
    %c0_i32 = arith.constant 0 : i32
    %c0_i32_0 = arith.constant 0 : i32
    %c0_i32_1 = arith.constant 0 : i32
    return %c0_i32, %c0_i32_0 : i32, i32
  }
  func.func @transform_10(%arg0: i32) -> (i32, i32) {
    %c0_i32 = arith.constant 0 : i32
    %c0_i32_0 = arith.constant 0 : i32
    %c0_i32_1 = arith.constant 0 : i32
    return %c0_i32, %c0_i32_0 : i32, i32
  }
  func.func @transform_11(%arg0: i32) -> (i32, i32) {
    %c0_i32 = arith.constant 0 : i32
    %c0_i32_0 = arith.constant 0 : i32
    %c0_i32_1 = arith.constant 0 : i32
    return %c0_i32, %c0_i32_0 : i32, i32
  }
  func.func @transform_12(%arg0: i32) -> (i32, i32) {
    %c0_i32 = arith.constant 0 : i32
    %c0_i32_0 = arith.constant 0 : i32
    %c0_i32_1 = arith.constant 0 : i32
    return %c0_i32, %c0_i32_0 : i32, i32
  }
  func.func @transform_13(%arg0: i32) -> (i32, i32) {
    %c0_i32 = arith.constant 0 : i32
    %c0_i32_0 = arith.constant 0 : i32
    %c0_i32_1 = arith.constant 0 : i32
    return %c0_i32, %c0_i32_0 : i32, i32
  }
  func.func @transform_14(%arg0: i32) -> (i32, i32) {
    %c0_i32 = arith.constant 0 : i32
    %c0_i32_0 = arith.constant 0 : i32
    %c0_i32_1 = arith.constant 0 : i32
    return %c0_i32, %c0_i32_0 : i32, i32
  }
  func.func @transform_15(%arg0: i32) -> (i32, i32) {
    %c0_i32 = arith.constant 0 : i32
    %c0_i32_0 = arith.constant 0 : i32
    %c0_i32_1 = arith.constant 0 : i32
    return %c0_i32, %c0_i32_0 : i32, i32
  }
  func.func @transform_16(%arg0: i32) -> (i32, i32) {
    %c0_i32 = arith.constant 0 : i32
    %c0_i32_0 = arith.constant 0 : i32
    %c0_i32_1 = arith.constant 0 : i32
    return %c0_i32, %c0_i32_0 : i32, i32
  }
  func.func @transform_17(%arg0: i32) -> (i32, i32, i32) {
    %c0_i32 = arith.constant 0 : i32
    %c0_i32_0 = arith.constant 0 : i32
    %c0_i32_1 = arith.constant 0 : i32
    return %arg0, %c0_i32, %c0_i32_0 : i32, i32, i32
  }
}

</mosaic_0001>

<llo_original>
// kernel: encoder_forward.9
$region0: #{encoder_forward.9}
  #allocation0 [shape = 'u32[]', space=smem, size = 0x4, offset = 0x4, fixed_abs, tag = 'smem constant byte address 0x4 - core index']
  #allocation1 [shape = 'u32[144,128]{1,0:T(1,128)}', space=vmem, size = 0x12000, scoped, tag = 'internal scratch']
  #allocation2 [shape = 'f32[1]{0:T(128)S(6)}', space=smem, size = 0x200, scoped, tag = 'scoped memory for encoder_forward.9']
  %s0 = inlined_call_operand.<no memory space> [shape: f32[1], index: 0, kind: input, shape index: {}]
  %s1 = inlined_call_operand.vmem [shape: f32[2,8,128], index: 1, kind: input, shape index: {}]
  %s2 = inlined_call_operand.vmem [shape: f32[128,128], index: 2, kind: input, shape index: {}]
  %s3 = inlined_call_operand.vmem [shape: f32[1,128], index: 3, kind: input, shape index: {}]
  %s4 = inlined_call_operand.vmem [shape: f32[8,128], index: 4, kind: input, shape index: {}]
  %s5 = inlined_call_operand.vmem [shape: f32[2,8,128], index: 5, kind: output, shape index: {}]
  %s6 = sld [smem:[#allocation0]]
  $region53: #{encoder_forward.9} parent=0
    _
  %s8 = ssub.s32 1, %s6
  %s9 = scalar_select 0, %s8, %s6
  %10 = sst [smem:[#allocation2]] %s0
  loop: start=0, step=1, limit=4
  $region2: #{encoder_forward.9} parent=0 // loop_pre_header
    _
  $region3: #{encoder_forward.9} parent=0 // loop_header
    %s12 = sphi 0, %s16
    %p13 = scmp.ge.s32.totalorder %s12, 4
    %s20 = sphi 0, %s20
    %s22 = sphi 0, %s20
    %s23 = sphi 0, %s22
    %s37 = sphi 0, %s23
    %s43 = sphi 0, %s45
    %s46 = sphi 0, %s43
    %s47 = sphi 0, %s46
    %s63 = sphi 0, %s47
    %s67 = sphi 0, %s67
    %s69 = sphi 0, %s67
    %s70 = sphi 0, %s69
    %s84 = sphi 0, %s70
    %s88 = sphi 0, %s88
    %s90 = sphi 0, %s88
    %s91 = sphi 0, %s90
    %s105 = sphi 0, %s91
    %s109 = sphi 0, %s109
    %s111 = sphi 0, %s109
    %s112 = sphi 0, %s111
    %s126 = sphi 0, %s112
    %s132 = sphi 0, %s134
    %s135 = sphi 0, %s132
    %s136 = sphi 0, %s135
    %s152 = sphi 0, %s136
  $region4: #{encoder_forward.9} parent=0 // loop_header_branch
    %15 = sbr.rel (%p13) target = $region8
  $region5: #{encoder_forward.9} parent=0 // loop_body
    %s17 = ssub.s32 %s12, 1
    %s18 = ssub.s32 %s12, 2
    %s19 = sadd.s32 %s12, 1
    %s21 = sadd.s32 %s20, 1
    %p24 = scmp.eq.s32.totalorder %s12, 1
    %p25 = scmp.ne.s32.totalorder %s20, %s22
    %p26 = scmp.eq.s32.totalorder %s12, 0
    %p27 = por %p25, %p26
    %p28 = scmp.ne.s32.totalorder %s20, %s22
    %p29 = scmp.eq.s32.totalorder %s17, 1
    %p30 = por %p28, %p29
    %p31 = scmp.ne.s32.totalorder %s22, %s23
    %p32 = scmp.eq.s32.totalorder %s17, 0
    %p33 = por %p31, %p32
    %p34 = scmp.ne.s32.totalorder %s22, %s23
    %p35 = scmp.eq.s32.totalorder %s18, 1
    %p36 = por %p34, %p35
    %p38 = scmp.ne.s32.totalorder %s23, %s37
    %p39 = scmp.eq.s32.totalorder %s18, 0
    %p40 = por %p38, %p39
    %s41 = ssub.s32 %s12, %s19
    %p42 = scmp.eq.s32.totalorder %s41, 0
    %s44 = sadd.s32 %s43, 1
    %s45 = scalar_select %p42, %s43, %s44
    %p48 = pneg %p42
    %p49 = scmp.eq.s32.totalorder %s12, 1
    %p50 = por %p48, %p49
    %p51 = scmp.ne.s32.totalorder %s43, %s46
    %p52 = scmp.eq.s32.totalorder %s12, 0
    %p53 = por %p51, %p52
    %p54 = scmp.ne.s32.totalorder %s43, %s46
    %p55 = scmp.eq.s32.totalorder %s17, 1
    %p56 = por %p54, %p55
    %p57 = scmp.ne.s32.totalorder %s46, %s47
    %p58 = scmp.eq.s32.totalorder %s17, 0
    %p59 = por %p57, %p58
    %p60 = scmp.ne.s32.totalorder %s46, %s47
    %p61 = scmp.eq.s32.totalorder %s18, 1
    %p62 = por %p60, %p61
    %p64 = scmp.ne.s32.totalorder %s47, %s63
    %p65 = scmp.eq.s32.totalorder %s18, 0
    %p66 = por %p64, %p65
    %s68 = sadd.s32 %s67, 1
    %p71 = scmp.eq.s32.totalorder %s12, 1
    %p72 = scmp.ne.s32.totalorder %s67, %s69
    %p73 = scmp.eq.s32.totalorder %s12, 0
    %p74 = por %p72, %p73
    %p75 = scmp.ne.s32.totalorder %s67, %s69
    %p76 = scmp.eq.s32.totalorder %s17, 1
    %p77 = por %p75, %p76
    %p78 = scmp.ne.s32.totalorder %s69, %s70
    %p79 = scmp.eq.s32.totalorder %s17, 0
    %p80 = por %p78, %p79
    %p81 = scmp.ne.s32.totalorder %s69, %s70
    %p82 = scmp.eq.s32.totalorder %s18, 1
    %p83 = por %p81, %p82
    %p85 = scmp.ne.s32.totalorder %s70, %s84
    %p86 = scmp.eq.s32.totalorder %s18, 0
    %p87 = por %p85, %p86
    %s89 = sadd.s32 %s88, 1
    %p92 = scmp.eq.s32.totalorder %s12, 1
    %p93 = scmp.ne.s32.totalorder %s88, %s90
    %p94 = scmp.eq.s32.totalorder %s12, 0
    %p95 = por %p93, %p94
    %p96 = scmp.ne.s32.totalorder %s88, %s90
    %p97 = scmp.eq.s32.totalorder %s17, 1
    %p98 = por %p96, %p97
    %p99 = scmp.ne.s32.totalorder %s90, %s91
    %p100 = scmp.eq.s32.totalorder %s17, 0
    %p101 = por %p99, %p100
    %p102 = scmp.ne.s32.totalorder %s90, %s91
    %p103 = scmp.eq.s32.totalorder %s18, 1
    %p104 = por %p102, %p103
    %p106 = scmp.ne.s32.totalorder %s91, %s105
    %p107 = scmp.eq.s32.totalorder %s18, 0
    %p108 = por %p106, %p107
    %s110 = sadd.s32 %s109, 1
    %p113 = scmp.eq.s32.totalorder %s12, 1
    %p114 = scmp.ne.s32.totalorder %s109, %s111
    %p115 = scmp.eq.s32.totalorder %s12, 0
    %p116 = por %p114, %p115
    %p117 = scmp.ne.s32.totalorder %s109, %s111
    %p118 = scmp.eq.s32.totalorder %s17, 1
    %p119 = por %p117, %p118
    %p120 = scmp.ne.s32.totalorder %s111, %s112
    %p121 = scmp.eq.s32.totalorder %s17, 0
    %p122 = por %p120, %p121
    %p123 = scmp.ne.s32.totalorder %s111, %s112
    %p124 = scmp.eq.s32.totalorder %s18, 1
    %p125 = por %p123, %p124
    %p127 = scmp.ne.s32.totalorder %s112, %s126
    %p128 = scmp.eq.s32.totalorder %s18, 0
    %p129 = por %p127, %p128
    %s130 = ssub.s32 %s12, %s19
    %p131 = scmp.eq.s32.totalorder %s130, 0
    %s133 = sadd.s32 %s132, 1
    %s134 = scalar_select %p131, %s132, %s133
    %p137 = pneg %p131
    %p138 = scmp.eq.s32.totalorder %s12, 1
    %p139 = por %p137, %p138
    %p140 = scmp.ne.s32.totalorder %s132, %s135
    %p141 = scmp.eq.s32.totalorder %s12, 0
    %p142 = por %p140, %p141
    %p143 = scmp.ne.s32.totalorder %s132, %s135
    %p144 = scmp.eq.s32.totalorder %s17, 1
    %p145 = por %p143, %p144
    %p146 = scmp.ne.s32.totalorder %s135, %s136
    %p147 = scmp.eq.s32.totalorder %s17, 0
    %p148 = por %p146, %p147
    %p149 = scmp.ne.s32.totalorder %s135, %s136
    %p150 = scmp.eq.s32.totalorder %s18, 1
    %p151 = por %p149, %p150
    %p153 = scmp.ne.s32.totalorder %s136, %s152
    %p154 = scmp.eq.s32.totalorder %s18, 0
    %p155 = por %p153, %p154
    %p156 = scmp.le.s32.totalorder 1, %s12
    %p157 = scmp.lt.s32.totalorder %s12, 3
    %p158 = pnand %p156, %p157
    %p159 = pneg %p158
    // Predicated region
    $region9: #{encoder_forward.9} parent=5 // pred_check
      _
    $region10: #{encoder_forward.9} parent=5 // pred_check_branch
      %161 = sbr.rel (%p158) target = $region12
    $region11: #{encoder_forward.9} parent=5 // pred_region
      %s162 = ssub.s32 %s12, 1
      // Predicated region
      $region13: #{encoder_forward.9} parent=11 // pred_check
        %p163 = pneg %p33
      $region14: #{encoder_forward.9} parent=11 // pred_check_branch
        %165 = sbr.rel (%p163) target = $region16
      $region15: #{encoder_forward.9} parent=11 // pred_region
        _
      $region16: #{encoder_forward.9} parent=11 // pred_fallthru
        _
      // Predicated region
      $region17: #{encoder_forward.9} parent=11 // pred_check
        %p166 = pneg %p80
      $region18: #{encoder_forward.9} parent=11 // pred_check_branch
        %168 = sbr.rel (%p166) target = $region20
      $region19: #{encoder_forward.9} parent=11 // pred_region
        _
      $region20: #{encoder_forward.9} parent=11 // pred_fallthru
        _
      // Predicated region
      $region21: #{encoder_forward.9} parent=11 // pred_check
        %p169 = pneg %p101
      $region22: #{encoder_forward.9} parent=11 // pred_check_branch
        %171 = sbr.rel (%p169) target = $region24
      $region23: #{encoder_forward.9} parent=11 // pred_region
        _
      $region24: #{encoder_forward.9} parent=11 // pred_fallthru
        _
      // Predicated region
      $region25: #{encoder_forward.9} parent=11 // pred_check
        %p172 = pneg %p122
      $region26: #{encoder_forward.9} parent=11 // pred_check_branch
        %174 = sbr.rel (%p172) target = $region28
      $region27: #{encoder_forward.9} parent=11 // pred_region
        _
      $region28: #{encoder_forward.9} parent=11 // pred_fallthru
        _
    $region12: #{encoder_forward.9} parent=5 // pred_fallthru
      _
    %p175 = scmp.lt.s32.totalorder %s12, 2
    // Predicated region
    $region29: #{encoder_forward.9} parent=5 // pred_check
      %p176 = pneg %p175
    $region30: #{encoder_forward.9} parent=5 // pred_check_branch
      %178 = sbr.rel (%p176) target = $region32
    $region31: #{encoder_forward.9} parent=5 // pred_region
      // Predicated region
      $region33: #{encoder_forward.9} parent=31 // pred_check
        %p179 = pneg %p53
      $region34: #{encoder_forward.9} parent=31 // pred_check_branch
        %181 = sbr.rel (%p179) target = $region36
      $region35: #{encoder_forward.9} parent=31 // pred_region
        %p182 = scmp.lt.s32.totalorder %s12, 1
        %s183 = scalar_select %p182, %s12, 1
        %s184 = smul.addr %s183, 8
        %s185 = scalar_lea.vmem %s1, %s184
      $region36: #{encoder_forward.9} parent=31 // pred_fallthru
        _
    $region32: #{encoder_forward.9} parent=5 // pred_fallthru
      _
    %p186 = scmp.le.s32.totalorder 1, %s12
    %p187 = scmp.lt.s32.totalorder %s12, 3
    %p188 = pnand %p186, %p187
    %p189 = pneg %p188
    // Predicated region
    $region37: #{encoder_forward.9} parent=5 // pred_check
      _
    $region38: #{encoder_forward.9} parent=5 // pred_check_branch
      %191 = sbr.rel (%p188) target = $region40
    $region39: #{encoder_forward.9} parent=5 // pred_region
      %s192 = ssub.s32 %s12, 1
      %p193 = pneg %p33
      %p194 = pneg %p30
      %p195 = scmp.lt.s32.totalorder %s17, 1
      %s196 = scalar_select %p195, %s17, 1
      %s197 = smul.addr %s196, 8
      %s198 = scalar_lea.vmem %s1, %s197
      %p199 = pneg %p59
      %p200 = pneg %p56
      %p201 = pneg %p80
      %p202 = pneg %p77
      %p203 = pneg %p101
      %p204 = pneg %p98
      %p205 = pneg %p122
      %p206 = pneg %p119
      %p207 = pneg %p148
      %p208 = pneg %p145
      %p209 = scmp.lt.s32.totalorder %s17, 1
      %s210 = scalar_select %p209, %s17, 1
      %s211 = smul.addr %s210, 8
      %s212 = scalar_lea.vmem %s5, %s211
      %p213 = scmp.lt.s32.totalorder %s17, 1
      %s214 = scalar_select %p213, %s17, 1
      %s215 = smul.addr %s214, 8
      %s216 = scalar_lea.vmem %s1, %s215
      %p217 = scmp.lt.s32.totalorder %s17, 1
      %s218 = scalar_select %p217, %s17, 1
      %s219 = smul.addr %s218, 8
      %s220 = scalar_lea.vmem %s5, %s219
      %v221 = vld [vmem:[%s216] sm:$0xff]
      %v222 = vld [vmem:[%s2] sm:$0xff]
      %v223 = vld [vmem:[%s2 + $0x8] sm:$0xff]
      %v224 = vld [vmem:[%s2 + $0x10] sm:$0xff]
      %v225 = vld [vmem:[%s2 + $0x18] sm:$0xff]
      %v226 = vld [vmem:[%s2 + $0x20] sm:$0xff]
      %v227 = vld [vmem:[%s2 + $0x28] sm:$0xff]
      %v228 = vld [vmem:[%s2 + $0x30] sm:$0xff]
      %v229 = vld [vmem:[%s2 + $0x38] sm:$0xff]
      %v230 = vld [vmem:[%s2 + $0x40] sm:$0xff]
      %v231 = vld [vmem:[%s2 + $0x48] sm:$0xff]
      %v232 = vld [vmem:[%s2 + $0x50] sm:$0xff]
      %v233 = vld [vmem:[%s2 + $0x58] sm:$0xff]
      %v234 = vld [vmem:[%s2 + $0x60] sm:$0xff]
      %v235 = vld [vmem:[%s2 + $0x68] sm:$0xff]
      %v236 = vld [vmem:[%s2 + $0x70] sm:$0xff]
      %v237 = vld [vmem:[%s2 + $0x78] sm:$0xff]
      %v238 = vld [vmem:[%s3] sm:$0x1]
      %v240 = vlaneseq
      %v241 = vshrl.u32 %v240, 7
      %v242 = vsub.s32 0, %v241
      %v243 = vrot.slane %v238, %v242
      %245 = vmatprep.subr.mxu0 0.0
      %246 = vmatpush1.msra.mxu0 %v222
      %247 = vmatprep.subr.mxu0 0.0
      %248 = vmatpush1.msra.mxu0 %v223
      %249 = vmatprep.subr.mxu0 0.0
      %250 = vmatpush1.msra.mxu0 %v224
      %251 = vmatprep.subr.mxu0 0.0
      %252 = vmatpush1.msra.mxu0 %v225
      %253 = vmatprep.subr.mxu0 0.0
      %254 = vmatpush1.msra.mxu0 %v226
      %255 = vmatprep.subr.mxu0 0.0
      %256 = vmatpush1.msra.mxu0 %v227
      %257 = vmatprep.subr.mxu0 0.0
      %258 = vmatpush1.msra.mxu0 %v228
      %259 = vmatprep.subr.mxu0 0.0
      %260 = vmatpush1.msra.mxu0 %v229
      %261 = vmatprep.subr.mxu0 0.0
      %262 = vmatpush1.msra.mxu0 %v230
      %263 = vmatprep.subr.mxu0 0.0
      %264 = vmatpush1.msra.mxu0 %v231
      %265 = vmatprep.subr.mxu0 0.0
      %266 = vmatpush1.msra.mxu0 %v232
      %267 = vmatprep.subr.mxu0 0.0
      %268 = vmatpush1.msra.mxu0 %v233
      %269 = vmatprep.subr.mxu0 0.0
      %270 = vmatpush1.msra.mxu0 %v234
      %271 = vmatprep.subr.mxu0 0.0
      %272 = vmatpush1.msra.mxu0 %v235
      %273 = vmatprep.subr.mxu0 0.0
      %274 = vmatpush1.msra.mxu0 %v236
      %275 = vmatprep.subr.mxu0 0.0
      %276 = vmatpush1.msra.mxu0 %v237
      %277 = vmatprep.subr.mxu0 0.0
      %278 = vmatpush1.msra.mxu0 0.0
      %279 = vmatprep.subr.mxu0 0.0
      %280 = vmatpush1.msra.mxu0 0.0
      %281 = vmatprep.subr.mxu0 0.0
      %282 = vmatpush1.msra.mxu0 0.0
      %283 = vmatprep.subr.mxu0 0.0
      %284 = vmatpush1.msra.mxu0 0.0
      %285 = vmatprep.subr.mxu0 0.0
      %286 = vmatpush1.msra.mxu0 0.0
      %287 = vmatprep.subr.mxu0 0.0
      %288 = vmatpush1.msra.mxu0 0.0
      %289 = vmatprep.subr.mxu0 0.0
      %290 = vmatpush1.msra.mxu0 0.0
      %291 = vmatprep.subr.mxu0 0.0
      %292 = vmatpush1.msra.mxu0 0.0
      %293 = vmatprep.subr.mxu0 0.0
      %294 = vmatpush1.msra.mxu0 0.0
      %295 = vmatprep.subr.mxu0 0.0
      %296 = vmatpush1.msra.mxu0 0.0
      %297 = vmatprep.subr.mxu0 0.0
      %298 = vmatpush1.msra.mxu0 0.0
      %299 = vmatprep.subr.mxu0 0.0
      %300 = vmatpush1.msra.mxu0 0.0
      %301 = vmatprep.subr.mxu0 0.0
      %302 = vmatpush1.msra.mxu0 0.0
      %303 = vmatprep.subr.mxu0 0.0
      %304 = vmatpush1.msra.mxu0 0.0
      %305 = vmatprep.subr.mxu0 0.0
      %306 = vmatpush1.msra.mxu0 0.0
      %307 = vmatprep.subr.mxu0 0.0
      %308 = vmatpush1.msra.mxu0 0.0
      %309 = vmatprep.mubr.f32.mxu0 0.0
      %310 = vmatmul.mubr.f32.gmra.mrb[0].mxu0 %v221
      %v311 = vpop.f32.mrb[0].mxu0
      %v312 = vadd.f32 %v243, %v311
      %v313 = vpop.f32.mrb[0].mxu0
      %314 = vdwg.mxu0
      %s315 = sld [smem:[#allocation2]]
      %v316 = vld [vmem:[%s4] sm:$0xff]
      %v317 = vstv %s315
      %v318 = vmul.f32 %v317, %v316
      %v319 = vadd.f32 %v312, %v318
      %320 = vst [vmem:[%s220] sm:$0xff] %v319
      %p321 = scmp.lt.s32.totalorder %s17, 1
      %s322 = scalar_select %p321, %s17, 1
      %s323 = smul.addr %s322, 8
      %s324 = scalar_lea.vmem %s5, %s323
      // Predicated region
      $region41: #{encoder_forward.9} parent=39 // pred_check
        %p325 = pneg %p145
      $region42: #{encoder_forward.9} parent=39 // pred_check_branch
        %327 = sbr.rel (%p325) target = $region44
      $region43: #{encoder_forward.9} parent=39 // pred_region
        _
      $region44: #{encoder_forward.9} parent=39 // pred_fallthru
        _
    $region40: #{encoder_forward.9} parent=5 // pred_fallthru
      _
    %p328 = scmp.le.s32.totalorder 2, %s12
    // Predicated region
    $region45: #{encoder_forward.9} parent=5 // pred_check
      %p329 = pneg %p328
    $region46: #{encoder_forward.9} parent=5 // pred_check_branch
      %331 = sbr.rel (%p329) target = $region48
    $region47: #{encoder_forward.9} parent=5 // pred_region
      %s332 = ssub.s32 %s12, 2
      // Predicated region
      $region49: #{encoder_forward.9} parent=47 // pred_check
        %p333 = pneg %p151
      $region50: #{encoder_forward.9} parent=47 // pred_check_branch
        %335 = sbr.rel (%p333) target = $region52
      $region51: #{encoder_forward.9} parent=47 // pred_region
        %p336 = scmp.lt.s32.totalorder %s18, 1
        %s337 = scalar_select %p336, %s18, 1
        %s338 = smul.addr %s337, 8
        %s339 = scalar_lea.vmem %s5, %s338
      $region52: #{encoder_forward.9} parent=47 // pred_fallthru
        _
    $region48: #{encoder_forward.9} parent=5 // pred_fallthru
      _
  $region6: #{encoder_forward.9} parent=0 // loop_footer
    %s16 = sadd.s32 1, %s12
  $region7: #{encoder_forward.9} parent=0 // loop_footer_branch
    %11 = sbr.rel target = $region3
  $region8: #{encoder_forward.9} parent=0 // loop_exit
    _

// kernel: encoder_forward.7
$region0: #{encoder_forward.7}
  #allocation0 [shape = 'u32[]', space=smem, size = 0x4, offset = 0x4, fixed_abs, tag = 'smem constant byte address 0x4 - core index']
  #allocation1 [shape = 'u32[144,128]{1,0:T(1,128)}', space=vmem, size = 0x12000, scoped, tag = 'internal scratch']
  %s0 = inlined_call_operand.vmem [shape: f32[2,12,128], index: 0, kind: input, shape index: {}]
  %s1 = inlined_call_operand.vmem [shape: f32[5,128,128], index: 1, kind: input, shape index: {}]
  %s2 = inlined_call_operand.vmem [shape: f32[1,128], index: 2, kind: input, shape index: {}]
  %s3 = inlined_call_operand.vmem [shape: f32[1,128], index: 3, kind: input, shape index: {}]
  %s4 = inlined_call_operand.vmem [shape: f32[1,128], index: 4, kind: input, shape index: {}]
  %s5 = inlined_call_operand.vmem [shape: f32[2,8,128], index: 5, kind: output, shape index: {}]
  %s6 = sld [smem:[#allocation0]]
  $region53: #{encoder_forward.7} parent=0
    _
  %s8 = ssub.s32 1, %s6
  %s9 = scalar_select 0, %s8, %s6
  loop: start=0, step=1, limit=4
  $region2: #{encoder_forward.7} parent=0 // loop_pre_header
    _
  $region3: #{encoder_forward.7} parent=0 // loop_header
    %s11 = sphi 0, %s15
    %p12 = scmp.ge.s32.totalorder %s11, 4
    %s21 = sphi 0, %s23
    %s24 = sphi 0, %s21
    %s25 = sphi 0, %s24
    %s41 = sphi 0, %s25
    %s45 = sphi 0, %s45
    %s47 = sphi 0, %s45
    %s48 = sphi 0, %s47
    %s62 = sphi 0, %s48
    %s66 = sphi 0, %s66
    %s68 = sphi 0, %s66
    %s69 = sphi 0, %s68
    %s83 = sphi 0, %s69
    %s87 = sphi 0, %s87
    %s89 = sphi 0, %s87
    %s90 = sphi 0, %s89
    %s104 = sphi 0, %s90
    %s108 = sphi 0, %s108
    %s110 = sphi 0, %s108
    %s111 = sphi 0, %s110
    %s125 = sphi 0, %s111
    %s131 = sphi 0, %s133
    %s134 = sphi 0, %s131
    %s135 = sphi 0, %s134
    %s151 = sphi 0, %s135
  $region4: #{encoder_forward.7} parent=0 // loop_header_branch
    %14 = sbr.rel (%p12) target = $region8
  $region5: #{encoder_forward.7} parent=0 // loop_body
    %s16 = ssub.s32 %s11, 1
    %s17 = ssub.s32 %s11, 2
    %s18 = sadd.s32 %s11, 1
    %s19 = ssub.s32 %s11, %s18
    %p20 = scmp.eq.s32.totalorder %s19, 0
    %s22 = sadd.s32 %s21, 1
    %s23 = scalar_select %p20, %s21, %s22
    %p26 = pneg %p20
    %p27 = scmp.eq.s32.totalorder %s11, 1
    %p28 = por %p26, %p27
    %p29 = scmp.ne.s32.totalorder %s21, %s24
    %p30 = scmp.eq.s32.totalorder %s11, 0
    %p31 = por %p29, %p30
    %p32 = scmp.ne.s32.totalorder %s21, %s24
    %p33 = scmp.eq.s32.totalorder %s16, 1
    %p34 = por %p32, %p33
    %p35 = scmp.ne.s32.totalorder %s24, %s25
    %p36 = scmp.eq.s32.totalorder %s16, 0
    %p37 = por %p35, %p36
    %p38 = scmp.ne.s32.totalorder %s24, %s25
    %p39 = scmp.eq.s32.totalorder %s17, 1
    %p40 = por %p38, %p39
    %p42 = scmp.ne.s32.totalorder %s25, %s41
    %p43 = scmp.eq.s32.totalorder %s17, 0
    %p44 = por %p42, %p43
    %s46 = sadd.s32 %s45, 1
    %p49 = scmp.eq.s32.totalorder %s11, 1
    %p50 = scmp.ne.s32.totalorder %s45, %s47
    %p51 = scmp.eq.s32.totalorder %s11, 0
    %p52 = por %p50, %p51
    %p53 = scmp.ne.s32.totalorder %s45, %s47
    %p54 = scmp.eq.s32.totalorder %s16, 1
    %p55 = por %p53, %p54
    %p56 = scmp.ne.s32.totalorder %s47, %s48
    %p57 = scmp.eq.s32.totalorder %s16, 0
    %p58 = por %p56, %p57
    %p59 = scmp.ne.s32.totalorder %s47, %s48
    %p60 = scmp.eq.s32.totalorder %s17, 1
    %p61 = por %p59, %p60
    %p63 = scmp.ne.s32.totalorder %s48, %s62
    %p64 = scmp.eq.s32.totalorder %s17, 0
    %p65 = por %p63, %p64
    %s67 = sadd.s32 %s66, 1
    %p70 = scmp.eq.s32.totalorder %s11, 1
    %p71 = scmp.ne.s32.totalorder %s66, %s68
    %p72 = scmp.eq.s32.totalorder %s11, 0
    %p73 = por %p71, %p72
    %p74 = scmp.ne.s32.totalorder %s66, %s68
    %p75 = scmp.eq.s32.totalorder %s16, 1
    %p76 = por %p74, %p75
    %p77 = scmp.ne.s32.totalorder %s68, %s69
    %p78 = scmp.eq.s32.totalorder %s16, 0
    %p79 = por %p77, %p78
    %p80 = scmp.ne.s32.totalorder %s68, %s69
    %p81 = scmp.eq.s32.totalorder %s17, 1
    %p82 = por %p80, %p81
    %p84 = scmp.ne.s32.totalorder %s69, %s83
    %p85 = scmp.eq.s32.totalorder %s17, 0
    %p86 = por %p84, %p85
    %s88 = sadd.s32 %s87, 1
    %p91 = scmp.eq.s32.totalorder %s11, 1
    %p92 = scmp.ne.s32.totalorder %s87, %s89
    %p93 = scmp.eq.s32.totalorder %s11, 0
    %p94 = por %p92, %p93
    %p95 = scmp.ne.s32.totalorder %s87, %s89
    %p96 = scmp.eq.s32.totalorder %s16, 1
    %p97 = por %p95, %p96
    %p98 = scmp.ne.s32.totalorder %s89, %s90
    %p99 = scmp.eq.s32.totalorder %s16, 0
    %p100 = por %p98, %p99
    %p101 = scmp.ne.s32.totalorder %s89, %s90
    %p102 = scmp.eq.s32.totalorder %s17, 1
    %p103 = por %p101, %p102
    %p105 = scmp.ne.s32.totalorder %s90, %s104
    %p106 = scmp.eq.s32.totalorder %s17, 0
    %p107 = por %p105, %p106
    %s109 = sadd.s32 %s108, 1
    %p112 = scmp.eq.s32.totalorder %s11, 1
    %p113 = scmp.ne.s32.totalorder %s108, %s110
    %p114 = scmp.eq.s32.totalorder %s11, 0
    %p115 = por %p113, %p114
    %p116 = scmp.ne.s32.totalorder %s108, %s110
    %p117 = scmp.eq.s32.totalorder %s16, 1
    %p118 = por %p116, %p117
    %p119 = scmp.ne.s32.totalorder %s110, %s111
    %p120 = scmp.eq.s32.totalorder %s16, 0
    %p121 = por %p119, %p120
    %p122 = scmp.ne.s32.totalorder %s110, %s111
    %p123 = scmp.eq.s32.totalorder %s17, 1
    %p124 = por %p122, %p123
    %p126 = scmp.ne.s32.totalorder %s111, %s125
    %p127 = scmp.eq.s32.totalorder %s17, 0
    %p128 = por %p126, %p127
    %s129 = ssub.s32 %s11, %s18
    %p130 = scmp.eq.s32.totalorder %s129, 0
    %s132 = sadd.s32 %s131, 1
    %s133 = scalar_select %p130, %s131, %s132
    %p136 = pneg %p130
    %p137 = scmp.eq.s32.totalorder %s11, 1
    %p138 = por %p136, %p137
    %p139 = scmp.ne.s32.totalorder %s131, %s134
    %p140 = scmp.eq.s32.totalorder %s11, 0
    %p141 = por %p139, %p140
    %p142 = scmp.ne.s32.totalorder %s131, %s134
    %p143 = scmp.eq.s32.totalorder %s16, 1
    %p144 = por %p142, %p143
    %p145 = scmp.ne.s32.totalorder %s134, %s135
    %p146 = scmp.eq.s32.totalorder %s16, 0
    %p147 = por %p145, %p146
    %p148 = scmp.ne.s32.totalorder %s134, %s135
    %p149 = scmp.eq.s32.totalorder %s17, 1
    %p150 = por %p148, %p149
    %p152 = scmp.ne.s32.totalorder %s135, %s151
    %p153 = scmp.eq.s32.totalorder %s17, 0
    %p154 = por %p152, %p153
    %p155 = scmp.le.s32.totalorder 1, %s11
    %p156 = scmp.lt.s32.totalorder %s11, 3
    %p157 = pnand %p155, %p156
    %p158 = pneg %p157
    // Predicated region
    $region9: #{encoder_forward.7} parent=5 // pred_check
      _
    $region10: #{encoder_forward.7} parent=5 // pred_check_branch
      %160 = sbr.rel (%p157) target = $region12
    $region11: #{encoder_forward.7} parent=5 // pred_region
      %s161 = ssub.s32 %s11, 1
      // Predicated region
      $region13: #{encoder_forward.7} parent=11 // pred_check
        %p162 = pneg %p58
      $region14: #{encoder_forward.7} parent=11 // pred_check_branch
        %164 = sbr.rel (%p162) target = $region16
      $region15: #{encoder_forward.7} parent=11 // pred_region
        _
      $region16: #{encoder_forward.7} parent=11 // pred_fallthru
        _
      // Predicated region
      $region17: #{encoder_forward.7} parent=11 // pred_check
        %p165 = pneg %p79
      $region18: #{encoder_forward.7} parent=11 // pred_check_branch
        %167 = sbr.rel (%p165) target = $region20
      $region19: #{encoder_forward.7} parent=11 // pred_region
        _
      $region20: #{encoder_forward.7} parent=11 // pred_fallthru
        _
      // Predicated region
      $region21: #{encoder_forward.7} parent=11 // pred_check
        %p168 = pneg %p100
      $region22: #{encoder_forward.7} parent=11 // pred_check_branch
        %170 = sbr.rel (%p168) target = $region24
      $region23: #{encoder_forward.7} parent=11 // pred_region
        _
      $region24: #{encoder_forward.7} parent=11 // pred_fallthru
        _
      // Predicated region
      $region25: #{encoder_forward.7} parent=11 // pred_check
        %p171 = pneg %p121
      $region26: #{encoder_forward.7} parent=11 // pred_check_branch
        %173 = sbr.rel (%p171) target = $region28
      $region27: #{encoder_forward.7} parent=11 // pred_region
        _
      $region28: #{encoder_forward.7} parent=11 // pred_fallthru
        _
    $region12: #{encoder_forward.7} parent=5 // pred_fallthru
      _
    %p174 = scmp.lt.s32.totalorder %s11, 2
    // Predicated region
    $region29: #{encoder_forward.7} parent=5 // pred_check
      %p175 = pneg %p174
    $region30: #{encoder_forward.7} parent=5 // pred_check_branch
      %177 = sbr.rel (%p175) target = $region32
    $region31: #{encoder_forward.7} parent=5 // pred_region
      // Predicated region
      $region33: #{encoder_forward.7} parent=31 // pred_check
        %p178 = pneg %p31
      $region34: #{encoder_forward.7} parent=31 // pred_check_branch
        %180 = sbr.rel (%p178) target = $region36
      $region35: #{encoder_forward.7} parent=31 // pred_region
        %p181 = scmp.lt.s32.totalorder %s11, 1
        %s182 = scalar_select %p181, %s11, 1
        %s183 = smul.addr %s182, 2
        %s184 = smul.addr %s183, 8
        %s185 = scalar_lea.vmem %s0, %s184
      $region36: #{encoder_forward.7} parent=31 // pred_fallthru
        _
    $region32: #{encoder_forward.7} parent=5 // pred_fallthru
      _
    %p186 = scmp.le.s32.totalorder 1, %s11
    %p187 = scmp.lt.s32.totalorder %s11, 3
    %p188 = pnand %p186, %p187
    %p189 = pneg %p188
    // Predicated region
    $region37: #{encoder_forward.7} parent=5 // pred_check
      _
    $region38: #{encoder_forward.7} parent=5 // pred_check_branch
      %191 = sbr.rel (%p188) target = $region40
    $region39: #{encoder_forward.7} parent=5 // pred_region
      %s192 = ssub.s32 %s11, 1
      %p193 = scmp.lt.s32.totalorder %s16, 1
      %s194 = scalar_select %p193, %s16, 1
      %s195 = smul.addr %s194, 2
      %s196 = smul.addr %s195, 8
      %s197 = scalar_lea.vmem %s0, %s196
      %p198 = pneg %p37
      %p199 = pneg %p34
      %p200 = pneg %p58
      %p201 = pneg %p55
      %p202 = pneg %p79
      %p203 = pneg %p76
      %p204 = pneg %p100
      %p205 = pneg %p97
      %p206 = pneg %p121
      %p207 = pneg %p118
      %p208 = pneg %p147
      %p209 = pneg %p144
      %p210 = scmp.lt.s32.totalorder %s16, 1
      %s211 = scalar_select %p210, %s16, 1
      %s212 = smul.addr %s211, 8
      %s213 = scalar_lea.vmem %s5, %s212
      %p214 = scmp.lt.s32.totalorder %s16, 1
      %s215 = scalar_select %p214, %s16, 1
      %s216 = smul.addr %s215, 2
      %s217 = smul.addr %s216, 8
      %s218 = scalar_lea.vmem %s0, %s217
      %p219 = scmp.lt.s32.totalorder %s16, 1
      %s220 = scalar_select %p219, %s16, 1
      %s221 = smul.addr %s220, 8
      %s222 = scalar_lea.vmem %s5, %s221
      %v223 = vld [vmem:[%s218] sm:$0xff]
      %v224 = vld [vmem:[%s218 + $0x8] sm:$0xf]
      %v225 = vld [vmem:[%s1] sm:$0xff]
      %v226 = vld [vmem:[%s1 + $0x8] sm:$0xff]
      %v227 = vld [vmem:[%s1 + $0x10] sm:$0xff]
      %v228 = vld [vmem:[%s1 + $0x18] sm:$0xff]
      %v229 = vld [vmem:[%s1 + $0x20] sm:$0xff]
      %v230 = vld [vmem:[%s1 + $0x28] sm:$0xff]
      %v231 = vld [vmem:[%s1 + $0x30] sm:$0xff]
      %v232 = vld [vmem:[%s1 + $0x38] sm:$0xff]
      %v233 = vld [vmem:[%s1 + $0x40] sm:$0xff]
      %v234 = vld [vmem:[%s1 + $0x48] sm:$0xff]
      %v235 = vld [vmem:[%s1 + $0x50] sm:$0xff]
      %v236 = vld [vmem:[%s1 + $0x58] sm:$0xff]
      %v237 = vld [vmem:[%s1 + $0x60] sm:$0xff]
      %v238 = vld [vmem:[%s1 + $0x68] sm:$0xff]
      %v239 = vld [vmem:[%s1 + $0x70] sm:$0xff]
      %v240 = vld [vmem:[%s1 + $0x78] sm:$0xff]
      %s241 = scalar_lea.vmem %s1, 128
      %v242 = vld [vmem:[%s241] sm:$0xff]
      %v243 = vld [vmem:[%s241 + $0x8] sm:$0xff]
      %v244 = vld [vmem:[%s241 + $0x10] sm:$0xff]
      %v245 = vld [vmem:[%s241 + $0x18] sm:$0xff]
      %v246 = vld [vmem:[%s241 + $0x20] sm:$0xff]
      %v247 = vld [vmem:[%s241 + $0x28] sm:$0xff]
      %v248 = vld [vmem:[%s241 + $0x30] sm:$0xff]
      %v249 = vld [vmem:[%s241 + $0x38] sm:$0xff]
      %v250 = vld [vmem:[%s241 + $0x40] sm:$0xff]
      %v251 = vld [vmem:[%s241 + $0x48] sm:$0xff]
      %v252 = vld [vmem:[%s241 + $0x50] sm:$0xff]
      %v253 = vld [vmem:[%s241 + $0x58] sm:$0xff]
      %v254 = vld [vmem:[%s241 + $0x60] sm:$0xff]
      %v255 = vld [vmem:[%s241 + $0x68] sm:$0xff]
      %v256 = vld [vmem:[%s241 + $0x70] sm:$0xff]
      %v257 = vld [vmem:[%s241 + $0x78] sm:$0xff]
      %vm260 = vcmask 1046528
      %v261 = vrot.slane %v223, 1
      %v262 = vrot.slane %v224, 1
      %v263 = vsel %vm260, %v261, %v262
      %265 = vmatprep.subr.mxu0 0.0
      %266 = vmatpush1.msra.mxu0 %v242
      %267 = vmatprep.subr.mxu0 0.0
      %268 = vmatpush1.msra.mxu0 %v243
      %269 = vmatprep.subr.mxu0 0.0
      %270 = vmatpush1.msra.mxu0 %v244
      %271 = vmatprep.subr.mxu0 0.0
      %272 = vmatpush1.msra.mxu0 %v245
      %273 = vmatprep.subr.mxu0 0.0
      %274 = vmatpush1.msra.mxu0 %v246
      %275 = vmatprep.subr.mxu0 0.0
      %276 = vmatpush1.msra.mxu0 %v247
      %277 = vmatprep.subr.mxu0 0.0
      %278 = vmatpush1.msra.mxu0 %v248
      %279 = vmatprep.subr.mxu0 0.0
      %280 = vmatpush1.msra.mxu0 %v249
      %281 = vmatprep.subr.mxu0 0.0
      %282 = vmatpush1.msra.mxu0 %v250
      %283 = vmatprep.subr.mxu0 0.0
      %284 = vmatpush1.msra.mxu0 %v251
      %285 = vmatprep.subr.mxu0 0.0
      %286 = vmatpush1.msra.mxu0 %v252
      %287 = vmatprep.subr.mxu0 0.0
      %288 = vmatpush1.msra.mxu0 %v253
      %289 = vmatprep.subr.mxu0 0.0
      %290 = vmatpush1.msra.mxu0 %v254
      %291 = vmatprep.subr.mxu0 0.0
      %292 = vmatpush1.msra.mxu0 %v255
      %293 = vmatprep.subr.mxu0 0.0
      %294 = vmatpush1.msra.mxu0 %v256
      %295 = vmatprep.subr.mxu0 0.0
      %296 = vmatpush1.msra.mxu0 %v257
      %297 = vmatprep.subr.mxu0 0.0
      %298 = vmatpush1.msra.mxu0 0.0
      %299 = vmatprep.subr.mxu0 0.0
      %300 = vmatpush1.msra.mxu0 0.0
      %301 = vmatprep.subr.mxu0 0.0
      %302 = vmatpush1.msra.mxu0 0.0
      %303 = vmatprep.subr.mxu0 0.0
      %304 = vmatpush1.msra.mxu0 0.0
      %305 = vmatprep.subr.mxu0 0.0
      %306 = vmatpush1.msra.mxu0 0.0
      %307 = vmatprep.subr.mxu0 0.0
      %308 = vmatpush1.msra.mxu0 0.0
      %309 = vmatprep.subr.mxu0 0.0
      %310 = vmatpush1.msra.mxu0 0.0
      %311 = vmatprep.subr.mxu0 0.0
      %312 = vmatpush1.msra.mxu0 0.0
      %313 = vmatprep.subr.mxu0 0.0
      %314 = vmatpush1.msra.mxu0 0.0
      %315 = vmatprep.subr.mxu0 0.0
      %316 = vmatpush1.msra.mxu0 0.0
      %317 = vmatprep.subr.mxu0 0.0
      %318 = vmatpush1.msra.mxu0 0.0
      %319 = vmatprep.subr.mxu0 0.0
      %320 = vmatpush1.msra.mxu0 0.0
      %321 = vmatprep.subr.mxu0 0.0
      %322 = vmatpush1.msra.mxu0 0.0
      %323 = vmatprep.subr.mxu0 0.0
      %324 = vmatpush1.msra.mxu0 0.0
      %325 = vmatprep.subr.mxu0 0.0
      %326 = vmatpush1.msra.mxu0 0.0
      %327 = vmatprep.subr.mxu0 0.0
      %328 = vmatpush1.msra.mxu0 0.0
      %329 = vmatprep.mubr.f32.mxu0 0.0
      %330 = vmatmul.mubr.f32.gmra.mrb[0].mxu0 %v263
      %v331 = vpop.f32.mrb[0].mxu0
      %v332 = vadd.f32 0.0, %v331
      %v333 = vpop.f32.mrb[0].mxu0
      %334 = vdwg.mxu0
      %335 = vmatprep.subr.mxu0 0.0
      %336 = vmatpush1.msra.mxu0 %v225
      %337 = vmatprep.subr.mxu0 0.0
      %338 = vmatpush1.msra.mxu0 %v226
      %339 = vmatprep.subr.mxu0 0.0
      %340 = vmatpush1.msra.mxu0 %v227
      %341 = vmatprep.subr.mxu0 0.0
      %342 = vmatpush1.msra.mxu0 %v228
      %343 = vmatprep.subr.mxu0 0.0
      %344 = vmatpush1.msra.mxu0 %v229
      %345 = vmatprep.subr.mxu0 0.0
      %346 = vmatpush1.msra.mxu0 %v230
      %347 = vmatprep.subr.mxu0 0.0
      %348 = vmatpush1.msra.mxu0 %v231
      %349 = vmatprep.subr.mxu0 0.0
      %350 = vmatpush1.msra.mxu0 %v232
      %351 = vmatprep.subr.mxu0 0.0
      %352 = vmatpush1.msra.mxu0 %v233
      %353 = vmatprep.subr.mxu0 0.0
      %354 = vmatpush1.msra.mxu0 %v234
      %355 = vmatprep.subr.mxu0 0.0
      %356 = vmatpush1.msra.mxu0 %v235
      %357 = vmatprep.subr.mxu0 0.0
      %358 = vmatpush1.msra.mxu0 %v236
      %359 = vmatprep.subr.mxu0 0.0
      %360 = vmatpush1.msra.mxu0 %v237
      %361 = vmatprep.subr.mxu0 0.0
      %362 = vmatpush1.msra.mxu0 %v238
      %363 = vmatprep.subr.mxu0 0.0
      %364 = vmatpush1.msra.mxu0 %v239
      %365 = vmatprep.subr.mxu0 0.0
      %366 = vmatpush1.msra.mxu0 %v240
      %367 = vmatprep.subr.mxu0 0.0
      %368 = vmatpush1.msra.mxu0 0.0
      %369 = vmatprep.subr.mxu0 0.0
      %370 = vmatpush1.msra.mxu0 0.0
      %371 = vmatprep.subr.mxu0 0.0
      %372 = vmatpush1.msra.mxu0 0.0
      %373 = vmatprep.subr.mxu0 0.0
      %374 = vmatpush1.msra.mxu0 0.0
      %375 = vmatprep.subr.mxu0 0.0
      %376 = vmatpush1.msra.mxu0 0.0
      %377 = vmatprep.subr.mxu0 0.0
      %378 = vmatpush1.msra.mxu0 0.0
      %379 = vmatprep.subr.mxu0 0.0
      %380 = vmatpush1.msra.mxu0 0.0
      %381 = vmatprep.subr.mxu0 0.0
      %382 = vmatpush1.msra.mxu0 0.0
      %383 = vmatprep.subr.mxu0 0.0
      %384 = vmatpush1.msra.mxu0 0.0
      %385 = vmatprep.subr.mxu0 0.0
      %386 = vmatpush1.msra.mxu0 0.0
      %387 = vmatprep.subr.mxu0 0.0
      %388 = vmatpush1.msra.mxu0 0.0
      %389 = vmatprep.subr.mxu0 0.0
      %390 = vmatpush1.msra.mxu0 0.0
      %391 = vmatprep.subr.mxu0 0.0
      %392 = vmatpush1.msra.mxu0 0.0
      %393 = vmatprep.subr.mxu0 0.0
      %394 = vmatpush1.msra.mxu0 0.0
      %395 = vmatprep.subr.mxu0 0.0
      %396 = vmatpush1.msra.mxu0 0.0
      %397 = vmatprep.subr.mxu0 0.0
      %398 = vmatpush1.msra.mxu0 0.0
      %399 = vmatprep.mubr.f32.mxu0 0.0
      %400 = vmatmul.mubr.f32.gmra.mrb[0].mxu0 %v223
      %v401 = vpop.f32.mrb[0].mxu0
      %v402 = vadd.f32 %v332, %v401
      %v403 = vpop.f32.mrb[0].mxu0
      %404 = vdwg.mxu0
      %s405 = scalar_lea.vmem %s1, 256
      %v406 = vld [vmem:[%s405] sm:$0xff]
      %v407 = vld [vmem:[%s405 + $0x8] sm:$0xff]
      %v408 = vld [vmem:[%s405 + $0x10] sm:$0xff]
      %v409 = vld [vmem:[%s405 + $0x18] sm:$0xff]
      %v410 = vld [vmem:[%s405 + $0x20] sm:$0xff]
      %v411 = vld [vmem:[%s405 + $0x28] sm:$0xff]
      %v412 = vld [vmem:[%s405 + $0x30] sm:$0xff]
      %v413 = vld [vmem:[%s405 + $0x38] sm:$0xff]
      %v414 = vld [vmem:[%s405 + $0x40] sm:$0xff]
      %v415 = vld [vmem:[%s405 + $0x48] sm:$0xff]
      %v416 = vld [vmem:[%s405 + $0x50] sm:$0xff]
      %v417 = vld [vmem:[%s405 + $0x58] sm:$0xff]
      %v418 = vld [vmem:[%s405 + $0x60] sm:$0xff]
      %v419 = vld [vmem:[%s405 + $0x68] sm:$0xff]
      %v420 = vld [vmem:[%s405 + $0x70] sm:$0xff]
      %v421 = vld [vmem:[%s405 + $0x78] sm:$0xff]
      %vm422 = vcmask 1045504
      %v423 = vrot.slane %v223, 2
      %v424 = vrot.slane %v224, 2
      %v425 = vsel %vm422, %v423, %v424
      %427 = vmatprep.subr.mxu0 0.0
      %428 = vmatpush1.msra.mxu0 %v406
      %429 = vmatprep.subr.mxu0 0.0
      %430 = vmatpush1.msra.mxu0 %v407
      %431 = vmatprep.subr.mxu0 0.0
      %432 = vmatpush1.msra.mxu0 %v408
      %433 = vmatprep.subr.mxu0 0.0
      %434 = vmatpush1.msra.mxu0 %v409
      %435 = vmatprep.subr.mxu0 0.0
      %436 = vmatpush1.msra.mxu0 %v410
      %437 = vmatprep.subr.mxu0 0.0
      %438 = vmatpush1.msra.mxu0 %v411
      %439 = vmatprep.subr.mxu0 0.0
      %440 = vmatpush1.msra.mxu0 %v412
      %441 = vmatprep.subr.mxu0 0.0
      %442 = vmatpush1.msra.mxu0 %v413
      %443 = vmatprep.subr.mxu0 0.0
      %444 = vmatpush1.msra.mxu0 %v414
      %445 = vmatprep.subr.mxu0 0.0
      %446 = vmatpush1.msra.mxu0 %v415
      %447 = vmatprep.subr.mxu0 0.0
      %448 = vmatpush1.msra.mxu0 %v416
      %449 = vmatprep.subr.mxu0 0.0
      %450 = vmatpush1.msra.mxu0 %v417
      %451 = vmatprep.subr.mxu0 0.0
      %452 = vmatpush1.msra.mxu0 %v418
      %453 = vmatprep.subr.mxu0 0.0
      %454 = vmatpush1.msra.mxu0 %v419
      %455 = vmatprep.subr.mxu0 0.0
      %456 = vmatpush1.msra.mxu0 %v420
      %457 = vmatprep.subr.mxu0 0.0
      %458 = vmatpush1.msra.mxu0 %v421
      %459 = vmatprep.subr.mxu0 0.0
      %460 = vmatpush1.msra.mxu0 0.0
      %461 = vmatprep.subr.mxu0 0.0
      %462 = vmatpush1.msra.mxu0 0.0
      %463 = vmatprep.subr.mxu0 0.0
      %464 = vmatpush1.msra.mxu0 0.0
      %465 = vmatprep.subr.mxu0 0.0
      %466 = vmatpush1.msra.mxu0 0.0
      %467 = vmatprep.subr.mxu0 0.0
      %468 = vmatpush1.msra.mxu0 0.0
      %469 = vmatprep.subr.mxu0 0.0
      %470 = vmatpush1.msra.mxu0 0.0
      %471 = vmatprep.subr.mxu0 0.0
      %472 = vmatpush1.msra.mxu0 0.0
      %473 = vmatprep.subr.mxu0 0.0
      %474 = vmatpush1.msra.mxu0 0.0
      %475 = vmatprep.subr.mxu0 0.0
      %476 = vmatpush1.msra.mxu0 0.0
      %477 = vmatprep.subr.mxu0 0.0
      %478 = vmatpush1.msra.mxu0 0.0
      %479 = vmatprep.subr.mxu0 0.0
      %480 = vmatpush1.msra.mxu0 0.0
      %481 = vmatprep.subr.mxu0 0.0
      %482 = vmatpush1.msra.mxu0 0.0
      %483 = vmatprep.subr.mxu0 0.0
      %484 = vmatpush1.msra.mxu0 0.0
      %485 = vmatprep.subr.mxu0 0.0
      %486 = vmatpush1.msra.mxu0 0.0
      %487 = vmatprep.subr.mxu0 0.0
      %488 = vmatpush1.msra.mxu0 0.0
      %489 = vmatprep.subr.mxu0 0.0
      %490 = vmatpush1.msra.mxu0 0.0
      %491 = vmatprep.mubr.f32.mxu0 0.0
      %492 = vmatmul.mubr.f32.gmra.mrb[0].mxu0 %v425
      %v493 = vpop.f32.mrb[0].mxu0
      %v494 = vadd.f32 0.0, %v493
      %v495 = vpop.f32.mrb[0].mxu0
      %496 = vdwg.mxu0
      %v497 = vadd.f32 %v402, %v494
      %s498 = scalar_lea.vmem %s1, 384
      %v499 = vld [vmem:[%s498] sm:$0xff]
      %v500 = vld [vmem:[%s498 + $0x8] sm:$0xff]
      %v501 = vld [vmem:[%s498 + $0x10] sm:$0xff]
      %v502 = vld [vmem:[%s498 + $0x18] sm:$0xff]
      %v503 = vld [vmem:[%s498 + $0x20] sm:$0xff]
      %v504 = vld [vmem:[%s498 + $0x28] sm:$0xff]
      %v505 = vld [vmem:[%s498 + $0x30] sm:$0xff]
      %v506 = vld [vmem:[%s498 + $0x38] sm:$0xff]
      %v507 = vld [vmem:[%s498 + $0x40] sm:$0xff]
      %v508 = vld [vmem:[%s498 + $0x48] sm:$0xff]
      %v509 = vld [vmem:[%s498 + $0x50] sm:$0xff]
      %v510 = vld [vmem:[%s498 + $0x58] sm:$0xff]
      %v511 = vld [vmem:[%s498 + $0x60] sm:$0xff]
      %v512 = vld [vmem:[%s498 + $0x68] sm:$0xff]
      %v513 = vld [vmem:[%s498 + $0x70] sm:$0xff]
      %v514 = vld [vmem:[%s498 + $0x78] sm:$0xff]
      %vm515 = vcmask 1044480
      %v516 = vrot.slane %v223, 3
      %v517 = vrot.slane %v224, 3
      %v518 = vsel %vm515, %v516, %v517
      %520 = vmatprep.subr.mxu0 0.0
      %521 = vmatpush1.msra.mxu0 %v499
      %522 = vmatprep.subr.mxu0 0.0
      %523 = vmatpush1.msra.mxu0 %v500
      %524 = vmatprep.subr.mxu0 0.0
      %525 = vmatpush1.msra.mxu0 %v501
      %526 = vmatprep.subr.mxu0 0.0
      %527 = vmatpush1.msra.mxu0 %v502
      %528 = vmatprep.subr.mxu0 0.0
      %529 = vmatpush1.msra.mxu0 %v503
      %530 = vmatprep.subr.mxu0 0.0
      %531 = vmatpush1.msra.mxu0 %v504
      %532 = vmatprep.subr.mxu0 0.0
      %533 = vmatpush1.msra.mxu0 %v505
      %534 = vmatprep.subr.mxu0 0.0
      %535 = vmatpush1.msra.mxu0 %v506
      %536 = vmatprep.subr.mxu0 0.0
      %537 = vmatpush1.msra.mxu0 %v507
      %538 = vmatprep.subr.mxu0 0.0
      %539 = vmatpush1.msra.mxu0 %v508
      %540 = vmatprep.subr.mxu0 0.0
      %541 = vmatpush1.msra.mxu0 %v509
      %542 = vmatprep.subr.mxu0 0.0
      %543 = vmatpush1.msra.mxu0 %v510
      %544 = vmatprep.subr.mxu0 0.0
      %545 = vmatpush1.msra.mxu0 %v511
      %546 = vmatprep.subr.mxu0 0.0
      %547 = vmatpush1.msra.mxu0 %v512
      %548 = vmatprep.subr.mxu0 0.0
      %549 = vmatpush1.msra.mxu0 %v513
      %550 = vmatprep.subr.mxu0 0.0
      %551 = vmatpush1.msra.mxu0 %v514
      %552 = vmatprep.subr.mxu0 0.0
      %553 = vmatpush1.msra.mxu0 0.0
      %554 = vmatprep.subr.mxu0 0.0
      %555 = vmatpush1.msra.mxu0 0.0
      %556 = vmatprep.subr.mxu0 0.0
      %557 = vmatpush1.msra.mxu0 0.0
      %558 = vmatprep.subr.mxu0 0.0
      %559 = vmatpush1.msra.mxu0 0.0
      %560 = vmatprep.subr.mxu0 0.0
      %561 = vmatpush1.msra.mxu0 0.0
      %562 = vmatprep.subr.mxu0 0.0
      %563 = vmatpush1.msra.mxu0 0.0
      %564 = vmatprep.subr.mxu0 0.0
      %565 = vmatpush1.msra.mxu0 0.0
      %566 = vmatprep.subr.mxu0 0.0
      %567 = vmatpush1.msra.mxu0 0.0
      %568 = vmatprep.subr.mxu0 0.0
      %569 = vmatpush1.msra.mxu0 0.0
      %570 = vmatprep.subr.mxu0 0.0
      %571 = vmatpush1.msra.mxu0 0.0
      %572 = vmatprep.subr.mxu0 0.0
      %573 = vmatpush1.msra.mxu0 0.0
      %574 = vmatprep.subr.mxu0 0.0
      %575 = vmatpush1.msra.mxu0 0.0
      %576 = vmatprep.subr.mxu0 0.0
      %577 = vmatpush1.msra.mxu0 0.0
      %578 = vmatprep.subr.mxu0 0.0
      %579 = vmatpush1.msra.mxu0 0.0
      %580 = vmatprep.subr.mxu0 0.0
      %581 = vmatpush1.msra.mxu0 0.0
      %582 = vmatprep.subr.mxu0 0.0
      %583 = vmatpush1.msra.mxu0 0.0
      %584 = vmatprep.mubr.f32.mxu0 0.0
      %585 = vmatmul.mubr.f32.gmra.mrb[0].mxu0 %v518
      %v586 = vpop.f32.mrb[0].mxu0
      %v587 = vadd.f32 0.0, %v586
      %v588 = vpop.f32.mrb[0].mxu0
      %589 = vdwg.mxu0
      %v590 = vadd.f32 %v497, %v587
      %s591 = scalar_lea.vmem %s1, 512
      %v592 = vld [vmem:[%s591] sm:$0xff]
      %v593 = vld [vmem:[%s591 + $0x8] sm:$0xff]
      %v594 = vld [vmem:[%s591 + $0x10] sm:$0xff]
      %v595 = vld [vmem:[%s591 + $0x18] sm:$0xff]
      %v596 = vld [vmem:[%s591 + $0x20] sm:$0xff]
      %v597 = vld [vmem:[%s591 + $0x28] sm:$0xff]
      %v598 = vld [vmem:[%s591 + $0x30] sm:$0xff]
      %v599 = vld [vmem:[%s591 + $0x38] sm:$0xff]
      %v600 = vld [vmem:[%s591 + $0x40] sm:$0xff]
      %v601 = vld [vmem:[%s591 + $0x48] sm:$0xff]
      %v602 = vld [vmem:[%s591 + $0x50] sm:$0xff]
      %v603 = vld [vmem:[%s591 + $0x58] sm:$0xff]
      %v604 = vld [vmem:[%s591 + $0x60] sm:$0xff]
      %v605 = vld [vmem:[%s591 + $0x68] sm:$0xff]
      %v606 = vld [vmem:[%s591 + $0x70] sm:$0xff]
      %v607 = vld [vmem:[%s591 + $0x78] sm:$0xff]
      %vm608 = vcmask 1043456
      %v609 = vrot.slane %v223, 4
      %v610 = vrot.slane %v224, 4
      %v611 = vsel %vm608, %v609, %v610
      %613 = vmatprep.subr.mxu0 0.0
      %614 = vmatpush1.msra.mxu0 %v592
      %615 = vmatprep.subr.mxu0 0.0
      %616 = vmatpush1.msra.mxu0 %v593
      %617 = vmatprep.subr.mxu0 0.0
      %618 = vmatpush1.msra.mxu0 %v594
      %619 = vmatprep.subr.mxu0 0.0
      %620 = vmatpush1.msra.mxu0 %v595
      %621 = vmatprep.subr.mxu0 0.0
      %622 = vmatpush1.msra.mxu0 %v596
      %623 = vmatprep.subr.mxu0 0.0
      %624 = vmatpush1.msra.mxu0 %v597
      %625 = vmatprep.subr.mxu0 0.0
      %626 = vmatpush1.msra.mxu0 %v598
      %627 = vmatprep.subr.mxu0 0.0
      %628 = vmatpush1.msra.mxu0 %v599
      %629 = vmatprep.subr.mxu0 0.0
      %630 = vmatpush1.msra.mxu0 %v600
      %631 = vmatprep.subr.mxu0 0.0
      %632 = vmatpush1.msra.mxu0 %v601
      %633 = vmatprep.subr.mxu0 0.0
      %634 = vmatpush1.msra.mxu0 %v602
      %635 = vmatprep.subr.mxu0 0.0
      %636 = vmatpush1.msra.mxu0 %v603
      %637 = vmatprep.subr.mxu0 0.0
      %638 = vmatpush1.msra.mxu0 %v604
      %639 = vmatprep.subr.mxu0 0.0
      %640 = vmatpush1.msra.mxu0 %v605
      %641 = vmatprep.subr.mxu0 0.0
      %642 = vmatpush1.msra.mxu0 %v606
      %643 = vmatprep.subr.mxu0 0.0
      %644 = vmatpush1.msra.mxu0 %v607
      %645 = vmatprep.subr.mxu0 0.0
      %646 = vmatpush1.msra.mxu0 0.0
      %647 = vmatprep.subr.mxu0 0.0
      %648 = vmatpush1.msra.mxu0 0.0
      %649 = vmatprep.subr.mxu0 0.0
      %650 = vmatpush1.msra.mxu0 0.0
      %651 = vmatprep.subr.mxu0 0.0
      %652 = vmatpush1.msra.mxu0 0.0
      %653 = vmatprep.subr.mxu0 0.0
      %654 = vmatpush1.msra.mxu0 0.0
      %655 = vmatprep.subr.mxu0 0.0
      %656 = vmatpush1.msra.mxu0 0.0
      %657 = vmatprep.subr.mxu0 0.0
      %658 = vmatpush1.msra.mxu0 0.0
      %659 = vmatprep.subr.mxu0 0.0
      %660 = vmatpush1.msra.mxu0 0.0
      %661 = vmatprep.subr.mxu0 0.0
      %662 = vmatpush1.msra.mxu0 0.0
      %663 = vmatprep.subr.mxu0 0.0
      %664 = vmatpush1.msra.mxu0 0.0
      %665 = vmatprep.subr.mxu0 0.0
      %666 = vmatpush1.msra.mxu0 0.0
      %667 = vmatprep.subr.mxu0 0.0
      %668 = vmatpush1.msra.mxu0 0.0
      %669 = vmatprep.subr.mxu0 0.0
      %670 = vmatpush1.msra.mxu0 0.0
      %671 = vmatprep.subr.mxu0 0.0
      %672 = vmatpush1.msra.mxu0 0.0
      %673 = vmatprep.subr.mxu0 0.0
      %674 = vmatpush1.msra.mxu0 0.0
      %675 = vmatprep.subr.mxu0 0.0
      %676 = vmatpush1.msra.mxu0 0.0
      %677 = vmatprep.mubr.f32.mxu0 0.0
      %678 = vmatmul.mubr.f32.gmra.mrb[0].mxu0 %v611
      %v679 = vpop.f32.mrb[0].mxu0
      %v680 = vadd.f32 0.0, %v679
      %v681 = vpop.f32.mrb[0].mxu0
      %682 = vdwg.mxu0
      %v683 = vadd.f32 %v590, %v680
      %v684 = vld [vmem:[%s2] sm:$0x1]
      %v686 = vlaneseq
      %v687 = vshrl.u32 %v686, 7
      %v688 = vsub.s32 0, %v687
      %v689 = vrot.slane %v684, %v688
      %v691 = vadd.f32 %v683, %v689
      %v692 = vld [vmem:[%s3] sm:$0x1]
      %v694 = vlaneseq
      %v695 = vshrl.u32 %v694, 7
      %v696 = vsub.s32 0, %v695
      %v697 = vrot.slane %v692, %v696
      %v699 = vmul.f32 %v691, %v697
      %v700 = vld [vmem:[%s4] sm:$0x1]
      %v702 = vlaneseq
      %v703 = vshrl.u32 %v702, 7
      %v704 = vsub.s32 0, %v703
      %v705 = vrot.slane %v700, %v704
      %v707 = vadd.f32 %v699, %v705
      %v708 = vmax.f32 %v707, 0.0
      %709 = vst [vmem:[%s222] sm:$0xff] %v708
      %p710 = scmp.lt.s32.totalorder %s16, 1
      %s711 = scalar_select %p710, %s16, 1
      %s712 = smul.addr %s711, 8
      %s713 = scalar_lea.vmem %s5, %s712
      // Predicated region
      $region41: #{encoder_forward.7} parent=39 // pred_check
        %p714 = pneg %p144
      $region42: #{encoder_forward.7} parent=39 // pred_check_branch
        %716 = sbr.rel (%p714) target = $region44
      $region43: #{encoder_forward.7} parent=39 // pred_region
        _
      $region44: #{encoder_forward.7} parent=39 // pred_fallthru
        _
    $region40: #{encoder_forward.7} parent=5 // pred_fallthru
      _
    %p717 = scmp.le.s32.totalorder 2, %s11
    // Predicated region
    $region45: #{encoder_forward.7} parent=5 // pred_check
      %p718 = pneg %p717
    $region46: #{encoder_forward.7} parent=5 // pred_check_branch
      %720 = sbr.rel (%p718) target = $region48
    $region47: #{encoder_forward.7} parent=5 // pred_region
      %s721 = ssub.s32 %s11, 2
      // Predicated region
      $region49: #{encoder_forward.7} parent=47 // pred_check
        %p722 = pneg %p150
      $region50: #{encoder_forward.7} parent=47 // pred_check_branch
        %724 = sbr.rel (%p722) target = $region52
      $region51: #{encoder_forward.7} parent=47 // pred_region
        %p725 = scmp.lt.s32.totalorder %s17, 1
        %s726 = scalar_select %p725, %s17, 1
        %s727 = smul.addr %s726, 8
        %s728 = scalar_lea.vmem %s5, %s727
      $region52: #{encoder_forward.7} parent=47 // pred_fallthru
        _
    $region48: #{encoder_forward.7} parent=5 // pred_fallthru
      _
  $region6: #{encoder_forward.7} parent=0 // loop_footer
    %s15 = sadd.s32 1, %s11
  $region7: #{encoder_forward.7} parent=0 // loop_footer_branch
    %10 = sbr.rel target = $region3
  $region8: #{encoder_forward.7} parent=0 // loop_exit
    _

// kernel: encoder_forward.6
$region0: #{encoder_forward.6}
  #allocation0 [shape = 'u32[]', space=smem, size = 0x4, offset = 0x4, fixed_abs, tag = 'smem constant byte address 0x4 - core index']
  #allocation1 [shape = 'u32[144,128]{1,0:T(1,128)}', space=vmem, size = 0x12000, scoped, tag = 'internal scratch']
  %s0 = inlined_call_operand.vmem [shape: f32[2,12,128], index: 0, kind: input, shape index: {}]
  %s1 = inlined_call_operand.hbm [shape: f32[5,128,128], index: 1, kind: input, shape index: {}]
  %s2 = inlined_call_operand.hbm [shape: f32[1,128], index: 2, kind: input, shape index: {}]
  %s3 = inlined_call_operand.hbm [shape: f32[1,128], index: 3, kind: input, shape index: {}]
  %s4 = inlined_call_operand.hbm [shape: f32[1,128], index: 4, kind: input, shape index: {}]
  %s5 = inlined_call_operand.vmem [shape: f32[2,8,128], index: 5, kind: output, shape index: {}]
  %s6 = sld [smem:[#allocation0]]
  $region69: #{encoder_forward.6} parent=0
    _
  %s8 = ssub.s32 1, %s6
  %s9 = scalar_select 0, %s8, %s6
  $region1: #{encoder_forward.6} parent=0
    #allocation2 [shape = 'u8[327680]{0}', space=vmem, size = 0x50000, scoped, tag = 'input window, operand 1, single buffered']
    #allocation3 [shape = 's32[2]{0}', space=sflag, size = 0x8, scoped, tag = 'scoped memory for encoder_forward.6']
    #allocation4 [shape = 'u8[512]{0}', space=vmem, size = 0x400, scoped, tag = 'input window, operand 2, single buffered']
    #allocation5 [shape = 's32[1]{0}', space=sflag, size = 0x4, scoped, tag = 'scoped memory for encoder_forward.6']
    #allocation6 [shape = 'u8[512]{0}', space=vmem, size = 0x400, scoped, tag = 'input window, operand 3, single buffered']
    #allocation7 [shape = 'u8[512]{0}', space=vmem, size = 0x400, scoped, tag = 'input window, operand 4, single buffered']
    #allocation8 [shape = 's32[1]{0}', space=sflag, size = 0x4, scoped, tag = 'scoped memory for encoder_forward.6']
    %10 = vsyncpa [#allocation3], 0
    %11 = vsyncpa [#allocation5], 0
    %12 = vsyncpa [#allocation8], 0
    loop: start=0, step=1, limit=4
    $region2: #{encoder_forward.6} parent=1 // loop_pre_header
      _
    $region3: #{encoder_forward.6} parent=1 // loop_header
      %s14 = sphi 0, %s18
      %p15 = scmp.ge.s32.totalorder %s14, 4
      %s24 = sphi 0, %s26
      %s27 = sphi 0, %s24
      %s28 = sphi 0, %s27
      %s44 = sphi 0, %s28
      %s48 = sphi 0, %s48
      %s50 = sphi 0, %s48
      %s51 = sphi 0, %s50
      %s65 = sphi 0, %s51
      %s69 = sphi 0, %s69
      %s71 = sphi 0, %s69
      %s72 = sphi 0, %s71
      %s86 = sphi 0, %s72
      %s90 = sphi 0, %s90
      %s92 = sphi 0, %s90
      %s93 = sphi 0, %s92
      %s107 = sphi 0, %s93
      %s111 = sphi 0, %s111
      %s113 = sphi 0, %s111
      %s114 = sphi 0, %s113
      %s128 = sphi 0, %s114
      %s134 = sphi 0, %s136
      %s137 = sphi 0, %s134
      %s138 = sphi 0, %s137
      %s154 = sphi 0, %s138
    $region4: #{encoder_forward.6} parent=1 // loop_header_branch
      %17 = sbr.rel (%p15) target = $region8
    $region5: #{encoder_forward.6} parent=1 // loop_body
      %s19 = ssub.s32 %s14, 1
      %s20 = ssub.s32 %s14, 2
      %s21 = sadd.s32 %s14, 1
      %s22 = ssub.s32 %s14, %s21
      %p23 = scmp.eq.s32.totalorder %s22, 0
      %s25 = sadd.s32 %s24, 1
      %s26 = scalar_select %p23, %s24, %s25
      %p29 = pneg %p23
      %p30 = scmp.eq.s32.totalorder %s14, 1
      %p31 = por %p29, %p30
      %p32 = scmp.ne.s32.totalorder %s24, %s27
      %p33 = scmp.eq.s32.totalorder %s14, 0
      %p34 = por %p32, %p33
      %p35 = scmp.ne.s32.totalorder %s24, %s27
      %p36 = scmp.eq.s32.totalorder %s19, 1
      %p37 = por %p35, %p36
      %p38 = scmp.ne.s32.totalorder %s27, %s28
      %p39 = scmp.eq.s32.totalorder %s19, 0
      %p40 = por %p38, %p39
      %p41 = scmp.ne.s32.totalorder %s27, %s28
      %p42 = scmp.eq.s32.totalorder %s20, 1
      %p43 = por %p41, %p42
      %p45 = scmp.ne.s32.totalorder %s28, %s44
      %p46 = scmp.eq.s32.totalorder %s20, 0
      %p47 = por %p45, %p46
      %s49 = sadd.s32 %s48, 1
      %p52 = scmp.eq.s32.totalorder %s14, 1
      %p53 = scmp.ne.s32.totalorder %s48, %s50
      %p54 = scmp.eq.s32.totalorder %s14, 0
      %p55 = por %p53, %p54
      %p56 = scmp.ne.s32.totalorder %s48, %s50
      %p57 = scmp.eq.s32.totalorder %s19, 1
      %p58 = por %p56, %p57
      %p59 = scmp.ne.s32.totalorder %s50, %s51
      %p60 = scmp.eq.s32.totalorder %s19, 0
      %p61 = por %p59, %p60
      %p62 = scmp.ne.s32.totalorder %s50, %s51
      %p63 = scmp.eq.s32.totalorder %s20, 1
      %p64 = por %p62, %p63
      %p66 = scmp.ne.s32.totalorder %s51, %s65
      %p67 = scmp.eq.s32.totalorder %s20, 0
      %p68 = por %p66, %p67
      %s70 = sadd.s32 %s69, 1
      %p73 = scmp.eq.s32.totalorder %s14, 1
      %p74 = scmp.ne.s32.totalorder %s69, %s71
      %p75 = scmp.eq.s32.totalorder %s14, 0
      %p76 = por %p74, %p75
      %p77 = scmp.ne.s32.totalorder %s69, %s71
      %p78 = scmp.eq.s32.totalorder %s19, 1
      %p79 = por %p77, %p78
      %p80 = scmp.ne.s32.totalorder %s71, %s72
      %p81 = scmp.eq.s32.totalorder %s19, 0
      %p82 = por %p80, %p81
      %p83 = scmp.ne.s32.totalorder %s71, %s72
      %p84 = scmp.eq.s32.totalorder %s20, 1
      %p85 = por %p83, %p84
      %p87 = scmp.ne.s32.totalorder %s72, %s86
      %p88 = scmp.eq.s32.totalorder %s20, 0
      %p89 = por %p87, %p88
      %s91 = sadd.s32 %s90, 1
      %p94 = scmp.eq.s32.totalorder %s14, 1
      %p95 = scmp.ne.s32.totalorder %s90, %s92
      %p96 = scmp.eq.s32.totalorder %s14, 0
      %p97 = por %p95, %p96
      %p98 = scmp.ne.s32.totalorder %s90, %s92
      %p99 = scmp.eq.s32.totalorder %s19, 1
      %p100 = por %p98, %p99
      %p101 = scmp.ne.s32.totalorder %s92, %s93
      %p102 = scmp.eq.s32.totalorder %s19, 0
      %p103 = por %p101, %p102
      %p104 = scmp.ne.s32.totalorder %s92, %s93
      %p105 = scmp.eq.s32.totalorder %s20, 1
      %p106 = por %p104, %p105
      %p108 = scmp.ne.s32.totalorder %s93, %s107
      %p109 = scmp.eq.s32.totalorder %s20, 0
      %p110 = por %p108, %p109
      %s112 = sadd.s32 %s111, 1
      %p115 = scmp.eq.s32.totalorder %s14, 1
      %p116 = scmp.ne.s32.totalorder %s111, %s113
      %p117 = scmp.eq.s32.totalorder %s14, 0
      %p118 = por %p116, %p117
      %p119 = scmp.ne.s32.totalorder %s111, %s113
      %p120 = scmp.eq.s32.totalorder %s19, 1
      %p121 = por %p119, %p120
      %p122 = scmp.ne.s32.totalorder %s113, %s114
      %p123 = scmp.eq.s32.totalorder %s19, 0
      %p124 = por %p122, %p123
      %p125 = scmp.ne.s32.totalorder %s113, %s114
      %p126 = scmp.eq.s32.totalorder %s20, 1
      %p127 = por %p125, %p126
      %p129 = scmp.ne.s32.totalorder %s114, %s128
      %p130 = scmp.eq.s32.totalorder %s20, 0
      %p131 = por %p129, %p130
      %s132 = ssub.s32 %s14, %s21
      %p133 = scmp.eq.s32.totalorder %s132, 0
      %s135 = sadd.s32 %s134, 1
      %s136 = scalar_select %p133, %s134, %s135
      %p139 = pneg %p133
      %p140 = scmp.eq.s32.totalorder %s14, 1
      %p141 = por %p139, %p140
      %p142 = scmp.ne.s32.totalorder %s134, %s137
      %p143 = scmp.eq.s32.totalorder %s14, 0
      %p144 = por %p142, %p143
      %p145 = scmp.ne.s32.totalorder %s134, %s137
      %p146 = scmp.eq.s32.totalorder %s19, 1
      %p147 = por %p145, %p146
      %p148 = scmp.ne.s32.totalorder %s137, %s138
      %p149 = scmp.eq.s32.totalorder %s19, 0
      %p150 = por %p148, %p149
      %p151 = scmp.ne.s32.totalorder %s137, %s138
      %p152 = scmp.eq.s32.totalorder %s20, 1
      %p153 = por %p151, %p152
      %p155 = scmp.ne.s32.totalorder %s138, %s154
      %p156 = scmp.eq.s32.totalorder %s20, 0
      %p157 = por %p155, %p156
      %p158 = scmp.le.s32.totalorder 1, %s14
      %p159 = scmp.lt.s32.totalorder %s14, 3
      %p160 = pnand %p158, %p159
      %p161 = pneg %p160
      // Predicated region
      $region9: #{encoder_forward.6} parent=5 // pred_check
        _
      $region10: #{encoder_forward.6} parent=5 // pred_check_branch
        %163 = sbr.rel (%p160) target = $region12
      $region11: #{encoder_forward.6} parent=5 // pred_region
        %s164 = ssub.s32 %s14, 1
        // Predicated region
        $region13: #{encoder_forward.6} parent=11 // pred_check
          %p165 = pneg %p61
        $region14: #{encoder_forward.6} parent=11 // pred_check_branch
          %167 = sbr.rel (%p165) target = $region16
        $region15: #{encoder_forward.6} parent=11 // pred_region
          %s169 = ssub.s32 10240, 10240
          %170 = vsyncadd [#allocation3], %s169
          %s171 = sshll.u32 [#allocation2], 4
          %s172 = int_to_ptr.vmem [resolvable:$true] %s171
          %177 = dma.hbm_to_vmem [thread:$0]  %s1, 10240, %s172, [#allocation3], 128, 128, 8
        $region16: #{encoder_forward.6} parent=11 // pred_fallthru
          _
        // Predicated region
        $region17: #{encoder_forward.6} parent=11 // pred_check
          %p178 = pneg %p82
        $region18: #{encoder_forward.6} parent=11 // pred_check_branch
          %180 = sbr.rel (%p178) target = $region20
        $region19: #{encoder_forward.6} parent=11 // pred_region
          %s182 = ssub.s32 16, 16
          %183 = vsyncadd [#allocation5], %s182
          %s185 = sshll.u32 [#allocation4], 4
          %s186 = int_to_ptr.vmem [resolvable:$true] %s185
          %188 = dma.hbm_to_vmem [thread:$0]  %s2, 16, %s186, [#allocation5]
        $region20: #{encoder_forward.6} parent=11 // pred_fallthru
          _
        // Predicated region
        $region21: #{encoder_forward.6} parent=11 // pred_check
          %p189 = pneg %p103
        $region22: #{encoder_forward.6} parent=11 // pred_check_branch
          %191 = sbr.rel (%p189) target = $region24
        $region23: #{encoder_forward.6} parent=11 // pred_region
          %s193 = ssub.s32 16, 16
          %194 = vsyncadd [#allocation5], %s193
          %s196 = sshll.u32 [#allocation6], 4
          %s197 = int_to_ptr.vmem [resolvable:$true] %s196
          %199 = dma.hbm_to_vmem [thread:$0]  %s3, 16, %s197, [#allocation5]
        $region24: #{encoder_forward.6} parent=11 // pred_fallthru
          _
        // Predicated region
        $region25: #{encoder_forward.6} parent=11 // pred_check
          %p200 = pneg %p124
        $region26: #{encoder_forward.6} parent=11 // pred_check_branch
          %202 = sbr.rel (%p200) target = $region28
        $region27: #{encoder_forward.6} parent=11 // pred_region
          %s204 = ssub.s32 16, 16
          %205 = vsyncadd [#allocation8], %s204
          %s207 = sshll.u32 [#allocation7], 4
          %s208 = int_to_ptr.vmem [resolvable:$true] %s207
          %210 = dma.hbm_to_vmem [thread:$0]  %s4, 16, %s208, [#allocation8]
        $region28: #{encoder_forward.6} parent=11 // pred_fallthru
          _
      $region12: #{encoder_forward.6} parent=5 // pred_fallthru
        _
      %p211 = scmp.lt.s32.totalorder %s14, 2
      // Predicated region
      $region29: #{encoder_forward.6} parent=5 // pred_check
        %p212 = pneg %p211
      $region30: #{encoder_forward.6} parent=5 // pred_check_branch
        %214 = sbr.rel (%p212) target = $region32
      $region31: #{encoder_forward.6} parent=5 // pred_region
        // Predicated region
        $region33: #{encoder_forward.6} parent=31 // pred_check
          %p215 = pneg %p34
        $region34: #{encoder_forward.6} parent=31 // pred_check_branch
          %217 = sbr.rel (%p215) target = $region36
        $region35: #{encoder_forward.6} parent=31 // pred_region
          %p218 = scmp.lt.s32.totalorder %s14, 1
          %s219 = scalar_select %p218, %s14, 1
          %s220 = smul.addr %s219, 2
          %s221 = smul.addr %s220, 8
          %s222 = scalar_lea.vmem %s0, %s221
        $region36: #{encoder_forward.6} parent=31 // pred_fallthru
          _
      $region32: #{encoder_forward.6} parent=5 // pred_fallthru
        _
      %p223 = scmp.le.s32.totalorder 1, %s14
      %p224 = scmp.lt.s32.totalorder %s14, 3
      %p225 = pnand %p223, %p224
      %p226 = pneg %p225
      // Predicated region
      $region37: #{encoder_forward.6} parent=5 // pred_check
        _
      $region38: #{encoder_forward.6} parent=5 // pred_check_branch
        %228 = sbr.rel (%p225) target = $region40
      $region39: #{encoder_forward.6} parent=5 // pred_region
        %s229 = ssub.s32 %s14, 1
        // Predicated region
        $region41: #{encoder_forward.6} parent=39 // pred_check
          %p230 = pneg %p61
        $region42: #{encoder_forward.6} parent=39 // pred_check_branch
          %232 = sbr.rel (%p230) target = $region44
        $region43: #{encoder_forward.6} parent=39 // pred_region
          %233 = dma.done [#allocation3], 10240
        $region44: #{encoder_forward.6} parent=39 // pred_fallthru
          _
        // Predicated region
        $region45: #{encoder_forward.6} parent=39 // pred_check
          %p234 = pneg %p82
        $region46: #{encoder_forward.6} parent=39 // pred_check_branch
          %236 = sbr.rel (%p234) target = $region48
        $region47: #{encoder_forward.6} parent=39 // pred_region
          %237 = dma.done [#allocation5], 16
        $region48: #{encoder_forward.6} parent=39 // pred_fallthru
          _
        // Predicated region
        $region49: #{encoder_forward.6} parent=39 // pred_check
          %p238 = pneg %p103
        $region50: #{encoder_forward.6} parent=39 // pred_check_branch
          %240 = sbr.rel (%p238) target = $region52
        $region51: #{encoder_forward.6} parent=39 // pred_region
          %241 = dma.done [#allocation5], 16
        $region52: #{encoder_forward.6} parent=39 // pred_fallthru
          _
        // Predicated region
        $region53: #{encoder_forward.6} parent=39 // pred_check
          %p242 = pneg %p124
        $region54: #{encoder_forward.6} parent=39 // pred_check_branch
          %244 = sbr.rel (%p242) target = $region56
        $region55: #{encoder_forward.6} parent=39 // pred_region
          %245 = dma.done [#allocation8], 16
        $region56: #{encoder_forward.6} parent=39 // pred_fallthru
          _
        %p246 = scmp.lt.s32.totalorder %s19, 1
        %s247 = scalar_select %p246, %s19, 1
        %s248 = smul.addr %s247, 2
        %s249 = smul.addr %s248, 8
        %s250 = scalar_lea.vmem %s0, %s249
        %p251 = pneg %p40
        %p252 = pneg %p37
        %p253 = pneg %p61
        %p254 = pneg %p58
        %p255 = pneg %p82
        %p256 = pneg %p79
        %p257 = pneg %p103
        %p258 = pneg %p100
        %p259 = pneg %p124
        %p260 = pneg %p121
        %p261 = pneg %p150
        %p262 = pneg %p147
        %p263 = scmp.lt.s32.totalorder %s19, 1
        %s264 = scalar_select %p263, %s19, 1
        %s265 = smul.addr %s264, 8
        %s266 = scalar_lea.vmem %s5, %s265
        %p267 = scmp.lt.s32.totalorder %s19, 1
        %s268 = scalar_select %p267, %s19, 1
        %s269 = smul.addr %s268, 2
        %s270 = smul.addr %s269, 8
        %s271 = scalar_lea.vmem %s0, %s270
        %p272 = scmp.lt.s32.totalorder %s19, 1
        %s273 = scalar_select %p272, %s19, 1
        %s274 = smul.addr %s273, 8
        %s275 = scalar_lea.vmem %s5, %s274
        %v276 = vld [vmem:[%s271] sm:$0xff]
        %v277 = vld [vmem:[%s271 + $0x8] sm:$0xf]
        %v278 = vld [vmem:[#allocation2] sm:$0xff]
        %v279 = vld [vmem:[#allocation2 + $0x8] sm:$0xff]
        %v280 = vld [vmem:[#allocation2 + $0x10] sm:$0xff]
        %v281 = vld [vmem:[#allocation2 + $0x18] sm:$0xff]
        %v282 = vld [vmem:[#allocation2 + $0x20] sm:$0xff]
        %v283 = vld [vmem:[#allocation2 + $0x28] sm:$0xff]
        %v284 = vld [vmem:[#allocation2 + $0x30] sm:$0xff]
        %v285 = vld [vmem:[#allocation2 + $0x38] sm:$0xff]
        %v286 = vld [vmem:[#allocation2 + $0x40] sm:$0xff]
        %v287 = vld [vmem:[#allocation2 + $0x48] sm:$0xff]
        %v288 = vld [vmem:[#allocation2 + $0x50] sm:$0xff]
        %v289 = vld [vmem:[#allocation2 + $0x58] sm:$0xff]
        %v290 = vld [vmem:[#allocation2 + $0x60] sm:$0xff]
        %v291 = vld [vmem:[#allocation2 + $0x68] sm:$0xff]
        %v292 = vld [vmem:[#allocation2 + $0x70] sm:$0xff]
        %v293 = vld [vmem:[#allocation2 + $0x78] sm:$0xff]
        %s294 = scalar_lea.vmem [#allocation2], 128
        %v295 = vld [vmem:[%s294] sm:$0xff]
        %v296 = vld [vmem:[%s294 + $0x8] sm:$0xff]
        %v297 = vld [vmem:[%s294 + $0x10] sm:$0xff]
        %v298 = vld [vmem:[%s294 + $0x18] sm:$0xff]
        %v299 = vld [vmem:[%s294 + $0x20] sm:$0xff]
        %v300 = vld [vmem:[%s294 + $0x28] sm:$0xff]
        %v301 = vld [vmem:[%s294 + $0x30] sm:$0xff]
        %v302 = vld [vmem:[%s294 + $0x38] sm:$0xff]
        %v303 = vld [vmem:[%s294 + $0x40] sm:$0xff]
        %v304 = vld [vmem:[%s294 + $0x48] sm:$0xff]
        %v305 = vld [vmem:[%s294 + $0x50] sm:$0xff]
        %v306 = vld [vmem:[%s294 + $0x58] sm:$0xff]
        %v307 = vld [vmem:[%s294 + $0x60] sm:$0xff]
        %v308 = vld [vmem:[%s294 + $0x68] sm:$0xff]
        %v309 = vld [vmem:[%s294 + $0x70] sm:$0xff]
        %v310 = vld [vmem:[%s294 + $0x78] sm:$0xff]
        %vm313 = vcmask 1046528
        %v314 = vrot.slane %v276, 1
        %v315 = vrot.slane %v277, 1
        %v316 = vsel %vm313, %v314, %v315
        %318 = vmatprep.subr.mxu0 0.0
        %319 = vmatpush1.msra.mxu0 %v295
        %320 = vmatprep.subr.mxu0 0.0
        %321 = vmatpush1.msra.mxu0 %v296
        %322 = vmatprep.subr.mxu0 0.0
        %323 = vmatpush1.msra.mxu0 %v297
        %324 = vmatprep.subr.mxu0 0.0
        %325 = vmatpush1.msra.mxu0 %v298
        %326 = vmatprep.subr.mxu0 0.0
        %327 = vmatpush1.msra.mxu0 %v299
        %328 = vmatprep.subr.mxu0 0.0
        %329 = vmatpush1.msra.mxu0 %v300
        %330 = vmatprep.subr.mxu0 0.0
        %331 = vmatpush1.msra.mxu0 %v301
        %332 = vmatprep.subr.mxu0 0.0
        %333 = vmatpush1.msra.mxu0 %v302
        %334 = vmatprep.subr.mxu0 0.0
        %335 = vmatpush1.msra.mxu0 %v303
        %336 = vmatprep.subr.mxu0 0.0
        %337 = vmatpush1.msra.mxu0 %v304
        %338 = vmatprep.subr.mxu0 0.0
        %339 = vmatpush1.msra.mxu0 %v305
        %340 = vmatprep.subr.mxu0 0.0
        %341 = vmatpush1.msra.mxu0 %v306
        %342 = vmatprep.subr.mxu0 0.0
        %343 = vmatpush1.msra.mxu0 %v307
        %344 = vmatprep.subr.mxu0 0.0
        %345 = vmatpush1.msra.mxu0 %v308
        %346 = vmatprep.subr.mxu0 0.0
        %347 = vmatpush1.msra.mxu0 %v309
        %348 = vmatprep.subr.mxu0 0.0
        %349 = vmatpush1.msra.mxu0 %v310
        %350 = vmatprep.subr.mxu0 0.0
        %351 = vmatpush1.msra.mxu0 0.0
        %352 = vmatprep.subr.mxu0 0.0
        %353 = vmatpush1.msra.mxu0 0.0
        %354 = vmatprep.subr.mxu0 0.0
        %355 = vmatpush1.msra.mxu0 0.0
        %356 = vmatprep.subr.mxu0 0.0
        %357 = vmatpush1.msra.mxu0 0.0
        %358 = vmatprep.subr.mxu0 0.0
        %359 = vmatpush1.msra.mxu0 0.0
        %360 = vmatprep.subr.mxu0 0.0
        %361 = vmatpush1.msra.mxu0 0.0
        %362 = vmatprep.subr.mxu0 0.0
        %363 = vmatpush1.msra.mxu0 0.0
        %364 = vmatprep.subr.mxu0 0.0
        %365 = vmatpush1.msra.mxu0 0.0
        %366 = vmatprep.subr.mxu0 0.0
        %367 = vmatpush1.msra.mxu0 0.0
        %368 = vmatprep.subr.mxu0 0.0
        %369 = vmatpush1.msra.mxu0 0.0
        %370 = vmatprep.subr.mxu0 0.0
        %371 = vmatpush1.msra.mxu0 0.0
        %372 = vmatprep.subr.mxu0 0.0
        %373 = vmatpush1.msra.mxu0 0.0
        %374 = vmatprep.subr.mxu0 0.0
        %375 = vmatpush1.msra.mxu0 0.0
        %376 = vmatprep.subr.mxu0 0.0
        %377 = vmatpush1.msra.mxu0 0.0
        %378 = vmatprep.subr.mxu0 0.0
        %379 = vmatpush1.msra.mxu0 0.0
        %380 = vmatprep.subr.mxu0 0.0
        %381 = vmatpush1.msra.mxu0 0.0
        %382 = vmatprep.mubr.f32.mxu0 0.0
        %383 = vmatmul.mubr.f32.gmra.mrb[0].mxu0 %v316
        %v384 = vpop.f32.mrb[0].mxu0
        %v385 = vadd.f32 0.0, %v384
        %v386 = vpop.f32.mrb[0].mxu0
        %387 = vdwg.mxu0
        %388 = vmatprep.subr.mxu0 0.0
        %389 = vmatpush1.msra.mxu0 %v278
        %390 = vmatprep.subr.mxu0 0.0
        %391 = vmatpush1.msra.mxu0 %v279
        %392 = vmatprep.subr.mxu0 0.0
        %393 = vmatpush1.msra.mxu0 %v280
        %394 = vmatprep.subr.mxu0 0.0
        %395 = vmatpush1.msra.mxu0 %v281
        %396 = vmatprep.subr.mxu0 0.0
        %397 = vmatpush1.msra.mxu0 %v282
        %398 = vmatprep.subr.mxu0 0.0
        %399 = vmatpush1.msra.mxu0 %v283
        %400 = vmatprep.subr.mxu0 0.0
        %401 = vmatpush1.msra.mxu0 %v284
        %402 = vmatprep.subr.mxu0 0.0
        %403 = vmatpush1.msra.mxu0 %v285
        %404 = vmatprep.subr.mxu0 0.0
        %405 = vmatpush1.msra.mxu0 %v286
        %406 = vmatprep.subr.mxu0 0.0
        %407 = vmatpush1.msra.mxu0 %v287
        %408 = vmatprep.subr.mxu0 0.0
        %409 = vmatpush1.msra.mxu0 %v288
        %410 = vmatprep.subr.mxu0 0.0
        %411 = vmatpush1.msra.mxu0 %v289
        %412 = vmatprep.subr.mxu0 0.0
        %413 = vmatpush1.msra.mxu0 %v290
        %414 = vmatprep.subr.mxu0 0.0
        %415 = vmatpush1.msra.mxu0 %v291
        %416 = vmatprep.subr.mxu0 0.0
        %417 = vmatpush1.msra.mxu0 %v292
        %418 = vmatprep.subr.mxu0 0.0
        %419 = vmatpush1.msra.mxu0 %v293
        %420 = vmatprep.subr.mxu0 0.0
        %421 = vmatpush1.msra.mxu0 0.0
        %422 = vmatprep.subr.mxu0 0.0
        %423 = vmatpush1.msra.mxu0 0.0
        %424 = vmatprep.subr.mxu0 0.0
        %425 = vmatpush1.msra.mxu0 0.0
        %426 = vmatprep.subr.mxu0 0.0
        %427 = vmatpush1.msra.mxu0 0.0
        %428 = vmatprep.subr.mxu0 0.0
        %429 = vmatpush1.msra.mxu0 0.0
        %430 = vmatprep.subr.mxu0 0.0
        %431 = vmatpush1.msra.mxu0 0.0
        %432 = vmatprep.subr.mxu0 0.0
        %433 = vmatpush1.msra.mxu0 0.0
        %434 = vmatprep.subr.mxu0 0.0
        %435 = vmatpush1.msra.mxu0 0.0
        %436 = vmatprep.subr.mxu0 0.0
        %437 = vmatpush1.msra.mxu0 0.0
        %438 = vmatprep.subr.mxu0 0.0
        %439 = vmatpush1.msra.mxu0 0.0
        %440 = vmatprep.subr.mxu0 0.0
        %441 = vmatpush1.msra.mxu0 0.0
        %442 = vmatprep.subr.mxu0 0.0
        %443 = vmatpush1.msra.mxu0 0.0
        %444 = vmatprep.subr.mxu0 0.0
        %445 = vmatpush1.msra.mxu0 0.0
        %446 = vmatprep.subr.mxu0 0.0
        %447 = vmatpush1.msra.mxu0 0.0
        %448 = vmatprep.subr.mxu0 0.0
        %449 = vmatpush1.msra.mxu0 0.0
        %450 = vmatprep.subr.mxu0 0.0
        %451 = vmatpush1.msra.mxu0 0.0
        %452 = vmatprep.mubr.f32.mxu0 0.0
        %453 = vmatmul.mubr.f32.gmra.mrb[0].mxu0 %v276
        %v454 = vpop.f32.mrb[0].mxu0
        %v455 = vadd.f32 %v385, %v454
        %v456 = vpop.f32.mrb[0].mxu0
        %457 = vdwg.mxu0
        %s458 = scalar_lea.vmem [#allocation2], 256
        %v459 = vld [vmem:[%s458] sm:$0xff]
        %v460 = vld [vmem:[%s458 + $0x8] sm:$0xff]
        %v461 = vld [vmem:[%s458 + $0x10] sm:$0xff]
        %v462 = vld [vmem:[%s458 + $0x18] sm:$0xff]
        %v463 = vld [vmem:[%s458 + $0x20] sm:$0xff]
        %v464 = vld [vmem:[%s458 + $0x28] sm:$0xff]
        %v465 = vld [vmem:[%s458 + $0x30] sm:$0xff]
        %v466 = vld [vmem:[%s458 + $0x38] sm:$0xff]
        %v467 = vld [vmem:[%s458 + $0x40] sm:$0xff]
        %v468 = vld [vmem:[%s458 + $0x48] sm:$0xff]
        %v469 = vld [vmem:[%s458 + $0x50] sm:$0xff]
        %v470 = vld [vmem:[%s458 + $0x58] sm:$0xff]
        %v471 = vld [vmem:[%s458 + $0x60] sm:$0xff]
        %v472 = vld [vmem:[%s458 + $0x68] sm:$0xff]
        %v473 = vld [vmem:[%s458 + $0x70] sm:$0xff]
        %v474 = vld [vmem:[%s458 + $0x78] sm:$0xff]
        %vm475 = vcmask 1045504
        %v476 = vrot.slane %v276, 2
        %v477 = vrot.slane %v277, 2
        %v478 = vsel %vm475, %v476, %v477
        %480 = vmatprep.subr.mxu0 0.0
        %481 = vmatpush1.msra.mxu0 %v459
        %482 = vmatprep.subr.mxu0 0.0
        %483 = vmatpush1.msra.mxu0 %v460
        %484 = vmatprep.subr.mxu0 0.0
        %485 = vmatpush1.msra.mxu0 %v461
        %486 = vmatprep.subr.mxu0 0.0
        %487 = vmatpush1.msra.mxu0 %v462
        %488 = vmatprep.subr.mxu0 0.0
        %489 = vmatpush1.msra.mxu0 %v463
        %490 = vmatprep.subr.mxu0 0.0
        %491 = vmatpush1.msra.mxu0 %v464
        %492 = vmatprep.subr.mxu0 0.0
        %493 = vmatpush1.msra.mxu0 %v465
        %494 = vmatprep.subr.mxu0 0.0
        %495 = vmatpush1.msra.mxu0 %v466
        %496 = vmatprep.subr.mxu0 0.0
        %497 = vmatpush1.msra.mxu0 %v467
        %498 = vmatprep.subr.mxu0 0.0
        %499 = vmatpush1.msra.mxu0 %v468
        %500 = vmatprep.subr.mxu0 0.0
        %501 = vmatpush1.msra.mxu0 %v469
        %502 = vmatprep.subr.mxu0 0.0
        %503 = vmatpush1.msra.mxu0 %v470
        %504 = vmatprep.subr.mxu0 0.0
        %505 = vmatpush1.msra.mxu0 %v471
        %506 = vmatprep.subr.mxu0 0.0
        %507 = vmatpush1.msra.mxu0 %v472
        %508 = vmatprep.subr.mxu0 0.0
        %509 = vmatpush1.msra.mxu0 %v473
        %510 = vmatprep.subr.mxu0 0.0
        %511 = vmatpush1.msra.mxu0 %v474
        %512 = vmatprep.subr.mxu0 0.0
        %513 = vmatpush1.msra.mxu0 0.0
        %514 = vmatprep.subr.mxu0 0.0
        %515 = vmatpush1.msra.mxu0 0.0
        %516 = vmatprep.subr.mxu0 0.0
        %517 = vmatpush1.msra.mxu0 0.0
        %518 = vmatprep.subr.mxu0 0.0
        %519 = vmatpush1.msra.mxu0 0.0
        %520 = vmatprep.subr.mxu0 0.0
        %521 = vmatpush1.msra.mxu0 0.0
        %522 = vmatprep.subr.mxu0 0.0
        %523 = vmatpush1.msra.mxu0 0.0
        %524 = vmatprep.subr.mxu0 0.0
        %525 = vmatpush1.msra.mxu0 0.0
        %526 = vmatprep.subr.mxu0 0.0
        %527 = vmatpush1.msra.mxu0 0.0
        %528 = vmatprep.subr.mxu0 0.0
        %529 = vmatpush1.msra.mxu0 0.0
        %530 = vmatprep.subr.mxu0 0.0
        %531 = vmatpush1.msra.mxu0 0.0
        %532 = vmatprep.subr.mxu0 0.0
        %533 = vmatpush1.msra.mxu0 0.0
        %534 = vmatprep.subr.mxu0 0.0
        %535 = vmatpush1.msra.mxu0 0.0
        %536 = vmatprep.subr.mxu0 0.0
        %537 = vmatpush1.msra.mxu0 0.0
        %538 = vmatprep.subr.mxu0 0.0
        %539 = vmatpush1.msra.mxu0 0.0
        %540 = vmatprep.subr.mxu0 0.0
        %541 = vmatpush1.msra.mxu0 0.0
        %542 = vmatprep.subr.mxu0 0.0
        %543 = vmatpush1.msra.mxu0 0.0
        %544 = vmatprep.mubr.f32.mxu0 0.0
        %545 = vmatmul.mubr.f32.gmra.mrb[0].mxu0 %v478
        %v546 = vpop.f32.mrb[0].mxu0
        %v547 = vadd.f32 0.0, %v546
        %v548 = vpop.f32.mrb[0].mxu0
        %549 = vdwg.mxu0
        %v550 = vadd.f32 %v455, %v547
        %s551 = scalar_lea.vmem [#allocation2], 384
        %v552 = vld [vmem:[%s551] sm:$0xff]
        %v553 = vld [vmem:[%s551 + $0x8] sm:$0xff]
        %v554 = vld [vmem:[%s551 + $0x10] sm:$0xff]
        %v555 = vld [vmem:[%s551 + $0x18] sm:$0xff]
        %v556 = vld [vmem:[%s551 + $0x20] sm:$0xff]
        %v557 = vld [vmem:[%s551 + $0x28] sm:$0xff]
        %v558 = vld [vmem:[%s551 + $0x30] sm:$0xff]
        %v559 = vld [vmem:[%s551 + $0x38] sm:$0xff]
        %v560 = vld [vmem:[%s551 + $0x40] sm:$0xff]
        %v561 = vld [vmem:[%s551 + $0x48] sm:$0xff]
        %v562 = vld [vmem:[%s551 + $0x50] sm:$0xff]
        %v563 = vld [vmem:[%s551 + $0x58] sm:$0xff]
        %v564 = vld [vmem:[%s551 + $0x60] sm:$0xff]
        %v565 = vld [vmem:[%s551 + $0x68] sm:$0xff]
        %v566 = vld [vmem:[%s551 + $0x70] sm:$0xff]
        %v567 = vld [vmem:[%s551 + $0x78] sm:$0xff]
        %vm568 = vcmask 1044480
        %v569 = vrot.slane %v276, 3
        %v570 = vrot.slane %v277, 3
        %v571 = vsel %vm568, %v569, %v570
        %573 = vmatprep.subr.mxu0 0.0
        %574 = vmatpush1.msra.mxu0 %v552
        %575 = vmatprep.subr.mxu0 0.0
        %576 = vmatpush1.msra.mxu0 %v553
        %577 = vmatprep.subr.mxu0 0.0
        %578 = vmatpush1.msra.mxu0 %v554
        %579 = vmatprep.subr.mxu0 0.0
        %580 = vmatpush1.msra.mxu0 %v555
        %581 = vmatprep.subr.mxu0 0.0
        %582 = vmatpush1.msra.mxu0 %v556
        %583 = vmatprep.subr.mxu0 0.0
        %584 = vmatpush1.msra.mxu0 %v557
        %585 = vmatprep.subr.mxu0 0.0
        %586 = vmatpush1.msra.mxu0 %v558
        %587 = vmatprep.subr.mxu0 0.0
        %588 = vmatpush1.msra.mxu0 %v559
        %589 = vmatprep.subr.mxu0 0.0
        %590 = vmatpush1.msra.mxu0 %v560
        %591 = vmatprep.subr.mxu0 0.0
        %592 = vmatpush1.msra.mxu0 %v561
        %593 = vmatprep.subr.mxu0 0.0
        %594 = vmatpush1.msra.mxu0 %v562
        %595 = vmatprep.subr.mxu0 0.0
        %596 = vmatpush1.msra.mxu0 %v563
        %597 = vmatprep.subr.mxu0 0.0
        %598 = vmatpush1.msra.mxu0 %v564
        %599 = vmatprep.subr.mxu0 0.0
        %600 = vmatpush1.msra.mxu0 %v565
        %601 = vmatprep.subr.mxu0 0.0
        %602 = vmatpush1.msra.mxu0 %v566
        %603 = vmatprep.subr.mxu0 0.0
        %604 = vmatpush1.msra.mxu0 %v567
        %605 = vmatprep.subr.mxu0 0.0
        %606 = vmatpush1.msra.mxu0 0.0
        %607 = vmatprep.subr.mxu0 0.0
        %608 = vmatpush1.msra.mxu0 0.0
        %609 = vmatprep.subr.mxu0 0.0
        %610 = vmatpush1.msra.mxu0 0.0
        %611 = vmatprep.subr.mxu0 0.0
        %612 = vmatpush1.msra.mxu0 0.0
        %613 = vmatprep.subr.mxu0 0.0
        %614 = vmatpush1.msra.mxu0 0.0
        %615 = vmatprep.subr.mxu0 0.0
        %616 = vmatpush1.msra.mxu0 0.0
        %617 = vmatprep.subr.mxu0 0.0
        %618 = vmatpush1.msra.mxu0 0.0
        %619 = vmatprep.subr.mxu0 0.0
        %620 = vmatpush1.msra.mxu0 0.0
        %621 = vmatprep.subr.mxu0 0.0
        %622 = vmatpush1.msra.mxu0 0.0
        %623 = vmatprep.subr.mxu0 0.0
        %624 = vmatpush1.msra.mxu0 0.0
        %625 = vmatprep.subr.mxu0 0.0
        %626 = vmatpush1.msra.mxu0 0.0
        %627 = vmatprep.subr.mxu0 0.0
        %628 = vmatpush1.msra.mxu0 0.0
        %629 = vmatprep.subr.mxu0 0.0
        %630 = vmatpush1.msra.mxu0 0.0
        %631 = vmatprep.subr.mxu0 0.0
        %632 = vmatpush1.msra.mxu0 0.0
        %633 = vmatprep.subr.mxu0 0.0
        %634 = vmatpush1.msra.mxu0 0.0
        %635 = vmatprep.subr.mxu0 0.0
        %636 = vmatpush1.msra.mxu0 0.0
        %637 = vmatprep.mubr.f32.mxu0 0.0
        %638 = vmatmul.mubr.f32.gmra.mrb[0].mxu0 %v571
        %v639 = vpop.f32.mrb[0].mxu0
        %v640 = vadd.f32 0.0, %v639
        %v641 = vpop.f32.mrb[0].mxu0
        %642 = vdwg.mxu0
        %v643 = vadd.f32 %v550, %v640
        %s644 = scalar_lea.vmem [#allocation2], 512
        %v645 = vld [vmem:[%s644] sm:$0xff]
        %v646 = vld [vmem:[%s644 + $0x8] sm:$0xff]
        %v647 = vld [vmem:[%s644 + $0x10] sm:$0xff]
        %v648 = vld [vmem:[%s644 + $0x18] sm:$0xff]
        %v649 = vld [vmem:[%s644 + $0x20] sm:$0xff]
        %v650 = vld [vmem:[%s644 + $0x28] sm:$0xff]
        %v651 = vld [vmem:[%s644 + $0x30] sm:$0xff]
        %v652 = vld [vmem:[%s644 + $0x38] sm:$0xff]
        %v653 = vld [vmem:[%s644 + $0x40] sm:$0xff]
        %v654 = vld [vmem:[%s644 + $0x48] sm:$0xff]
        %v655 = vld [vmem:[%s644 + $0x50] sm:$0xff]
        %v656 = vld [vmem:[%s644 + $0x58] sm:$0xff]
        %v657 = vld [vmem:[%s644 + $0x60] sm:$0xff]
        %v658 = vld [vmem:[%s644 + $0x68] sm:$0xff]
        %v659 = vld [vmem:[%s644 + $0x70] sm:$0xff]
        %v660 = vld [vmem:[%s644 + $0x78] sm:$0xff]
        %vm661 = vcmask 1043456
        %v662 = vrot.slane %v276, 4
        %v663 = vrot.slane %v277, 4
        %v664 = vsel %vm661, %v662, %v663
        %666 = vmatprep.subr.mxu0 0.0
        %667 = vmatpush1.msra.mxu0 %v645
        %668 = vmatprep.subr.mxu0 0.0
        %669 = vmatpush1.msra.mxu0 %v646
        %670 = vmatprep.subr.mxu0 0.0
        %671 = vmatpush1.msra.mxu0 %v647
        %672 = vmatprep.subr.mxu0 0.0
        %673 = vmatpush1.msra.mxu0 %v648
        %674 = vmatprep.subr.mxu0 0.0
        %675 = vmatpush1.msra.mxu0 %v649
        %676 = vmatprep.subr.mxu0 0.0
        %677 = vmatpush1.msra.mxu0 %v650
        %678 = vmatprep.subr.mxu0 0.0
        %679 = vmatpush1.msra.mxu0 %v651
        %680 = vmatprep.subr.mxu0 0.0
        %681 = vmatpush1.msra.mxu0 %v652
        %682 = vmatprep.subr.mxu0 0.0
        %683 = vmatpush1.msra.mxu0 %v653
        %684 = vmatprep.subr.mxu0 0.0
        %685 = vmatpush1.msra.mxu0 %v654
        %686 = vmatprep.subr.mxu0 0.0
        %687 = vmatpush1.msra.mxu0 %v655
        %688 = vmatprep.subr.mxu0 0.0
        %689 = vmatpush1.msra.mxu0 %v656
        %690 = vmatprep.subr.mxu0 0.0
        %691 = vmatpush1.msra.mxu0 %v657
        %692 = vmatprep.subr.mxu0 0.0
        %693 = vmatpush1.msra.mxu0 %v658
        %694 = vmatprep.subr.mxu0 0.0
        %695 = vmatpush1.msra.mxu0 %v659
        %696 = vmatprep.subr.mxu0 0.0
        %697 = vmatpush1.msra.mxu0 %v660
        %698 = vmatprep.subr.mxu0 0.0
        %699 = vmatpush1.msra.mxu0 0.0
        %700 = vmatprep.subr.mxu0 0.0
        %701 = vmatpush1.msra.mxu0 0.0
        %702 = vmatprep.subr.mxu0 0.0
        %703 = vmatpush1.msra.mxu0 0.0
        %704 = vmatprep.subr.mxu0 0.0
        %705 = vmatpush1.msra.mxu0 0.0
        %706 = vmatprep.subr.mxu0 0.0
        %707 = vmatpush1.msra.mxu0 0.0
        %708 = vmatprep.subr.mxu0 0.0
        %709 = vmatpush1.msra.mxu0 0.0
        %710 = vmatprep.subr.mxu0 0.0
        %711 = vmatpush1.msra.mxu0 0.0
        %712 = vmatprep.subr.mxu0 0.0
        %713 = vmatpush1.msra.mxu0 0.0
        %714 = vmatprep.subr.mxu0 0.0
        %715 = vmatpush1.msra.mxu0 0.0
        %716 = vmatprep.subr.mxu0 0.0
        %717 = vmatpush1.msra.mxu0 0.0
        %718 = vmatprep.subr.mxu0 0.0
        %719 = vmatpush1.msra.mxu0 0.0
        %720 = vmatprep.subr.mxu0 0.0
        %721 = vmatpush1.msra.mxu0 0.0
        %722 = vmatprep.subr.mxu0 0.0
        %723 = vmatpush1.msra.mxu0 0.0
        %724 = vmatprep.subr.mxu0 0.0
        %725 = vmatpush1.msra.mxu0 0.0
        %726 = vmatprep.subr.mxu0 0.0
        %727 = vmatpush1.msra.mxu0 0.0
        %728 = vmatprep.subr.mxu0 0.0
        %729 = vmatpush1.msra.mxu0 0.0
        %730 = vmatprep.mubr.f32.mxu0 0.0
        %731 = vmatmul.mubr.f32.gmra.mrb[0].mxu0 %v664
        %v732 = vpop.f32.mrb[0].mxu0
        %v733 = vadd.f32 0.0, %v732
        %v734 = vpop.f32.mrb[0].mxu0
        %735 = vdwg.mxu0
        %v736 = vadd.f32 %v643, %v733
        %v737 = vld [vmem:[#allocation4] sm:$0x1]
        %v739 = vlaneseq
        %v740 = vshrl.u32 %v739, 7
        %v741 = vsub.s32 0, %v740
        %v742 = vrot.slane %v737, %v741
        %v744 = vadd.f32 %v736, %v742
        %v745 = vld [vmem:[#allocation6] sm:$0x1]
        %v747 = vlaneseq
        %v748 = vshrl.u32 %v747, 7
        %v749 = vsub.s32 0, %v748
        %v750 = vrot.slane %v745, %v749
        %v752 = vmul.f32 %v744, %v750
        %v753 = vld [vmem:[#allocation7] sm:$0x1]
        %v755 = vlaneseq
        %v756 = vshrl.u32 %v755, 7
        %v757 = vsub.s32 0, %v756
        %v758 = vrot.slane %v753, %v757
        %v760 = vadd.f32 %v752, %v758
        %v761 = vmax.f32 %v760, 0.0
        %762 = vst [vmem:[%s275] sm:$0xff] %v761
        %p763 = scmp.lt.s32.totalorder %s19, 1
        %s764 = scalar_select %p763, %s19, 1
        %s765 = smul.addr %s764, 8
        %s766 = scalar_lea.vmem %s5, %s765
        // Predicated region
        $region57: #{encoder_forward.6} parent=39 // pred_check
          %p767 = pneg %p147
        $region58: #{encoder_forward.6} parent=39 // pred_check_branch
          %769 = sbr.rel (%p767) target = $region60
        $region59: #{encoder_forward.6} parent=39 // pred_region
          _
        $region60: #{encoder_forward.6} parent=39 // pred_fallthru
          _
      $region40: #{encoder_forward.6} parent=5 // pred_fallthru
        _
      %p770 = scmp.le.s32.totalorder 2, %s14
      // Predicated region
      $region61: #{encoder_forward.6} parent=5 // pred_check
        %p771 = pneg %p770
      $region62: #{encoder_forward.6} parent=5 // pred_check_branch
        %773 = sbr.rel (%p771) target = $region64
      $region63: #{encoder_forward.6} parent=5 // pred_region
        %s774 = ssub.s32 %s14, 2
        // Predicated region
        $region65: #{encoder_forward.6} parent=63 // pred_check
          %p775 = pneg %p153
        $region66: #{encoder_forward.6} parent=63 // pred_check_branch
          %777 = sbr.rel (%p775) target = $region68
        $region67: #{encoder_forward.6} parent=63 // pred_region
          %p778 = scmp.lt.s32.totalorder %s20, 1
          %s779 = scalar_select %p778, %s20, 1
          %s780 = smul.addr %s779, 8
          %s781 = scalar_lea.vmem %s5, %s780
        $region68: #{encoder_forward.6} parent=63 // pred_fallthru
          _
      $region64: #{encoder_forward.6} parent=5 // pred_fallthru
        _
    $region6: #{encoder_forward.6} parent=1 // loop_footer
      %s18 = sadd.s32 1, %s14
    $region7: #{encoder_forward.6} parent=1 // loop_footer_branch
      %13 = sbr.rel target = $region3
    $region8: #{encoder_forward.6} parent=1 // loop_exit
      _
    %782 = vsyncpa [#allocation3], 1
    %s783 = scalar_lea.sflag [#allocation3], 1
    %784 = vsyncpa %s783, 1
    %785 = vsyncpa [#allocation5], 1
    %786 = vsyncpa [#allocation8], 1

// kernel: encoder_forward.10
$region0: #{encoder_forward.10}
  #allocation0 [shape = 'u32[]', space=smem, size = 0x4, offset = 0x4, fixed_abs, tag = 'smem constant byte address 0x4 - core index']
  #allocation1 [shape = 'u32[144,128]{1,0:T(1,128)}', space=vmem, size = 0x12000, scoped, tag = 'internal scratch']
  %s0 = inlined_call_operand.vmem [shape: f32[2,8,128], index: 0, kind: input, shape index: {}]
  %s1 = inlined_call_operand.vmem [shape: f32[4,128,32], index: 1, kind: input, shape index: {}]
  %s2 = inlined_call_operand.vmem [shape: f32[4,1,32], index: 2, kind: input, shape index: {}]
  %s3 = inlined_call_operand.vmem [shape: f32[4,128,32], index: 3, kind: input, shape index: {}]
  %s4 = inlined_call_operand.vmem [shape: f32[4,1,32], index: 4, kind: input, shape index: {}]
  %s5 = inlined_call_operand.vmem [shape: f32[4,128,32], index: 5, kind: input, shape index: {}]
  %s6 = inlined_call_operand.vmem [shape: f32[4,1,32], index: 6, kind: input, shape index: {}]
  %s7 = inlined_call_operand.vmem [shape: f32[4,32,128], index: 7, kind: input, shape index: {}]
  %s8 = inlined_call_operand.vmem [shape: f32[1,128], index: 8, kind: input, shape index: {}]
  %s9 = inlined_call_operand.vmem [shape: f32[128,256], index: 9, kind: input, shape index: {}]
  %s10 = inlined_call_operand.vmem [shape: f32[1,256], index: 10, kind: input, shape index: {}]
  %s11 = inlined_call_operand.vmem [shape: f32[256,128], index: 11, kind: input, shape index: {}]
  %s12 = inlined_call_operand.vmem [shape: f32[1,128], index: 12, kind: input, shape index: {}]
  %s13 = inlined_call_operand.vmem [shape: f32[1,128], index: 13, kind: input, shape index: {}]
  %s14 = inlined_call_operand.vmem [shape: f32[1,128], index: 14, kind: input, shape index: {}]
  %s15 = inlined_call_operand.vmem [shape: f32[1,128], index: 15, kind: input, shape index: {}]
  %s16 = inlined_call_operand.vmem [shape: f32[1,128], index: 16, kind: input, shape index: {}]
  %s17 = inlined_call_operand.vmem [shape: f32[2,8,128], index: 17, kind: output, shape index: {}]
  %s18 = sld [smem:[#allocation0]]
  $region101: #{encoder_forward.10} parent=0
    _
  %s20 = ssub.s32 1, %s18
  %s21 = scalar_select 0, %s20, %s18
  loop: start=0, step=1, limit=4
  $region2: #{encoder_forward.10} parent=0 // loop_pre_header
    _
  $region3: #{encoder_forward.10} parent=0 // loop_header
    %s23 = sphi 0, %s27
    %p24 = scmp.ge.s32.totalorder %s23, 4
    %s33 = sphi 0, %s35
    %s36 = sphi 0, %s33
    %s37 = sphi 0, %s36
    %s53 = sphi 0, %s37
    %s57 = sphi 0, %s57
    %s59 = sphi 0, %s57
    %s60 = sphi 0, %s59
    %s74 = sphi 0, %s60
    %s78 = sphi 0, %s78
    %s80 = sphi 0, %s78
    %s81 = sphi 0, %s80
    %s95 = sphi 0, %s81
    %s99 = sphi 0, %s99
    %s101 = sphi 0, %s99
    %s102 = sphi 0, %s101
    %s116 = sphi 0, %s102
    %s120 = sphi 0, %s120
    %s122 = sphi 0, %s120
    %s123 = sphi 0, %s122
    %s137 = sphi 0, %s123
    %s141 = sphi 0, %s141
    %s143 = sphi 0, %s141
    %s144 = sphi 0, %s143
    %s158 = sphi 0, %s144
    %s162 = sphi 0, %s162
    %s164 = sphi 0, %s162
    %s165 = sphi 0, %s164
    %s179 = sphi 0, %s165
    %s183 = sphi 0, %s183
    %s185 = sphi 0, %s183
    %s186 = sphi 0, %s185
    %s200 = sphi 0, %s186
    %s204 = sphi 0, %s204
    %s206 = sphi 0, %s204
    %s207 = sphi 0, %s206
    %s221 = sphi 0, %s207
    %s225 = sphi 0, %s225
    %s227 = sphi 0, %s225
    %s228 = sphi 0, %s227
    %s242 = sphi 0, %s228
    %s246 = sphi 0, %s246
    %s248 = sphi 0, %s246
    %s249 = sphi 0, %s248
    %s263 = sphi 0, %s249
    %s267 = sphi 0, %s267
    %s269 = sphi 0, %s267
    %s270 = sphi 0, %s269
    %s284 = sphi 0, %s270
    %s288 = sphi 0, %s288
    %s290 = sphi 0, %s288
    %s291 = sphi 0, %s290
    %s305 = sphi 0, %s291
    %s309 = sphi 0, %s309
    %s311 = sphi 0, %s309
    %s312 = sphi 0, %s311
    %s326 = sphi 0, %s312
    %s330 = sphi 0, %s330
    %s332 = sphi 0, %s330
    %s333 = sphi 0, %s332
    %s347 = sphi 0, %s333
    %s351 = sphi 0, %s351
    %s353 = sphi 0, %s351
    %s354 = sphi 0, %s353
    %s368 = sphi 0, %s354
    %s372 = sphi 0, %s372
    %s374 = sphi 0, %s372
    %s375 = sphi 0, %s374
    %s389 = sphi 0, %s375
    %s395 = sphi 0, %s397
    %s398 = sphi 0, %s395
    %s399 = sphi 0, %s398
    %s415 = sphi 0, %s399
  $region4: #{encoder_forward.10} parent=0 // loop_header_branch
    %26 = sbr.rel (%p24) target = $region8
  $region5: #{encoder_forward.10} parent=0 // loop_body
    %s28 = ssub.s32 %s23, 1
    %s29 = ssub.s32 %s23, 2
    %s30 = sadd.s32 %s23, 1
    %s31 = ssub.s32 %s23, %s30
    %p32 = scmp.eq.s32.totalorder %s31, 0
    %s34 = sadd.s32 %s33, 1
    %s35 = scalar_select %p32, %s33, %s34
    %p38 = pneg %p32
    %p39 = scmp.eq.s32.totalorder %s23, 1
    %p40 = por %p38, %p39
    %p41 = scmp.ne.s32.totalorder %s33, %s36
    %p42 = scmp.eq.s32.totalorder %s23, 0
    %p43 = por %p41, %p42
    %p44 = scmp.ne.s32.totalorder %s33, %s36
    %p45 = scmp.eq.s32.totalorder %s28, 1
    %p46 = por %p44, %p45
    %p47 = scmp.ne.s32.totalorder %s36, %s37
    %p48 = scmp.eq.s32.totalorder %s28, 0
    %p49 = por %p47, %p48
    %p50 = scmp.ne.s32.totalorder %s36, %s37
    %p51 = scmp.eq.s32.totalorder %s29, 1
    %p52 = por %p50, %p51
    %p54 = scmp.ne.s32.totalorder %s37, %s53
    %p55 = scmp.eq.s32.totalorder %s29, 0
    %p56 = por %p54, %p55
    %s58 = sadd.s32 %s57, 1
    %p61 = scmp.eq.s32.totalorder %s23, 1
    %p62 = scmp.ne.s32.totalorder %s57, %s59
    %p63 = scmp.eq.s32.totalorder %s23, 0
    %p64 = por %p62, %p63
    %p65 = scmp.ne.s32.totalorder %s57, %s59
    %p66 = scmp.eq.s32.totalorder %s28, 1
    %p67 = por %p65, %p66
    %p68 = scmp.ne.s32.totalorder %s59, %s60
    %p69 = scmp.eq.s32.totalorder %s28, 0
    %p70 = por %p68, %p69
    %p71 = scmp.ne.s32.totalorder %s59, %s60
    %p72 = scmp.eq.s32.totalorder %s29, 1
    %p73 = por %p71, %p72
    %p75 = scmp.ne.s32.totalorder %s60, %s74
    %p76 = scmp.eq.s32.totalorder %s29, 0
    %p77 = por %p75, %p76
    %s79 = sadd.s32 %s78, 1
    %p82 = scmp.eq.s32.totalorder %s23, 1
    %p83 = scmp.ne.s32.totalorder %s78, %s80
    %p84 = scmp.eq.s32.totalorder %s23, 0
    %p85 = por %p83, %p84
    %p86 = scmp.ne.s32.totalorder %s78, %s80
    %p87 = scmp.eq.s32.totalorder %s28, 1
    %p88 = por %p86, %p87
    %p89 = scmp.ne.s32.totalorder %s80, %s81
    %p90 = scmp.eq.s32.totalorder %s28, 0
    %p91 = por %p89, %p90
    %p92 = scmp.ne.s32.totalorder %s80, %s81
    %p93 = scmp.eq.s32.totalorder %s29, 1
    %p94 = por %p92, %p93
    %p96 = scmp.ne.s32.totalorder %s81, %s95
    %p97 = scmp.eq.s32.totalorder %s29, 0
    %p98 = por %p96, %p97
    %s100 = sadd.s32 %s99, 1
    %p103 = scmp.eq.s32.totalorder %s23, 1
    %p104 = scmp.ne.s32.totalorder %s99, %s101
    %p105 = scmp.eq.s32.totalorder %s23, 0
    %p106 = por %p104, %p105
    %p107 = scmp.ne.s32.totalorder %s99, %s101
    %p108 = scmp.eq.s32.totalorder %s28, 1
    %p109 = por %p107, %p108
    %p110 = scmp.ne.s32.totalorder %s101, %s102
    %p111 = scmp.eq.s32.totalorder %s28, 0
    %p112 = por %p110, %p111
    %p113 = scmp.ne.s32.totalorder %s101, %s102
    %p114 = scmp.eq.s32.totalorder %s29, 1
    %p115 = por %p113, %p114
    %p117 = scmp.ne.s32.totalorder %s102, %s116
    %p118 = scmp.eq.s32.totalorder %s29, 0
    %p119 = por %p117, %p118
    %s121 = sadd.s32 %s120, 1
    %p124 = scmp.eq.s32.totalorder %s23, 1
    %p125 = scmp.ne.s32.totalorder %s120, %s122
    %p126 = scmp.eq.s32.totalorder %s23, 0
    %p127 = por %p125, %p126
    %p128 = scmp.ne.s32.totalorder %s120, %s122
    %p129 = scmp.eq.s32.totalorder %s28, 1
    %p130 = por %p128, %p129
    %p131 = scmp.ne.s32.totalorder %s122, %s123
    %p132 = scmp.eq.s32.totalorder %s28, 0
    %p133 = por %p131, %p132
    %p134 = scmp.ne.s32.totalorder %s122, %s123
    %p135 = scmp.eq.s32.totalorder %s29, 1
    %p136 = por %p134, %p135
    %p138 = scmp.ne.s32.totalorder %s123, %s137
    %p139 = scmp.eq.s32.totalorder %s29, 0
    %p140 = por %p138, %p139
    %s142 = sadd.s32 %s141, 1
    %p145 = scmp.eq.s32.totalorder %s23, 1
    %p146 = scmp.ne.s32.totalorder %s141, %s143
    %p147 = scmp.eq.s32.totalorder %s23, 0
    %p148 = por %p146, %p147
    %p149 = scmp.ne.s32.totalorder %s141, %s143
    %p150 = scmp.eq.s32.totalorder %s28, 1
    %p151 = por %p149, %p150
    %p152 = scmp.ne.s32.totalorder %s143, %s144
    %p153 = scmp.eq.s32.totalorder %s28, 0
    %p154 = por %p152, %p153
    %p155 = scmp.ne.s32.totalorder %s143, %s144
    %p156 = scmp.eq.s32.totalorder %s29, 1
    %p157 = por %p155, %p156
    %p159 = scmp.ne.s32.totalorder %s144, %s158
    %p160 = scmp.eq.s32.totalorder %s29, 0
    %p161 = por %p159, %p160
    %s163 = sadd.s32 %s162, 1
    %p166 = scmp.eq.s32.totalorder %s23, 1
    %p167 = scmp.ne.s32.totalorder %s162, %s164
    %p168 = scmp.eq.s32.totalorder %s23, 0
    %p169 = por %p167, %p168
    %p170 = scmp.ne.s32.totalorder %s162, %s164
    %p171 = scmp.eq.s32.totalorder %s28, 1
    %p172 = por %p170, %p171
    %p173 = scmp.ne.s32.totalorder %s164, %s165
    %p174 = scmp.eq.s32.totalorder %s28, 0
    %p175 = por %p173, %p174
    %p176 = scmp.ne.s32.totalorder %s164, %s165
    %p177 = scmp.eq.s32.totalorder %s29, 1
    %p178 = por %p176, %p177
    %p180 = scmp.ne.s32.totalorder %s165, %s179
    %p181 = scmp.eq.s32.totalorder %s29, 0
    %p182 = por %p180, %p181
    %s184 = sadd.s32 %s183, 1
    %p187 = scmp.eq.s32.totalorder %s23, 1
    %p188 = scmp.ne.s32.totalorder %s183, %s185
    %p189 = scmp.eq.s32.totalorder %s23, 0
    %p190 = por %p188, %p189
    %p191 = scmp.ne.s32.totalorder %s183, %s185
    %p192 = scmp.eq.s32.totalorder %s28, 1
    %p193 = por %p191, %p192
    %p194 = scmp.ne.s32.totalorder %s185, %s186
    %p195 = scmp.eq.s32.totalorder %s28, 0
    %p196 = por %p194, %p195
    %p197 = scmp.ne.s32.totalorder %s185, %s186
    %p198 = scmp.eq.s32.totalorder %s29, 1
    %p199 = por %p197, %p198
    %p201 = scmp.ne.s32.totalorder %s186, %s200
    %p202 = scmp.eq.s32.totalorder %s29, 0
    %p203 = por %p201, %p202
    %s205 = sadd.s32 %s204, 1
    %p208 = scmp.eq.s32.totalorder %s23, 1
    %p209 = scmp.ne.s32.totalorder %s204, %s206
    %p210 = scmp.eq.s32.totalorder %s23, 0
    %p211 = por %p209, %p210
    %p212 = scmp.ne.s32.totalorder %s204, %s206
    %p213 = scmp.eq.s32.totalorder %s28, 1
    %p214 = por %p212, %p213
    %p215 = scmp.ne.s32.totalorder %s206, %s207
    %p216 = scmp.eq.s32.totalorder %s28, 0
    %p217 = por %p215, %p216
    %p218 = scmp.ne.s32.totalorder %s206, %s207
    %p219 = scmp.eq.s32.totalorder %s29, 1
    %p220 = por %p218, %p219
    %p222 = scmp.ne.s32.totalorder %s207, %s221
    %p223 = scmp.eq.s32.totalorder %s29, 0
    %p224 = por %p222, %p223
    %s226 = sadd.s32 %s225, 1
    %p229 = scmp.eq.s32.totalorder %s23, 1
    %p230 = scmp.ne.s32.totalorder %s225, %s227
    %p231 = scmp.eq.s32.totalorder %s23, 0
    %p232 = por %p230, %p231
    %p233 = scmp.ne.s32.totalorder %s225, %s227
    %p234 = scmp.eq.s32.totalorder %s28, 1
    %p235 = por %p233, %p234
    %p236 = scmp.ne.s32.totalorder %s227, %s228
    %p237 = scmp.eq.s32.totalorder %s28, 0
    %p238 = por %p236, %p237
    %p239 = scmp.ne.s32.totalorder %s227, %s228
    %p240 = scmp.eq.s32.totalorder %s29, 1
    %p241 = por %p239, %p240
    %p243 = scmp.ne.s32.totalorder %s228, %s242
    %p244 = scmp.eq.s32.totalorder %s29, 0
    %p245 = por %p243, %p244
    %s247 = sadd.s32 %s246, 1
    %p250 = scmp.eq.s32.totalorder %s23, 1
    %p251 = scmp.ne.s32.totalorder %s246, %s248
    %p252 = scmp.eq.s32.totalorder %s23, 0
    %p253 = por %p251, %p252
    %p254 = scmp.ne.s32.totalorder %s246, %s248
    %p255 = scmp.eq.s32.totalorder %s28, 1
    %p256 = por %p254, %p255
    %p257 = scmp.ne.s32.totalorder %s248, %s249
    %p258 = scmp.eq.s32.totalorder %s28, 0
    %p259 = por %p257, %p258
    %p260 = scmp.ne.s32.totalorder %s248, %s249
    %p261 = scmp.eq.s32.totalorder %s29, 1
    %p262 = por %p260, %p261
    %p264 = scmp.ne.s32.totalorder %s249, %s263
    %p265 = scmp.eq.s32.totalorder %s29, 0
    %p266 = por %p264, %p265
    %s268 = sadd.s32 %s267, 1
    %p271 = scmp.eq.s32.totalorder %s23, 1
    %p272 = scmp.ne.s32.totalorder %s267, %s269
    %p273 = scmp.eq.s32.totalorder %s23, 0
    %p274 = por %p272, %p273
    %p275 = scmp.ne.s32.totalorder %s267, %s269
    %p276 = scmp.eq.s32.totalorder %s28, 1
    %p277 = por %p275, %p276
    %p278 = scmp.ne.s32.totalorder %s269, %s270
    %p279 = scmp.eq.s32.totalorder %s28, 0
    %p280 = por %p278, %p279
    %p281 = scmp.ne.s32.totalorder %s269, %s270
    %p282 = scmp.eq.s32.totalorder %s29, 1
    %p283 = por %p281, %p282
    %p285 = scmp.ne.s32.totalorder %s270, %s284
    %p286 = scmp.eq.s32.totalorder %s29, 0
    %p287 = por %p285, %p286
    %s289 = sadd.s32 %s288, 1
    %p292 = scmp.eq.s32.totalorder %s23, 1
    %p293 = scmp.ne.s32.totalorder %s288, %s290
    %p294 = scmp.eq.s32.totalorder %s23, 0
    %p295 = por %p293, %p294
    %p296 = scmp.ne.s32.totalorder %s288, %s290
    %p297 = scmp.eq.s32.totalorder %s28, 1
    %p298 = por %p296, %p297
    %p299 = scmp.ne.s32.totalorder %s290, %s291
    %p300 = scmp.eq.s32.totalorder %s28, 0
    %p301 = por %p299, %p300
    %p302 = scmp.ne.s32.totalorder %s290, %s291
    %p303 = scmp.eq.s32.totalorder %s29, 1
    %p304 = por %p302, %p303
    %p306 = scmp.ne.s32.totalorder %s291, %s305
    %p307 = scmp.eq.s32.totalorder %s29, 0
    %p308 = por %p306, %p307
    %s310 = sadd.s32 %s309, 1
    %p313 = scmp.eq.s32.totalorder %s23, 1
    %p314 = scmp.ne.s32.totalorder %s309, %s311
    %p315 = scmp.eq.s32.totalorder %s23, 0
    %p316 = por %p314, %p315
    %p317 = scmp.ne.s32.totalorder %s309, %s311
    %p318 = scmp.eq.s32.totalorder %s28, 1
    %p319 = por %p317, %p318
    %p320 = scmp.ne.s32.totalorder %s311, %s312
    %p321 = scmp.eq.s32.totalorder %s28, 0
    %p322 = por %p320, %p321
    %p323 = scmp.ne.s32.totalorder %s311, %s312
    %p324 = scmp.eq.s32.totalorder %s29, 1
    %p325 = por %p323, %p324
    %p327 = scmp.ne.s32.totalorder %s312, %s326
    %p328 = scmp.eq.s32.totalorder %s29, 0
    %p329 = por %p327, %p328
    %s331 = sadd.s32 %s330, 1
    %p334 = scmp.eq.s32.totalorder %s23, 1
    %p335 = scmp.ne.s32.totalorder %s330, %s332
    %p336 = scmp.eq.s32.totalorder %s23, 0
    %p337 = por %p335, %p336
    %p338 = scmp.ne.s32.totalorder %s330, %s332
    %p339 = scmp.eq.s32.totalorder %s28, 1
    %p340 = por %p338, %p339
    %p341 = scmp.ne.s32.totalorder %s332, %s333
    %p342 = scmp.eq.s32.totalorder %s28, 0
    %p343 = por %p341, %p342
    %p344 = scmp.ne.s32.totalorder %s332, %s333
    %p345 = scmp.eq.s32.totalorder %s29, 1
    %p346 = por %p344, %p345
    %p348 = scmp.ne.s32.totalorder %s333, %s347
    %p349 = scmp.eq.s32.totalorder %s29, 0
    %p350 = por %p348, %p349
    %s352 = sadd.s32 %s351, 1
    %p355 = scmp.eq.s32.totalorder %s23, 1
    %p356 = scmp.ne.s32.totalorder %s351, %s353
    %p357 = scmp.eq.s32.totalorder %s23, 0
    %p358 = por %p356, %p357
    %p359 = scmp.ne.s32.totalorder %s351, %s353
    %p360 = scmp.eq.s32.totalorder %s28, 1
    %p361 = por %p359, %p360
    %p362 = scmp.ne.s32.totalorder %s353, %s354
    %p363 = scmp.eq.s32.totalorder %s28, 0
    %p364 = por %p362, %p363
    %p365 = scmp.ne.s32.totalorder %s353, %s354
    %p366 = scmp.eq.s32.totalorder %s29, 1
    %p367 = por %p365, %p366
    %p369 = scmp.ne.s32.totalorder %s354, %s368
    %p370 = scmp.eq.s32.totalorder %s29, 0
    %p371 = por %p369, %p370
    %s373 = sadd.s32 %s372, 1
    %p376 = scmp.eq.s32.totalorder %s23, 1
    %p377 = scmp.ne.s32.totalorder %s372, %s374
    %p378 = scmp.eq.s32.totalorder %s23, 0
    %p379 = por %p377, %p378
    %p380 = scmp.ne.s32.totalorder %s372, %s374
    %p381 = scmp.eq.s32.totalorder %s28, 1
    %p382 = por %p380, %p381
    %p383 = scmp.ne.s32.totalorder %s374, %s375
    %p384 = scmp.eq.s32.totalorder %s28, 0
    %p385 = por %p383, %p384
    %p386 = scmp.ne.s32.totalorder %s374, %s375
    %p387 = scmp.eq.s32.totalorder %s29, 1
    %p388 = por %p386, %p387
    %p390 = scmp.ne.s32.totalorder %s375, %s389
    %p391 = scmp.eq.s32.totalorder %s29, 0
    %p392 = por %p390, %p391
    %s393 = ssub.s32 %s23, %s30
    %p394 = scmp.eq.s32.totalorder %s393, 0
    %s396 = sadd.s32 %s395, 1
    %s397 = scalar_select %p394, %s395, %s396
    %p400 = pneg %p394
    %p401 = scmp.eq.s32.totalorder %s23, 1
    %p402 = por %p400, %p401
    %p403 = scmp.ne.s32.totalorder %s395, %s398
    %p404 = scmp.eq.s32.totalorder %s23, 0
    %p405 = por %p403, %p404
    %p406 = scmp.ne.s32.totalorder %s395, %s398
    %p407 = scmp.eq.s32.totalorder %s28, 1
    %p408 = por %p406, %p407
    %p409 = scmp.ne.s32.totalorder %s398, %s399
    %p410 = scmp.eq.s32.totalorder %s28, 0
    %p411 = por %p409, %p410
    %p412 = scmp.ne.s32.totalorder %s398, %s399
    %p413 = scmp.eq.s32.totalorder %s29, 1
    %p414 = por %p412, %p413
    %p416 = scmp.ne.s32.totalorder %s399, %s415
    %p417 = scmp.eq.s32.totalorder %s29, 0
    %p418 = por %p416, %p417
    %p419 = scmp.le.s32.totalorder 1, %s23
    %p420 = scmp.lt.s32.totalorder %s23, 3
    %p421 = pnand %p419, %p420
    %p422 = pneg %p421
    // Predicated region
    $region9: #{encoder_forward.10} parent=5 // pred_check
      _
    $region10: #{encoder_forward.10} parent=5 // pred_check_branch
      %424 = sbr.rel (%p421) target = $region12
    $region11: #{encoder_forward.10} parent=5 // pred_region
      %s425 = ssub.s32 %s23, 1
      // Predicated region
      $region13: #{encoder_forward.10} parent=11 // pred_check
        %p426 = pneg %p70
      $region14: #{encoder_forward.10} parent=11 // pred_check_branch
        %428 = sbr.rel (%p426) target = $region16
      $region15: #{encoder_forward.10} parent=11 // pred_region
        _
      $region16: #{encoder_forward.10} parent=11 // pred_fallthru
        _
      // Predicated region
      $region17: #{encoder_forward.10} parent=11 // pred_check
        %p429 = pneg %p91
      $region18: #{encoder_forward.10} parent=11 // pred_check_branch
        %431 = sbr.rel (%p429) target = $region20
      $region19: #{encoder_forward.10} parent=11 // pred_region
        _
      $region20: #{encoder_forward.10} parent=11 // pred_fallthru
        _
      // Predicated region
      $region21: #{encoder_forward.10} parent=11 // pred_check
        %p432 = pneg %p112
      $region22: #{encoder_forward.10} parent=11 // pred_check_branch
        %434 = sbr.rel (%p432) target = $region24
      $region23: #{encoder_forward.10} parent=11 // pred_region
        _
      $region24: #{encoder_forward.10} parent=11 // pred_fallthru
        _
      // Predicated region
      $region25: #{encoder_forward.10} parent=11 // pred_check
        %p435 = pneg %p133
      $region26: #{encoder_forward.10} parent=11 // pred_check_branch
        %437 = sbr.rel (%p435) target = $region28
      $region27: #{encoder_forward.10} parent=11 // pred_region
        _
      $region28: #{encoder_forward.10} parent=11 // pred_fallthru
        _
      // Predicated region
      $region29: #{encoder_forward.10} parent=11 // pred_check
        %p438 = pneg %p154
      $region30: #{encoder_forward.10} parent=11 // pred_check_branch
        %440 = sbr.rel (%p438) target = $region32
      $region31: #{encoder_forward.10} parent=11 // pred_region
        _
      $region32: #{encoder_forward.10} parent=11 // pred_fallthru
        _
      // Predicated region
      $region33: #{encoder_forward.10} parent=11 // pred_check
        %p441 = pneg %p175
      $region34: #{encoder_forward.10} parent=11 // pred_check_branch
        %443 = sbr.rel (%p441) target = $region36
      $region35: #{encoder_forward.10} parent=11 // pred_region
        _
      $region36: #{encoder_forward.10} parent=11 // pred_fallthru
        _
      // Predicated region
      $region37: #{encoder_forward.10} parent=11 // pred_check
        %p444 = pneg %p196
      $region38: #{encoder_forward.10} parent=11 // pred_check_branch
        %446 = sbr.rel (%p444) target = $region40
      $region39: #{encoder_forward.10} parent=11 // pred_region
        _
      $region40: #{encoder_forward.10} parent=11 // pred_fallthru
        _
      // Predicated region
      $region41: #{encoder_forward.10} parent=11 // pred_check
        %p447 = pneg %p217
      $region42: #{encoder_forward.10} parent=11 // pred_check_branch
        %449 = sbr.rel (%p447) target = $region44
      $region43: #{encoder_forward.10} parent=11 // pred_region
        _
      $region44: #{encoder_forward.10} parent=11 // pred_fallthru
        _
      // Predicated region
      $region45: #{encoder_forward.10} parent=11 // pred_check
        %p450 = pneg %p238
      $region46: #{encoder_forward.10} parent=11 // pred_check_branch
        %452 = sbr.rel (%p450) target = $region48
      $region47: #{encoder_forward.10} parent=11 // pred_region
        _
      $region48: #{encoder_forward.10} parent=11 // pred_fallthru
        _
      // Predicated region
      $region49: #{encoder_forward.10} parent=11 // pred_check
        %p453 = pneg %p259
      $region50: #{encoder_forward.10} parent=11 // pred_check_branch
        %455 = sbr.rel (%p453) target = $region52
      $region51: #{encoder_forward.10} parent=11 // pred_region
        _
      $region52: #{encoder_forward.10} parent=11 // pred_fallthru
        _
      // Predicated region
      $region53: #{encoder_forward.10} parent=11 // pred_check
        %p456 = pneg %p280
      $region54: #{encoder_forward.10} parent=11 // pred_check_branch
        %458 = sbr.rel (%p456) target = $region56
      $region55: #{encoder_forward.10} parent=11 // pred_region
        _
      $region56: #{encoder_forward.10} parent=11 // pred_fallthru
        _
      // Predicated region
      $region57: #{encoder_forward.10} parent=11 // pred_check
        %p459 = pneg %p301
      $region58: #{encoder_forward.10} parent=11 // pred_check_branch
        %461 = sbr.rel (%p459) target = $region60
      $region59: #{encoder_forward.10} parent=11 // pred_region
        _
      $region60: #{encoder_forward.10} parent=11 // pred_fallthru
        _
      // Predicated region
      $region61: #{encoder_forward.10} parent=11 // pred_check
        %p462 = pneg %p322
      $region62: #{encoder_forward.10} parent=11 // pred_check_branch
        %464 = sbr.rel (%p462) target = $region64
      $region63: #{encoder_forward.10} parent=11 // pred_region
        _
      $region64: #{encoder_forward.10} parent=11 // pred_fallthru
        _
      // Predicated region
      $region65: #{encoder_forward.10} parent=11 // pred_check
        %p465 = pneg %p343
      $region66: #{encoder_forward.10} parent=11 // pred_check_branch
        %467 = sbr.rel (%p465) target = $region68
      $region67: #{encoder_forward.10} parent=11 // pred_region
        _
      $region68: #{encoder_forward.10} parent=11 // pred_fallthru
        _
      // Predicated region
      $region69: #{encoder_forward.10} parent=11 // pred_check
        %p468 = pneg %p364
      $region70: #{encoder_forward.10} parent=11 // pred_check_branch
        %470 = sbr.rel (%p468) target = $region72
      $region71: #{encoder_forward.10} parent=11 // pred_region
        _
      $region72: #{encoder_forward.10} parent=11 // pred_fallthru
        _
      // Predicated region
      $region73: #{encoder_forward.10} parent=11 // pred_check
        %p471 = pneg %p385
      $region74: #{encoder_forward.10} parent=11 // pred_check_branch
        %473 = sbr.rel (%p471) target = $region76
      $region75: #{encoder_forward.10} parent=11 // pred_region
        _
      $region76: #{encoder_forward.10} parent=11 // pred_fallthru
        _
    $region12: #{encoder_forward.10} parent=5 // pred_fallthru
      _
    %p474 = scmp.lt.s32.totalorder %s23, 2
    // Predicated region
    $region77: #{encoder_forward.10} parent=5 // pred_check
      %p475 = pneg %p474
    $region78: #{encoder_forward.10} parent=5 // pred_check_branch
      %477 = sbr.rel (%p475) target = $region80
    $region79: #{encoder_forward.10} parent=5 // pred_region
      // Predicated region
      $region81: #{encoder_forward.10} parent=79 // pred_check
        %p478 = pneg %p43
      $region82: #{encoder_forward.10} parent=79 // pred_check_branch
        %480 = sbr.rel (%p478) target = $region84
      $region83: #{encoder_forward.10} parent=79 // pred_region
        %p481 = scmp.lt.s32.totalorder %s23, 1
        %s482 = scalar_select %p481, %s23, 1
        %s483 = smul.addr %s482, 8
        %s484 = scalar_lea.vmem %s0, %s483
      $region84: #{encoder_forward.10} parent=79 // pred_fallthru
        _
    $region80: #{encoder_forward.10} parent=5 // pred_fallthru
      _
    %p485 = scmp.le.s32.totalorder 1, %s23
    %p486 = scmp.lt.s32.totalorder %s23, 3
    %p487 = pnand %p485, %p486
    %p488 = pneg %p487
    // Predicated region
    $region85: #{encoder_forward.10} parent=5 // pred_check
      _
    $region86: #{encoder_forward.10} parent=5 // pred_check_branch
      %490 = sbr.rel (%p487) target = $region88
    $region87: #{encoder_forward.10} parent=5 // pred_region
      %s491 = ssub.s32 %s23, 1
      %p492 = scmp.lt.s32.totalorder %s28, 1
      %s493 = scalar_select %p492, %s28, 1
      %s494 = smul.addr %s493, 8
      %s495 = scalar_lea.vmem %s0, %s494
      %p496 = pneg %p49
      %p497 = pneg %p46
      %p498 = pneg %p70
      %p499 = pneg %p67
      %p500 = pneg %p91
      %p501 = pneg %p88
      %p502 = pneg %p112
      %p503 = pneg %p109
      %p504 = pneg %p133
      %p505 = pneg %p130
      %p506 = pneg %p154
      %p507 = pneg %p151
      %p508 = pneg %p175
      %p509 = pneg %p172
      %p510 = pneg %p196
      %p511 = pneg %p193
      %p512 = pneg %p217
      %p513 = pneg %p214
      %p514 = pneg %p238
      %p515 = pneg %p235
      %p516 = pneg %p259
      %p517 = pneg %p256
      %p518 = pneg %p280
      %p519 = pneg %p277
      %p520 = pneg %p301
      %p521 = pneg %p298
      %p522 = pneg %p322
      %p523 = pneg %p319
      %p524 = pneg %p343
      %p525 = pneg %p340
      %p526 = pneg %p364
      %p527 = pneg %p361
      %p528 = pneg %p385
      %p529 = pneg %p382
      %p530 = pneg %p411
      %p531 = pneg %p408
      %p532 = scmp.lt.s32.totalorder %s28, 1
      %s533 = scalar_select %p532, %s28, 1
      %s534 = smul.addr %s533, 8
      %s535 = scalar_lea.vmem %s17, %s534
      %p536 = scmp.lt.s32.totalorder %s28, 1
      %s537 = scalar_select %p536, %s28, 1
      %s538 = smul.addr %s537, 8
      %s539 = scalar_lea.vmem %s0, %s538
      %p540 = scmp.lt.s32.totalorder %s28, 1
      %s541 = scalar_select %p540, %s28, 1
      %s542 = smul.addr %s541, 8
      %s543 = scalar_lea.vmem %s17, %s542
      %v544 = vld [vmem:[%s539] sm:$0xff]
      %v545 = vld [vmem:[%s1] sm:$0xff]
      %v546 = vld [vmem:[%s1 + $0x8] sm:$0xff]
      %v547 = vld [vmem:[%s1 + $0x10] sm:$0xff]
      %v548 = vld [vmem:[%s1 + $0x18] sm:$0xff]
      %v549 = vld [vmem:[%s1 + $0x20] sm:$0xff]
      %v550 = vld [vmem:[%s1 + $0x28] sm:$0xff]
      %v551 = vld [vmem:[%s1 + $0x30] sm:$0xff]
      %v552 = vld [vmem:[%s1 + $0x38] sm:$0xff]
      %v553 = vld [vmem:[%s1 + $0x40] sm:$0xff]
      %v554 = vld [vmem:[%s1 + $0x48] sm:$0xff]
      %v555 = vld [vmem:[%s1 + $0x50] sm:$0xff]
      %v556 = vld [vmem:[%s1 + $0x58] sm:$0xff]
      %v557 = vld [vmem:[%s1 + $0x60] sm:$0xff]
      %v558 = vld [vmem:[%s1 + $0x68] sm:$0xff]
      %v559 = vld [vmem:[%s1 + $0x70] sm:$0xff]
      %v560 = vld [vmem:[%s1 + $0x78] sm:$0xff]
      %v561 = vld [vmem:[%s2] sm:$0x1]
      %v563 = vlaneseq
      %v564 = vshrl.u32 %v563, 7
      %v565 = vsub.s32 0, %v564
      %v566 = vrot.slane %v561, %v565
      %568 = vmatprep.subr.mxu0 0.0
      %569 = vmatpush1.msra.mxu0 %v545
      %570 = vmatprep.subr.mxu0 0.0
      %571 = vmatpush1.msra.mxu0 %v546
      %572 = vmatprep.subr.mxu0 0.0
      %573 = vmatpush1.msra.mxu0 %v547
      %574 = vmatprep.subr.mxu0 0.0
      %575 = vmatpush1.msra.mxu0 %v548
      %576 = vmatprep.subr.mxu0 0.0
      %577 = vmatpush1.msra.mxu0 %v549
      %578 = vmatprep.subr.mxu0 0.0
      %579 = vmatpush1.msra.mxu0 %v550
      %580 = vmatprep.subr.mxu0 0.0
      %581 = vmatpush1.msra.mxu0 %v551
      %582 = vmatprep.subr.mxu0 0.0
      %583 = vmatpush1.msra.mxu0 %v552
      %584 = vmatprep.subr.mxu0 0.0
      %585 = vmatpush1.msra.mxu0 %v553
      %586 = vmatprep.subr.mxu0 0.0
      %587 = vmatpush1.msra.mxu0 %v554
      %588 = vmatprep.subr.mxu0 0.0
      %589 = vmatpush1.msra.mxu0 %v555
      %590 = vmatprep.subr.mxu0 0.0
      %591 = vmatpush1.msra.mxu0 %v556
      %592 = vmatprep.subr.mxu0 0.0
      %593 = vmatpush1.msra.mxu0 %v557
      %594 = vmatprep.subr.mxu0 0.0
      %595 = vmatpush1.msra.mxu0 %v558
      %596 = vmatprep.subr.mxu0 0.0
      %597 = vmatpush1.msra.mxu0 %v559
      %598 = vmatprep.subr.mxu0 0.0
      %599 = vmatpush1.msra.mxu0 %v560
      %600 = vmatprep.subr.mxu0 0.0
      %601 = vmatpush1.msra.mxu0 0.0
      %602 = vmatprep.subr.mxu0 0.0
      %603 = vmatpush1.msra.mxu0 0.0
      %604 = vmatprep.subr.mxu0 0.0
      %605 = vmatpush1.msra.mxu0 0.0
      %606 = vmatprep.subr.mxu0 0.0
      %607 = vmatpush1.msra.mxu0 0.0
      %608 = vmatprep.subr.mxu0 0.0
      %609 = vmatpush1.msra.mxu0 0.0
      %610 = vmatprep.subr.mxu0 0.0
      %611 = vmatpush1.msra.mxu0 0.0
      %612 = vmatprep.subr.mxu0 0.0
      %613 = vmatpush1.msra.mxu0 0.0
      %614 = vmatprep.subr.mxu0 0.0
      %615 = vmatpush1.msra.mxu0 0.0
      %616 = vmatprep.subr.mxu0 0.0
      %617 = vmatpush1.msra.mxu0 0.0
      %618 = vmatprep.subr.mxu0 0.0
      %619 = vmatpush1.msra.mxu0 0.0
      %620 = vmatprep.subr.mxu0 0.0
      %621 = vmatpush1.msra.mxu0 0.0
      %622 = vmatprep.subr.mxu0 0.0
      %623 = vmatpush1.msra.mxu0 0.0
      %624 = vmatprep.subr.mxu0 0.0
      %625 = vmatpush1.msra.mxu0 0.0
      %626 = vmatprep.subr.mxu0 0.0
      %627 = vmatpush1.msra.mxu0 0.0
      %628 = vmatprep.subr.mxu0 0.0
      %629 = vmatpush1.msra.mxu0 0.0
      %630 = vmatprep.subr.mxu0 0.0
      %631 = vmatpush1.msra.mxu0 0.0
      %632 = vmatprep.mubr.f32.mxu0 0.0
      %633 = vmatmul.mubr.f32.gmra.mrb[0].mxu0 %v544
      %v634 = vpop.f32.mrb[0].mxu0
      %v635 = vadd.f32 %v566, %v634
      %v636 = vpop.f32.mrb[0].mxu0
      %637 = vdwg.mxu0
      %v638 = vld [vmem:[%s3] sm:$0xff]
      %v639 = vld [vmem:[%s3 + $0x8] sm:$0xff]
      %v640 = vld [vmem:[%s3 + $0x10] sm:$0xff]
      %v641 = vld [vmem:[%s3 + $0x18] sm:$0xff]
      %v642 = vld [vmem:[%s3 + $0x20] sm:$0xff]
      %v643 = vld [vmem:[%s3 + $0x28] sm:$0xff]
      %v644 = vld [vmem:[%s3 + $0x30] sm:$0xff]
      %v645 = vld [vmem:[%s3 + $0x38] sm:$0xff]
      %v646 = vld [vmem:[%s3 + $0x40] sm:$0xff]
      %v647 = vld [vmem:[%s3 + $0x48] sm:$0xff]
      %v648 = vld [vmem:[%s3 + $0x50] sm:$0xff]
      %v649 = vld [vmem:[%s3 + $0x58] sm:$0xff]
      %v650 = vld [vmem:[%s3 + $0x60] sm:$0xff]
      %v651 = vld [vmem:[%s3 + $0x68] sm:$0xff]
      %v652 = vld [vmem:[%s3 + $0x70] sm:$0xff]
      %v653 = vld [vmem:[%s3 + $0x78] sm:$0xff]
      %v654 = vld [vmem:[%s4] sm:$0x1]
      %v656 = vlaneseq
      %v657 = vshrl.u32 %v656, 7
      %v658 = vsub.s32 0, %v657
      %v659 = vrot.slane %v654, %v658
      %661 = vmatprep.subr.mxu0 0.0
      %662 = vmatpush1.msra.mxu0 %v638
      %663 = vmatprep.subr.mxu0 0.0
      %664 = vmatpush1.msra.mxu0 %v639
      %665 = vmatprep.subr.mxu0 0.0
      %666 = vmatpush1.msra.mxu0 %v640
      %667 = vmatprep.subr.mxu0 0.0
      %668 = vmatpush1.msra.mxu0 %v641
      %669 = vmatprep.subr.mxu0 0.0
      %670 = vmatpush1.msra.mxu0 %v642
      %671 = vmatprep.subr.mxu0 0.0
      %672 = vmatpush1.msra.mxu0 %v643
      %673 = vmatprep.subr.mxu0 0.0
      %674 = vmatpush1.msra.mxu0 %v644
      %675 = vmatprep.subr.mxu0 0.0
      %676 = vmatpush1.msra.mxu0 %v645
      %677 = vmatprep.subr.mxu0 0.0
      %678 = vmatpush1.msra.mxu0 %v646
      %679 = vmatprep.subr.mxu0 0.0
      %680 = vmatpush1.msra.mxu0 %v647
      %681 = vmatprep.subr.mxu0 0.0
      %682 = vmatpush1.msra.mxu0 %v648
      %683 = vmatprep.subr.mxu0 0.0
      %684 = vmatpush1.msra.mxu0 %v649
      %685 = vmatprep.subr.mxu0 0.0
      %686 = vmatpush1.msra.mxu0 %v650
      %687 = vmatprep.subr.mxu0 0.0
      %688 = vmatpush1.msra.mxu0 %v651
      %689 = vmatprep.subr.mxu0 0.0
      %690 = vmatpush1.msra.mxu0 %v652
      %691 = vmatprep.subr.mxu0 0.0
      %692 = vmatpush1.msra.mxu0 %v653
      %693 = vmatprep.subr.mxu0 0.0
      %694 = vmatpush1.msra.mxu0 0.0
      %695 = vmatprep.subr.mxu0 0.0
      %696 = vmatpush1.msra.mxu0 0.0
      %697 = vmatprep.subr.mxu0 0.0
      %698 = vmatpush1.msra.mxu0 0.0
      %699 = vmatprep.subr.mxu0 0.0
      %700 = vmatpush1.msra.mxu0 0.0
      %701 = vmatprep.subr.mxu0 0.0
      %702 = vmatpush1.msra.mxu0 0.0
      %703 = vmatprep.subr.mxu0 0.0
      %704 = vmatpush1.msra.mxu0 0.0
      %705 = vmatprep.subr.mxu0 0.0
      %706 = vmatpush1.msra.mxu0 0.0
      %707 = vmatprep.subr.mxu0 0.0
      %708 = vmatpush1.msra.mxu0 0.0
      %709 = vmatprep.subr.mxu0 0.0
      %710 = vmatpush1.msra.mxu0 0.0
      %711 = vmatprep.subr.mxu0 0.0
      %712 = vmatpush1.msra.mxu0 0.0
      %713 = vmatprep.subr.mxu0 0.0
      %714 = vmatpush1.msra.mxu0 0.0
      %715 = vmatprep.subr.mxu0 0.0
      %716 = vmatpush1.msra.mxu0 0.0
      %717 = vmatprep.subr.mxu0 0.0
      %718 = vmatpush1.msra.mxu0 0.0
      %719 = vmatprep.subr.mxu0 0.0
      %720 = vmatpush1.msra.mxu0 0.0
      %721 = vmatprep.subr.mxu0 0.0
      %722 = vmatpush1.msra.mxu0 0.0
      %723 = vmatprep.subr.mxu0 0.0
      %724 = vmatpush1.msra.mxu0 0.0
      %725 = vmatprep.mubr.f32.mxu0 0.0
      %726 = vmatmul.mubr.f32.gmra.mrb[0].mxu0 %v544
      %v727 = vpop.f32.mrb[0].mxu0
      %v728 = vadd.f32 %v659, %v727
      %v729 = vpop.f32.mrb[0].mxu0
      %730 = vdwg.mxu0
      %v731 = vld [vmem:[%s5] sm:$0xff]
      %v732 = vld [vmem:[%s5 + $0x8] sm:$0xff]
      %v733 = vld [vmem:[%s5 + $0x10] sm:$0xff]
      %v734 = vld [vmem:[%s5 + $0x18] sm:$0xff]
      %v735 = vld [vmem:[%s5 + $0x20] sm:$0xff]
      %v736 = vld [vmem:[%s5 + $0x28] sm:$0xff]
      %v737 = vld [vmem:[%s5 + $0x30] sm:$0xff]
      %v738 = vld [vmem:[%s5 + $0x38] sm:$0xff]
      %v739 = vld [vmem:[%s5 + $0x40] sm:$0xff]
      %v740 = vld [vmem:[%s5 + $0x48] sm:$0xff]
      %v741 = vld [vmem:[%s5 + $0x50] sm:$0xff]
      %v742 = vld [vmem:[%s5 + $0x58] sm:$0xff]
      %v743 = vld [vmem:[%s5 + $0x60] sm:$0xff]
      %v744 = vld [vmem:[%s5 + $0x68] sm:$0xff]
      %v745 = vld [vmem:[%s5 + $0x70] sm:$0xff]
      %v746 = vld [vmem:[%s5 + $0x78] sm:$0xff]
      %v747 = vld [vmem:[%s6] sm:$0x1]
      %v749 = vlaneseq
      %v750 = vshrl.u32 %v749, 7
      %v751 = vsub.s32 0, %v750
      %v752 = vrot.slane %v747, %v751
      %754 = vmatprep.subr.mxu0 0.0
      %755 = vmatpush1.msra.mxu0 %v731
      %756 = vmatprep.subr.mxu0 0.0
      %757 = vmatpush1.msra.mxu0 %v732
      %758 = vmatprep.subr.mxu0 0.0
      %759 = vmatpush1.msra.mxu0 %v733
      %760 = vmatprep.subr.mxu0 0.0
      %761 = vmatpush1.msra.mxu0 %v734
      %762 = vmatprep.subr.mxu0 0.0
      %763 = vmatpush1.msra.mxu0 %v735
      %764 = vmatprep.subr.mxu0 0.0
      %765 = vmatpush1.msra.mxu0 %v736
      %766 = vmatprep.subr.mxu0 0.0
      %767 = vmatpush1.msra.mxu0 %v737
      %768 = vmatprep.subr.mxu0 0.0
      %769 = vmatpush1.msra.mxu0 %v738
      %770 = vmatprep.subr.mxu0 0.0
      %771 = vmatpush1.msra.mxu0 %v739
      %772 = vmatprep.subr.mxu0 0.0
      %773 = vmatpush1.msra.mxu0 %v740
      %774 = vmatprep.subr.mxu0 0.0
      %775 = vmatpush1.msra.mxu0 %v741
      %776 = vmatprep.subr.mxu0 0.0
      %777 = vmatpush1.msra.mxu0 %v742
      %778 = vmatprep.subr.mxu0 0.0
      %779 = vmatpush1.msra.mxu0 %v743
      %780 = vmatprep.subr.mxu0 0.0
      %781 = vmatpush1.msra.mxu0 %v744
      %782 = vmatprep.subr.mxu0 0.0
      %783 = vmatpush1.msra.mxu0 %v745
      %784 = vmatprep.subr.mxu0 0.0
      %785 = vmatpush1.msra.mxu0 %v746
      %786 = vmatprep.subr.mxu0 0.0
      %787 = vmatpush1.msra.mxu0 0.0
      %788 = vmatprep.subr.mxu0 0.0
      %789 = vmatpush1.msra.mxu0 0.0
      %790 = vmatprep.subr.mxu0 0.0
      %791 = vmatpush1.msra.mxu0 0.0
      %792 = vmatprep.subr.mxu0 0.0
      %793 = vmatpush1.msra.mxu0 0.0
      %794 = vmatprep.subr.mxu0 0.0
      %795 = vmatpush1.msra.mxu0 0.0
      %796 = vmatprep.subr.mxu0 0.0
      %797 = vmatpush1.msra.mxu0 0.0
      %798 = vmatprep.subr.mxu0 0.0
      %799 = vmatpush1.msra.mxu0 0.0
      %800 = vmatprep.subr.mxu0 0.0
      %801 = vmatpush1.msra.mxu0 0.0
      %802 = vmatprep.subr.mxu0 0.0
      %803 = vmatpush1.msra.mxu0 0.0
      %804 = vmatprep.subr.mxu0 0.0
      %805 = vmatpush1.msra.mxu0 0.0
      %806 = vmatprep.subr.mxu0 0.0
      %807 = vmatpush1.msra.mxu0 0.0
      %808 = vmatprep.subr.mxu0 0.0
      %809 = vmatpush1.msra.mxu0 0.0
      %810 = vmatprep.subr.mxu0 0.0
      %811 = vmatpush1.msra.mxu0 0.0
      %812 = vmatprep.subr.mxu0 0.0
      %813 = vmatpush1.msra.mxu0 0.0
      %814 = vmatprep.subr.mxu0 0.0
      %815 = vmatpush1.msra.mxu0 0.0
      %816 = vmatprep.subr.mxu0 0.0
      %817 = vmatpush1.msra.mxu0 0.0
      %818 = vmatprep.mubr.f32.mxu0 0.0
      %819 = vmatmul.mubr.f32.gmra.mrb[0].mxu0 %v544
      %v820 = vpop.f32.mrb[0].mxu0
      %v821 = vadd.f32 %v752, %v820
      %v822 = vpop.f32.mrb[0].mxu0
      %823 = vdwg.mxu0
      %vm824 = vcmask 261120
      %v826 = vsel %vm824, %v635, 0
      %v829 = vsel %vm824, %v728, 0
      %831 = vmatprep.subr.mxu0 0.0
      %832 = vmatpush1.xpose.msra.mxu0 %v829
      %833 = vmatprep.subr.mxu0 0.0
      %834 = vmatpush1.xpose.msra.mxu0 0.0
      %835 = vmatprep.subr.mxu0 0.0
      %836 = vmatpush1.xpose.msra.mxu0 0.0
      %837 = vmatprep.subr.mxu0 0.0
      %838 = vmatpush1.xpose.msra.mxu0 0.0
      %839 = vmatprep.subr.mxu0 0.0
      %840 = vmatpush1.xpose.msra.mxu0 0.0
      %841 = vmatprep.subr.mxu0 0.0
      %842 = vmatpush1.xpose.msra.mxu0 0.0
      %843 = vmatprep.subr.mxu0 0.0
      %844 = vmatpush1.xpose.msra.mxu0 0.0
      %845 = vmatprep.subr.mxu0 0.0
      %846 = vmatpush1.xpose.msra.mxu0 0.0
      %847 = vmatprep.subr.mxu0 0.0
      %848 = vmatpush1.xpose.msra.mxu0 0.0
      %849 = vmatprep.subr.mxu0 0.0
      %850 = vmatpush1.xpose.msra.mxu0 0.0
      %851 = vmatprep.subr.mxu0 0.0
      %852 = vmatpush1.xpose.msra.mxu0 0.0
      %853 = vmatprep.subr.mxu0 0.0
      %854 = vmatpush1.xpose.msra.mxu0 0.0
      %855 = vmatprep.subr.mxu0 0.0
      %856 = vmatpush1.xpose.msra.mxu0 0.0
      %857 = vmatprep.subr.mxu0 0.0
      %858 = vmatpush1.xpose.msra.mxu0 0.0
      %859 = vmatprep.subr.mxu0 0.0
      %860 = vmatpush1.xpose.msra.mxu0 0.0
      %861 = vmatprep.subr.mxu0 0.0
      %862 = vmatpush1.xpose.msra.mxu0 0.0
      %863 = vmatprep.subr.mxu0 0.0
      %864 = vmatpush1.xpose.msra.mxu0 0.0
      %865 = vmatprep.subr.mxu0 0.0
      %866 = vmatpush1.xpose.msra.mxu0 0.0
      %867 = vmatprep.subr.mxu0 0.0
      %868 = vmatpush1.xpose.msra.mxu0 0.0
      %869 = vmatprep.subr.mxu0 0.0
      %870 = vmatpush1.xpose.msra.mxu0 0.0
      %871 = vmatprep.subr.mxu0 0.0
      %872 = vmatpush1.xpose.msra.mxu0 0.0
      %873 = vmatprep.subr.mxu0 0.0
      %874 = vmatpush1.xpose.msra.mxu0 0.0
      %875 = vmatprep.subr.mxu0 0.0
      %876 = vmatpush1.xpose.msra.mxu0 0.0
      %877 = vmatprep.subr.mxu0 0.0
      %878 = vmatpush1.xpose.msra.mxu0 0.0
      %879 = vmatprep.subr.mxu0 0.0
      %880 = vmatpush1.xpose.msra.mxu0 0.0
      %881 = vmatprep.subr.mxu0 0.0
      %882 = vmatpush1.xpose.msra.mxu0 0.0
      %883 = vmatprep.subr.mxu0 0.0
      %884 = vmatpush1.xpose.msra.mxu0 0.0
      %885 = vmatprep.subr.mxu0 0.0
      %886 = vmatpush1.xpose.msra.mxu0 0.0
      %887 = vmatprep.subr.mxu0 0.0
      %888 = vmatpush1.xpose.msra.mxu0 0.0
      %889 = vmatprep.subr.mxu0 0.0
      %890 = vmatpush1.xpose.msra.mxu0 0.0
      %891 = vmatprep.subr.mxu0 0.0
      %892 = vmatpush1.xpose.msra.mxu0 0.0
      %893 = vmatprep.subr.mxu0 0.0
      %894 = vmatpush1.xpose.msra.mxu0 0.0
      %895 = vmatprep.mubr.f32.mxu0 0.0
      %896 = vmatmul.mubr.f32.gmra.mrb[0].mxu0 %v826
      %v897 = vpop.f32.mrb[0].mxu0
      %v898 = vadd.f32 0.0, %v897
      %v899 = vpop.f32.mrb[0].mxu0
      %900 = vdwg.mxu0
      %v901 = vmul.f32 %v898, 0.17677669
      %vm902 = vcmask 64512
      %v903 = vsel %vm902, %v901, -inf
      %904 = vmax.xlane.f32.xlu0 %v903
      %v905 = vpop.xlane.xlu0 %904
      %v906 = vsub.f32 %v901, %v905
      %v907 = vmul.f32 %v906, 1.442695
      %v908 = vpow.pop %v907
      %v909 = vsel %vm902, %v908, 0.0
      %910 = vadd.xlane.f32.xlu0 %v909
      %v911 = vpop.xlane.xlu0 %910
      %v912 = vrcp.pop %v911
      %v913 = vmul.f32 %v908, %v912
      %v915 = vsel %vm902, %v913, 0
      %917 = vmatprep.subr.mxu0 0.0
      %918 = vmatpush1.msra.mxu0 %v821
      %919 = vmatprep.subr.mxu0 0.0
      %920 = vmatpush1.msra.mxu0 0.0
      %921 = vmatprep.subr.mxu0 0.0
      %922 = vmatpush1.msra.mxu0 0.0
      %923 = vmatprep.subr.mxu0 0.0
      %924 = vmatpush1.msra.mxu0 0.0
      %925 = vmatprep.subr.mxu0 0.0
      %926 = vmatpush1.msra.mxu0 0.0
      %927 = vmatprep.subr.mxu0 0.0
      %928 = vmatpush1.msra.mxu0 0.0
      %929 = vmatprep.subr.mxu0 0.0
      %930 = vmatpush1.msra.mxu0 0.0
      %931 = vmatprep.subr.mxu0 0.0
      %932 = vmatpush1.msra.mxu0 0.0
      %933 = vmatprep.subr.mxu0 0.0
      %934 = vmatpush1.msra.mxu0 0.0
      %935 = vmatprep.subr.mxu0 0.0
      %936 = vmatpush1.msra.mxu0 0.0
      %937 = vmatprep.subr.mxu0 0.0
      %938 = vmatpush1.msra.mxu0 0.0
      %939 = vmatprep.subr.mxu0 0.0
      %940 = vmatpush1.msra.mxu0 0.0
      %941 = vmatprep.subr.mxu0 0.0
      %942 = vmatpush1.msra.mxu0 0.0
      %943 = vmatprep.subr.mxu0 0.0
      %944 = vmatpush1.msra.mxu0 0.0
      %945 = vmatprep.subr.mxu0 0.0
      %946 = vmatpush1.msra.mxu0 0.0
      %947 = vmatprep.subr.mxu0 0.0
      %948 = vmatpush1.msra.mxu0 0.0
      %949 = vmatprep.subr.mxu0 0.0
      %950 = vmatpush1.msra.mxu0 0.0
      %951 = vmatprep.subr.mxu0 0.0
      %952 = vmatpush1.msra.mxu0 0.0
      %953 = vmatprep.subr.mxu0 0.0
      %954 = vmatpush1.msra.mxu0 0.0
      %955 = vmatprep.subr.mxu0 0.0
      %956 = vmatpush1.msra.mxu0 0.0
      %957 = vmatprep.subr.mxu0 0.0
      %958 = vmatpush1.msra.mxu0 0.0
      %959 = vmatprep.subr.mxu0 0.0
      %960 = vmatpush1.msra.mxu0 0.0
      %961 = vmatprep.subr.mxu0 0.0
      %962 = vmatpush1.msra.mxu0 0.0
      %963 = vmatprep.subr.mxu0 0.0
      %964 = vmatpush1.msra.mxu0 0.0
      %965 = vmatprep.subr.mxu0 0.0
      %966 = vmatpush1.msra.mxu0 0.0
      %967 = vmatprep.subr.mxu0 0.0
      %968 = vmatpush1.msra.mxu0 0.0
      %969 = vmatprep.subr.mxu0 0.0
      %970 = vmatpush1.msra.mxu0 0.0
      %971 = vmatprep.subr.mxu0 0.0
      %972 = vmatpush1.msra.mxu0 0.0
      %973 = vmatprep.subr.mxu0 0.0
      %974 = vmatpush1.msra.mxu0 0.0
      %975 = vmatprep.subr.mxu0 0.0
      %976 = vmatpush1.msra.mxu0 0.0
      %977 = vmatprep.subr.mxu0 0.0
      %978 = vmatpush1.msra.mxu0 0.0
      %979 = vmatprep.subr.mxu0 0.0
      %980 = vmatpush1.msra.mxu0 0.0
      %981 = vmatprep.mubr.f32.mxu0 0.0
      %982 = vmatmul.mubr.f32.gmra.mrb[0].mxu0 %v915
      %v983 = vpop.f32.mrb[0].mxu0
      %v984 = vadd.f32 0.0, %v983
      %v985 = vpop.f32.mrb[0].mxu0
      %986 = vdwg.mxu0
      %v987 = vld [vmem:[%s7] sm:$0xff]
      %v988 = vld [vmem:[%s7 + $0x8] sm:$0xff]
      %v989 = vld [vmem:[%s7 + $0x10] sm:$0xff]
      %v990 = vld [vmem:[%s7 + $0x18] sm:$0xff]
      %s991 = scalar_lea.vmem %s1, 128
      %v992 = vld [vmem:[%s991] sm:$0xff]
      %v993 = vld [vmem:[%s991 + $0x8] sm:$0xff]
      %v994 = vld [vmem:[%s991 + $0x10] sm:$0xff]
      %v995 = vld [vmem:[%s991 + $0x18] sm:$0xff]
      %v996 = vld [vmem:[%s991 + $0x20] sm:$0xff]
      %v997 = vld [vmem:[%s991 + $0x28] sm:$0xff]
      %v998 = vld [vmem:[%s991 + $0x30] sm:$0xff]
      %v999 = vld [vmem:[%s991 + $0x38] sm:$0xff]
      %v1000 = vld [vmem:[%s991 + $0x40] sm:$0xff]
      %v1001 = vld [vmem:[%s991 + $0x48] sm:$0xff]
      %v1002 = vld [vmem:[%s991 + $0x50] sm:$0xff]
      %v1003 = vld [vmem:[%s991 + $0x58] sm:$0xff]
      %v1004 = vld [vmem:[%s991 + $0x60] sm:$0xff]
      %v1005 = vld [vmem:[%s991 + $0x68] sm:$0xff]
      %v1006 = vld [vmem:[%s991 + $0x70] sm:$0xff]
      %v1007 = vld [vmem:[%s991 + $0x78] sm:$0xff]
      %s1008 = scalar_lea.vmem %s2, 1
      %v1009 = vld [vmem:[%s1008] sm:$0x1]
      %v1011 = vlaneseq
      %v1012 = vshrl.u32 %v1011, 7
      %v1013 = vsub.s32 0, %v1012
      %v1014 = vrot.slane %v1009, %v1013
      %1016 = vmatprep.subr.mxu0 0.0
      %1017 = vmatpush1.msra.mxu0 %v992
      %1018 = vmatprep.subr.mxu0 0.0
      %1019 = vmatpush1.msra.mxu0 %v993
      %1020 = vmatprep.subr.mxu0 0.0
      %1021 = vmatpush1.msra.mxu0 %v994
      %1022 = vmatprep.subr.mxu0 0.0
      %1023 = vmatpush1.msra.mxu0 %v995
      %1024 = vmatprep.subr.mxu0 0.0
      %1025 = vmatpush1.msra.mxu0 %v996
      %1026 = vmatprep.subr.mxu0 0.0
      %1027 = vmatpush1.msra.mxu0 %v997
      %1028 = vmatprep.subr.mxu0 0.0
      %1029 = vmatpush1.msra.mxu0 %v998
      %1030 = vmatprep.subr.mxu0 0.0
      %1031 = vmatpush1.msra.mxu0 %v999
      %1032 = vmatprep.subr.mxu0 0.0
      %1033 = vmatpush1.msra.mxu0 %v1000
      %1034 = vmatprep.subr.mxu0 0.0
      %1035 = vmatpush1.msra.mxu0 %v1001
      %1036 = vmatprep.subr.mxu0 0.0
      %1037 = vmatpush1.msra.mxu0 %v1002
      %1038 = vmatprep.subr.mxu0 0.0
      %1039 = vmatpush1.msra.mxu0 %v1003
      %1040 = vmatprep.subr.mxu0 0.0
      %1041 = vmatpush1.msra.mxu0 %v1004
      %1042 = vmatprep.subr.mxu0 0.0
      %1043 = vmatpush1.msra.mxu0 %v1005
      %1044 = vmatprep.subr.mxu0 0.0
      %1045 = vmatpush1.msra.mxu0 %v1006
      %1046 = vmatprep.subr.mxu0 0.0
      %1047 = vmatpush1.msra.mxu0 %v1007
      %1048 = vmatprep.subr.mxu0 0.0
      %1049 = vmatpush1.msra.mxu0 0.0
      %1050 = vmatprep.subr.mxu0 0.0
      %1051 = vmatpush1.msra.mxu0 0.0
      %1052 = vmatprep.subr.mxu0 0.0
      %1053 = vmatpush1.msra.mxu0 0.0
      %1054 = vmatprep.subr.mxu0 0.0
      %1055 = vmatpush1.msra.mxu0 0.0
      %1056 = vmatprep.subr.mxu0 0.0
      %1057 = vmatpush1.msra.mxu0 0.0
      %1058 = vmatprep.subr.mxu0 0.0
      %1059 = vmatpush1.msra.mxu0 0.0
      %1060 = vmatprep.subr.mxu0 0.0
      %1061 = vmatpush1.msra.mxu0 0.0
      %1062 = vmatprep.subr.mxu0 0.0
      %1063 = vmatpush1.msra.mxu0 0.0
      %1064 = vmatprep.subr.mxu0 0.0
      %1065 = vmatpush1.msra.mxu0 0.0
      %1066 = vmatprep.subr.mxu0 0.0
      %1067 = vmatpush1.msra.mxu0 0.0
      %1068 = vmatprep.subr.mxu0 0.0
      %1069 = vmatpush1.msra.mxu0 0.0
      %1070 = vmatprep.subr.mxu0 0.0
      %1071 = vmatpush1.msra.mxu0 0.0
      %1072 = vmatprep.subr.mxu0 0.0
      %1073 = vmatpush1.msra.mxu0 0.0
      %1074 = vmatprep.subr.mxu0 0.0
      %1075 = vmatpush1.msra.mxu0 0.0
      %1076 = vmatprep.subr.mxu0 0.0
      %1077 = vmatpush1.msra.mxu0 0.0
      %1078 = vmatprep.subr.mxu0 0.0
      %1079 = vmatpush1.msra.mxu0 0.0
      %1080 = vmatprep.mubr.f32.mxu0 0.0
      %1081 = vmatmul.mubr.f32.gmra.mrb[0].mxu0 %v544
      %v1082 = vpop.f32.mrb[0].mxu0
      %v1083 = vadd.f32 %v1014, %v1082
      %v1084 = vpop.f32.mrb[0].mxu0
      %1085 = vdwg.mxu0
      %s1086 = scalar_lea.vmem %s3, 128
      %v1087 = vld [vmem:[%s1086] sm:$0xff]
      %v1088 = vld [vmem:[%s1086 + $0x8] sm:$0xff]
      %v1089 = vld [vmem:[%s1086 + $0x10] sm:$0xff]
      %v1090 = vld [vmem:[%s1086 + $0x18] sm:$0xff]
      %v1091 = vld [vmem:[%s1086 + $0x20] sm:$0xff]
      %v1092 = vld [vmem:[%s1086 + $0x28] sm:$0xff]
      %v1093 = vld [vmem:[%s1086 + $0x30] sm:$0xff]
      %v1094 = vld [vmem:[%s1086 + $0x38] sm:$0xff]
      %v1095 = vld [vmem:[%s1086 + $0x40] sm:$0xff]
      %v1096 = vld [vmem:[%s1086 + $0x48] sm:$0xff]
      %v1097 = vld [vmem:[%s1086 + $0x50] sm:$0xff]
      %v1098 = vld [vmem:[%s1086 + $0x58] sm:$0xff]
      %v1099 = vld [vmem:[%s1086 + $0x60] sm:$0xff]
      %v1100 = vld [vmem:[%s1086 + $0x68] sm:$0xff]
      %v1101 = vld [vmem:[%s1086 + $0x70] sm:$0xff]
      %v1102 = vld [vmem:[%s1086 + $0x78] sm:$0xff]
      %s1103 = scalar_lea.vmem %s4, 1
      %v1104 = vld [vmem:[%s1103] sm:$0x1]
      %v1106 = vlaneseq
      %v1107 = vshrl.u32 %v1106, 7
      %v1108 = vsub.s32 0, %v1107
      %v1109 = vrot.slane %v1104, %v1108
      %1111 = vmatprep.subr.mxu0 0.0
      %1112 = vmatpush1.msra.mxu0 %v1087
      %1113 = vmatprep.subr.mxu0 0.0
      %1114 = vmatpush1.msra.mxu0 %v1088
      %1115 = vmatprep.subr.mxu0 0.0
      %1116 = vmatpush1.msra.mxu0 %v1089
      %1117 = vmatprep.subr.mxu0 0.0
      %1118 = vmatpush1.msra.mxu0 %v1090
      %1119 = vmatprep.subr.mxu0 0.0
      %1120 = vmatpush1.msra.mxu0 %v1091
      %1121 = vmatprep.subr.mxu0 0.0
      %1122 = vmatpush1.msra.mxu0 %v1092
      %1123 = vmatprep.subr.mxu0 0.0
      %1124 = vmatpush1.msra.mxu0 %v1093
      %1125 = vmatprep.subr.mxu0 0.0
      %1126 = vmatpush1.msra.mxu0 %v1094
      %1127 = vmatprep.subr.mxu0 0.0
      %1128 = vmatpush1.msra.mxu0 %v1095
      %1129 = vmatprep.subr.mxu0 0.0
      %1130 = vmatpush1.msra.mxu0 %v1096
      %1131 = vmatprep.subr.mxu0 0.0
      %1132 = vmatpush1.msra.mxu0 %v1097
      %1133 = vmatprep.subr.mxu0 0.0
      %1134 = vmatpush1.msra.mxu0 %v1098
      %1135 = vmatprep.subr.mxu0 0.0
      %1136 = vmatpush1.msra.mxu0 %v1099
      %1137 = vmatprep.subr.mxu0 0.0
      %1138 = vmatpush1.msra.mxu0 %v1100
      %1139 = vmatprep.subr.mxu0 0.0
      %1140 = vmatpush1.msra.mxu0 %v1101
      %1141 = vmatprep.subr.mxu0 0.0
      %1142 = vmatpush1.msra.mxu0 %v1102
      %1143 = vmatprep.subr.mxu0 0.0
      %1144 = vmatpush1.msra.mxu0 0.0
      %1145 = vmatprep.subr.mxu0 0.0
      %1146 = vmatpush1.msra.mxu0 0.0
      %1147 = vmatprep.subr.mxu0 0.0
      %1148 = vmatpush1.msra.mxu0 0.0
      %1149 = vmatprep.subr.mxu0 0.0
      %1150 = vmatpush1.msra.mxu0 0.0
      %1151 = vmatprep.subr.mxu0 0.0
      %1152 = vmatpush1.msra.mxu0 0.0
      %1153 = vmatprep.subr.mxu0 0.0
      %1154 = vmatpush1.msra.mxu0 0.0
      %1155 = vmatprep.subr.mxu0 0.0
      %1156 = vmatpush1.msra.mxu0 0.0
      %1157 = vmatprep.subr.mxu0 0.0
      %1158 = vmatpush1.msra.mxu0 0.0
      %1159 = vmatprep.subr.mxu0 0.0
      %1160 = vmatpush1.msra.mxu0 0.0
      %1161 = vmatprep.subr.mxu0 0.0
      %1162 = vmatpush1.msra.mxu0 0.0
      %1163 = vmatprep.subr.mxu0 0.0
      %1164 = vmatpush1.msra.mxu0 0.0
      %1165 = vmatprep.subr.mxu0 0.0
      %1166 = vmatpush1.msra.mxu0 0.0
      %1167 = vmatprep.subr.mxu0 0.0
      %1168 = vmatpush1.msra.mxu0 0.0
      %1169 = vmatprep.subr.mxu0 0.0
      %1170 = vmatpush1.msra.mxu0 0.0
      %1171 = vmatprep.subr.mxu0 0.0
      %1172 = vmatpush1.msra.mxu0 0.0
      %1173 = vmatprep.subr.mxu0 0.0
      %1174 = vmatpush1.msra.mxu0 0.0
      %1175 = vmatprep.mubr.f32.mxu0 0.0
      %1176 = vmatmul.mubr.f32.gmra.mrb[0].mxu0 %v544
      %v1177 = vpop.f32.mrb[0].mxu0
      %v1178 = vadd.f32 %v1109, %v1177
      %v1179 = vpop.f32.mrb[0].mxu0
      %1180 = vdwg.mxu0
      %s1181 = scalar_lea.vmem %s5, 128
      %v1182 = vld [vmem:[%s1181] sm:$0xff]
      %v1183 = vld [vmem:[%s1181 + $0x8] sm:$0xff]
      %v1184 = vld [vmem:[%s1181 + $0x10] sm:$0xff]
      %v1185 = vld [vmem:[%s1181 + $0x18] sm:$0xff]
      %v1186 = vld [vmem:[%s1181 + $0x20] sm:$0xff]
      %v1187 = vld [vmem:[%s1181 + $0x28] sm:$0xff]
      %v1188 = vld [vmem:[%s1181 + $0x30] sm:$0xff]
      %v1189 = vld [vmem:[%s1181 + $0x38] sm:$0xff]
      %v1190 = vld [vmem:[%s1181 + $0x40] sm:$0xff]
      %v1191 = vld [vmem:[%s1181 + $0x48] sm:$0xff]
      %v1192 = vld [vmem:[%s1181 + $0x50] sm:$0xff]
      %v1193 = vld [vmem:[%s1181 + $0x58] sm:$0xff]
      %v1194 = vld [vmem:[%s1181 + $0x60] sm:$0xff]
      %v1195 = vld [vmem:[%s1181 + $0x68] sm:$0xff]
      %v1196 = vld [vmem:[%s1181 + $0x70] sm:$0xff]
      %v1197 = vld [vmem:[%s1181 + $0x78] sm:$0xff]
      %s1198 = scalar_lea.vmem %s6, 1
      %v1199 = vld [vmem:[%s1198] sm:$0x1]
      %v1201 = vlaneseq
      %v1202 = vshrl.u32 %v1201, 7
      %v1203 = vsub.s32 0, %v1202
      %v1204 = vrot.slane %v1199, %v1203
      %1206 = vmatprep.subr.mxu0 0.0
      %1207 = vmatpush1.msra.mxu0 %v1182
      %1208 = vmatprep.subr.mxu0 0.0
      %1209 = vmatpush1.msra.mxu0 %v1183
      %1210 = vmatprep.subr.mxu0 0.0
      %1211 = vmatpush1.msra.mxu0 %v1184
      %1212 = vmatprep.subr.mxu0 0.0
      %1213 = vmatpush1.msra.mxu0 %v1185
      %1214 = vmatprep.subr.mxu0 0.0
      %1215 = vmatpush1.msra.mxu0 %v1186
      %1216 = vmatprep.subr.mxu0 0.0
      %1217 = vmatpush1.msra.mxu0 %v1187
      %1218 = vmatprep.subr.mxu0 0.0
      %1219 = vmatpush1.msra.mxu0 %v1188
      %1220 = vmatprep.subr.mxu0 0.0
      %1221 = vmatpush1.msra.mxu0 %v1189
      %1222 = vmatprep.subr.mxu0 0.0
      %1223 = vmatpush1.msra.mxu0 %v1190
      %1224 = vmatprep.subr.mxu0 0.0
      %1225 = vmatpush1.msra.mxu0 %v1191
      %1226 = vmatprep.subr.mxu0 0.0
      %1227 = vmatpush1.msra.mxu0 %v1192
      %1228 = vmatprep.subr.mxu0 0.0
      %1229 = vmatpush1.msra.mxu0 %v1193
      %1230 = vmatprep.subr.mxu0 0.0
      %1231 = vmatpush1.msra.mxu0 %v1194
      %1232 = vmatprep.subr.mxu0 0.0
      %1233 = vmatpush1.msra.mxu0 %v1195
      %1234 = vmatprep.subr.mxu0 0.0
      %1235 = vmatpush1.msra.mxu0 %v1196
      %1236 = vmatprep.subr.mxu0 0.0
      %1237 = vmatpush1.msra.mxu0 %v1197
      %1238 = vmatprep.subr.mxu0 0.0
      %1239 = vmatpush1.msra.mxu0 0.0
      %1240 = vmatprep.subr.mxu0 0.0
      %1241 = vmatpush1.msra.mxu0 0.0
      %1242 = vmatprep.subr.mxu0 0.0
      %1243 = vmatpush1.msra.mxu0 0.0
      %1244 = vmatprep.subr.mxu0 0.0
      %1245 = vmatpush1.msra.mxu0 0.0
      %1246 = vmatprep.subr.mxu0 0.0
      %1247 = vmatpush1.msra.mxu0 0.0
      %1248 = vmatprep.subr.mxu0 0.0
      %1249 = vmatpush1.msra.mxu0 0.0
      %1250 = vmatprep.subr.mxu0 0.0
      %1251 = vmatpush1.msra.mxu0 0.0
      %1252 = vmatprep.subr.mxu0 0.0
      %1253 = vmatpush1.msra.mxu0 0.0
      %1254 = vmatprep.subr.mxu0 0.0
      %1255 = vmatpush1.msra.mxu0 0.0
      %1256 = vmatprep.subr.mxu0 0.0
      %1257 = vmatpush1.msra.mxu0 0.0
      %1258 = vmatprep.subr.mxu0 0.0
      %1259 = vmatpush1.msra.mxu0 0.0
      %1260 = vmatprep.subr.mxu0 0.0
      %1261 = vmatpush1.msra.mxu0 0.0
      %1262 = vmatprep.subr.mxu0 0.0
      %1263 = vmatpush1.msra.mxu0 0.0
      %1264 = vmatprep.subr.mxu0 0.0
      %1265 = vmatpush1.msra.mxu0 0.0
      %1266 = vmatprep.subr.mxu0 0.0
      %1267 = vmatpush1.msra.mxu0 0.0
      %1268 = vmatprep.subr.mxu0 0.0
      %1269 = vmatpush1.msra.mxu0 0.0
      %1270 = vmatprep.mubr.f32.mxu0 0.0
      %1271 = vmatmul.mubr.f32.gmra.mrb[0].mxu0 %v544
      %v1272 = vpop.f32.mrb[0].mxu0
      %v1273 = vadd.f32 %v1204, %v1272
      %v1274 = vpop.f32.mrb[0].mxu0
      %1275 = vdwg.mxu0
      %v1277 = vsel %vm824, %v1083, 0
      %v1280 = vsel %vm824, %v1178, 0
      %1282 = vmatprep.subr.mxu0 0.0
      %1283 = vmatpush1.xpose.msra.mxu0 %v1280
      %1284 = vmatprep.subr.mxu0 0.0
      %1285 = vmatpush1.xpose.msra.mxu0 0.0
      %1286 = vmatprep.subr.mxu0 0.0
      %1287 = vmatpush1.xpose.msra.mxu0 0.0
      %1288 = vmatprep.subr.mxu0 0.0
      %1289 = vmatpush1.xpose.msra.mxu0 0.0
      %1290 = vmatprep.subr.mxu0 0.0
      %1291 = vmatpush1.xpose.msra.mxu0 0.0
      %1292 = vmatprep.subr.mxu0 0.0
      %1293 = vmatpush1.xpose.msra.mxu0 0.0
      %1294 = vmatprep.subr.mxu0 0.0
      %1295 = vmatpush1.xpose.msra.mxu0 0.0
      %1296 = vmatprep.subr.mxu0 0.0
      %1297 = vmatpush1.xpose.msra.mxu0 0.0
      %1298 = vmatprep.subr.mxu0 0.0
      %1299 = vmatpush1.xpose.msra.mxu0 0.0
      %1300 = vmatprep.subr.mxu0 0.0
      %1301 = vmatpush1.xpose.msra.mxu0 0.0
      %1302 = vmatprep.subr.mxu0 0.0
      %1303 = vmatpush1.xpose.msra.mxu0 0.0
      %1304 = vmatprep.subr.mxu0 0.0
      %1305 = vmatpush1.xpose.msra.mxu0 0.0
      %1306 = vmatprep.subr.mxu0 0.0
      %1307 = vmatpush1.xpose.msra.mxu0 0.0
      %1308 = vmatprep.subr.mxu0 0.0
      %1309 = vmatpush1.xpose.msra.mxu0 0.0
      %1310 = vmatprep.subr.mxu0 0.0
      %1311 = vmatpush1.xpose.msra.mxu0 0.0
      %1312 = vmatprep.subr.mxu0 0.0
      %1313 = vmatpush1.xpose.msra.mxu0 0.0
      %1314 = vmatprep.subr.mxu0 0.0
      %1315 = vmatpush1.xpose.msra.mxu0 0.0
      %1316 = vmatprep.subr.mxu0 0.0
      %1317 = vmatpush1.xpose.msra.mxu0 0.0
      %1318 = vmatprep.subr.mxu0 0.0
      %1319 = vmatpush1.xpose.msra.mxu0 0.0
      %1320 = vmatprep.subr.mxu0 0.0
      %1321 = vmatpush1.xpose.msra.mxu0 0.0
      %1322 = vmatprep.subr.mxu0 0.0
      %1323 = vmatpush1.xpose.msra.mxu0 0.0
      %1324 = vmatprep.subr.mxu0 0.0
      %1325 = vmatpush1.xpose.msra.mxu0 0.0
      %1326 = vmatprep.subr.mxu0 0.0
      %1327 = vmatpush1.xpose.msra.mxu0 0.0
      %1328 = vmatprep.subr.mxu0 0.0
      %1329 = vmatpush1.xpose.msra.mxu0 0.0
      %1330 = vmatprep.subr.mxu0 0.0
      %1331 = vmatpush1.xpose.msra.mxu0 0.0
      %1332 = vmatprep.subr.mxu0 0.0
      %1333 = vmatpush1.xpose.msra.mxu0 0.0
      %1334 = vmatprep.subr.mxu0 0.0
      %1335 = vmatpush1.xpose.msra.mxu0 0.0
      %1336 = vmatprep.subr.mxu0 0.0
      %1337 = vmatpush1.xpose.msra.mxu0 0.0
      %1338 = vmatprep.subr.mxu0 0.0
      %1339 = vmatpush1.xpose.msra.mxu0 0.0
      %1340 = vmatprep.subr.mxu0 0.0
      %1341 = vmatpush1.xpose.msra.mxu0 0.0
      %1342 = vmatprep.subr.mxu0 0.0
      %1343 = vmatpush1.xpose.msra.mxu0 0.0
      %1344 = vmatprep.subr.mxu0 0.0
      %1345 = vmatpush1.xpose.msra.mxu0 0.0
      %1346 = vmatprep.mubr.f32.mxu0 0.0
      %1347 = vmatmul.mubr.f32.gmra.mrb[0].mxu0 %v1277
      %v1348 = vpop.f32.mrb[0].mxu0
      %v1349 = vadd.f32 0.0, %v1348
      %v1350 = vpop.f32.mrb[0].mxu0
      %1351 = vdwg.mxu0
      %v1352 = vmul.f32 %v1349, 0.17677669
      %v1353 = vsel %vm902, %v1352, -inf
      %1354 = vmax.xlane.f32.xlu0 %v1353
      %v1355 = vpop.xlane.xlu0 %1354
      %v1356 = vsub.f32 %v1352, %v1355
      %v1357 = vmul.f32 %v1356, 1.442695
      %v1358 = vpow.pop %v1357
      %v1359 = vsel %vm902, %v1358, 0.0
      %1360 = vadd.xlane.f32.xlu0 %v1359
      %v1361 = vpop.xlane.xlu0 %1360
      %v1362 = vrcp.pop %v1361
      %v1363 = vmul.f32 %v1358, %v1362
      %v1365 = vsel %vm902, %v1363, 0
      %1367 = vmatprep.subr.mxu0 0.0
      %1368 = vmatpush1.msra.mxu0 %v1273
      %1369 = vmatprep.subr.mxu0 0.0
      %1370 = vmatpush1.msra.mxu0 0.0
      %1371 = vmatprep.subr.mxu0 0.0
      %1372 = vmatpush1.msra.mxu0 0.0
      %1373 = vmatprep.subr.mxu0 0.0
      %1374 = vmatpush1.msra.mxu0 0.0
      %1375 = vmatprep.subr.mxu0 0.0
      %1376 = vmatpush1.msra.mxu0 0.0
      %1377 = vmatprep.subr.mxu0 0.0
      %1378 = vmatpush1.msra.mxu0 0.0
      %1379 = vmatprep.subr.mxu0 0.0
      %1380 = vmatpush1.msra.mxu0 0.0
      %1381 = vmatprep.subr.mxu0 0.0
      %1382 = vmatpush1.msra.mxu0 0.0
      %1383 = vmatprep.subr.mxu0 0.0
      %1384 = vmatpush1.msra.mxu0 0.0
      %1385 = vmatprep.subr.mxu0 0.0
      %1386 = vmatpush1.msra.mxu0 0.0
      %1387 = vmatprep.subr.mxu0 0.0
      %1388 = vmatpush1.msra.mxu0 0.0
      %1389 = vmatprep.subr.mxu0 0.0
      %1390 = vmatpush1.msra.mxu0 0.0
      %1391 = vmatprep.subr.mxu0 0.0
      %1392 = vmatpush1.msra.mxu0 0.0
      %1393 = vmatprep.subr.mxu0 0.0
      %1394 = vmatpush1.msra.mxu0 0.0
      %1395 = vmatprep.subr.mxu0 0.0
      %1396 = vmatpush1.msra.mxu0 0.0
      %1397 = vmatprep.subr.mxu0 0.0
      %1398 = vmatpush1.msra.mxu0 0.0
      %1399 = vmatprep.subr.mxu0 0.0
      %1400 = vmatpush1.msra.mxu0 0.0
      %1401 = vmatprep.subr.mxu0 0.0
      %1402 = vmatpush1.msra.mxu0 0.0
      %1403 = vmatprep.subr.mxu0 0.0
      %1404 = vmatpush1.msra.mxu0 0.0
      %1405 = vmatprep.subr.mxu0 0.0
      %1406 = vmatpush1.msra.mxu0 0.0
      %1407 = vmatprep.subr.mxu0 0.0
      %1408 = vmatpush1.msra.mxu0 0.0
      %1409 = vmatprep.subr.mxu0 0.0
      %1410 = vmatpush1.msra.mxu0 0.0
      %1411 = vmatprep.subr.mxu0 0.0
      %1412 = vmatpush1.msra.mxu0 0.0
      %1413 = vmatprep.subr.mxu0 0.0
      %1414 = vmatpush1.msra.mxu0 0.0
      %1415 = vmatprep.subr.mxu0 0.0
      %1416 = vmatpush1.msra.mxu0 0.0
      %1417 = vmatprep.subr.mxu0 0.0
      %1418 = vmatpush1.msra.mxu0 0.0
      %1419 = vmatprep.subr.mxu0 0.0
      %1420 = vmatpush1.msra.mxu0 0.0
      %1421 = vmatprep.subr.mxu0 0.0
      %1422 = vmatpush1.msra.mxu0 0.0
      %1423 = vmatprep.subr.mxu0 0.0
      %1424 = vmatpush1.msra.mxu0 0.0
      %1425 = vmatprep.subr.mxu0 0.0
      %1426 = vmatpush1.msra.mxu0 0.0
      %1427 = vmatprep.subr.mxu0 0.0
      %1428 = vmatpush1.msra.mxu0 0.0
      %1429 = vmatprep.subr.mxu0 0.0
      %1430 = vmatpush1.msra.mxu0 0.0
      %1431 = vmatprep.mubr.f32.mxu0 0.0
      %1432 = vmatmul.mubr.f32.gmra.mrb[0].mxu0 %v1365
      %v1433 = vpop.f32.mrb[0].mxu0
      %v1434 = vadd.f32 0.0, %v1433
      %v1435 = vpop.f32.mrb[0].mxu0
      %1436 = vdwg.mxu0
      %s1437 = scalar_lea.vmem %s7, 32
      %v1438 = vld [vmem:[%s1437] sm:$0xff]
      %v1439 = vld [vmem:[%s1437 + $0x8] sm:$0xff]
      %v1440 = vld [vmem:[%s1437 + $0x10] sm:$0xff]
      %v1441 = vld [vmem:[%s1437 + $0x18] sm:$0xff]
      %v1443 = vsel %vm824, %v1434, 0
      %1445 = vmatprep.subr.mxu0 0.0
      %1446 = vmatpush1.msra.mxu0 %v1438
      %1447 = vmatprep.subr.mxu0 0.0
      %1448 = vmatpush1.msra.mxu0 %v1439
      %1449 = vmatprep.subr.mxu0 0.0
      %1450 = vmatpush1.msra.mxu0 %v1440
      %1451 = vmatprep.subr.mxu0 0.0
      %1452 = vmatpush1.msra.mxu0 %v1441
      %1453 = vmatprep.subr.mxu0 0.0
      %1454 = vmatpush1.msra.mxu0 0.0
      %1455 = vmatprep.subr.mxu0 0.0
      %1456 = vmatpush1.msra.mxu0 0.0
      %1457 = vmatprep.subr.mxu0 0.0
      %1458 = vmatpush1.msra.mxu0 0.0
      %1459 = vmatprep.subr.mxu0 0.0
      %1460 = vmatpush1.msra.mxu0 0.0
      %1461 = vmatprep.subr.mxu0 0.0
      %1462 = vmatpush1.msra.mxu0 0.0
      %1463 = vmatprep.subr.mxu0 0.0
      %1464 = vmatpush1.msra.mxu0 0.0
      %1465 = vmatprep.subr.mxu0 0.0
      %1466 = vmatpush1.msra.mxu0 0.0
      %1467 = vmatprep.subr.mxu0 0.0
      %1468 = vmatpush1.msra.mxu0 0.0
      %1469 = vmatprep.subr.mxu0 0.0
      %1470 = vmatpush1.msra.mxu0 0.0
      %1471 = vmatprep.subr.mxu0 0.0
      %1472 = vmatpush1.msra.mxu0 0.0
      %1473 = vmatprep.subr.mxu0 0.0
      %1474 = vmatpush1.msra.mxu0 0.0
      %1475 = vmatprep.subr.mxu0 0.0
      %1476 = vmatpush1.msra.mxu0 0.0
      %1477 = vmatprep.subr.mxu0 0.0
      %1478 = vmatpush1.msra.mxu0 0.0
      %1479 = vmatprep.subr.mxu0 0.0
      %1480 = vmatpush1.msra.mxu0 0.0
      %1481 = vmatprep.subr.mxu0 0.0
      %1482 = vmatpush1.msra.mxu0 0.0
      %1483 = vmatprep.subr.mxu0 0.0
      %1484 = vmatpush1.msra.mxu0 0.0
      %1485 = vmatprep.subr.mxu0 0.0
      %1486 = vmatpush1.msra.mxu0 0.0
      %1487 = vmatprep.subr.mxu0 0.0
      %1488 = vmatpush1.msra.mxu0 0.0
      %1489 = vmatprep.subr.mxu0 0.0
      %1490 = vmatpush1.msra.mxu0 0.0
      %1491 = vmatprep.subr.mxu0 0.0
      %1492 = vmatpush1.msra.mxu0 0.0
      %1493 = vmatprep.subr.mxu0 0.0
      %1494 = vmatpush1.msra.mxu0 0.0
      %1495 = vmatprep.subr.mxu0 0.0
      %1496 = vmatpush1.msra.mxu0 0.0
      %1497 = vmatprep.subr.mxu0 0.0
      %1498 = vmatpush1.msra.mxu0 0.0
      %1499 = vmatprep.subr.mxu0 0.0
      %1500 = vmatpush1.msra.mxu0 0.0
      %1501 = vmatprep.subr.mxu0 0.0
      %1502 = vmatpush1.msra.mxu0 0.0
      %1503 = vmatprep.subr.mxu0 0.0
      %1504 = vmatpush1.msra.mxu0 0.0
      %1505 = vmatprep.subr.mxu0 0.0
      %1506 = vmatpush1.msra.mxu0 0.0
      %1507 = vmatprep.subr.mxu0 0.0
      %1508 = vmatpush1.msra.mxu0 0.0
      %1509 = vmatprep.mubr.f32.mxu0 0.0
      %1510 = vmatmul.mubr.f32.gmra.mrb[0].mxu0 %v1443
      %v1511 = vpop.f32.mrb[0].mxu0
      %v1512 = vadd.f32 0.0, %v1511
      %v1513 = vpop.f32.mrb[0].mxu0
      %1514 = vdwg.mxu0
      %v1516 = vsel %vm824, %v984, 0
      %1518 = vmatprep.subr.mxu0 0.0
      %1519 = vmatpush1.msra.mxu0 %v987
      %1520 = vmatprep.subr.mxu0 0.0
      %1521 = vmatpush1.msra.mxu0 %v988
      %1522 = vmatprep.subr.mxu0 0.0
      %1523 = vmatpush1.msra.mxu0 %v989
      %1524 = vmatprep.subr.mxu0 0.0
      %1525 = vmatpush1.msra.mxu0 %v990
      %1526 = vmatprep.subr.mxu0 0.0
      %1527 = vmatpush1.msra.mxu0 0.0
      %1528 = vmatprep.subr.mxu0 0.0
      %1529 = vmatpush1.msra.mxu0 0.0
      %1530 = vmatprep.subr.mxu0 0.0
      %1531 = vmatpush1.msra.mxu0 0.0
      %1532 = vmatprep.subr.mxu0 0.0
      %1533 = vmatpush1.msra.mxu0 0.0
      %1534 = vmatprep.subr.mxu0 0.0
      %1535 = vmatpush1.msra.mxu0 0.0
      %1536 = vmatprep.subr.mxu0 0.0
      %1537 = vmatpush1.msra.mxu0 0.0
      %1538 = vmatprep.subr.mxu0 0.0
      %1539 = vmatpush1.msra.mxu0 0.0
      %1540 = vmatprep.subr.mxu0 0.0
      %1541 = vmatpush1.msra.mxu0 0.0
      %1542 = vmatprep.subr.mxu0 0.0
      %1543 = vmatpush1.msra.mxu0 0.0
      %1544 = vmatprep.subr.mxu0 0.0
      %1545 = vmatpush1.msra.mxu0 0.0
      %1546 = vmatprep.subr.mxu0 0.0
      %1547 = vmatpush1.msra.mxu0 0.0
      %1548 = vmatprep.subr.mxu0 0.0
      %1549 = vmatpush1.msra.mxu0 0.0
      %1550 = vmatprep.subr.mxu0 0.0
      %1551 = vmatpush1.msra.mxu0 0.0
      %1552 = vmatprep.subr.mxu0 0.0
      %1553 = vmatpush1.msra.mxu0 0.0
      %1554 = vmatprep.subr.mxu0 0.0
      %1555 = vmatpush1.msra.mxu0 0.0
      %1556 = vmatprep.subr.mxu0 0.0
      %1557 = vmatpush1.msra.mxu0 0.0
      %1558 = vmatprep.subr.mxu0 0.0
      %1559 = vmatpush1.msra.mxu0 0.0
      %1560 = vmatprep.subr.mxu0 0.0
      %1561 = vmatpush1.msra.mxu0 0.0
      %1562 = vmatprep.subr.mxu0 0.0
      %1563 = vmatpush1.msra.mxu0 0.0
      %1564 = vmatprep.subr.mxu0 0.0
      %1565 = vmatpush1.msra.mxu0 0.0
      %1566 = vmatprep.subr.mxu0 0.0
      %1567 = vmatpush1.msra.mxu0 0.0
      %1568 = vmatprep.subr.mxu0 0.0
      %1569 = vmatpush1.msra.mxu0 0.0
      %1570 = vmatprep.subr.mxu0 0.0
      %1571 = vmatpush1.msra.mxu0 0.0
      %1572 = vmatprep.subr.mxu0 0.0
      %1573 = vmatpush1.msra.mxu0 0.0
      %1574 = vmatprep.subr.mxu0 0.0
      %1575 = vmatpush1.msra.mxu0 0.0
      %1576 = vmatprep.subr.mxu0 0.0
      %1577 = vmatpush1.msra.mxu0 0.0
      %1578 = vmatprep.subr.mxu0 0.0
      %1579 = vmatpush1.msra.mxu0 0.0
      %1580 = vmatprep.subr.mxu0 0.0
      %1581 = vmatpush1.msra.mxu0 0.0
      %1582 = vmatprep.mubr.f32.mxu0 0.0
      %1583 = vmatmul.mubr.f32.gmra.mrb[0].mxu0 %v1516
      %v1584 = vpop.f32.mrb[0].mxu0
      %v1585 = vadd.f32 %v1512, %v1584
      %v1586 = vpop.f32.mrb[0].mxu0
      %1587 = vdwg.mxu0
      %s1588 = scalar_lea.vmem %s1, 256
      %v1589 = vld [vmem:[%s1588] sm:$0xff]
      %v1590 = vld [vmem:[%s1588 + $0x8] sm:$0xff]
      %v1591 = vld [vmem:[%s1588 + $0x10] sm:$0xff]
      %v1592 = vld [vmem:[%s1588 + $0x18] sm:$0xff]
      %v1593 = vld [vmem:[%s1588 + $0x20] sm:$0xff]
      %v1594 = vld [vmem:[%s1588 + $0x28] sm:$0xff]
      %v1595 = vld [vmem:[%s1588 + $0x30] sm:$0xff]
      %v1596 = vld [vmem:[%s1588 + $0x38] sm:$0xff]
      %v1597 = vld [vmem:[%s1588 + $0x40] sm:$0xff]
      %v1598 = vld [vmem:[%s1588 + $0x48] sm:$0xff]
      %v1599 = vld [vmem:[%s1588 + $0x50] sm:$0xff]
      %v1600 = vld [vmem:[%s1588 + $0x58] sm:$0xff]
      %v1601 = vld [vmem:[%s1588 + $0x60] sm:$0xff]
      %v1602 = vld [vmem:[%s1588 + $0x68] sm:$0xff]
      %v1603 = vld [vmem:[%s1588 + $0x70] sm:$0xff]
      %v1604 = vld [vmem:[%s1588 + $0x78] sm:$0xff]
      %s1605 = scalar_lea.vmem %s2, 2
      %v1606 = vld [vmem:[%s1605] sm:$0x1]
      %v1608 = vlaneseq
      %v1609 = vshrl.u32 %v1608, 7
      %v1610 = vsub.s32 0, %v1609
      %v1611 = vrot.slane %v1606, %v1610
      %1613 = vmatprep.subr.mxu0 0.0
      %1614 = vmatpush1.msra.mxu0 %v1589
      %1615 = vmatprep.subr.mxu0 0.0
      %1616 = vmatpush1.msra.mxu0 %v1590
      %1617 = vmatprep.subr.mxu0 0.0
      %1618 = vmatpush1.msra.mxu0 %v1591
      %1619 = vmatprep.subr.mxu0 0.0
      %1620 = vmatpush1.msra.mxu0 %v1592
      %1621 = vmatprep.subr.mxu0 0.0
      %1622 = vmatpush1.msra.mxu0 %v1593
      %1623 = vmatprep.subr.mxu0 0.0
      %1624 = vmatpush1.msra.mxu0 %v1594
      %1625 = vmatprep.subr.mxu0 0.0
      %1626 = vmatpush1.msra.mxu0 %v1595
      %1627 = vmatprep.subr.mxu0 0.0
      %1628 = vmatpush1.msra.mxu0 %v1596
      %1629 = vmatprep.subr.mxu0 0.0
      %1630 = vmatpush1.msra.mxu0 %v1597
      %1631 = vmatprep.subr.mxu0 0.0
      %1632 = vmatpush1.msra.mxu0 %v1598
      %1633 = vmatprep.subr.mxu0 0.0
      %1634 = vmatpush1.msra.mxu0 %v1599
      %1635 = vmatprep.subr.mxu0 0.0
      %1636 = vmatpush1.msra.mxu0 %v1600
      %1637 = vmatprep.subr.mxu0 0.0
      %1638 = vmatpush1.msra.mxu0 %v1601
      %1639 = vmatprep.subr.mxu0 0.0
      %1640 = vmatpush1.msra.mxu0 %v1602
      %1641 = vmatprep.subr.mxu0 0.0
      %1642 = vmatpush1.msra.mxu0 %v1603
      %1643 = vmatprep.subr.mxu0 0.0
      %1644 = vmatpush1.msra.mxu0 %v1604
      %1645 = vmatprep.subr.mxu0 0.0
      %1646 = vmatpush1.msra.mxu0 0.0
      %1647 = vmatprep.subr.mxu0 0.0
      %1648 = vmatpush1.msra.mxu0 0.0
      %1649 = vmatprep.subr.mxu0 0.0
      %1650 = vmatpush1.msra.mxu0 0.0
      %1651 = vmatprep.subr.mxu0 0.0
      %1652 = vmatpush1.msra.mxu0 0.0
      %1653 = vmatprep.subr.mxu0 0.0
      %1654 = vmatpush1.msra.mxu0 0.0
      %1655 = vmatprep.subr.mxu0 0.0
      %1656 = vmatpush1.msra.mxu0 0.0
      %1657 = vmatprep.subr.mxu0 0.0
      %1658 = vmatpush1.msra.mxu0 0.0
      %1659 = vmatprep.subr.mxu0 0.0
      %1660 = vmatpush1.msra.mxu0 0.0
      %1661 = vmatprep.subr.mxu0 0.0
      %1662 = vmatpush1.msra.mxu0 0.0
      %1663 = vmatprep.subr.mxu0 0.0
      %1664 = vmatpush1.msra.mxu0 0.0
      %1665 = vmatprep.subr.mxu0 0.0
      %1666 = vmatpush1.msra.mxu0 0.0
      %1667 = vmatprep.subr.mxu0 0.0
      %1668 = vmatpush1.msra.mxu0 0.0
      %1669 = vmatprep.subr.mxu0 0.0
      %1670 = vmatpush1.msra.mxu0 0.0
      %1671 = vmatprep.subr.mxu0 0.0
      %1672 = vmatpush1.msra.mxu0 0.0
      %1673 = vmatprep.subr.mxu0 0.0
      %1674 = vmatpush1.msra.mxu0 0.0
      %1675 = vmatprep.subr.mxu0 0.0
      %1676 = vmatpush1.msra.mxu0 0.0
      %1677 = vmatprep.mubr.f32.mxu0 0.0
      %1678 = vmatmul.mubr.f32.gmra.mrb[0].mxu0 %v544
      %v1679 = vpop.f32.mrb[0].mxu0
      %v1680 = vadd.f32 %v1611, %v1679
      %v1681 = vpop.f32.mrb[0].mxu0
      %1682 = vdwg.mxu0
      %s1683 = scalar_lea.vmem %s3, 256
      %v1684 = vld [vmem:[%s1683] sm:$0xff]
      %v1685 = vld [vmem:[%s1683 + $0x8] sm:$0xff]
      %v1686 = vld [vmem:[%s1683 + $0x10] sm:$0xff]
      %v1687 = vld [vmem:[%s1683 + $0x18] sm:$0xff]
      %v1688 = vld [vmem:[%s1683 + $0x20] sm:$0xff]
      %v1689 = vld [vmem:[%s1683 + $0x28] sm:$0xff]
      %v1690 = vld [vmem:[%s1683 + $0x30] sm:$0xff]
      %v1691 = vld [vmem:[%s1683 + $0x38] sm:$0xff]
      %v1692 = vld [vmem:[%s1683 + $0x40] sm:$0xff]
      %v1693 = vld [vmem:[%s1683 + $0x48] sm:$0xff]
      %v1694 = vld [vmem:[%s1683 + $0x50] sm:$0xff]
      %v1695 = vld [vmem:[%s1683 + $0x58] sm:$0xff]
      %v1696 = vld [vmem:[%s1683 + $0x60] sm:$0xff]
      %v1697 = vld [vmem:[%s1683 + $0x68] sm:$0xff]
      %v1698 = vld [vmem:[%s1683 + $0x70] sm:$0xff]
      %v1699 = vld [vmem:[%s1683 + $0x78] sm:$0xff]
      %s1700 = scalar_lea.vmem %s4, 2
      %v1701 = vld [vmem:[%s1700] sm:$0x1]
      %v1703 = vlaneseq
      %v1704 = vshrl.u32 %v1703, 7
      %v1705 = vsub.s32 0, %v1704
      %v1706 = vrot.slane %v1701, %v1705
      %1708 = vmatprep.subr.mxu0 0.0
      %1709 = vmatpush1.msra.mxu0 %v1684
      %1710 = vmatprep.subr.mxu0 0.0
      %1711 = vmatpush1.msra.mxu0 %v1685
      %1712 = vmatprep.subr.mxu0 0.0
      %1713 = vmatpush1.msra.mxu0 %v1686
      %1714 = vmatprep.subr.mxu0 0.0
      %1715 = vmatpush1.msra.mxu0 %v1687
      %1716 = vmatprep.subr.mxu0 0.0
      %1717 = vmatpush1.msra.mxu0 %v1688
      %1718 = vmatprep.subr.mxu0 0.0
      %1719 = vmatpush1.msra.mxu0 %v1689
      %1720 = vmatprep.subr.mxu0 0.0
      %1721 = vmatpush1.msra.mxu0 %v1690
      %1722 = vmatprep.subr.mxu0 0.0
      %1723 = vmatpush1.msra.mxu0 %v1691
      %1724 = vmatprep.subr.mxu0 0.0
      %1725 = vmatpush1.msra.mxu0 %v1692
      %1726 = vmatprep.subr.mxu0 0.0
      %1727 = vmatpush1.msra.mxu0 %v1693
      %1728 = vmatprep.subr.mxu0 0.0
      %1729 = vmatpush1.msra.mxu0 %v1694
      %1730 = vmatprep.subr.mxu0 0.0
      %1731 = vmatpush1.msra.mxu0 %v1695
      %1732 = vmatprep.subr.mxu0 0.0
      %1733 = vmatpush1.msra.mxu0 %v1696
      %1734 = vmatprep.subr.mxu0 0.0
      %1735 = vmatpush1.msra.mxu0 %v1697
      %1736 = vmatprep.subr.mxu0 0.0
      %1737 = vmatpush1.msra.mxu0 %v1698
      %1738 = vmatprep.subr.mxu0 0.0
      %1739 = vmatpush1.msra.mxu0 %v1699
      %1740 = vmatprep.subr.mxu0 0.0
      %1741 = vmatpush1.msra.mxu0 0.0
      %1742 = vmatprep.subr.mxu0 0.0
      %1743 = vmatpush1.msra.mxu0 0.0
      %1744 = vmatprep.subr.mxu0 0.0
      %1745 = vmatpush1.msra.mxu0 0.0
      %1746 = vmatprep.subr.mxu0 0.0
      %1747 = vmatpush1.msra.mxu0 0.0
      %1748 = vmatprep.subr.mxu0 0.0
      %1749 = vmatpush1.msra.mxu0 0.0
      %1750 = vmatprep.subr.mxu0 0.0
      %1751 = vmatpush1.msra.mxu0 0.0
      %1752 = vmatprep.subr.mxu0 0.0
      %1753 = vmatpush1.msra.mxu0 0.0
      %1754 = vmatprep.subr.mxu0 0.0
      %1755 = vmatpush1.msra.mxu0 0.0
      %1756 = vmatprep.subr.mxu0 0.0
      %1757 = vmatpush1.msra.mxu0 0.0
      %1758 = vmatprep.subr.mxu0 0.0
      %1759 = vmatpush1.msra.mxu0 0.0
      %1760 = vmatprep.subr.mxu0 0.0
      %1761 = vmatpush1.msra.mxu0 0.0
      %1762 = vmatprep.subr.mxu0 0.0
      %1763 = vmatpush1.msra.mxu0 0.0
      %1764 = vmatprep.subr.mxu0 0.0
      %1765 = vmatpush1.msra.mxu0 0.0
      %1766 = vmatprep.subr.mxu0 0.0
      %1767 = vmatpush1.msra.mxu0 0.0
      %1768 = vmatprep.subr.mxu0 0.0
      %1769 = vmatpush1.msra.mxu0 0.0
      %1770 = vmatprep.subr.mxu0 0.0
      %1771 = vmatpush1.msra.mxu0 0.0
      %1772 = vmatprep.mubr.f32.mxu0 0.0
      %1773 = vmatmul.mubr.f32.gmra.mrb[0].mxu0 %v544
      %v1774 = vpop.f32.mrb[0].mxu0
      %v1775 = vadd.f32 %v1706, %v1774
      %v1776 = vpop.f32.mrb[0].mxu0
      %1777 = vdwg.mxu0
      %s1778 = scalar_lea.vmem %s5, 256
      %v1779 = vld [vmem:[%s1778] sm:$0xff]
      %v1780 = vld [vmem:[%s1778 + $0x8] sm:$0xff]
      %v1781 = vld [vmem:[%s1778 + $0x10] sm:$0xff]
      %v1782 = vld [vmem:[%s1778 + $0x18] sm:$0xff]
      %v1783 = vld [vmem:[%s1778 + $0x20] sm:$0xff]
      %v1784 = vld [vmem:[%s1778 + $0x28] sm:$0xff]
      %v1785 = vld [vmem:[%s1778 + $0x30] sm:$0xff]
      %v1786 = vld [vmem:[%s1778 + $0x38] sm:$0xff]
      %v1787 = vld [vmem:[%s1778 + $0x40] sm:$0xff]
      %v1788 = vld [vmem:[%s1778 + $0x48] sm:$0xff]
      %v1789 = vld [vmem:[%s1778 + $0x50] sm:$0xff]
      %v1790 = vld [vmem:[%s1778 + $0x58] sm:$0xff]
      %v1791 = vld [vmem:[%s1778 + $0x60] sm:$0xff]
      %v1792 = vld [vmem:[%s1778 + $0x68] sm:$0xff]
      %v1793 = vld [vmem:[%s1778 + $0x70] sm:$0xff]
      %v1794 = vld [vmem:[%s1778 + $0x78] sm:$0xff]
      %s1795 = scalar_lea.vmem %s6, 2
      %v1796 = vld [vmem:[%s1795] sm:$0x1]
      %v1798 = vlaneseq
      %v1799 = vshrl.u32 %v1798, 7
      %v1800 = vsub.s32 0, %v1799
      %v1801 = vrot.slane %v1796, %v1800
      %1803 = vmatprep.subr.mxu0 0.0
      %1804 = vmatpush1.msra.mxu0 %v1779
      %1805 = vmatprep.subr.mxu0 0.0
      %1806 = vmatpush1.msra.mxu0 %v1780
      %1807 = vmatprep.subr.mxu0 0.0
      %1808 = vmatpush1.msra.mxu0 %v1781
      %1809 = vmatprep.subr.mxu0 0.0
      %1810 = vmatpush1.msra.mxu0 %v1782
      %1811 = vmatprep.subr.mxu0 0.0
      %1812 = vmatpush1.msra.mxu0 %v1783
      %1813 = vmatprep.subr.mxu0 0.0
      %1814 = vmatpush1.msra.mxu0 %v1784
      %1815 = vmatprep.subr.mxu0 0.0
      %1816 = vmatpush1.msra.mxu0 %v1785
      %1817 = vmatprep.subr.mxu0 0.0
      %1818 = vmatpush1.msra.mxu0 %v1786
      %1819 = vmatprep.subr.mxu0 0.0
      %1820 = vmatpush1.msra.mxu0 %v1787
      %1821 = vmatprep.subr.mxu0 0.0
      %1822 = vmatpush1.msra.mxu0 %v1788
      %1823 = vmatprep.subr.mxu0 0.0
      %1824 = vmatpush1.msra.mxu0 %v1789
      %1825 = vmatprep.subr.mxu0 0.0
      %1826 = vmatpush1.msra.mxu0 %v1790
      %1827 = vmatprep.subr.mxu0 0.0
      %1828 = vmatpush1.msra.mxu0 %v1791
      %1829 = vmatprep.subr.mxu0 0.0
      %1830 = vmatpush1.msra.mxu0 %v1792
      %1831 = vmatprep.subr.mxu0 0.0
      %1832 = vmatpush1.msra.mxu0 %v1793
      %1833 = vmatprep.subr.mxu0 0.0
      %1834 = vmatpush1.msra.mxu0 %v1794
      %1835 = vmatprep.subr.mxu0 0.0
      %1836 = vmatpush1.msra.mxu0 0.0
      %1837 = vmatprep.subr.mxu0 0.0
      %1838 = vmatpush1.msra.mxu0 0.0
      %1839 = vmatprep.subr.mxu0 0.0
      %1840 = vmatpush1.msra.mxu0 0.0
      %1841 = vmatprep.subr.mxu0 0.0
      %1842 = vmatpush1.msra.mxu0 0.0
      %1843 = vmatprep.subr.mxu0 0.0
      %1844 = vmatpush1.msra.mxu0 0.0
      %1845 = vmatprep.subr.mxu0 0.0
      %1846 = vmatpush1.msra.mxu0 0.0
      %1847 = vmatprep.subr.mxu0 0.0
      %1848 = vmatpush1.msra.mxu0 0.0
      %1849 = vmatprep.subr.mxu0 0.0
      %1850 = vmatpush1.msra.mxu0 0.0
      %1851 = vmatprep.subr.mxu0 0.0
      %1852 = vmatpush1.msra.mxu0 0.0
      %1853 = vmatprep.subr.mxu0 0.0
      %1854 = vmatpush1.msra.mxu0 0.0
      %1855 = vmatprep.subr.mxu0 0.0
      %1856 = vmatpush1.msra.mxu0 0.0
      %1857 = vmatprep.subr.mxu0 0.0
      %1858 = vmatpush1.msra.mxu0 0.0
      %1859 = vmatprep.subr.mxu0 0.0
      %1860 = vmatpush1.msra.mxu0 0.0
      %1861 = vmatprep.subr.mxu0 0.0
      %1862 = vmatpush1.msra.mxu0 0.0
      %1863 = vmatprep.subr.mxu0 0.0
      %1864 = vmatpush1.msra.mxu0 0.0
      %1865 = vmatprep.subr.mxu0 0.0
      %1866 = vmatpush1.msra.mxu0 0.0
      %1867 = vmatprep.mubr.f32.mxu0 0.0
      %1868 = vmatmul.mubr.f32.gmra.mrb[0].mxu0 %v544
      %v1869 = vpop.f32.mrb[0].mxu0
      %v1870 = vadd.f32 %v1801, %v1869
      %v1871 = vpop.f32.mrb[0].mxu0
      %1872 = vdwg.mxu0
      %v1874 = vsel %vm824, %v1680, 0
      %v1877 = vsel %vm824, %v1775, 0
      %1879 = vmatprep.subr.mxu0 0.0
      %1880 = vmatpush1.xpose.msra.mxu0 %v1877
      %1881 = vmatprep.subr.mxu0 0.0
      %1882 = vmatpush1.xpose.msra.mxu0 0.0
      %1883 = vmatprep.subr.mxu0 0.0
      %1884 = vmatpush1.xpose.msra.mxu0 0.0
      %1885 = vmatprep.subr.mxu0 0.0
      %1886 = vmatpush1.xpose.msra.mxu0 0.0
      %1887 = vmatprep.subr.mxu0 0.0
      %1888 = vmatpush1.xpose.msra.mxu0 0.0
      %1889 = vmatprep.subr.mxu0 0.0
      %1890 = vmatpush1.xpose.msra.mxu0 0.0
      %1891 = vmatprep.subr.mxu0 0.0
      %1892 = vmatpush1.xpose.msra.mxu0 0.0
      %1893 = vmatprep.subr.mxu0 0.0
      %1894 = vmatpush1.xpose.msra.mxu0 0.0
      %1895 = vmatprep.subr.mxu0 0.0
      %1896 = vmatpush1.xpose.msra.mxu0 0.0
      %1897 = vmatprep.subr.mxu0 0.0
      %1898 = vmatpush1.xpose.msra.mxu0 0.0
      %1899 = vmatprep.subr.mxu0 0.0
      %1900 = vmatpush1.xpose.msra.mxu0 0.0
      %1901 = vmatprep.subr.mxu0 0.0
      %1902 = vmatpush1.xpose.msra.mxu0 0.0
      %1903 = vmatprep.subr.mxu0 0.0
      %1904 = vmatpush1.xpose.msra.mxu0 0.0
      %1905 = vmatprep.subr.mxu0 0.0
      %1906 = vmatpush1.xpose.msra.mxu0 0.0
      %1907 = vmatprep.subr.mxu0 0.0
      %1908 = vmatpush1.xpose.msra.mxu0 0.0
      %1909 = vmatprep.subr.mxu0 0.0
      %1910 = vmatpush1.xpose.msra.mxu0 0.0
      %1911 = vmatprep.subr.mxu0 0.0
      %1912 = vmatpush1.xpose.msra.mxu0 0.0
      %1913 = vmatprep.subr.mxu0 0.0
      %1914 = vmatpush1.xpose.msra.mxu0 0.0
      %1915 = vmatprep.subr.mxu0 0.0
      %1916 = vmatpush1.xpose.msra.mxu0 0.0
      %1917 = vmatprep.subr.mxu0 0.0
      %1918 = vmatpush1.xpose.msra.mxu0 0.0
      %1919 = vmatprep.subr.mxu0 0.0
      %1920 = vmatpush1.xpose.msra.mxu0 0.0
      %1921 = vmatprep.subr.mxu0 0.0
      %1922 = vmatpush1.xpose.msra.mxu0 0.0
      %1923 = vmatprep.subr.mxu0 0.0
      %1924 = vmatpush1.xpose.msra.mxu0 0.0
      %1925 = vmatprep.subr.mxu0 0.0
      %1926 = vmatpush1.xpose.msra.mxu0 0.0
      %1927 = vmatprep.subr.mxu0 0.0
      %1928 = vmatpush1.xpose.msra.mxu0 0.0
      %1929 = vmatprep.subr.mxu0 0.0
      %1930 = vmatpush1.xpose.msra.mxu0 0.0
      %1931 = vmatprep.subr.mxu0 0.0
      %1932 = vmatpush1.xpose.msra.mxu0 0.0
      %1933 = vmatprep.subr.mxu0 0.0
      %1934 = vmatpush1.xpose.msra.mxu0 0.0
      %1935 = vmatprep.subr.mxu0 0.0
      %1936 = vmatpush1.xpose.msra.mxu0 0.0
      %1937 = vmatprep.subr.mxu0 0.0
      %1938 = vmatpush1.xpose.msra.mxu0 0.0
      %1939 = vmatprep.subr.mxu0 0.0
      %1940 = vmatpush1.xpose.msra.mxu0 0.0
      %1941 = vmatprep.subr.mxu0 0.0
      %1942 = vmatpush1.xpose.msra.mxu0 0.0
      %1943 = vmatprep.mubr.f32.mxu0 0.0
      %1944 = vmatmul.mubr.f32.gmra.mrb[0].mxu0 %v1874
      %v1945 = vpop.f32.mrb[0].mxu0
      %v1946 = vadd.f32 0.0, %v1945
      %v1947 = vpop.f32.mrb[0].mxu0
      %1948 = vdwg.mxu0
      %v1949 = vmul.f32 %v1946, 0.17677669
      %v1950 = vsel %vm902, %v1949, -inf
      %1951 = vmax.xlane.f32.xlu0 %v1950
      %v1952 = vpop.xlane.xlu0 %1951
      %v1953 = vsub.f32 %v1949, %v1952
      %v1954 = vmul.f32 %v1953, 1.442695
      %v1955 = vpow.pop %v1954
      %v1956 = vsel %vm902, %v1955, 0.0
      %1957 = vadd.xlane.f32.xlu0 %v1956
      %v1958 = vpop.xlane.xlu0 %1957
      %v1959 = vrcp.pop %v1958
      %v1960 = vmul.f32 %v1955, %v1959
      %v1962 = vsel %vm902, %v1960, 0
      %1964 = vmatprep.subr.mxu0 0.0
      %1965 = vmatpush1.msra.mxu0 %v1870
      %1966 = vmatprep.subr.mxu0 0.0
      %1967 = vmatpush1.msra.mxu0 0.0
      %1968 = vmatprep.subr.mxu0 0.0
      %1969 = vmatpush1.msra.mxu0 0.0
      %1970 = vmatprep.subr.mxu0 0.0
      %1971 = vmatpush1.msra.mxu0 0.0
      %1972 = vmatprep.subr.mxu0 0.0
      %1973 = vmatpush1.msra.mxu0 0.0
      %1974 = vmatprep.subr.mxu0 0.0
      %1975 = vmatpush1.msra.mxu0 0.0
      %1976 = vmatprep.subr.mxu0 0.0
      %1977 = vmatpush1.msra.mxu0 0.0
      %1978 = vmatprep.subr.mxu0 0.0
      %1979 = vmatpush1.msra.mxu0 0.0
      %1980 = vmatprep.subr.mxu0 0.0
      %1981 = vmatpush1.msra.mxu0 0.0
      %1982 = vmatprep.subr.mxu0 0.0
      %1983 = vmatpush1.msra.mxu0 0.0
      %1984 = vmatprep.subr.mxu0 0.0
      %1985 = vmatpush1.msra.mxu0 0.0
      %1986 = vmatprep.subr.mxu0 0.0
      %1987 = vmatpush1.msra.mxu0 0.0
      %1988 = vmatprep.subr.mxu0 0.0
      %1989 = vmatpush1.msra.mxu0 0.0
      %1990 = vmatprep.subr.mxu0 0.0
      %1991 = vmatpush1.msra.mxu0 0.0
      %1992 = vmatprep.subr.mxu0 0.0
      %1993 = vmatpush1.msra.mxu0 0.0
      %1994 = vmatprep.subr.mxu0 0.0
      %1995 = vmatpush1.msra.mxu0 0.0
      %1996 = vmatprep.subr.mxu0 0.0
      %1997 = vmatpush1.msra.mxu0 0.0
      %1998 = vmatprep.subr.mxu0 0.0
      %1999 = vmatpush1.msra.mxu0 0.0
      %2000 = vmatprep.subr.mxu0 0.0
      %2001 = vmatpush1.msra.mxu0 0.0
      %2002 = vmatprep.subr.mxu0 0.0
      %2003 = vmatpush1.msra.mxu0 0.0
      %2004 = vmatprep.subr.mxu0 0.0
      %2005 = vmatpush1.msra.mxu0 0.0
      %2006 = vmatprep.subr.mxu0 0.0
      %2007 = vmatpush1.msra.mxu0 0.0
      %2008 = vmatprep.subr.mxu0 0.0
      %2009 = vmatpush1.msra.mxu0 0.0
      %2010 = vmatprep.subr.mxu0 0.0
      %2011 = vmatpush1.msra.mxu0 0.0
      %2012 = vmatprep.subr.mxu0 0.0
      %2013 = vmatpush1.msra.mxu0 0.0
      %2014 = vmatprep.subr.mxu0 0.0
      %2015 = vmatpush1.msra.mxu0 0.0
      %2016 = vmatprep.subr.mxu0 0.0
      %2017 = vmatpush1.msra.mxu0 0.0
      %2018 = vmatprep.subr.mxu0 0.0
      %2019 = vmatpush1.msra.mxu0 0.0
      %2020 = vmatprep.subr.mxu0 0.0
      %2021 = vmatpush1.msra.mxu0 0.0
      %2022 = vmatprep.subr.mxu0 0.0
      %2023 = vmatpush1.msra.mxu0 0.0
      %2024 = vmatprep.subr.mxu0 0.0
      %2025 = vmatpush1.msra.mxu0 0.0
      %2026 = vmatprep.subr.mxu0 0.0
      %2027 = vmatpush1.msra.mxu0 0.0
      %2028 = vmatprep.mubr.f32.mxu0 0.0
      %2029 = vmatmul.mubr.f32.gmra.mrb[0].mxu0 %v1962
      %v2030 = vpop.f32.mrb[0].mxu0
      %v2031 = vadd.f32 0.0, %v2030
      %v2032 = vpop.f32.mrb[0].mxu0
      %2033 = vdwg.mxu0
      %s2034 = scalar_lea.vmem %s7, 64
      %v2035 = vld [vmem:[%s2034] sm:$0xff]
      %v2036 = vld [vmem:[%s2034 + $0x8] sm:$0xff]
      %v2037 = vld [vmem:[%s2034 + $0x10] sm:$0xff]
      %v2038 = vld [vmem:[%s2034 + $0x18] sm:$0xff]
      %v2040 = vsel %vm824, %v2031, 0
      %2042 = vmatprep.subr.mxu0 0.0
      %2043 = vmatpush1.msra.mxu0 %v2035
      %2044 = vmatprep.subr.mxu0 0.0
      %2045 = vmatpush1.msra.mxu0 %v2036
      %2046 = vmatprep.subr.mxu0 0.0
      %2047 = vmatpush1.msra.mxu0 %v2037
      %2048 = vmatprep.subr.mxu0 0.0
      %2049 = vmatpush1.msra.mxu0 %v2038
      %2050 = vmatprep.subr.mxu0 0.0
      %2051 = vmatpush1.msra.mxu0 0.0
      %2052 = vmatprep.subr.mxu0 0.0
      %2053 = vmatpush1.msra.mxu0 0.0
      %2054 = vmatprep.subr.mxu0 0.0
      %2055 = vmatpush1.msra.mxu0 0.0
      %2056 = vmatprep.subr.mxu0 0.0
      %2057 = vmatpush1.msra.mxu0 0.0
      %2058 = vmatprep.subr.mxu0 0.0
      %2059 = vmatpush1.msra.mxu0 0.0
      %2060 = vmatprep.subr.mxu0 0.0
      %2061 = vmatpush1.msra.mxu0 0.0
      %2062 = vmatprep.subr.mxu0 0.0
      %2063 = vmatpush1.msra.mxu0 0.0
      %2064 = vmatprep.subr.mxu0 0.0
      %2065 = vmatpush1.msra.mxu0 0.0
      %2066 = vmatprep.subr.mxu0 0.0
      %2067 = vmatpush1.msra.mxu0 0.0
      %2068 = vmatprep.subr.mxu0 0.0
      %2069 = vmatpush1.msra.mxu0 0.0
      %2070 = vmatprep.subr.mxu0 0.0
      %2071 = vmatpush1.msra.mxu0 0.0
      %2072 = vmatprep.subr.mxu0 0.0
      %2073 = vmatpush1.msra.mxu0 0.0
      %2074 = vmatprep.subr.mxu0 0.0
      %2075 = vmatpush1.msra.mxu0 0.0
      %2076 = vmatprep.subr.mxu0 0.0
      %2077 = vmatpush1.msra.mxu0 0.0
      %2078 = vmatprep.subr.mxu0 0.0
      %2079 = vmatpush1.msra.mxu0 0.0
      %2080 = vmatprep.subr.mxu0 0.0
      %2081 = vmatpush1.msra.mxu0 0.0
      %2082 = vmatprep.subr.mxu0 0.0
      %2083 = vmatpush1.msra.mxu0 0.0
      %2084 = vmatprep.subr.mxu0 0.0
      %2085 = vmatpush1.msra.mxu0 0.0
      %2086 = vmatprep.subr.mxu0 0.0
      %2087 = vmatpush1.msra.mxu0 0.0
      %2088 = vmatprep.subr.mxu0 0.0
      %2089 = vmatpush1.msra.mxu0 0.0
      %2090 = vmatprep.subr.mxu0 0.0
      %2091 = vmatpush1.msra.mxu0 0.0
      %2092 = vmatprep.subr.mxu0 0.0
      %2093 = vmatpush1.msra.mxu0 0.0
      %2094 = vmatprep.subr.mxu0 0.0
      %2095 = vmatpush1.msra.mxu0 0.0
      %2096 = vmatprep.subr.mxu0 0.0
      %2097 = vmatpush1.msra.mxu0 0.0
      %2098 = vmatprep.subr.mxu0 0.0
      %2099 = vmatpush1.msra.mxu0 0.0
      %2100 = vmatprep.subr.mxu0 0.0
      %2101 = vmatpush1.msra.mxu0 0.0
      %2102 = vmatprep.subr.mxu0 0.0
      %2103 = vmatpush1.msra.mxu0 0.0
      %2104 = vmatprep.subr.mxu0 0.0
      %2105 = vmatpush1.msra.mxu0 0.0
      %2106 = vmatprep.mubr.f32.mxu0 0.0
      %2107 = vmatmul.mubr.f32.gmra.mrb[0].mxu0 %v2040
      %v2108 = vpop.f32.mrb[0].mxu0
      %v2109 = vadd.f32 0.0, %v2108
      %v2110 = vpop.f32.mrb[0].mxu0
      %2111 = vdwg.mxu0
      %v2112 = vadd.f32 %v1585, %v2109
      %s2113 = scalar_lea.vmem %s1, 384
      %v2114 = vld [vmem:[%s2113] sm:$0xff]
      %v2115 = vld [vmem:[%s2113 + $0x8] sm:$0xff]
      %v2116 = vld [vmem:[%s2113 + $0x10] sm:$0xff]
      %v2117 = vld [vmem:[%s2113 + $0x18] sm:$0xff]
      %v2118 = vld [vmem:[%s2113 + $0x20] sm:$0xff]
      %v2119 = vld [vmem:[%s2113 + $0x28] sm:$0xff]
      %v2120 = vld [vmem:[%s2113 + $0x30] sm:$0xff]
      %v2121 = vld [vmem:[%s2113 + $0x38] sm:$0xff]
      %v2122 = vld [vmem:[%s2113 + $0x40] sm:$0xff]
      %v2123 = vld [vmem:[%s2113 + $0x48] sm:$0xff]
      %v2124 = vld [vmem:[%s2113 + $0x50] sm:$0xff]
      %v2125 = vld [vmem:[%s2113 + $0x58] sm:$0xff]
      %v2126 = vld [vmem:[%s2113 + $0x60] sm:$0xff]
      %v2127 = vld [vmem:[%s2113 + $0x68] sm:$0xff]
      %v2128 = vld [vmem:[%s2113 + $0x70] sm:$0xff]
      %v2129 = vld [vmem:[%s2113 + $0x78] sm:$0xff]
      %s2130 = scalar_lea.vmem %s2, 3
      %v2131 = vld [vmem:[%s2130] sm:$0x1]
      %v2133 = vlaneseq
      %v2134 = vshrl.u32 %v2133, 7
      %v2135 = vsub.s32 0, %v2134
      %v2136 = vrot.slane %v2131, %v2135
      %2138 = vmatprep.subr.mxu0 0.0
      %2139 = vmatpush1.msra.mxu0 %v2114
      %2140 = vmatprep.subr.mxu0 0.0
      %2141 = vmatpush1.msra.mxu0 %v2115
      %2142 = vmatprep.subr.mxu0 0.0
      %2143 = vmatpush1.msra.mxu0 %v2116
      %2144 = vmatprep.subr.mxu0 0.0
      %2145 = vmatpush1.msra.mxu0 %v2117
      %2146 = vmatprep.subr.mxu0 0.0
      %2147 = vmatpush1.msra.mxu0 %v2118
      %2148 = vmatprep.subr.mxu0 0.0
      %2149 = vmatpush1.msra.mxu0 %v2119
      %2150 = vmatprep.subr.mxu0 0.0
      %2151 = vmatpush1.msra.mxu0 %v2120
      %2152 = vmatprep.subr.mxu0 0.0
      %2153 = vmatpush1.msra.mxu0 %v2121
      %2154 = vmatprep.subr.mxu0 0.0
      %2155 = vmatpush1.msra.mxu0 %v2122
      %2156 = vmatprep.subr.mxu0 0.0
      %2157 = vmatpush1.msra.mxu0 %v2123
      %2158 = vmatprep.subr.mxu0 0.0
      %2159 = vmatpush1.msra.mxu0 %v2124
      %2160 = vmatprep.subr.mxu0 0.0
      %2161 = vmatpush1.msra.mxu0 %v2125
      %2162 = vmatprep.subr.mxu0 0.0
      %2163 = vmatpush1.msra.mxu0 %v2126
      %2164 = vmatprep.subr.mxu0 0.0
      %2165 = vmatpush1.msra.mxu0 %v2127
      %2166 = vmatprep.subr.mxu0 0.0
      %2167 = vmatpush1.msra.mxu0 %v2128
      %2168 = vmatprep.subr.mxu0 0.0
      %2169 = vmatpush1.msra.mxu0 %v2129
      %2170 = vmatprep.subr.mxu0 0.0
      %2171 = vmatpush1.msra.mxu0 0.0
      %2172 = vmatprep.subr.mxu0 0.0
      %2173 = vmatpush1.msra.mxu0 0.0
      %2174 = vmatprep.subr.mxu0 0.0
      %2175 = vmatpush1.msra.mxu0 0.0
      %2176 = vmatprep.subr.mxu0 0.0
      %2177 = vmatpush1.msra.mxu0 0.0
      %2178 = vmatprep.subr.mxu0 0.0
      %2179 = vmatpush1.msra.mxu0 0.0
      %2180 = vmatprep.subr.mxu0 0.0
      %2181 = vmatpush1.msra.mxu0 0.0
      %2182 = vmatprep.subr.mxu0 0.0
      %2183 = vmatpush1.msra.mxu0 0.0
      %2184 = vmatprep.subr.mxu0 0.0
      %2185 = vmatpush1.msra.mxu0 0.0
      %2186 = vmatprep.subr.mxu0 0.0
      %2187 = vmatpush1.msra.mxu0 0.0
      %2188 = vmatprep.subr.mxu0 0.0
      %2189 = vmatpush1.msra.mxu0 0.0
      %2190 = vmatprep.subr.mxu0 0.0
      %2191 = vmatpush1.msra.mxu0 0.0
      %2192 = vmatprep.subr.mxu0 0.0
      %2193 = vmatpush1.msra.mxu0 0.0
      %2194 = vmatprep.subr.mxu0 0.0
      %2195 = vmatpush1.msra.mxu0 0.0
      %2196 = vmatprep.subr.mxu0 0.0
      %2197 = vmatpush1.msra.mxu0 0.0
      %2198 = vmatprep.subr.mxu0 0.0
      %2199 = vmatpush1.msra.mxu0 0.0
      %2200 = vmatprep.subr.mxu0 0.0
      %2201 = vmatpush1.msra.mxu0 0.0
      %2202 = vmatprep.mubr.f32.mxu0 0.0
      %2203 = vmatmul.mubr.f32.gmra.mrb[0].mxu0 %v544
      %v2204 = vpop.f32.mrb[0].mxu0
      %v2205 = vadd.f32 %v2136, %v2204
      %v2206 = vpop.f32.mrb[0].mxu0
      %2207 = vdwg.mxu0
      %s2208 = scalar_lea.vmem %s3, 384
      %v2209 = vld [vmem:[%s2208] sm:$0xff]
      %v2210 = vld [vmem:[%s2208 + $0x8] sm:$0xff]
      %v2211 = vld [vmem:[%s2208 + $0x10] sm:$0xff]
      %v2212 = vld [vmem:[%s2208 + $0x18] sm:$0xff]
      %v2213 = vld [vmem:[%s2208 + $0x20] sm:$0xff]
      %v2214 = vld [vmem:[%s2208 + $0x28] sm:$0xff]
      %v2215 = vld [vmem:[%s2208 + $0x30] sm:$0xff]
      %v2216 = vld [vmem:[%s2208 + $0x38] sm:$0xff]
      %v2217 = vld [vmem:[%s2208 + $0x40] sm:$0xff]
      %v2218 = vld [vmem:[%s2208 + $0x48] sm:$0xff]
      %v2219 = vld [vmem:[%s2208 + $0x50] sm:$0xff]
      %v2220 = vld [vmem:[%s2208 + $0x58] sm:$0xff]
      %v2221 = vld [vmem:[%s2208 + $0x60] sm:$0xff]
      %v2222 = vld [vmem:[%s2208 + $0x68] sm:$0xff]
      %v2223 = vld [vmem:[%s2208 + $0x70] sm:$0xff]
      %v2224 = vld [vmem:[%s2208 + $0x78] sm:$0xff]
      %s2225 = scalar_lea.vmem %s4, 3
      %v2226 = vld [vmem:[%s2225] sm:$0x1]
      %v2228 = vlaneseq
      %v2229 = vshrl.u32 %v2228, 7
      %v2230 = vsub.s32 0, %v2229
      %v2231 = vrot.slane %v2226, %v2230
      %2233 = vmatprep.subr.mxu0 0.0
      %2234 = vmatpush1.msra.mxu0 %v2209
      %2235 = vmatprep.subr.mxu0 0.0
      %2236 = vmatpush1.msra.mxu0 %v2210
      %2237 = vmatprep.subr.mxu0 0.0
      %2238 = vmatpush1.msra.mxu0 %v2211
      %2239 = vmatprep.subr.mxu0 0.0
      %2240 = vmatpush1.msra.mxu0 %v2212
      %2241 = vmatprep.subr.mxu0 0.0
      %2242 = vmatpush1.msra.mxu0 %v2213
      %2243 = vmatprep.subr.mxu0 0.0
      %2244 = vmatpush1.msra.mxu0 %v2214
      %2245 = vmatprep.subr.mxu0 0.0
      %2246 = vmatpush1.msra.mxu0 %v2215
      %2247 = vmatprep.subr.mxu0 0.0
      %2248 = vmatpush1.msra.mxu0 %v2216
      %2249 = vmatprep.subr.mxu0 0.0
      %2250 = vmatpush1.msra.mxu0 %v2217
      %2251 = vmatprep.subr.mxu0 0.0
      %2252 = vmatpush1.msra.mxu0 %v2218
      %2253 = vmatprep.subr.mxu0 0.0
      %2254 = vmatpush1.msra.mxu0 %v2219
      %2255 = vmatprep.subr.mxu0 0.0
      %2256 = vmatpush1.msra.mxu0 %v2220
      %2257 = vmatprep.subr.mxu0 0.0
      %2258 = vmatpush1.msra.mxu0 %v2221
      %2259 = vmatprep.subr.mxu0 0.0
      %2260 = vmatpush1.msra.mxu0 %v2222
      %2261 = vmatprep.subr.mxu0 0.0
      %2262 = vmatpush1.msra.mxu0 %v2223
      %2263 = vmatprep.subr.mxu0 0.0
      %2264 = vmatpush1.msra.mxu0 %v2224
      %2265 = vmatprep.subr.mxu0 0.0
      %2266 = vmatpush1.msra.mxu0 0.0
      %2267 = vmatprep.subr.mxu0 0.0
      %2268 = vmatpush1.msra.mxu0 0.0
      %2269 = vmatprep.subr.mxu0 0.0
      %2270 = vmatpush1.msra.mxu0 0.0
      %2271 = vmatprep.subr.mxu0 0.0
      %2272 = vmatpush1.msra.mxu0 0.0
      %2273 = vmatprep.subr.mxu0 0.0
      %2274 = vmatpush1.msra.mxu0 0.0
      %2275 = vmatprep.subr.mxu0 0.0
      %2276 = vmatpush1.msra.mxu0 0.0
      %2277 = vmatprep.subr.mxu0 0.0
      %2278 = vmatpush1.msra.mxu0 0.0
      %2279 = vmatprep.subr.mxu0 0.0
      %2280 = vmatpush1.msra.mxu0 0.0
      %2281 = vmatprep.subr.mxu0 0.0
      %2282 = vmatpush1.msra.mxu0 0.0
      %2283 = vmatprep.subr.mxu0 0.0
      %2284 = vmatpush1.msra.mxu0 0.0
      %2285 = vmatprep.subr.mxu0 0.0
      %2286 = vmatpush1.msra.mxu0 0.0
      %2287 = vmatprep.subr.mxu0 0.0
      %2288 = vmatpush1.msra.mxu0 0.0
      %2289 = vmatprep.subr.mxu0 0.0
      %2290 = vmatpush1.msra.mxu0 0.0
      %2291 = vmatprep.subr.mxu0 0.0
      %2292 = vmatpush1.msra.mxu0 0.0
      %2293 = vmatprep.subr.mxu0 0.0
      %2294 = vmatpush1.msra.mxu0 0.0
      %2295 = vmatprep.subr.mxu0 0.0
      %2296 = vmatpush1.msra.mxu0 0.0
      %2297 = vmatprep.mubr.f32.mxu0 0.0
      %2298 = vmatmul.mubr.f32.gmra.mrb[0].mxu0 %v544
      %v2299 = vpop.f32.mrb[0].mxu0
      %v2300 = vadd.f32 %v2231, %v2299
      %v2301 = vpop.f32.mrb[0].mxu0
      %2302 = vdwg.mxu0
      %s2303 = scalar_lea.vmem %s5, 384
      %v2304 = vld [vmem:[%s2303] sm:$0xff]
      %v2305 = vld [vmem:[%s2303 + $0x8] sm:$0xff]
      %v2306 = vld [vmem:[%s2303 + $0x10] sm:$0xff]
      %v2307 = vld [vmem:[%s2303 + $0x18] sm:$0xff]
      %v2308 = vld [vmem:[%s2303 + $0x20] sm:$0xff]
      %v2309 = vld [vmem:[%s2303 + $0x28] sm:$0xff]
      %v2310 = vld [vmem:[%s2303 + $0x30] sm:$0xff]
      %v2311 = vld [vmem:[%s2303 + $0x38] sm:$0xff]
      %v2312 = vld [vmem:[%s2303 + $0x40] sm:$0xff]
      %v2313 = vld [vmem:[%s2303 + $0x48] sm:$0xff]
      %v2314 = vld [vmem:[%s2303 + $0x50] sm:$0xff]
      %v2315 = vld [vmem:[%s2303 + $0x58] sm:$0xff]
      %v2316 = vld [vmem:[%s2303 + $0x60] sm:$0xff]
      %v2317 = vld [vmem:[%s2303 + $0x68] sm:$0xff]
      %v2318 = vld [vmem:[%s2303 + $0x70] sm:$0xff]
      %v2319 = vld [vmem:[%s2303 + $0x78] sm:$0xff]
      %s2320 = scalar_lea.vmem %s6, 3
      %v2321 = vld [vmem:[%s2320] sm:$0x1]
      %v2323 = vlaneseq
      %v2324 = vshrl.u32 %v2323, 7
      %v2325 = vsub.s32 0, %v2324
      %v2326 = vrot.slane %v2321, %v2325
      %2328 = vmatprep.subr.mxu0 0.0
      %2329 = vmatpush1.msra.mxu0 %v2304
      %2330 = vmatprep.subr.mxu0 0.0
      %2331 = vmatpush1.msra.mxu0 %v2305
      %2332 = vmatprep.subr.mxu0 0.0
      %2333 = vmatpush1.msra.mxu0 %v2306
      %2334 = vmatprep.subr.mxu0 0.0
      %2335 = vmatpush1.msra.mxu0 %v2307
      %2336 = vmatprep.subr.mxu0 0.0
      %2337 = vmatpush1.msra.mxu0 %v2308
      %2338 = vmatprep.subr.mxu0 0.0
      %2339 = vmatpush1.msra.mxu0 %v2309
      %2340 = vmatprep.subr.mxu0 0.0
      %2341 = vmatpush1.msra.mxu0 %v2310
      %2342 = vmatprep.subr.mxu0 0.0
      %2343 = vmatpush1.msra.mxu0 %v2311
      %2344 = vmatprep.subr.mxu0 0.0
      %2345 = vmatpush1.msra.mxu0 %v2312
      %2346 = vmatprep.subr.mxu0 0.0
      %2347 = vmatpush1.msra.mxu0 %v2313
      %2348 = vmatprep.subr.mxu0 0.0
      %2349 = vmatpush1.msra.mxu0 %v2314
      %2350 = vmatprep.subr.mxu0 0.0
      %2351 = vmatpush1.msra.mxu0 %v2315
      %2352 = vmatprep.subr.mxu0 0.0
      %2353 = vmatpush1.msra.mxu0 %v2316
      %2354 = vmatprep.subr.mxu0 0.0
      %2355 = vmatpush1.msra.mxu0 %v2317
      %2356 = vmatprep.subr.mxu0 0.0
      %2357 = vmatpush1.msra.mxu0 %v2318
      %2358 = vmatprep.subr.mxu0 0.0
      %2359 = vmatpush1.msra.mxu0 %v2319
      %2360 = vmatprep.subr.mxu0 0.0
      %2361 = vmatpush1.msra.mxu0 0.0
      %2362 = vmatprep.subr.mxu0 0.0
      %2363 = vmatpush1.msra.mxu0 0.0
      %2364 = vmatprep.subr.mxu0 0.0
      %2365 = vmatpush1.msra.mxu0 0.0
      %2366 = vmatprep.subr.mxu0 0.0
      %2367 = vmatpush1.msra.mxu0 0.0
      %2368 = vmatprep.subr.mxu0 0.0
      %2369 = vmatpush1.msra.mxu0 0.0
      %2370 = vmatprep.subr.mxu0 0.0
      %2371 = vmatpush1.msra.mxu0 0.0
      %2372 = vmatprep.subr.mxu0 0.0
      %2373 = vmatpush1.msra.mxu0 0.0
      %2374 = vmatprep.subr.mxu0 0.0
      %2375 = vmatpush1.msra.mxu0 0.0
      %2376 = vmatprep.subr.mxu0 0.0
      %2377 = vmatpush1.msra.mxu0 0.0
      %2378 = vmatprep.subr.mxu0 0.0
      %2379 = vmatpush1.msra.mxu0 0.0
      %2380 = vmatprep.subr.mxu0 0.0
      %2381 = vmatpush1.msra.mxu0 0.0
      %2382 = vmatprep.subr.mxu0 0.0
      %2383 = vmatpush1.msra.mxu0 0.0
      %2384 = vmatprep.subr.mxu0 0.0
      %2385 = vmatpush1.msra.mxu0 0.0
      %2386 = vmatprep.subr.mxu0 0.0
      %2387 = vmatpush1.msra.mxu0 0.0
      %2388 = vmatprep.subr.mxu0 0.0
      %2389 = vmatpush1.msra.mxu0 0.0
      %2390 = vmatprep.subr.mxu0 0.0
      %2391 = vmatpush1.msra.mxu0 0.0
      %2392 = vmatprep.mubr.f32.mxu0 0.0
      %2393 = vmatmul.mubr.f32.gmra.mrb[0].mxu0 %v544
      %v2394 = vpop.f32.mrb[0].mxu0
      %v2395 = vadd.f32 %v2326, %v2394
      %v2396 = vpop.f32.mrb[0].mxu0
      %2397 = vdwg.mxu0
      %v2399 = vsel %vm824, %v2205, 0
      %v2402 = vsel %vm824, %v2300, 0
      %2404 = vmatprep.subr.mxu0 0.0
      %2405 = vmatpush1.xpose.msra.mxu0 %v2402
      %2406 = vmatprep.subr.mxu0 0.0
      %2407 = vmatpush1.xpose.msra.mxu0 0.0
      %2408 = vmatprep.subr.mxu0 0.0
      %2409 = vmatpush1.xpose.msra.mxu0 0.0
      %2410 = vmatprep.subr.mxu0 0.0
      %2411 = vmatpush1.xpose.msra.mxu0 0.0
      %2412 = vmatprep.subr.mxu0 0.0
      %2413 = vmatpush1.xpose.msra.mxu0 0.0
      %2414 = vmatprep.subr.mxu0 0.0
      %2415 = vmatpush1.xpose.msra.mxu0 0.0
      %2416 = vmatprep.subr.mxu0 0.0
      %2417 = vmatpush1.xpose.msra.mxu0 0.0
      %2418 = vmatprep.subr.mxu0 0.0
      %2419 = vmatpush1.xpose.msra.mxu0 0.0
      %2420 = vmatprep.subr.mxu0 0.0
      %2421 = vmatpush1.xpose.msra.mxu0 0.0
      %2422 = vmatprep.subr.mxu0 0.0
      %2423 = vmatpush1.xpose.msra.mxu0 0.0
      %2424 = vmatprep.subr.mxu0 0.0
      %2425 = vmatpush1.xpose.msra.mxu0 0.0
      %2426 = vmatprep.subr.mxu0 0.0
      %2427 = vmatpush1.xpose.msra.mxu0 0.0
      %2428 = vmatprep.subr.mxu0 0.0
      %2429 = vmatpush1.xpose.msra.mxu0 0.0
      %2430 = vmatprep.subr.mxu0 0.0
      %2431 = vmatpush1.xpose.msra.mxu0 0.0
      %2432 = vmatprep.subr.mxu0 0.0
      %2433 = vmatpush1.xpose.msra.mxu0 0.0
      %2434 = vmatprep.subr.mxu0 0.0
      %2435 = vmatpush1.xpose.msra.mxu0 0.0
      %2436 = vmatprep.subr.mxu0 0.0
      %2437 = vmatpush1.xpose.msra.mxu0 0.0
      %2438 = vmatprep.subr.mxu0 0.0
      %2439 = vmatpush1.xpose.msra.mxu0 0.0
      %2440 = vmatprep.subr.mxu0 0.0
      %2441 = vmatpush1.xpose.msra.mxu0 0.0
      %2442 = vmatprep.subr.mxu0 0.0
      %2443 = vmatpush1.xpose.msra.mxu0 0.0
      %2444 = vmatprep.subr.mxu0 0.0
      %2445 = vmatpush1.xpose.msra.mxu0 0.0
      %2446 = vmatprep.subr.mxu0 0.0
      %2447 = vmatpush1.xpose.msra.mxu0 0.0
      %2448 = vmatprep.subr.mxu0 0.0
      %2449 = vmatpush1.xpose.msra.mxu0 0.0
      %2450 = vmatprep.subr.mxu0 0.0
      %2451 = vmatpush1.xpose.msra.mxu0 0.0
      %2452 = vmatprep.subr.mxu0 0.0
      %2453 = vmatpush1.xpose.msra.mxu0 0.0
      %2454 = vmatprep.subr.mxu0 0.0
      %2455 = vmatpush1.xpose.msra.mxu0 0.0
      %2456 = vmatprep.subr.mxu0 0.0
      %2457 = vmatpush1.xpose.msra.mxu0 0.0
      %2458 = vmatprep.subr.mxu0 0.0
      %2459 = vmatpush1.xpose.msra.mxu0 0.0
      %2460 = vmatprep.subr.mxu0 0.0
      %2461 = vmatpush1.xpose.msra.mxu0 0.0
      %2462 = vmatprep.subr.mxu0 0.0
      %2463 = vmatpush1.xpose.msra.mxu0 0.0
      %2464 = vmatprep.subr.mxu0 0.0
      %2465 = vmatpush1.xpose.msra.mxu0 0.0
      %2466 = vmatprep.subr.mxu0 0.0
      %2467 = vmatpush1.xpose.msra.mxu0 0.0
      %2468 = vmatprep.mubr.f32.mxu0 0.0
      %2469 = vmatmul.mubr.f32.gmra.mrb[0].mxu0 %v2399
      %v2470 = vpop.f32.mrb[0].mxu0
      %v2471 = vadd.f32 0.0, %v2470
      %v2472 = vpop.f32.mrb[0].mxu0
      %2473 = vdwg.mxu0
      %v2474 = vmul.f32 %v2471, 0.17677669
      %v2475 = vsel %vm902, %v2474, -inf
      %2476 = vmax.xlane.f32.xlu0 %v2475
      %v2477 = vpop.xlane.xlu0 %2476
      %v2478 = vsub.f32 %v2474, %v2477
      %v2479 = vmul.f32 %v2478, 1.442695
      %v2480 = vpow.pop %v2479
      %v2481 = vsel %vm902, %v2480, 0.0
      %2482 = vadd.xlane.f32.xlu0 %v2481
      %v2483 = vpop.xlane.xlu0 %2482
      %v2484 = vrcp.pop %v2483
      %v2485 = vmul.f32 %v2480, %v2484
      %v2487 = vsel %vm902, %v2485, 0
      %2489 = vmatprep.subr.mxu0 0.0
      %2490 = vmatpush1.msra.mxu0 %v2395
      %2491 = vmatprep.subr.mxu0 0.0
      %2492 = vmatpush1.msra.mxu0 0.0
      %2493 = vmatprep.subr.mxu0 0.0
      %2494 = vmatpush1.msra.mxu0 0.0
      %2495 = vmatprep.subr.mxu0 0.0
      %2496 = vmatpush1.msra.mxu0 0.0
      %2497 = vmatprep.subr.mxu0 0.0
      %2498 = vmatpush1.msra.mxu0 0.0
      %2499 = vmatprep.subr.mxu0 0.0
      %2500 = vmatpush1.msra.mxu0 0.0
      %2501 = vmatprep.subr.mxu0 0.0
      %2502 = vmatpush1.msra.mxu0 0.0
      %2503 = vmatprep.subr.mxu0 0.0
      %2504 = vmatpush1.msra.mxu0 0.0
      %2505 = vmatprep.subr.mxu0 0.0
      %2506 = vmatpush1.msra.mxu0 0.0
      %2507 = vmatprep.subr.mxu0 0.0
      %2508 = vmatpush1.msra.mxu0 0.0
      %2509 = vmatprep.subr.mxu0 0.0
      %2510 = vmatpush1.msra.mxu0 0.0
      %2511 = vmatprep.subr.mxu0 0.0
      %2512 = vmatpush1.msra.mxu0 0.0
      %2513 = vmatprep.subr.mxu0 0.0
      %2514 = vmatpush1.msra.mxu0 0.0
      %2515 = vmatprep.subr.mxu0 0.0
      %2516 = vmatpush1.msra.mxu0 0.0
      %2517 = vmatprep.subr.mxu0 0.0
      %2518 = vmatpush1.msra.mxu0 0.0
      %2519 = vmatprep.subr.mxu0 0.0
      %2520 = vmatpush1.msra.mxu0 0.0
      %2521 = vmatprep.subr.mxu0 0.0
      %2522 = vmatpush1.msra.mxu0 0.0
      %2523 = vmatprep.subr.mxu0 0.0
      %2524 = vmatpush1.msra.mxu0 0.0
      %2525 = vmatprep.subr.mxu0 0.0
      %2526 = vmatpush1.msra.mxu0 0.0
      %2527 = vmatprep.subr.mxu0 0.0
      %2528 = vmatpush1.msra.mxu0 0.0
      %2529 = vmatprep.subr.mxu0 0.0
      %2530 = vmatpush1.msra.mxu0 0.0
      %2531 = vmatprep.subr.mxu0 0.0
      %2532 = vmatpush1.msra.mxu0 0.0
      %2533 = vmatprep.subr.mxu0 0.0
      %2534 = vmatpush1.msra.mxu0 0.0
      %2535 = vmatprep.subr.mxu0 0.0
      %2536 = vmatpush1.msra.mxu0 0.0
      %2537 = vmatprep.subr.mxu0 0.0
      %2538 = vmatpush1.msra.mxu0 0.0
      %2539 = vmatprep.subr.mxu0 0.0
      %2540 = vmatpush1.msra.mxu0 0.0
      %2541 = vmatprep.subr.mxu0 0.0
      %2542 = vmatpush1.msra.mxu0 0.0
      %2543 = vmatprep.subr.mxu0 0.0
      %2544 = vmatpush1.msra.mxu0 0.0
      %2545 = vmatprep.subr.mxu0 0.0
      %2546 = vmatpush1.msra.mxu0 0.0
      %2547 = vmatprep.subr.mxu0 0.0
      %2548 = vmatpush1.msra.mxu0 0.0
      %2549 = vmatprep.subr.mxu0 0.0
      %2550 = vmatpush1.msra.mxu0 0.0
      %2551 = vmatprep.subr.mxu0 0.0
      %2552 = vmatpush1.msra.mxu0 0.0
      %2553 = vmatprep.mubr.f32.mxu0 0.0
      %2554 = vmatmul.mubr.f32.gmra.mrb[0].mxu0 %v2487
      %v2555 = vpop.f32.mrb[0].mxu0
      %v2556 = vadd.f32 0.0, %v2555
      %v2557 = vpop.f32.mrb[0].mxu0
      %2558 = vdwg.mxu0
      %s2559 = scalar_lea.vmem %s7, 96
      %v2560 = vld [vmem:[%s2559] sm:$0xff]
      %v2561 = vld [vmem:[%s2559 + $0x8] sm:$0xff]
      %v2562 = vld [vmem:[%s2559 + $0x10] sm:$0xff]
      %v2563 = vld [vmem:[%s2559 + $0x18] sm:$0xff]
      %v2565 = vsel %vm824, %v2556, 0
      %2567 = vmatprep.subr.mxu0 0.0
      %2568 = vmatpush1.msra.mxu0 %v2560
      %2569 = vmatprep.subr.mxu0 0.0
      %2570 = vmatpush1.msra.mxu0 %v2561
      %2571 = vmatprep.subr.mxu0 0.0
      %2572 = vmatpush1.msra.mxu0 %v2562
      %2573 = vmatprep.subr.mxu0 0.0
      %2574 = vmatpush1.msra.mxu0 %v2563
      %2575 = vmatprep.subr.mxu0 0.0
      %2576 = vmatpush1.msra.mxu0 0.0
      %2577 = vmatprep.subr.mxu0 0.0
      %2578 = vmatpush1.msra.mxu0 0.0
      %2579 = vmatprep.subr.mxu0 0.0
      %2580 = vmatpush1.msra.mxu0 0.0
      %2581 = vmatprep.subr.mxu0 0.0
      %2582 = vmatpush1.msra.mxu0 0.0
      %2583 = vmatprep.subr.mxu0 0.0
      %2584 = vmatpush1.msra.mxu0 0.0
      %2585 = vmatprep.subr.mxu0 0.0
      %2586 = vmatpush1.msra.mxu0 0.0
      %2587 = vmatprep.subr.mxu0 0.0
      %2588 = vmatpush1.msra.mxu0 0.0
      %2589 = vmatprep.subr.mxu0 0.0
      %2590 = vmatpush1.msra.mxu0 0.0
      %2591 = vmatprep.subr.mxu0 0.0
      %2592 = vmatpush1.msra.mxu0 0.0
      %2593 = vmatprep.subr.mxu0 0.0
      %2594 = vmatpush1.msra.mxu0 0.0
      %2595 = vmatprep.subr.mxu0 0.0
      %2596 = vmatpush1.msra.mxu0 0.0
      %2597 = vmatprep.subr.mxu0 0.0
      %2598 = vmatpush1.msra.mxu0 0.0
      %2599 = vmatprep.subr.mxu0 0.0
      %2600 = vmatpush1.msra.mxu0 0.0
      %2601 = vmatprep.subr.mxu0 0.0
      %2602 = vmatpush1.msra.mxu0 0.0
      %2603 = vmatprep.subr.mxu0 0.0
      %2604 = vmatpush1.msra.mxu0 0.0
      %2605 = vmatprep.subr.mxu0 0.0
      %2606 = vmatpush1.msra.mxu0 0.0
      %2607 = vmatprep.subr.mxu0 0.0
      %2608 = vmatpush1.msra.mxu0 0.0
      %2609 = vmatprep.subr.mxu0 0.0
      %2610 = vmatpush1.msra.mxu0 0.0
      %2611 = vmatprep.subr.mxu0 0.0
      %2612 = vmatpush1.msra.mxu0 0.0
      %2613 = vmatprep.subr.mxu0 0.0
      %2614 = vmatpush1.msra.mxu0 0.0
      %2615 = vmatprep.subr.mxu0 0.0
      %2616 = vmatpush1.msra.mxu0 0.0
      %2617 = vmatprep.subr.mxu0 0.0
      %2618 = vmatpush1.msra.mxu0 0.0
      %2619 = vmatprep.subr.mxu0 0.0
      %2620 = vmatpush1.msra.mxu0 0.0
      %2621 = vmatprep.subr.mxu0 0.0
      %2622 = vmatpush1.msra.mxu0 0.0
      %2623 = vmatprep.subr.mxu0 0.0
      %2624 = vmatpush1.msra.mxu0 0.0
      %2625 = vmatprep.subr.mxu0 0.0
      %2626 = vmatpush1.msra.mxu0 0.0
      %2627 = vmatprep.subr.mxu0 0.0
      %2628 = vmatpush1.msra.mxu0 0.0
      %2629 = vmatprep.subr.mxu0 0.0
      %2630 = vmatpush1.msra.mxu0 0.0
      %2631 = vmatprep.mubr.f32.mxu0 0.0
      %2632 = vmatmul.mubr.f32.gmra.mrb[0].mxu0 %v2565
      %v2633 = vpop.f32.mrb[0].mxu0
      %v2634 = vadd.f32 0.0, %v2633
      %v2635 = vpop.f32.mrb[0].mxu0
      %2636 = vdwg.mxu0
      %v2637 = vadd.f32 %v2112, %v2634
      %v2638 = vld [vmem:[%s8] sm:$0x1]
      %v2640 = vlaneseq
      %v2641 = vshrl.u32 %v2640, 7
      %v2642 = vsub.s32 0, %v2641
      %v2643 = vrot.slane %v2638, %v2642
      %v2645 = vadd.f32 %v2637, %v2643
      %v2646 = vadd.f32 %v544, %v2645
      %2647 = vadd.xlane.f32.xlu0 %v2646
      %v2648 = vpop.xlane.xlu0 %2647
      %v2649 = vrcp.pop 128.0
      %v2650 = vmul.f32 %v2648, %v2649
      %v2651 = vsub.f32 %v2646, %v2650
      %v2652 = vmul.f32 %v2651, %v2651
      %2653 = vadd.xlane.f32.xlu0 %v2652
      %v2654 = vpop.xlane.xlu0 %2653
      %v2655 = vmul.f32 %v2654, %v2649
      %v2656 = vadd.f32 %v2655, 1e-05
      %v2657 = vrsqrt.pop %v2656
      %v2658 = vmul.f32 %v2651, %v2657
      %v2659 = vld [vmem:[%s13] sm:$0x1]
      %v2661 = vlaneseq
      %v2662 = vshrl.u32 %v2661, 7
      %v2663 = vsub.s32 0, %v2662
      %v2664 = vrot.slane %v2659, %v2663
      %v2666 = vmul.f32 %v2658, %v2664
      %v2667 = vld [vmem:[%s14] sm:$0x1]
      %v2669 = vlaneseq
      %v2670 = vshrl.u32 %v2669, 7
      %v2671 = vsub.s32 0, %v2670
      %v2672 = vrot.slane %v2667, %v2671
      %v2674 = vadd.f32 %v2666, %v2672
      %v2675 = vld [vmem:[%s9] sm:$0xff]
      %v2676 = vld [vmem:[%s9 + $0x8] sm:$0xff]
      %v2677 = vld [vmem:[%s9 + $0x10] sm:$0xff]
      %v2678 = vld [vmem:[%s9 + $0x18] sm:$0xff]
      %v2679 = vld [vmem:[%s9 + $0x20] sm:$0xff]
      %v2680 = vld [vmem:[%s9 + $0x28] sm:$0xff]
      %v2681 = vld [vmem:[%s9 + $0x30] sm:$0xff]
      %v2682 = vld [vmem:[%s9 + $0x38] sm:$0xff]
      %v2683 = vld [vmem:[%s9 + $0x40] sm:$0xff]
      %v2684 = vld [vmem:[%s9 + $0x48] sm:$0xff]
      %v2685 = vld [vmem:[%s9 + $0x50] sm:$0xff]
      %v2686 = vld [vmem:[%s9 + $0x58] sm:$0xff]
      %v2687 = vld [vmem:[%s9 + $0x60] sm:$0xff]
      %v2688 = vld [vmem:[%s9 + $0x68] sm:$0xff]
      %v2689 = vld [vmem:[%s9 + $0x70] sm:$0xff]
      %v2690 = vld [vmem:[%s9 + $0x78] sm:$0xff]
      %v2691 = vld [vmem:[%s9 + $0x80] sm:$0xff]
      %v2692 = vld [vmem:[%s9 + $0x88] sm:$0xff]
      %v2693 = vld [vmem:[%s9 + $0x90] sm:$0xff]
      %v2694 = vld [vmem:[%s9 + $0x98] sm:$0xff]
      %v2695 = vld [vmem:[%s9 + $0xa0] sm:$0xff]
      %v2696 = vld [vmem:[%s9 + $0xa8] sm:$0xff]
      %v2697 = vld [vmem:[%s9 + $0xb0] sm:$0xff]
      %v2698 = vld [vmem:[%s9 + $0xb8] sm:$0xff]
      %v2699 = vld [vmem:[%s9 + $0xc0] sm:$0xff]
      %v2700 = vld [vmem:[%s9 + $0xc8] sm:$0xff]
      %v2701 = vld [vmem:[%s9 + $0xd0] sm:$0xff]
      %v2702 = vld [vmem:[%s9 + $0xd8] sm:$0xff]
      %v2703 = vld [vmem:[%s9 + $0xe0] sm:$0xff]
      %v2704 = vld [vmem:[%s9 + $0xe8] sm:$0xff]
      %v2705 = vld [vmem:[%s9 + $0xf0] sm:$0xff]
      %v2706 = vld [vmem:[%s9 + $0xf8] sm:$0xff]
      %v2707 = vld [vmem:[%s10] sm:$0x3]
      %v2709 = vlaneseq
      %v2710 = vshrl.u32 %v2709, 7
      %v2711 = vsub.s32 0, %v2710
      %v2712 = vrot.slane %v2707, %v2711
      %v2713 = vlaneseq
      %v2714 = vshrl.u32 %v2713, 7
      %v2715 = vsub.s32 1, %v2714
      %v2716 = vrot.slane %v2707, %v2715
      %2719 = vmatprep.subr.mxu0 %v2676
      %2720 = vmatpush1.msra.mxu0 %v2675
      %2721 = vmatprep.subr.mxu0 %v2678
      %2722 = vmatpush1.msra.mxu0 %v2677
      %2723 = vmatprep.subr.mxu0 %v2680
      %2724 = vmatpush1.msra.mxu0 %v2679
      %2725 = vmatprep.subr.mxu0 %v2682
      %2726 = vmatpush1.msra.mxu0 %v2681
      %2727 = vmatprep.subr.mxu0 %v2684
      %2728 = vmatpush1.msra.mxu0 %v2683
      %2729 = vmatprep.subr.mxu0 %v2686
      %2730 = vmatpush1.msra.mxu0 %v2685
      %2731 = vmatprep.subr.mxu0 %v2688
      %2732 = vmatpush1.msra.mxu0 %v2687
      %2733 = vmatprep.subr.mxu0 %v2690
      %2734 = vmatpush1.msra.mxu0 %v2689
      %2735 = vmatprep.subr.mxu0 %v2692
      %2736 = vmatpush1.msra.mxu0 %v2691
      %2737 = vmatprep.subr.mxu0 %v2694
      %2738 = vmatpush1.msra.mxu0 %v2693
      %2739 = vmatprep.subr.mxu0 %v2696
      %2740 = vmatpush1.msra.mxu0 %v2695
      %2741 = vmatprep.subr.mxu0 %v2698
      %2742 = vmatpush1.msra.mxu0 %v2697
      %2743 = vmatprep.subr.mxu0 %v2700
      %2744 = vmatpush1.msra.mxu0 %v2699
      %2745 = vmatprep.subr.mxu0 %v2702
      %2746 = vmatpush1.msra.mxu0 %v2701
      %2747 = vmatprep.subr.mxu0 %v2704
      %2748 = vmatpush1.msra.mxu0 %v2703
      %2749 = vmatprep.subr.mxu0 %v2706
      %2750 = vmatpush1.msra.mxu0 %v2705
      %2751 = vmatprep.subr.mxu0 0.0
      %2752 = vmatpush1.msra.mxu0 0.0
      %2753 = vmatprep.subr.mxu0 0.0
      %2754 = vmatpush1.msra.mxu0 0.0
      %2755 = vmatprep.subr.mxu0 0.0
      %2756 = vmatpush1.msra.mxu0 0.0
      %2757 = vmatprep.subr.mxu0 0.0
      %2758 = vmatpush1.msra.mxu0 0.0
      %2759 = vmatprep.subr.mxu0 0.0
      %2760 = vmatpush1.msra.mxu0 0.0
      %2761 = vmatprep.subr.mxu0 0.0
      %2762 = vmatpush1.msra.mxu0 0.0
      %2763 = vmatprep.subr.mxu0 0.0
      %2764 = vmatpush1.msra.mxu0 0.0
      %2765 = vmatprep.subr.mxu0 0.0
      %2766 = vmatpush1.msra.mxu0 0.0
      %2767 = vmatprep.subr.mxu0 0.0
      %2768 = vmatpush1.msra.mxu0 0.0
      %2769 = vmatprep.subr.mxu0 0.0
      %2770 = vmatpush1.msra.mxu0 0.0
      %2771 = vmatprep.subr.mxu0 0.0
      %2772 = vmatpush1.msra.mxu0 0.0
      %2773 = vmatprep.subr.mxu0 0.0
      %2774 = vmatpush1.msra.mxu0 0.0
      %2775 = vmatprep.subr.mxu0 0.0
      %2776 = vmatpush1.msra.mxu0 0.0
      %2777 = vmatprep.subr.mxu0 0.0
      %2778 = vmatpush1.msra.mxu0 0.0
      %2779 = vmatprep.subr.mxu0 0.0
      %2780 = vmatpush1.msra.mxu0 0.0
      %2781 = vmatprep.subr.mxu0 0.0
      %2782 = vmatpush1.msra.mxu0 0.0
      %2783 = vmatprep.mubr.f32.mxu0 0.0
      %2784 = vmatmul.mubr.f32.gmra.mrb[0].mxu0 %v2674
      %v2785 = vpop.f32.mrb[0].mxu0
      %v2786 = vadd.f32 %v2712, %v2785
      %v2787 = vpop.f32.mrb[0].mxu0
      %v2788 = vadd.f32 %v2716, %v2787
      %2789 = vdwg.mxu0
      %v2790 = vmax.f32 %v2786, 0.0
      %v2791 = vmax.f32 %v2788, 0.0
      %v2792 = vld [vmem:[%s11] sm:$0xff]
      %v2793 = vld [vmem:[%s11 + $0x8] sm:$0xff]
      %v2794 = vld [vmem:[%s11 + $0x10] sm:$0xff]
      %v2795 = vld [vmem:[%s11 + $0x18] sm:$0xff]
      %v2796 = vld [vmem:[%s11 + $0x20] sm:$0xff]
      %v2797 = vld [vmem:[%s11 + $0x28] sm:$0xff]
      %v2798 = vld [vmem:[%s11 + $0x30] sm:$0xff]
      %v2799 = vld [vmem:[%s11 + $0x38] sm:$0xff]
      %v2800 = vld [vmem:[%s11 + $0x40] sm:$0xff]
      %v2801 = vld [vmem:[%s11 + $0x48] sm:$0xff]
      %v2802 = vld [vmem:[%s11 + $0x50] sm:$0xff]
      %v2803 = vld [vmem:[%s11 + $0x58] sm:$0xff]
      %v2804 = vld [vmem:[%s11 + $0x60] sm:$0xff]
      %v2805 = vld [vmem:[%s11 + $0x68] sm:$0xff]
      %v2806 = vld [vmem:[%s11 + $0x70] sm:$0xff]
      %v2807 = vld [vmem:[%s11 + $0x78] sm:$0xff]
      %v2808 = vld [vmem:[%s11 + $0x80] sm:$0xff]
      %v2809 = vld [vmem:[%s11 + $0x88] sm:$0xff]
      %v2810 = vld [vmem:[%s11 + $0x90] sm:$0xff]
      %v2811 = vld [vmem:[%s11 + $0x98] sm:$0xff]
      %v2812 = vld [vmem:[%s11 + $0xa0] sm:$0xff]
      %v2813 = vld [vmem:[%s11 + $0xa8] sm:$0xff]
      %v2814 = vld [vmem:[%s11 + $0xb0] sm:$0xff]
      %v2815 = vld [vmem:[%s11 + $0xb8] sm:$0xff]
      %v2816 = vld [vmem:[%s11 + $0xc0] sm:$0xff]
      %v2817 = vld [vmem:[%s11 + $0xc8] sm:$0xff]
      %v2818 = vld [vmem:[%s11 + $0xd0] sm:$0xff]
      %v2819 = vld [vmem:[%s11 + $0xd8] sm:$0xff]
      %v2820 = vld [vmem:[%s11 + $0xe0] sm:$0xff]
      %v2821 = vld [vmem:[%s11 + $0xe8] sm:$0xff]
      %v2822 = vld [vmem:[%s11 + $0xf0] sm:$0xff]
      %v2823 = vld [vmem:[%s11 + $0xf8] sm:$0xff]
      %v2824 = vld [vmem:[%s12] sm:$0x1]
      %v2826 = vlaneseq
      %v2827 = vshrl.u32 %v2826, 7
      %v2828 = vsub.s32 0, %v2827
      %v2829 = vrot.slane %v2824, %v2828
      %2831 = vmatprep.subr.mxu0 0.0
      %2832 = vmatpush1.msra.mxu0 %v2792
      %2833 = vmatprep.subr.mxu0 0.0
      %2834 = vmatpush1.msra.mxu0 %v2793
      %2835 = vmatprep.subr.mxu0 0.0
      %2836 = vmatpush1.msra.mxu0 %v2794
      %2837 = vmatprep.subr.mxu0 0.0
      %2838 = vmatpush1.msra.mxu0 %v2795
      %2839 = vmatprep.subr.mxu0 0.0
      %2840 = vmatpush1.msra.mxu0 %v2796
      %2841 = vmatprep.subr.mxu0 0.0
      %2842 = vmatpush1.msra.mxu0 %v2797
      %2843 = vmatprep.subr.mxu0 0.0
      %2844 = vmatpush1.msra.mxu0 %v2798
      %2845 = vmatprep.subr.mxu0 0.0
      %2846 = vmatpush1.msra.mxu0 %v2799
      %2847 = vmatprep.subr.mxu0 0.0
      %2848 = vmatpush1.msra.mxu0 %v2800
      %2849 = vmatprep.subr.mxu0 0.0
      %2850 = vmatpush1.msra.mxu0 %v2801
      %2851 = vmatprep.subr.mxu0 0.0
      %2852 = vmatpush1.msra.mxu0 %v2802
      %2853 = vmatprep.subr.mxu0 0.0
      %2854 = vmatpush1.msra.mxu0 %v2803
      %2855 = vmatprep.subr.mxu0 0.0
      %2856 = vmatpush1.msra.mxu0 %v2804
      %2857 = vmatprep.subr.mxu0 0.0
      %2858 = vmatpush1.msra.mxu0 %v2805
      %2859 = vmatprep.subr.mxu0 0.0
      %2860 = vmatpush1.msra.mxu0 %v2806
      %2861 = vmatprep.subr.mxu0 0.0
      %2862 = vmatpush1.msra.mxu0 %v2807
      %2863 = vmatprep.subr.mxu0 0.0
      %2864 = vmatpush1.msra.mxu0 %v2808
      %2865 = vmatprep.subr.mxu0 0.0
      %2866 = vmatpush1.msra.mxu0 %v2809
      %2867 = vmatprep.subr.mxu0 0.0
      %2868 = vmatpush1.msra.mxu0 %v2810
      %2869 = vmatprep.subr.mxu0 0.0
      %2870 = vmatpush1.msra.mxu0 %v2811
      %2871 = vmatprep.subr.mxu0 0.0
      %2872 = vmatpush1.msra.mxu0 %v2812
      %2873 = vmatprep.subr.mxu0 0.0
      %2874 = vmatpush1.msra.mxu0 %v2813
      %2875 = vmatprep.subr.mxu0 0.0
      %2876 = vmatpush1.msra.mxu0 %v2814
      %2877 = vmatprep.subr.mxu0 0.0
      %2878 = vmatpush1.msra.mxu0 %v2815
      %2879 = vmatprep.subr.mxu0 0.0
      %2880 = vmatpush1.msra.mxu0 %v2816
      %2881 = vmatprep.subr.mxu0 0.0
      %2882 = vmatpush1.msra.mxu0 %v2817
      %2883 = vmatprep.subr.mxu0 0.0
      %2884 = vmatpush1.msra.mxu0 %v2818
      %2885 = vmatprep.subr.mxu0 0.0
      %2886 = vmatpush1.msra.mxu0 %v2819
      %2887 = vmatprep.subr.mxu0 0.0
      %2888 = vmatpush1.msra.mxu0 %v2820
      %2889 = vmatprep.subr.mxu0 0.0
      %2890 = vmatpush1.msra.mxu0 %v2821
      %2891 = vmatprep.subr.mxu0 0.0
      %2892 = vmatpush1.msra.mxu0 %v2822
      %2893 = vmatprep.subr.mxu0 0.0
      %2894 = vmatpush1.msra.mxu0 %v2823
      %2895 = vmatprep.mubr.f32.mxu0 %v2791
      %2896 = vmatmul.mubr.f32.gmra.mrb[0].mxu0 %v2790
      %v2897 = vpop.f32.mrb[0].mxu0
      %v2898 = vadd.f32 %v2829, %v2897
      %v2899 = vpop.f32.mrb[0].mxu0
      %2900 = vdwg.mxu0
      %v2901 = vadd.f32 %v2674, %v2898
      %2902 = vadd.xlane.f32.xlu0 %v2901
      %v2903 = vpop.xlane.xlu0 %2902
      %v2904 = vmul.f32 %v2903, %v2649
      %v2905 = vsub.f32 %v2901, %v2904
      %v2906 = vmul.f32 %v2905, %v2905
      %2907 = vadd.xlane.f32.xlu0 %v2906
      %v2908 = vpop.xlane.xlu0 %2907
      %v2909 = vmul.f32 %v2908, %v2649
      %v2910 = vadd.f32 %v2909, 1e-05
      %v2911 = vrsqrt.pop %v2910
      %v2912 = vmul.f32 %v2905, %v2911
      %v2913 = vld [vmem:[%s15] sm:$0x1]
      %v2915 = vlaneseq
      %v2916 = vshrl.u32 %v2915, 7
      %v2917 = vsub.s32 0, %v2916
      %v2918 = vrot.slane %v2913, %v2917
      %v2920 = vmul.f32 %v2912, %v2918
      %v2921 = vld [vmem:[%s16] sm:$0x1]
      %v2923 = vlaneseq
      %v2924 = vshrl.u32 %v2923, 7
      %v2925 = vsub.s32 0, %v2924
      %v2926 = vrot.slane %v2921, %v2925
      %v2928 = vadd.f32 %v2920, %v2926
      %2929 = vst [vmem:[%s543] sm:$0xff] %v2928
      %p2930 = scmp.lt.s32.totalorder %s28, 1
      %s2931 = scalar_select %p2930, %s28, 1
      %s2932 = smul.addr %s2931, 8
      %s2933 = scalar_lea.vmem %s17, %s2932
      // Predicated region
      $region89: #{encoder_forward.10} parent=87 // pred_check
        %p2934 = pneg %p408
      $region90: #{encoder_forward.10} parent=87 // pred_check_branch
        %2936 = sbr.rel (%p2934) target = $region92
      $region91: #{encoder_forward.10} parent=87 // pred_region
        _
      $region92: #{encoder_forward.10} parent=87 // pred_fallthru
        _
    $region88: #{encoder_forward.10} parent=5 // pred_fallthru
      _
    %p2937 = scmp.le.s32.totalorder 2, %s23
    // Predicated region
    $region93: #{encoder_forward.10} parent=5 // pred_check
      %p2938 = pneg %p2937
    $region94: #{encoder_forward.10} parent=5 // pred_check_branch
      %2940 = sbr.rel (%p2938) target = $region96
    $region95: #{encoder_forward.10} parent=5 // pred_region
      %s2941 = ssub.s32 %s23, 2
      // Predicated region
      $region97: #{encoder_forward.10} parent=95 // pred_check
        %p2942 = pneg %p414
      $region98: #{encoder_forward.10} parent=95 // pred_check_branch
        %2944 = sbr.rel (%p2942) target = $region100
      $region99: #{encoder_forward.10} parent=95 // pred_region
        %p2945 = scmp.lt.s32.totalorder %s29, 1
        %s2946 = scalar_select %p2945, %s29, 1
        %s2947 = smul.addr %s2946, 8
        %s2948 = scalar_lea.vmem %s17, %s2947
      $region100: #{encoder_forward.10} parent=95 // pred_fallthru
        _
    $region96: #{encoder_forward.10} parent=5 // pred_fallthru
      _
  $region6: #{encoder_forward.10} parent=0 // loop_footer
    %s27 = sadd.s32 1, %s23
  $region7: #{encoder_forward.10} parent=0 // loop_footer_branch
    %22 = sbr.rel target = $region3
  $region8: #{encoder_forward.10} parent=0 // loop_exit
    _

// kernel: encoder_forward.11
$region0: #{encoder_forward.11}
  #allocation0 [shape = 'u32[]', space=smem, size = 0x4, offset = 0x4, fixed_abs, tag = 'smem constant byte address 0x4 - core index']
  #allocation1 [shape = 'u32[144,128]{1,0:T(1,128)}', space=vmem, size = 0x12000, scoped, tag = 'internal scratch']
  %s0 = inlined_call_operand.vmem [shape: f32[2,8,128], index: 0, kind: input, shape index: {}]
  %s1 = inlined_call_operand.vmem [shape: f32[4,128,32], index: 1, kind: input, shape index: {}]
  %s2 = inlined_call_operand.vmem [shape: f32[4,1,32], index: 2, kind: input, shape index: {}]
  %s3 = inlined_call_operand.vmem [shape: f32[4,128,32], index: 3, kind: input, shape index: {}]
  %s4 = inlined_call_operand.vmem [shape: f32[4,1,32], index: 4, kind: input, shape index: {}]
  %s5 = inlined_call_operand.vmem [shape: f32[4,128,32], index: 5, kind: input, shape index: {}]
  %s6 = inlined_call_operand.vmem [shape: f32[4,1,32], index: 6, kind: input, shape index: {}]
  %s7 = inlined_call_operand.vmem [shape: f32[4,32,128], index: 7, kind: input, shape index: {}]
  %s8 = inlined_call_operand.vmem [shape: f32[1,128], index: 8, kind: input, shape index: {}]
  %s9 = inlined_call_operand.vmem [shape: f32[128,256], index: 9, kind: input, shape index: {}]
  %s10 = inlined_call_operand.vmem [shape: f32[1,256], index: 10, kind: input, shape index: {}]
  %s11 = inlined_call_operand.vmem [shape: f32[256,128], index: 11, kind: input, shape index: {}]
  %s12 = inlined_call_operand.vmem [shape: f32[1,128], index: 12, kind: input, shape index: {}]
  %s13 = inlined_call_operand.vmem [shape: f32[1,128], index: 13, kind: input, shape index: {}]
  %s14 = inlined_call_operand.vmem [shape: f32[1,128], index: 14, kind: input, shape index: {}]
  %s15 = inlined_call_operand.vmem [shape: f32[1,128], index: 15, kind: input, shape index: {}]
  %s16 = inlined_call_operand.vmem [shape: f32[1,128], index: 16, kind: input, shape index: {}]
  %s17 = inlined_call_operand.hbm [shape: f32[2,8,128], index: 17, kind: output, shape index: {}]
  %s18 = sld [smem:[#allocation0]]
  $region101: #{encoder_forward.11} parent=0
    _
  %s20 = ssub.s32 1, %s18
  %s21 = scalar_select 0, %s20, %s18
  $region1: #{encoder_forward.11} parent=0
    #allocation2 [shape = 'u8[8192]{0}', space=vmem, size = 0x2000, scoped, tag = 'output window, operand 0']
    #allocation3 [shape = 's32[2]{0}', space=sflag, size = 0x8, scoped, tag = 'scoped memory for encoder_forward.11']
    %22 = vsyncpa [#allocation3], 0
    %s23 = scalar_lea.sflag [#allocation3], 1
    %24 = vsyncpa %s23, 0
    loop: start=0, step=1, limit=4
    $region2: #{encoder_forward.11} parent=1 // loop_pre_header
      _
    $region3: #{encoder_forward.11} parent=1 // loop_header
      %s26 = sphi 0, %s30
      %p27 = scmp.ge.s32.totalorder %s26, 4
      %s36 = sphi 0, %s38
      %s39 = sphi 0, %s36
      %s40 = sphi 0, %s39
      %s56 = sphi 0, %s40
      %s60 = sphi 0, %s60
      %s62 = sphi 0, %s60
      %s63 = sphi 0, %s62
      %s77 = sphi 0, %s63
      %s81 = sphi 0, %s81
      %s83 = sphi 0, %s81
      %s84 = sphi 0, %s83
      %s98 = sphi 0, %s84
      %s102 = sphi 0, %s102
      %s104 = sphi 0, %s102
      %s105 = sphi 0, %s104
      %s119 = sphi 0, %s105
      %s123 = sphi 0, %s123
      %s125 = sphi 0, %s123
      %s126 = sphi 0, %s125
      %s140 = sphi 0, %s126
      %s144 = sphi 0, %s144
      %s146 = sphi 0, %s144
      %s147 = sphi 0, %s146
      %s161 = sphi 0, %s147
      %s165 = sphi 0, %s165
      %s167 = sphi 0, %s165
      %s168 = sphi 0, %s167
      %s182 = sphi 0, %s168
      %s186 = sphi 0, %s186
      %s188 = sphi 0, %s186
      %s189 = sphi 0, %s188
      %s203 = sphi 0, %s189
      %s207 = sphi 0, %s207
      %s209 = sphi 0, %s207
      %s210 = sphi 0, %s209
      %s224 = sphi 0, %s210
      %s228 = sphi 0, %s228
      %s230 = sphi 0, %s228
      %s231 = sphi 0, %s230
      %s245 = sphi 0, %s231
      %s249 = sphi 0, %s249
      %s251 = sphi 0, %s249
      %s252 = sphi 0, %s251
      %s266 = sphi 0, %s252
      %s270 = sphi 0, %s270
      %s272 = sphi 0, %s270
      %s273 = sphi 0, %s272
      %s287 = sphi 0, %s273
      %s291 = sphi 0, %s291
      %s293 = sphi 0, %s291
      %s294 = sphi 0, %s293
      %s308 = sphi 0, %s294
      %s312 = sphi 0, %s312
      %s314 = sphi 0, %s312
      %s315 = sphi 0, %s314
      %s329 = sphi 0, %s315
      %s333 = sphi 0, %s333
      %s335 = sphi 0, %s333
      %s336 = sphi 0, %s335
      %s350 = sphi 0, %s336
      %s354 = sphi 0, %s354
      %s356 = sphi 0, %s354
      %s357 = sphi 0, %s356
      %s371 = sphi 0, %s357
      %s375 = sphi 0, %s375
      %s377 = sphi 0, %s375
      %s378 = sphi 0, %s377
      %s392 = sphi 0, %s378
      %s398 = sphi 0, %s400
      %s401 = sphi 0, %s398
      %s402 = sphi 0, %s401
      %s418 = sphi 0, %s402
    $region4: #{encoder_forward.11} parent=1 // loop_header_branch
      %29 = sbr.rel (%p27) target = $region8
    $region5: #{encoder_forward.11} parent=1 // loop_body
      %s31 = ssub.s32 %s26, 1
      %s32 = ssub.s32 %s26, 2
      %s33 = sadd.s32 %s26, 1
      %s34 = ssub.s32 %s26, %s33
      %p35 = scmp.eq.s32.totalorder %s34, 0
      %s37 = sadd.s32 %s36, 1
      %s38 = scalar_select %p35, %s36, %s37
      %p41 = pneg %p35
      %p42 = scmp.eq.s32.totalorder %s26, 1
      %p43 = por %p41, %p42
      %p44 = scmp.ne.s32.totalorder %s36, %s39
      %p45 = scmp.eq.s32.totalorder %s26, 0
      %p46 = por %p44, %p45
      %p47 = scmp.ne.s32.totalorder %s36, %s39
      %p48 = scmp.eq.s32.totalorder %s31, 1
      %p49 = por %p47, %p48
      %p50 = scmp.ne.s32.totalorder %s39, %s40
      %p51 = scmp.eq.s32.totalorder %s31, 0
      %p52 = por %p50, %p51
      %p53 = scmp.ne.s32.totalorder %s39, %s40
      %p54 = scmp.eq.s32.totalorder %s32, 1
      %p55 = por %p53, %p54
      %p57 = scmp.ne.s32.totalorder %s40, %s56
      %p58 = scmp.eq.s32.totalorder %s32, 0
      %p59 = por %p57, %p58
      %s61 = sadd.s32 %s60, 1
      %p64 = scmp.eq.s32.totalorder %s26, 1
      %p65 = scmp.ne.s32.totalorder %s60, %s62
      %p66 = scmp.eq.s32.totalorder %s26, 0
      %p67 = por %p65, %p66
      %p68 = scmp.ne.s32.totalorder %s60, %s62
      %p69 = scmp.eq.s32.totalorder %s31, 1
      %p70 = por %p68, %p69
      %p71 = scmp.ne.s32.totalorder %s62, %s63
      %p72 = scmp.eq.s32.totalorder %s31, 0
      %p73 = por %p71, %p72
      %p74 = scmp.ne.s32.totalorder %s62, %s63
      %p75 = scmp.eq.s32.totalorder %s32, 1
      %p76 = por %p74, %p75
      %p78 = scmp.ne.s32.totalorder %s63, %s77
      %p79 = scmp.eq.s32.totalorder %s32, 0
      %p80 = por %p78, %p79
      %s82 = sadd.s32 %s81, 1
      %p85 = scmp.eq.s32.totalorder %s26, 1
      %p86 = scmp.ne.s32.totalorder %s81, %s83
      %p87 = scmp.eq.s32.totalorder %s26, 0
      %p88 = por %p86, %p87
      %p89 = scmp.ne.s32.totalorder %s81, %s83
      %p90 = scmp.eq.s32.totalorder %s31, 1
      %p91 = por %p89, %p90
      %p92 = scmp.ne.s32.totalorder %s83, %s84
      %p93 = scmp.eq.s32.totalorder %s31, 0
      %p94 = por %p92, %p93
      %p95 = scmp.ne.s32.totalorder %s83, %s84
      %p96 = scmp.eq.s32.totalorder %s32, 1
      %p97 = por %p95, %p96
      %p99 = scmp.ne.s32.totalorder %s84, %s98
      %p100 = scmp.eq.s32.totalorder %s32, 0
      %p101 = por %p99, %p100
      %s103 = sadd.s32 %s102, 1
      %p106 = scmp.eq.s32.totalorder %s26, 1
      %p107 = scmp.ne.s32.totalorder %s102, %s104
      %p108 = scmp.eq.s32.totalorder %s26, 0
      %p109 = por %p107, %p108
      %p110 = scmp.ne.s32.totalorder %s102, %s104
      %p111 = scmp.eq.s32.totalorder %s31, 1
      %p112 = por %p110, %p111
      %p113 = scmp.ne.s32.totalorder %s104, %s105
      %p114 = scmp.eq.s32.totalorder %s31, 0
      %p115 = por %p113, %p114
      %p116 = scmp.ne.s32.totalorder %s104, %s105
      %p117 = scmp.eq.s32.totalorder %s32, 1
      %p118 = por %p116, %p117
      %p120 = scmp.ne.s32.totalorder %s105, %s119
      %p121 = scmp.eq.s32.totalorder %s32, 0
      %p122 = por %p120, %p121
      %s124 = sadd.s32 %s123, 1
      %p127 = scmp.eq.s32.totalorder %s26, 1
      %p128 = scmp.ne.s32.totalorder %s123, %s125
      %p129 = scmp.eq.s32.totalorder %s26, 0
      %p130 = por %p128, %p129
      %p131 = scmp.ne.s32.totalorder %s123, %s125
      %p132 = scmp.eq.s32.totalorder %s31, 1
      %p133 = por %p131, %p132
      %p134 = scmp.ne.s32.totalorder %s125, %s126
      %p135 = scmp.eq.s32.totalorder %s31, 0
      %p136 = por %p134, %p135
      %p137 = scmp.ne.s32.totalorder %s125, %s126
      %p138 = scmp.eq.s32.totalorder %s32, 1
      %p139 = por %p137, %p138
      %p141 = scmp.ne.s32.totalorder %s126, %s140
      %p142 = scmp.eq.s32.totalorder %s32, 0
      %p143 = por %p141, %p142
      %s145 = sadd.s32 %s144, 1
      %p148 = scmp.eq.s32.totalorder %s26, 1
      %p149 = scmp.ne.s32.totalorder %s144, %s146
      %p150 = scmp.eq.s32.totalorder %s26, 0
      %p151 = por %p149, %p150
      %p152 = scmp.ne.s32.totalorder %s144, %s146
      %p153 = scmp.eq.s32.totalorder %s31, 1
      %p154 = por %p152, %p153
      %p155 = scmp.ne.s32.totalorder %s146, %s147
      %p156 = scmp.eq.s32.totalorder %s31, 0
      %p157 = por %p155, %p156
      %p158 = scmp.ne.s32.totalorder %s146, %s147
      %p159 = scmp.eq.s32.totalorder %s32, 1
      %p160 = por %p158, %p159
      %p162 = scmp.ne.s32.totalorder %s147, %s161
      %p163 = scmp.eq.s32.totalorder %s32, 0
      %p164 = por %p162, %p163
      %s166 = sadd.s32 %s165, 1
      %p169 = scmp.eq.s32.totalorder %s26, 1
      %p170 = scmp.ne.s32.totalorder %s165, %s167
      %p171 = scmp.eq.s32.totalorder %s26, 0
      %p172 = por %p170, %p171
      %p173 = scmp.ne.s32.totalorder %s165, %s167
      %p174 = scmp.eq.s32.totalorder %s31, 1
      %p175 = por %p173, %p174
      %p176 = scmp.ne.s32.totalorder %s167, %s168
      %p177 = scmp.eq.s32.totalorder %s31, 0
      %p178 = por %p176, %p177
      %p179 = scmp.ne.s32.totalorder %s167, %s168
      %p180 = scmp.eq.s32.totalorder %s32, 1
      %p181 = por %p179, %p180
      %p183 = scmp.ne.s32.totalorder %s168, %s182
      %p184 = scmp.eq.s32.totalorder %s32, 0
      %p185 = por %p183, %p184
      %s187 = sadd.s32 %s186, 1
      %p190 = scmp.eq.s32.totalorder %s26, 1
      %p191 = scmp.ne.s32.totalorder %s186, %s188
      %p192 = scmp.eq.s32.totalorder %s26, 0
      %p193 = por %p191, %p192
      %p194 = scmp.ne.s32.totalorder %s186, %s188
      %p195 = scmp.eq.s32.totalorder %s31, 1
      %p196 = por %p194, %p195
      %p197 = scmp.ne.s32.totalorder %s188, %s189
      %p198 = scmp.eq.s32.totalorder %s31, 0
      %p199 = por %p197, %p198
      %p200 = scmp.ne.s32.totalorder %s188, %s189
      %p201 = scmp.eq.s32.totalorder %s32, 1
      %p202 = por %p200, %p201
      %p204 = scmp.ne.s32.totalorder %s189, %s203
      %p205 = scmp.eq.s32.totalorder %s32, 0
      %p206 = por %p204, %p205
      %s208 = sadd.s32 %s207, 1
      %p211 = scmp.eq.s32.totalorder %s26, 1
      %p212 = scmp.ne.s32.totalorder %s207, %s209
      %p213 = scmp.eq.s32.totalorder %s26, 0
      %p214 = por %p212, %p213
      %p215 = scmp.ne.s32.totalorder %s207, %s209
      %p216 = scmp.eq.s32.totalorder %s31, 1
      %p217 = por %p215, %p216
      %p218 = scmp.ne.s32.totalorder %s209, %s210
      %p219 = scmp.eq.s32.totalorder %s31, 0
      %p220 = por %p218, %p219
      %p221 = scmp.ne.s32.totalorder %s209, %s210
      %p222 = scmp.eq.s32.totalorder %s32, 1
      %p223 = por %p221, %p222
      %p225 = scmp.ne.s32.totalorder %s210, %s224
      %p226 = scmp.eq.s32.totalorder %s32, 0
      %p227 = por %p225, %p226
      %s229 = sadd.s32 %s228, 1
      %p232 = scmp.eq.s32.totalorder %s26, 1
      %p233 = scmp.ne.s32.totalorder %s228, %s230
      %p234 = scmp.eq.s32.totalorder %s26, 0
      %p235 = por %p233, %p234
      %p236 = scmp.ne.s32.totalorder %s228, %s230
      %p237 = scmp.eq.s32.totalorder %s31, 1
      %p238 = por %p236, %p237
      %p239 = scmp.ne.s32.totalorder %s230, %s231
      %p240 = scmp.eq.s32.totalorder %s31, 0
      %p241 = por %p239, %p240
      %p242 = scmp.ne.s32.totalorder %s230, %s231
      %p243 = scmp.eq.s32.totalorder %s32, 1
      %p244 = por %p242, %p243
      %p246 = scmp.ne.s32.totalorder %s231, %s245
      %p247 = scmp.eq.s32.totalorder %s32, 0
      %p248 = por %p246, %p247
      %s250 = sadd.s32 %s249, 1
      %p253 = scmp.eq.s32.totalorder %s26, 1
      %p254 = scmp.ne.s32.totalorder %s249, %s251
      %p255 = scmp.eq.s32.totalorder %s26, 0
      %p256 = por %p254, %p255
      %p257 = scmp.ne.s32.totalorder %s249, %s251
      %p258 = scmp.eq.s32.totalorder %s31, 1
      %p259 = por %p257, %p258
      %p260 = scmp.ne.s32.totalorder %s251, %s252
      %p261 = scmp.eq.s32.totalorder %s31, 0
      %p262 = por %p260, %p261
      %p263 = scmp.ne.s32.totalorder %s251, %s252
      %p264 = scmp.eq.s32.totalorder %s32, 1
      %p265 = por %p263, %p264
      %p267 = scmp.ne.s32.totalorder %s252, %s266
      %p268 = scmp.eq.s32.totalorder %s32, 0
      %p269 = por %p267, %p268
      %s271 = sadd.s32 %s270, 1
      %p274 = scmp.eq.s32.totalorder %s26, 1
      %p275 = scmp.ne.s32.totalorder %s270, %s272
      %p276 = scmp.eq.s32.totalorder %s26, 0
      %p277 = por %p275, %p276
      %p278 = scmp.ne.s32.totalorder %s270, %s272
      %p279 = scmp.eq.s32.totalorder %s31, 1
      %p280 = por %p278, %p279
      %p281 = scmp.ne.s32.totalorder %s272, %s273
      %p282 = scmp.eq.s32.totalorder %s31, 0
      %p283 = por %p281, %p282
      %p284 = scmp.ne.s32.totalorder %s272, %s273
      %p285 = scmp.eq.s32.totalorder %s32, 1
      %p286 = por %p284, %p285
      %p288 = scmp.ne.s32.totalorder %s273, %s287
      %p289 = scmp.eq.s32.totalorder %s32, 0
      %p290 = por %p288, %p289
      %s292 = sadd.s32 %s291, 1
      %p295 = scmp.eq.s32.totalorder %s26, 1
      %p296 = scmp.ne.s32.totalorder %s291, %s293
      %p297 = scmp.eq.s32.totalorder %s26, 0
      %p298 = por %p296, %p297
      %p299 = scmp.ne.s32.totalorder %s291, %s293
      %p300 = scmp.eq.s32.totalorder %s31, 1
      %p301 = por %p299, %p300
      %p302 = scmp.ne.s32.totalorder %s293, %s294
      %p303 = scmp.eq.s32.totalorder %s31, 0
      %p304 = por %p302, %p303
      %p305 = scmp.ne.s32.totalorder %s293, %s294
      %p306 = scmp.eq.s32.totalorder %s32, 1
      %p307 = por %p305, %p306
      %p309 = scmp.ne.s32.totalorder %s294, %s308
      %p310 = scmp.eq.s32.totalorder %s32, 0
      %p311 = por %p309, %p310
      %s313 = sadd.s32 %s312, 1
      %p316 = scmp.eq.s32.totalorder %s26, 1
      %p317 = scmp.ne.s32.totalorder %s312, %s314
      %p318 = scmp.eq.s32.totalorder %s26, 0
      %p319 = por %p317, %p318
      %p320 = scmp.ne.s32.totalorder %s312, %s314
      %p321 = scmp.eq.s32.totalorder %s31, 1
      %p322 = por %p320, %p321
      %p323 = scmp.ne.s32.totalorder %s314, %s315
      %p324 = scmp.eq.s32.totalorder %s31, 0
      %p325 = por %p323, %p324
      %p326 = scmp.ne.s32.totalorder %s314, %s315
      %p327 = scmp.eq.s32.totalorder %s32, 1
      %p328 = por %p326, %p327
      %p330 = scmp.ne.s32.totalorder %s315, %s329
      %p331 = scmp.eq.s32.totalorder %s32, 0
      %p332 = por %p330, %p331
      %s334 = sadd.s32 %s333, 1
      %p337 = scmp.eq.s32.totalorder %s26, 1
      %p338 = scmp.ne.s32.totalorder %s333, %s335
      %p339 = scmp.eq.s32.totalorder %s26, 0
      %p340 = por %p338, %p339
      %p341 = scmp.ne.s32.totalorder %s333, %s335
      %p342 = scmp.eq.s32.totalorder %s31, 1
      %p343 = por %p341, %p342
      %p344 = scmp.ne.s32.totalorder %s335, %s336
      %p345 = scmp.eq.s32.totalorder %s31, 0
      %p346 = por %p344, %p345
      %p347 = scmp.ne.s32.totalorder %s335, %s336
      %p348 = scmp.eq.s32.totalorder %s32, 1
      %p349 = por %p347, %p348
      %p351 = scmp.ne.s32.totalorder %s336, %s350
      %p352 = scmp.eq.s32.totalorder %s32, 0
      %p353 = por %p351, %p352
      %s355 = sadd.s32 %s354, 1
      %p358 = scmp.eq.s32.totalorder %s26, 1
      %p359 = scmp.ne.s32.totalorder %s354, %s356
      %p360 = scmp.eq.s32.totalorder %s26, 0
      %p361 = por %p359, %p360
      %p362 = scmp.ne.s32.totalorder %s354, %s356
      %p363 = scmp.eq.s32.totalorder %s31, 1
      %p364 = por %p362, %p363
      %p365 = scmp.ne.s32.totalorder %s356, %s357
      %p366 = scmp.eq.s32.totalorder %s31, 0
      %p367 = por %p365, %p366
      %p368 = scmp.ne.s32.totalorder %s356, %s357
      %p369 = scmp.eq.s32.totalorder %s32, 1
      %p370 = por %p368, %p369
      %p372 = scmp.ne.s32.totalorder %s357, %s371
      %p373 = scmp.eq.s32.totalorder %s32, 0
      %p374 = por %p372, %p373
      %s376 = sadd.s32 %s375, 1
      %p379 = scmp.eq.s32.totalorder %s26, 1
      %p380 = scmp.ne.s32.totalorder %s375, %s377
      %p381 = scmp.eq.s32.totalorder %s26, 0
      %p382 = por %p380, %p381
      %p383 = scmp.ne.s32.totalorder %s375, %s377
      %p384 = scmp.eq.s32.totalorder %s31, 1
      %p385 = por %p383, %p384
      %p386 = scmp.ne.s32.totalorder %s377, %s378
      %p387 = scmp.eq.s32.totalorder %s31, 0
      %p388 = por %p386, %p387
      %p389 = scmp.ne.s32.totalorder %s377, %s378
      %p390 = scmp.eq.s32.totalorder %s32, 1
      %p391 = por %p389, %p390
      %p393 = scmp.ne.s32.totalorder %s378, %s392
      %p394 = scmp.eq.s32.totalorder %s32, 0
      %p395 = por %p393, %p394
      %s396 = ssub.s32 %s26, %s33
      %p397 = scmp.eq.s32.totalorder %s396, 0
      %s399 = sadd.s32 %s398, 1
      %s400 = scalar_select %p397, %s398, %s399
      %p403 = pneg %p397
      %p404 = scmp.eq.s32.totalorder %s26, 1
      %p405 = por %p403, %p404
      %p406 = scmp.ne.s32.totalorder %s398, %s401
      %p407 = scmp.eq.s32.totalorder %s26, 0
      %p408 = por %p406, %p407
      %p409 = scmp.ne.s32.totalorder %s398, %s401
      %p410 = scmp.eq.s32.totalorder %s31, 1
      %p411 = por %p409, %p410
      %p412 = scmp.ne.s32.totalorder %s401, %s402
      %p413 = scmp.eq.s32.totalorder %s31, 0
      %p414 = por %p412, %p413
      %p415 = scmp.ne.s32.totalorder %s401, %s402
      %p416 = scmp.eq.s32.totalorder %s32, 1
      %p417 = por %p415, %p416
      %p419 = scmp.ne.s32.totalorder %s402, %s418
      %p420 = scmp.eq.s32.totalorder %s32, 0
      %p421 = por %p419, %p420
      %p422 = scmp.le.s32.totalorder 1, %s26
      %p423 = scmp.lt.s32.totalorder %s26, 3
      %p424 = pnand %p422, %p423
      %p425 = pneg %p424
      // Predicated region
      $region9: #{encoder_forward.11} parent=5 // pred_check
        _
      $region10: #{encoder_forward.11} parent=5 // pred_check_branch
        %427 = sbr.rel (%p424) target = $region12
      $region11: #{encoder_forward.11} parent=5 // pred_region
        %s428 = ssub.s32 %s26, 1
        // Predicated region
        $region13: #{encoder_forward.11} parent=11 // pred_check
          %p429 = pneg %p73
        $region14: #{encoder_forward.11} parent=11 // pred_check_branch
          %431 = sbr.rel (%p429) target = $region16
        $region15: #{encoder_forward.11} parent=11 // pred_region
          _
        $region16: #{encoder_forward.11} parent=11 // pred_fallthru
          _
        // Predicated region
        $region17: #{encoder_forward.11} parent=11 // pred_check
          %p432 = pneg %p94
        $region18: #{encoder_forward.11} parent=11 // pred_check_branch
          %434 = sbr.rel (%p432) target = $region20
        $region19: #{encoder_forward.11} parent=11 // pred_region
          _
        $region20: #{encoder_forward.11} parent=11 // pred_fallthru
          _
        // Predicated region
        $region21: #{encoder_forward.11} parent=11 // pred_check
          %p435 = pneg %p115
        $region22: #{encoder_forward.11} parent=11 // pred_check_branch
          %437 = sbr.rel (%p435) target = $region24
        $region23: #{encoder_forward.11} parent=11 // pred_region
          _
        $region24: #{encoder_forward.11} parent=11 // pred_fallthru
          _
        // Predicated region
        $region25: #{encoder_forward.11} parent=11 // pred_check
          %p438 = pneg %p136
        $region26: #{encoder_forward.11} parent=11 // pred_check_branch
          %440 = sbr.rel (%p438) target = $region28
        $region27: #{encoder_forward.11} parent=11 // pred_region
          _
        $region28: #{encoder_forward.11} parent=11 // pred_fallthru
          _
        // Predicated region
        $region29: #{encoder_forward.11} parent=11 // pred_check
          %p441 = pneg %p157
        $region30: #{encoder_forward.11} parent=11 // pred_check_branch
          %443 = sbr.rel (%p441) target = $region32
        $region31: #{encoder_forward.11} parent=11 // pred_region
          _
        $region32: #{encoder_forward.11} parent=11 // pred_fallthru
          _
        // Predicated region
        $region33: #{encoder_forward.11} parent=11 // pred_check
          %p444 = pneg %p178
        $region34: #{encoder_forward.11} parent=11 // pred_check_branch
          %446 = sbr.rel (%p444) target = $region36
        $region35: #{encoder_forward.11} parent=11 // pred_region
          _
        $region36: #{encoder_forward.11} parent=11 // pred_fallthru
          _
        // Predicated region
        $region37: #{encoder_forward.11} parent=11 // pred_check
          %p447 = pneg %p199
        $region38: #{encoder_forward.11} parent=11 // pred_check_branch
          %449 = sbr.rel (%p447) target = $region40
        $region39: #{encoder_forward.11} parent=11 // pred_region
          _
        $region40: #{encoder_forward.11} parent=11 // pred_fallthru
          _
        // Predicated region
        $region41: #{encoder_forward.11} parent=11 // pred_check
          %p450 = pneg %p220
        $region42: #{encoder_forward.11} parent=11 // pred_check_branch
          %452 = sbr.rel (%p450) target = $region44
        $region43: #{encoder_forward.11} parent=11 // pred_region
          _
        $region44: #{encoder_forward.11} parent=11 // pred_fallthru
          _
        // Predicated region
        $region45: #{encoder_forward.11} parent=11 // pred_check
          %p453 = pneg %p241
        $region46: #{encoder_forward.11} parent=11 // pred_check_branch
          %455 = sbr.rel (%p453) target = $region48
        $region47: #{encoder_forward.11} parent=11 // pred_region
          _
        $region48: #{encoder_forward.11} parent=11 // pred_fallthru
          _
        // Predicated region
        $region49: #{encoder_forward.11} parent=11 // pred_check
          %p456 = pneg %p262
        $region50: #{encoder_forward.11} parent=11 // pred_check_branch
          %458 = sbr.rel (%p456) target = $region52
        $region51: #{encoder_forward.11} parent=11 // pred_region
          _
        $region52: #{encoder_forward.11} parent=11 // pred_fallthru
          _
        // Predicated region
        $region53: #{encoder_forward.11} parent=11 // pred_check
          %p459 = pneg %p283
        $region54: #{encoder_forward.11} parent=11 // pred_check_branch
          %461 = sbr.rel (%p459) target = $region56
        $region55: #{encoder_forward.11} parent=11 // pred_region
          _
        $region56: #{encoder_forward.11} parent=11 // pred_fallthru
          _
        // Predicated region
        $region57: #{encoder_forward.11} parent=11 // pred_check
          %p462 = pneg %p304
        $region58: #{encoder_forward.11} parent=11 // pred_check_branch
          %464 = sbr.rel (%p462) target = $region60
        $region59: #{encoder_forward.11} parent=11 // pred_region
          _
        $region60: #{encoder_forward.11} parent=11 // pred_fallthru
          _
        // Predicated region
        $region61: #{encoder_forward.11} parent=11 // pred_check
          %p465 = pneg %p325
        $region62: #{encoder_forward.11} parent=11 // pred_check_branch
          %467 = sbr.rel (%p465) target = $region64
        $region63: #{encoder_forward.11} parent=11 // pred_region
          _
        $region64: #{encoder_forward.11} parent=11 // pred_fallthru
          _
        // Predicated region
        $region65: #{encoder_forward.11} parent=11 // pred_check
          %p468 = pneg %p346
        $region66: #{encoder_forward.11} parent=11 // pred_check_branch
          %470 = sbr.rel (%p468) target = $region68
        $region67: #{encoder_forward.11} parent=11 // pred_region
          _
        $region68: #{encoder_forward.11} parent=11 // pred_fallthru
          _
        // Predicated region
        $region69: #{encoder_forward.11} parent=11 // pred_check
          %p471 = pneg %p367
        $region70: #{encoder_forward.11} parent=11 // pred_check_branch
          %473 = sbr.rel (%p471) target = $region72
        $region71: #{encoder_forward.11} parent=11 // pred_region
          _
        $region72: #{encoder_forward.11} parent=11 // pred_fallthru
          _
        // Predicated region
        $region73: #{encoder_forward.11} parent=11 // pred_check
          %p474 = pneg %p388
        $region74: #{encoder_forward.11} parent=11 // pred_check_branch
          %476 = sbr.rel (%p474) target = $region76
        $region75: #{encoder_forward.11} parent=11 // pred_region
          _
        $region76: #{encoder_forward.11} parent=11 // pred_fallthru
          _
      $region12: #{encoder_forward.11} parent=5 // pred_fallthru
        _
      %p477 = scmp.lt.s32.totalorder %s26, 2
      // Predicated region
      $region77: #{encoder_forward.11} parent=5 // pred_check
        %p478 = pneg %p477
      $region78: #{encoder_forward.11} parent=5 // pred_check_branch
        %480 = sbr.rel (%p478) target = $region80
      $region79: #{encoder_forward.11} parent=5 // pred_region
        // Predicated region
        $region81: #{encoder_forward.11} parent=79 // pred_check
          %p481 = pneg %p46
        $region82: #{encoder_forward.11} parent=79 // pred_check_branch
          %483 = sbr.rel (%p481) target = $region84
        $region83: #{encoder_forward.11} parent=79 // pred_region
          %p484 = scmp.lt.s32.totalorder %s26, 1
          %s485 = scalar_select %p484, %s26, 1
          %s486 = smul.addr %s485, 8
          %s487 = scalar_lea.vmem %s0, %s486
        $region84: #{encoder_forward.11} parent=79 // pred_fallthru
          _
      $region80: #{encoder_forward.11} parent=5 // pred_fallthru
        _
      %p488 = scmp.le.s32.totalorder 1, %s26
      %p489 = scmp.lt.s32.totalorder %s26, 3
      %p490 = pnand %p488, %p489
      %p491 = pneg %p490
      // Predicated region
      $region85: #{encoder_forward.11} parent=5 // pred_check
        _
      $region86: #{encoder_forward.11} parent=5 // pred_check_branch
        %493 = sbr.rel (%p490) target = $region88
      $region87: #{encoder_forward.11} parent=5 // pred_region
        %s494 = ssub.s32 %s26, 1
        %p495 = scmp.lt.s32.totalorder %s31, 1
        %s496 = scalar_select %p495, %s31, 1
        %s497 = smul.addr %s496, 8
        %s498 = scalar_lea.vmem %s0, %s497
        %p499 = pneg %p52
        %p500 = pneg %p49
        %p501 = pneg %p73
        %p502 = pneg %p70
        %p503 = pneg %p94
        %p504 = pneg %p91
        %p505 = pneg %p115
        %p506 = pneg %p112
        %p507 = pneg %p136
        %p508 = pneg %p133
        %p509 = pneg %p157
        %p510 = pneg %p154
        %p511 = pneg %p178
        %p512 = pneg %p175
        %p513 = pneg %p199
        %p514 = pneg %p196
        %p515 = pneg %p220
        %p516 = pneg %p217
        %p517 = pneg %p241
        %p518 = pneg %p238
        %p519 = pneg %p262
        %p520 = pneg %p259
        %p521 = pneg %p283
        %p522 = pneg %p280
        %p523 = pneg %p304
        %p524 = pneg %p301
        %p525 = pneg %p325
        %p526 = pneg %p322
        %p527 = pneg %p346
        %p528 = pneg %p343
        %p529 = pneg %p367
        %p530 = pneg %p364
        %p531 = pneg %p388
        %p532 = pneg %p385
        %p533 = pneg %p414
        %p534 = pneg %p411
        %s535 = sand.u32 %s401, 1
        %s536 = scalar_lea.sflag [#allocation3], %s535
        %s537 = sand.u32 %s401, 1
        %s538 = smul.addr %s537, 8
        %s539 = scalar_lea.vmem [#allocation2], %s538
        %p540 = scmp.lt.s32.totalorder %s31, 1
        %s541 = scalar_select %p540, %s31, 1
        %s542 = smul.addr %s541, 8
        %s543 = scalar_lea.vmem %s0, %s542
        %v544 = vld [vmem:[%s543] sm:$0xff]
        %v545 = vld [vmem:[%s1] sm:$0xff]
        %v546 = vld [vmem:[%s1 + $0x8] sm:$0xff]
        %v547 = vld [vmem:[%s1 + $0x10] sm:$0xff]
        %v548 = vld [vmem:[%s1 + $0x18] sm:$0xff]
        %v549 = vld [vmem:[%s1 + $0x20] sm:$0xff]
        %v550 = vld [vmem:[%s1 + $0x28] sm:$0xff]
        %v551 = vld [vmem:[%s1 + $0x30] sm:$0xff]
        %v552 = vld [vmem:[%s1 + $0x38] sm:$0xff]
        %v553 = vld [vmem:[%s1 + $0x40] sm:$0xff]
        %v554 = vld [vmem:[%s1 + $0x48] sm:$0xff]
        %v555 = vld [vmem:[%s1 + $0x50] sm:$0xff]
        %v556 = vld [vmem:[%s1 + $0x58] sm:$0xff]
        %v557 = vld [vmem:[%s1 + $0x60] sm:$0xff]
        %v558 = vld [vmem:[%s1 + $0x68] sm:$0xff]
        %v559 = vld [vmem:[%s1 + $0x70] sm:$0xff]
        %v560 = vld [vmem:[%s1 + $0x78] sm:$0xff]
        %v561 = vld [vmem:[%s2] sm:$0x1]
        %v563 = vlaneseq
        %v564 = vshrl.u32 %v563, 7
        %v565 = vsub.s32 0, %v564
        %v566 = vrot.slane %v561, %v565
        %568 = vmatprep.subr.mxu0 0.0
        %569 = vmatpush1.msra.mxu0 %v545
        %570 = vmatprep.subr.mxu0 0.0
        %571 = vmatpush1.msra.mxu0 %v546
        %572 = vmatprep.subr.mxu0 0.0
        %573 = vmatpush1.msra.mxu0 %v547
        %574 = vmatprep.subr.mxu0 0.0
        %575 = vmatpush1.msra.mxu0 %v548
        %576 = vmatprep.subr.mxu0 0.0
        %577 = vmatpush1.msra.mxu0 %v549
        %578 = vmatprep.subr.mxu0 0.0
        %579 = vmatpush1.msra.mxu0 %v550
        %580 = vmatprep.subr.mxu0 0.0
        %581 = vmatpush1.msra.mxu0 %v551
        %582 = vmatprep.subr.mxu0 0.0
        %583 = vmatpush1.msra.mxu0 %v552
        %584 = vmatprep.subr.mxu0 0.0
        %585 = vmatpush1.msra.mxu0 %v553
        %586 = vmatprep.subr.mxu0 0.0
        %587 = vmatpush1.msra.mxu0 %v554
        %588 = vmatprep.subr.mxu0 0.0
        %589 = vmatpush1.msra.mxu0 %v555
        %590 = vmatprep.subr.mxu0 0.0
        %591 = vmatpush1.msra.mxu0 %v556
        %592 = vmatprep.subr.mxu0 0.0
        %593 = vmatpush1.msra.mxu0 %v557
        %594 = vmatprep.subr.mxu0 0.0
        %595 = vmatpush1.msra.mxu0 %v558
        %596 = vmatprep.subr.mxu0 0.0
        %597 = vmatpush1.msra.mxu0 %v559
        %598 = vmatprep.subr.mxu0 0.0
        %599 = vmatpush1.msra.mxu0 %v560
        %600 = vmatprep.subr.mxu0 0.0
        %601 = vmatpush1.msra.mxu0 0.0
        %602 = vmatprep.subr.mxu0 0.0
        %603 = vmatpush1.msra.mxu0 0.0
        %604 = vmatprep.subr.mxu0 0.0
        %605 = vmatpush1.msra.mxu0 0.0
        %606 = vmatprep.subr.mxu0 0.0
        %607 = vmatpush1.msra.mxu0 0.0
        %608 = vmatprep.subr.mxu0 0.0
        %609 = vmatpush1.msra.mxu0 0.0
        %610 = vmatprep.subr.mxu0 0.0
        %611 = vmatpush1.msra.mxu0 0.0
        %612 = vmatprep.subr.mxu0 0.0
        %613 = vmatpush1.msra.mxu0 0.0
        %614 = vmatprep.subr.mxu0 0.0
        %615 = vmatpush1.msra.mxu0 0.0
        %616 = vmatprep.subr.mxu0 0.0
        %617 = vmatpush1.msra.mxu0 0.0
        %618 = vmatprep.subr.mxu0 0.0
        %619 = vmatpush1.msra.mxu0 0.0
        %620 = vmatprep.subr.mxu0 0.0
        %621 = vmatpush1.msra.mxu0 0.0
        %622 = vmatprep.subr.mxu0 0.0
        %623 = vmatpush1.msra.mxu0 0.0
        %624 = vmatprep.subr.mxu0 0.0
        %625 = vmatpush1.msra.mxu0 0.0
        %626 = vmatprep.subr.mxu0 0.0
        %627 = vmatpush1.msra.mxu0 0.0
        %628 = vmatprep.subr.mxu0 0.0
        %629 = vmatpush1.msra.mxu0 0.0
        %630 = vmatprep.subr.mxu0 0.0
        %631 = vmatpush1.msra.mxu0 0.0
        %632 = vmatprep.mubr.f32.mxu0 0.0
        %633 = vmatmul.mubr.f32.gmra.mrb[0].mxu0 %v544
        %v634 = vpop.f32.mrb[0].mxu0
        %v635 = vadd.f32 %v566, %v634
        %v636 = vpop.f32.mrb[0].mxu0
        %637 = vdwg.mxu0
        %v638 = vld [vmem:[%s3] sm:$0xff]
        %v639 = vld [vmem:[%s3 + $0x8] sm:$0xff]
        %v640 = vld [vmem:[%s3 + $0x10] sm:$0xff]
        %v641 = vld [vmem:[%s3 + $0x18] sm:$0xff]
        %v642 = vld [vmem:[%s3 + $0x20] sm:$0xff]
        %v643 = vld [vmem:[%s3 + $0x28] sm:$0xff]
        %v644 = vld [vmem:[%s3 + $0x30] sm:$0xff]
        %v645 = vld [vmem:[%s3 + $0x38] sm:$0xff]
        %v646 = vld [vmem:[%s3 + $0x40] sm:$0xff]
        %v647 = vld [vmem:[%s3 + $0x48] sm:$0xff]
        %v648 = vld [vmem:[%s3 + $0x50] sm:$0xff]
        %v649 = vld [vmem:[%s3 + $0x58] sm:$0xff]
        %v650 = vld [vmem:[%s3 + $0x60] sm:$0xff]
        %v651 = vld [vmem:[%s3 + $0x68] sm:$0xff]
        %v652 = vld [vmem:[%s3 + $0x70] sm:$0xff]
        %v653 = vld [vmem:[%s3 + $0x78] sm:$0xff]
        %v654 = vld [vmem:[%s4] sm:$0x1]
        %v656 = vlaneseq
        %v657 = vshrl.u32 %v656, 7
        %v658 = vsub.s32 0, %v657
        %v659 = vrot.slane %v654, %v658
        %661 = vmatprep.subr.mxu0 0.0
        %662 = vmatpush1.msra.mxu0 %v638
        %663 = vmatprep.subr.mxu0 0.0
        %664 = vmatpush1.msra.mxu0 %v639
        %665 = vmatprep.subr.mxu0 0.0
        %666 = vmatpush1.msra.mxu0 %v640
        %667 = vmatprep.subr.mxu0 0.0
        %668 = vmatpush1.msra.mxu0 %v641
        %669 = vmatprep.subr.mxu0 0.0
        %670 = vmatpush1.msra.mxu0 %v642
        %671 = vmatprep.subr.mxu0 0.0
        %672 = vmatpush1.msra.mxu0 %v643
        %673 = vmatprep.subr.mxu0 0.0
        %674 = vmatpush1.msra.mxu0 %v644
        %675 = vmatprep.subr.mxu0 0.0
        %676 = vmatpush1.msra.mxu0 %v645
        %677 = vmatprep.subr.mxu0 0.0
        %678 = vmatpush1.msra.mxu0 %v646
        %679 = vmatprep.subr.mxu0 0.0
        %680 = vmatpush1.msra.mxu0 %v647
        %681 = vmatprep.subr.mxu0 0.0
        %682 = vmatpush1.msra.mxu0 %v648
        %683 = vmatprep.subr.mxu0 0.0
        %684 = vmatpush1.msra.mxu0 %v649
        %685 = vmatprep.subr.mxu0 0.0
        %686 = vmatpush1.msra.mxu0 %v650
        %687 = vmatprep.subr.mxu0 0.0
        %688 = vmatpush1.msra.mxu0 %v651
        %689 = vmatprep.subr.mxu0 0.0
        %690 = vmatpush1.msra.mxu0 %v652
        %691 = vmatprep.subr.mxu0 0.0
        %692 = vmatpush1.msra.mxu0 %v653
        %693 = vmatprep.subr.mxu0 0.0
        %694 = vmatpush1.msra.mxu0 0.0
        %695 = vmatprep.subr.mxu0 0.0
        %696 = vmatpush1.msra.mxu0 0.0
        %697 = vmatprep.subr.mxu0 0.0
        %698 = vmatpush1.msra.mxu0 0.0
        %699 = vmatprep.subr.mxu0 0.0
        %700 = vmatpush1.msra.mxu0 0.0
        %701 = vmatprep.subr.mxu0 0.0
        %702 = vmatpush1.msra.mxu0 0.0
        %703 = vmatprep.subr.mxu0 0.0
        %704 = vmatpush1.msra.mxu0 0.0
        %705 = vmatprep.subr.mxu0 0.0
        %706 = vmatpush1.msra.mxu0 0.0
        %707 = vmatprep.subr.mxu0 0.0
        %708 = vmatpush1.msra.mxu0 0.0
        %709 = vmatprep.subr.mxu0 0.0
        %710 = vmatpush1.msra.mxu0 0.0
        %711 = vmatprep.subr.mxu0 0.0
        %712 = vmatpush1.msra.mxu0 0.0
        %713 = vmatprep.subr.mxu0 0.0
        %714 = vmatpush1.msra.mxu0 0.0
        %715 = vmatprep.subr.mxu0 0.0
        %716 = vmatpush1.msra.mxu0 0.0
        %717 = vmatprep.subr.mxu0 0.0
        %718 = vmatpush1.msra.mxu0 0.0
        %719 = vmatprep.subr.mxu0 0.0
        %720 = vmatpush1.msra.mxu0 0.0
        %721 = vmatprep.subr.mxu0 0.0
        %722 = vmatpush1.msra.mxu0 0.0
        %723 = vmatprep.subr.mxu0 0.0
        %724 = vmatpush1.msra.mxu0 0.0
        %725 = vmatprep.mubr.f32.mxu0 0.0
        %726 = vmatmul.mubr.f32.gmra.mrb[0].mxu0 %v544
        %v727 = vpop.f32.mrb[0].mxu0
        %v728 = vadd.f32 %v659, %v727
        %v729 = vpop.f32.mrb[0].mxu0
        %730 = vdwg.mxu0
        %v731 = vld [vmem:[%s5] sm:$0xff]
        %v732 = vld [vmem:[%s5 + $0x8] sm:$0xff]
        %v733 = vld [vmem:[%s5 + $0x10] sm:$0xff]
        %v734 = vld [vmem:[%s5 + $0x18] sm:$0xff]
        %v735 = vld [vmem:[%s5 + $0x20] sm:$0xff]
        %v736 = vld [vmem:[%s5 + $0x28] sm:$0xff]
        %v737 = vld [vmem:[%s5 + $0x30] sm:$0xff]
        %v738 = vld [vmem:[%s5 + $0x38] sm:$0xff]
        %v739 = vld [vmem:[%s5 + $0x40] sm:$0xff]
        %v740 = vld [vmem:[%s5 + $0x48] sm:$0xff]
        %v741 = vld [vmem:[%s5 + $0x50] sm:$0xff]
        %v742 = vld [vmem:[%s5 + $0x58] sm:$0xff]
        %v743 = vld [vmem:[%s5 + $0x60] sm:$0xff]
        %v744 = vld [vmem:[%s5 + $0x68] sm:$0xff]
        %v745 = vld [vmem:[%s5 + $0x70] sm:$0xff]
        %v746 = vld [vmem:[%s5 + $0x78] sm:$0xff]
        %v747 = vld [vmem:[%s6] sm:$0x1]
        %v749 = vlaneseq
        %v750 = vshrl.u32 %v749, 7
        %v751 = vsub.s32 0, %v750
        %v752 = vrot.slane %v747, %v751
        %754 = vmatprep.subr.mxu0 0.0
        %755 = vmatpush1.msra.mxu0 %v731
        %756 = vmatprep.subr.mxu0 0.0
        %757 = vmatpush1.msra.mxu0 %v732
        %758 = vmatprep.subr.mxu0 0.0
        %759 = vmatpush1.msra.mxu0 %v733
        %760 = vmatprep.subr.mxu0 0.0
        %761 = vmatpush1.msra.mxu0 %v734
        %762 = vmatprep.subr.mxu0 0.0
        %763 = vmatpush1.msra.mxu0 %v735
        %764 = vmatprep.subr.mxu0 0.0
        %765 = vmatpush1.msra.mxu0 %v736
        %766 = vmatprep.subr.mxu0 0.0
        %767 = vmatpush1.msra.mxu0 %v737
        %768 = vmatprep.subr.mxu0 0.0
        %769 = vmatpush1.msra.mxu0 %v738
        %770 = vmatprep.subr.mxu0 0.0
        %771 = vmatpush1.msra.mxu0 %v739
        %772 = vmatprep.subr.mxu0 0.0
        %773 = vmatpush1.msra.mxu0 %v740
        %774 = vmatprep.subr.mxu0 0.0
        %775 = vmatpush1.msra.mxu0 %v741
        %776 = vmatprep.subr.mxu0 0.0
        %777 = vmatpush1.msra.mxu0 %v742
        %778 = vmatprep.subr.mxu0 0.0
        %779 = vmatpush1.msra.mxu0 %v743
        %780 = vmatprep.subr.mxu0 0.0
        %781 = vmatpush1.msra.mxu0 %v744
        %782 = vmatprep.subr.mxu0 0.0
        %783 = vmatpush1.msra.mxu0 %v745
        %784 = vmatprep.subr.mxu0 0.0
        %785 = vmatpush1.msra.mxu0 %v746
        %786 = vmatprep.subr.mxu0 0.0
        %787 = vmatpush1.msra.mxu0 0.0
        %788 = vmatprep.subr.mxu0 0.0
        %789 = vmatpush1.msra.mxu0 0.0
        %790 = vmatprep.subr.mxu0 0.0
        %791 = vmatpush1.msra.mxu0 0.0
        %792 = vmatprep.subr.mxu0 0.0
        %793 = vmatpush1.msra.mxu0 0.0
        %794 = vmatprep.subr.mxu0 0.0
        %795 = vmatpush1.msra.mxu0 0.0
        %796 = vmatprep.subr.mxu0 0.0
        %797 = vmatpush1.msra.mxu0 0.0
        %798 = vmatprep.subr.mxu0 0.0
        %799 = vmatpush1.msra.mxu0 0.0
        %800 = vmatprep.subr.mxu0 0.0
        %801 = vmatpush1.msra.mxu0 0.0
        %802 = vmatprep.subr.mxu0 0.0
        %803 = vmatpush1.msra.mxu0 0.0
        %804 = vmatprep.subr.mxu0 0.0
        %805 = vmatpush1.msra.mxu0 0.0
        %806 = vmatprep.subr.mxu0 0.0
        %807 = vmatpush1.msra.mxu0 0.0
        %808 = vmatprep.subr.mxu0 0.0
        %809 = vmatpush1.msra.mxu0 0.0
        %810 = vmatprep.subr.mxu0 0.0
        %811 = vmatpush1.msra.mxu0 0.0
        %812 = vmatprep.subr.mxu0 0.0
        %813 = vmatpush1.msra.mxu0 0.0
        %814 = vmatprep.subr.mxu0 0.0
        %815 = vmatpush1.msra.mxu0 0.0
        %816 = vmatprep.subr.mxu0 0.0
        %817 = vmatpush1.msra.mxu0 0.0
        %818 = vmatprep.mubr.f32.mxu0 0.0
        %819 = vmatmul.mubr.f32.gmra.mrb[0].mxu0 %v544
        %v820 = vpop.f32.mrb[0].mxu0
        %v821 = vadd.f32 %v752, %v820
        %v822 = vpop.f32.mrb[0].mxu0
        %823 = vdwg.mxu0
        %vm824 = vcmask 261120
        %v826 = vsel %vm824, %v635, 0
        %v829 = vsel %vm824, %v728, 0
        %831 = vmatprep.subr.mxu0 0.0
        %832 = vmatpush1.xpose.msra.mxu0 %v829
        %833 = vmatprep.subr.mxu0 0.0
        %834 = vmatpush1.xpose.msra.mxu0 0.0
        %835 = vmatprep.subr.mxu0 0.0
        %836 = vmatpush1.xpose.msra.mxu0 0.0
        %837 = vmatprep.subr.mxu0 0.0
        %838 = vmatpush1.xpose.msra.mxu0 0.0
        %839 = vmatprep.subr.mxu0 0.0
        %840 = vmatpush1.xpose.msra.mxu0 0.0
        %841 = vmatprep.subr.mxu0 0.0
        %842 = vmatpush1.xpose.msra.mxu0 0.0
        %843 = vmatprep.subr.mxu0 0.0
        %844 = vmatpush1.xpose.msra.mxu0 0.0
        %845 = vmatprep.subr.mxu0 0.0
        %846 = vmatpush1.xpose.msra.mxu0 0.0
        %847 = vmatprep.subr.mxu0 0.0
        %848 = vmatpush1.xpose.msra.mxu0 0.0
        %849 = vmatprep.subr.mxu0 0.0
        %850 = vmatpush1.xpose.msra.mxu0 0.0
        %851 = vmatprep.subr.mxu0 0.0
        %852 = vmatpush1.xpose.msra.mxu0 0.0
        %853 = vmatprep.subr.mxu0 0.0
        %854 = vmatpush1.xpose.msra.mxu0 0.0
        %855 = vmatprep.subr.mxu0 0.0
        %856 = vmatpush1.xpose.msra.mxu0 0.0
        %857 = vmatprep.subr.mxu0 0.0
        %858 = vmatpush1.xpose.msra.mxu0 0.0
        %859 = vmatprep.subr.mxu0 0.0
        %860 = vmatpush1.xpose.msra.mxu0 0.0
        %861 = vmatprep.subr.mxu0 0.0
        %862 = vmatpush1.xpose.msra.mxu0 0.0
        %863 = vmatprep.subr.mxu0 0.0
        %864 = vmatpush1.xpose.msra.mxu0 0.0
        %865 = vmatprep.subr.mxu0 0.0
        %866 = vmatpush1.xpose.msra.mxu0 0.0
        %867 = vmatprep.subr.mxu0 0.0
        %868 = vmatpush1.xpose.msra.mxu0 0.0
        %869 = vmatprep.subr.mxu0 0.0
        %870 = vmatpush1.xpose.msra.mxu0 0.0
        %871 = vmatprep.subr.mxu0 0.0
        %872 = vmatpush1.xpose.msra.mxu0 0.0
        %873 = vmatprep.subr.mxu0 0.0
        %874 = vmatpush1.xpose.msra.mxu0 0.0
        %875 = vmatprep.subr.mxu0 0.0
        %876 = vmatpush1.xpose.msra.mxu0 0.0
        %877 = vmatprep.subr.mxu0 0.0
        %878 = vmatpush1.xpose.msra.mxu0 0.0
        %879 = vmatprep.subr.mxu0 0.0
        %880 = vmatpush1.xpose.msra.mxu0 0.0
        %881 = vmatprep.subr.mxu0 0.0
        %882 = vmatpush1.xpose.msra.mxu0 0.0
        %883 = vmatprep.subr.mxu0 0.0
        %884 = vmatpush1.xpose.msra.mxu0 0.0
        %885 = vmatprep.subr.mxu0 0.0
        %886 = vmatpush1.xpose.msra.mxu0 0.0
        %887 = vmatprep.subr.mxu0 0.0
        %888 = vmatpush1.xpose.msra.mxu0 0.0
        %889 = vmatprep.subr.mxu0 0.0
        %890 = vmatpush1.xpose.msra.mxu0 0.0
        %891 = vmatprep.subr.mxu0 0.0
        %892 = vmatpush1.xpose.msra.mxu0 0.0
        %893 = vmatprep.subr.mxu0 0.0
        %894 = vmatpush1.xpose.msra.mxu0 0.0
        %895 = vmatprep.mubr.f32.mxu0 0.0
        %896 = vmatmul.mubr.f32.gmra.mrb[0].mxu0 %v826
        %v897 = vpop.f32.mrb[0].mxu0
        %v898 = vadd.f32 0.0, %v897
        %v899 = vpop.f32.mrb[0].mxu0
        %900 = vdwg.mxu0
        %v901 = vmul.f32 %v898, 0.17677669
        %vm902 = vcmask 64512
        %v903 = vsel %vm902, %v901, -inf
        %904 = vmax.xlane.f32.xlu0 %v903
        %v905 = vpop.xlane.xlu0 %904
        %v906 = vsub.f32 %v901, %v905
        %v907 = vmul.f32 %v906, 1.442695
        %v908 = vpow.pop %v907
        %v909 = vsel %vm902, %v908, 0.0
        %910 = vadd.xlane.f32.xlu0 %v909
        %v911 = vpop.xlane.xlu0 %910
        %v912 = vrcp.pop %v911
        %v913 = vmul.f32 %v908, %v912
        %v915 = vsel %vm902, %v913, 0
        %917 = vmatprep.subr.mxu0 0.0
        %918 = vmatpush1.msra.mxu0 %v821
        %919 = vmatprep.subr.mxu0 0.0
        %920 = vmatpush1.msra.mxu0 0.0
        %921 = vmatprep.subr.mxu0 0.0
        %922 = vmatpush1.msra.mxu0 0.0
        %923 = vmatprep.subr.mxu0 0.0
        %924 = vmatpush1.msra.mxu0 0.0
        %925 = vmatprep.subr.mxu0 0.0
        %926 = vmatpush1.msra.mxu0 0.0
        %927 = vmatprep.subr.mxu0 0.0
        %928 = vmatpush1.msra.mxu0 0.0
        %929 = vmatprep.subr.mxu0 0.0
        %930 = vmatpush1.msra.mxu0 0.0
        %931 = vmatprep.subr.mxu0 0.0
        %932 = vmatpush1.msra.mxu0 0.0
        %933 = vmatprep.subr.mxu0 0.0
        %934 = vmatpush1.msra.mxu0 0.0
        %935 = vmatprep.subr.mxu0 0.0
        %936 = vmatpush1.msra.mxu0 0.0
        %937 = vmatprep.subr.mxu0 0.0
        %938 = vmatpush1.msra.mxu0 0.0
        %939 = vmatprep.subr.mxu0 0.0
        %940 = vmatpush1.msra.mxu0 0.0
        %941 = vmatprep.subr.mxu0 0.0
        %942 = vmatpush1.msra.mxu0 0.0
        %943 = vmatprep.subr.mxu0 0.0
        %944 = vmatpush1.msra.mxu0 0.0
        %945 = vmatprep.subr.mxu0 0.0
        %946 = vmatpush1.msra.mxu0 0.0
        %947 = vmatprep.subr.mxu0 0.0
        %948 = vmatpush1.msra.mxu0 0.0
        %949 = vmatprep.subr.mxu0 0.0
        %950 = vmatpush1.msra.mxu0 0.0
        %951 = vmatprep.subr.mxu0 0.0
        %952 = vmatpush1.msra.mxu0 0.0
        %953 = vmatprep.subr.mxu0 0.0
        %954 = vmatpush1.msra.mxu0 0.0
        %955 = vmatprep.subr.mxu0 0.0
        %956 = vmatpush1.msra.mxu0 0.0
        %957 = vmatprep.subr.mxu0 0.0
        %958 = vmatpush1.msra.mxu0 0.0
        %959 = vmatprep.subr.mxu0 0.0
        %960 = vmatpush1.msra.mxu0 0.0
        %961 = vmatprep.subr.mxu0 0.0
        %962 = vmatpush1.msra.mxu0 0.0
        %963 = vmatprep.subr.mxu0 0.0
        %964 = vmatpush1.msra.mxu0 0.0
        %965 = vmatprep.subr.mxu0 0.0
        %966 = vmatpush1.msra.mxu0 0.0
        %967 = vmatprep.subr.mxu0 0.0
        %968 = vmatpush1.msra.mxu0 0.0
        %969 = vmatprep.subr.mxu0 0.0
        %970 = vmatpush1.msra.mxu0 0.0
        %971 = vmatprep.subr.mxu0 0.0
        %972 = vmatpush1.msra.mxu0 0.0
        %973 = vmatprep.subr.mxu0 0.0
        %974 = vmatpush1.msra.mxu0 0.0
        %975 = vmatprep.subr.mxu0 0.0
        %976 = vmatpush1.msra.mxu0 0.0
        %977 = vmatprep.subr.mxu0 0.0
        %978 = vmatpush1.msra.mxu0 0.0
        %979 = vmatprep.subr.mxu0 0.0
        %980 = vmatpush1.msra.mxu0 0.0
        %981 = vmatprep.mubr.f32.mxu0 0.0
        %982 = vmatmul.mubr.f32.gmra.mrb[0].mxu0 %v915
        %v983 = vpop.f32.mrb[0].mxu0
        %v984 = vadd.f32 0.0, %v983
        %v985 = vpop.f32.mrb[0].mxu0
        %986 = vdwg.mxu0
        %v987 = vld [vmem:[%s7] sm:$0xff]
        %v988 = vld [vmem:[%s7 + $0x8] sm:$0xff]
        %v989 = vld [vmem:[%s7 + $0x10] sm:$0xff]
        %v990 = vld [vmem:[%s7 + $0x18] sm:$0xff]
        %s991 = scalar_lea.vmem %s1, 128
        %v992 = vld [vmem:[%s991] sm:$0xff]
        %v993 = vld [vmem:[%s991 + $0x8] sm:$0xff]
        %v994 = vld [vmem:[%s991 + $0x10] sm:$0xff]
        %v995 = vld [vmem:[%s991 + $0x18] sm:$0xff]
        %v996 = vld [vmem:[%s991 + $0x20] sm:$0xff]
        %v997 = vld [vmem:[%s991 + $0x28] sm:$0xff]
        %v998 = vld [vmem:[%s991 + $0x30] sm:$0xff]
        %v999 = vld [vmem:[%s991 + $0x38] sm:$0xff]
        %v1000 = vld [vmem:[%s991 + $0x40] sm:$0xff]
        %v1001 = vld [vmem:[%s991 + $0x48] sm:$0xff]
        %v1002 = vld [vmem:[%s991 + $0x50] sm:$0xff]
        %v1003 = vld [vmem:[%s991 + $0x58] sm:$0xff]
        %v1004 = vld [vmem:[%s991 + $0x60] sm:$0xff]
        %v1005 = vld [vmem:[%s991 + $0x68] sm:$0xff]
        %v1006 = vld [vmem:[%s991 + $0x70] sm:$0xff]
        %v1007 = vld [vmem:[%s991 + $0x78] sm:$0xff]
        %s1008 = scalar_lea.vmem %s2, 1
        %v1009 = vld [vmem:[%s1008] sm:$0x1]
        %v1011 = vlaneseq
        %v1012 = vshrl.u32 %v1011, 7
        %v1013 = vsub.s32 0, %v1012
        %v1014 = vrot.slane %v1009, %v1013
        %1016 = vmatprep.subr.mxu0 0.0
        %1017 = vmatpush1.msra.mxu0 %v992
        %1018 = vmatprep.subr.mxu0 0.0
        %1019 = vmatpush1.msra.mxu0 %v993
        %1020 = vmatprep.subr.mxu0 0.0
        %1021 = vmatpush1.msra.mxu0 %v994
        %1022 = vmatprep.subr.mxu0 0.0
        %1023 = vmatpush1.msra.mxu0 %v995
        %1024 = vmatprep.subr.mxu0 0.0
        %1025 = vmatpush1.msra.mxu0 %v996
        %1026 = vmatprep.subr.mxu0 0.0
        %1027 = vmatpush1.msra.mxu0 %v997
        %1028 = vmatprep.subr.mxu0 0.0
        %1029 = vmatpush1.msra.mxu0 %v998
        %1030 = vmatprep.subr.mxu0 0.0
        %1031 = vmatpush1.msra.mxu0 %v999
        %1032 = vmatprep.subr.mxu0 0.0
        %1033 = vmatpush1.msra.mxu0 %v1000
        %1034 = vmatprep.subr.mxu0 0.0
        %1035 = vmatpush1.msra.mxu0 %v1001
        %1036 = vmatprep.subr.mxu0 0.0
        %1037 = vmatpush1.msra.mxu0 %v1002
        %1038 = vmatprep.subr.mxu0 0.0
        %1039 = vmatpush1.msra.mxu0 %v1003
        %1040 = vmatprep.subr.mxu0 0.0
        %1041 = vmatpush1.msra.mxu0 %v1004
        %1042 = vmatprep.subr.mxu0 0.0
        %1043 = vmatpush1.msra.mxu0 %v1005
        %1044 = vmatprep.subr.mxu0 0.0
        %1045 = vmatpush1.msra.mxu0 %v1006
        %1046 = vmatprep.subr.mxu0 0.0
        %1047 = vmatpush1.msra.mxu0 %v1007
        %1048 = vmatprep.subr.mxu0 0.0
        %1049 = vmatpush1.msra.mxu0 0.0
        %1050 = vmatprep.subr.mxu0 0.0
        %1051 = vmatpush1.msra.mxu0 0.0
        %1052 = vmatprep.subr.mxu0 0.0
        %1053 = vmatpush1.msra.mxu0 0.0
        %1054 = vmatprep.subr.mxu0 0.0
        %1055 = vmatpush1.msra.mxu0 0.0
        %1056 = vmatprep.subr.mxu0 0.0
        %1057 = vmatpush1.msra.mxu0 0.0
        %1058 = vmatprep.subr.mxu0 0.0
        %1059 = vmatpush1.msra.mxu0 0.0
        %1060 = vmatprep.subr.mxu0 0.0
        %1061 = vmatpush1.msra.mxu0 0.0
        %1062 = vmatprep.subr.mxu0 0.0
        %1063 = vmatpush1.msra.mxu0 0.0
        %1064 = vmatprep.subr.mxu0 0.0
        %1065 = vmatpush1.msra.mxu0 0.0
        %1066 = vmatprep.subr.mxu0 0.0
        %1067 = vmatpush1.msra.mxu0 0.0
        %1068 = vmatprep.subr.mxu0 0.0
        %1069 = vmatpush1.msra.mxu0 0.0
        %1070 = vmatprep.subr.mxu0 0.0
        %1071 = vmatpush1.msra.mxu0 0.0
        %1072 = vmatprep.subr.mxu0 0.0
        %1073 = vmatpush1.msra.mxu0 0.0
        %1074 = vmatprep.subr.mxu0 0.0
        %1075 = vmatpush1.msra.mxu0 0.0
        %1076 = vmatprep.subr.mxu0 0.0
        %1077 = vmatpush1.msra.mxu0 0.0
        %1078 = vmatprep.subr.mxu0 0.0
        %1079 = vmatpush1.msra.mxu0 0.0
        %1080 = vmatprep.mubr.f32.mxu0 0.0
        %1081 = vmatmul.mubr.f32.gmra.mrb[0].mxu0 %v544
        %v1082 = vpop.f32.mrb[0].mxu0
        %v1083 = vadd.f32 %v1014, %v1082
        %v1084 = vpop.f32.mrb[0].mxu0
        %1085 = vdwg.mxu0
        %s1086 = scalar_lea.vmem %s3, 128
        %v1087 = vld [vmem:[%s1086] sm:$0xff]
        %v1088 = vld [vmem:[%s1086 + $0x8] sm:$0xff]
        %v1089 = vld [vmem:[%s1086 + $0x10] sm:$0xff]
        %v1090 = vld [vmem:[%s1086 + $0x18] sm:$0xff]
        %v1091 = vld [vmem:[%s1086 + $0x20] sm:$0xff]
        %v1092 = vld [vmem:[%s1086 + $0x28] sm:$0xff]
        %v1093 = vld [vmem:[%s1086 + $0x30] sm:$0xff]
        %v1094 = vld [vmem:[%s1086 + $0x38] sm:$0xff]
        %v1095 = vld [vmem:[%s1086 + $0x40] sm:$0xff]
        %v1096 = vld [vmem:[%s1086 + $0x48] sm:$0xff]
        %v1097 = vld [vmem:[%s1086 + $0x50] sm:$0xff]
        %v1098 = vld [vmem:[%s1086 + $0x58] sm:$0xff]
        %v1099 = vld [vmem:[%s1086 + $0x60] sm:$0xff]
        %v1100 = vld [vmem:[%s1086 + $0x68] sm:$0xff]
        %v1101 = vld [vmem:[%s1086 + $0x70] sm:$0xff]
        %v1102 = vld [vmem:[%s1086 + $0x78] sm:$0xff]
        %s1103 = scalar_lea.vmem %s4, 1
        %v1104 = vld [vmem:[%s1103] sm:$0x1]
        %v1106 = vlaneseq
        %v1107 = vshrl.u32 %v1106, 7
        %v1108 = vsub.s32 0, %v1107
        %v1109 = vrot.slane %v1104, %v1108
        %1111 = vmatprep.subr.mxu0 0.0
        %1112 = vmatpush1.msra.mxu0 %v1087
        %1113 = vmatprep.subr.mxu0 0.0
        %1114 = vmatpush1.msra.mxu0 %v1088
        %1115 = vmatprep.subr.mxu0 0.0
        %1116 = vmatpush1.msra.mxu0 %v1089
        %1117 = vmatprep.subr.mxu0 0.0
        %1118 = vmatpush1.msra.mxu0 %v1090
        %1119 = vmatprep.subr.mxu0 0.0
        %1120 = vmatpush1.msra.mxu0 %v1091
        %1121 = vmatprep.subr.mxu0 0.0
        %1122 = vmatpush1.msra.mxu0 %v1092
        %1123 = vmatprep.subr.mxu0 0.0
        %1124 = vmatpush1.msra.mxu0 %v1093
        %1125 = vmatprep.subr.mxu0 0.0
        %1126 = vmatpush1.msra.mxu0 %v1094
        %1127 = vmatprep.subr.mxu0 0.0
        %1128 = vmatpush1.msra.mxu0 %v1095
        %1129 = vmatprep.subr.mxu0 0.0
        %1130 = vmatpush1.msra.mxu0 %v1096
        %1131 = vmatprep.subr.mxu0 0.0
        %1132 = vmatpush1.msra.mxu0 %v1097
        %1133 = vmatprep.subr.mxu0 0.0
        %1134 = vmatpush1.msra.mxu0 %v1098
        %1135 = vmatprep.subr.mxu0 0.0
        %1136 = vmatpush1.msra.mxu0 %v1099
        %1137 = vmatprep.subr.mxu0 0.0
        %1138 = vmatpush1.msra.mxu0 %v1100
        %1139 = vmatprep.subr.mxu0 0.0
        %1140 = vmatpush1.msra.mxu0 %v1101
        %1141 = vmatprep.subr.mxu0 0.0
        %1142 = vmatpush1.msra.mxu0 %v1102
        %1143 = vmatprep.subr.mxu0 0.0
        %1144 = vmatpush1.msra.mxu0 0.0
        %1145 = vmatprep.subr.mxu0 0.0
        %1146 = vmatpush1.msra.mxu0 0.0
        %1147 = vmatprep.subr.mxu0 0.0
        %1148 = vmatpush1.msra.mxu0 0.0
        %1149 = vmatprep.subr.mxu0 0.0
        %1150 = vmatpush1.msra.mxu0 0.0
        %1151 = vmatprep.subr.mxu0 0.0
        %1152 = vmatpush1.msra.mxu0 0.0
        %1153 = vmatprep.subr.mxu0 0.0
        %1154 = vmatpush1.msra.mxu0 0.0
        %1155 = vmatprep.subr.mxu0 0.0
        %1156 = vmatpush1.msra.mxu0 0.0
        %1157 = vmatprep.subr.mxu0 0.0
        %1158 = vmatpush1.msra.mxu0 0.0
        %1159 = vmatprep.subr.mxu0 0.0
        %1160 = vmatpush1.msra.mxu0 0.0
        %1161 = vmatprep.subr.mxu0 0.0
        %1162 = vmatpush1.msra.mxu0 0.0
        %1163 = vmatprep.subr.mxu0 0.0
        %1164 = vmatpush1.msra.mxu0 0.0
        %1165 = vmatprep.subr.mxu0 0.0
        %1166 = vmatpush1.msra.mxu0 0.0
        %1167 = vmatprep.subr.mxu0 0.0
        %1168 = vmatpush1.msra.mxu0 0.0
        %1169 = vmatprep.subr.mxu0 0.0
        %1170 = vmatpush1.msra.mxu0 0.0
        %1171 = vmatprep.subr.mxu0 0.0
        %1172 = vmatpush1.msra.mxu0 0.0
        %1173 = vmatprep.subr.mxu0 0.0
        %1174 = vmatpush1.msra.mxu0 0.0
        %1175 = vmatprep.mubr.f32.mxu0 0.0
        %1176 = vmatmul.mubr.f32.gmra.mrb[0].mxu0 %v544
        %v1177 = vpop.f32.mrb[0].mxu0
        %v1178 = vadd.f32 %v1109, %v1177
        %v1179 = vpop.f32.mrb[0].mxu0
        %1180 = vdwg.mxu0
        %s1181 = scalar_lea.vmem %s5, 128
        %v1182 = vld [vmem:[%s1181] sm:$0xff]
        %v1183 = vld [vmem:[%s1181 + $0x8] sm:$0xff]
        %v1184 = vld [vmem:[%s1181 + $0x10] sm:$0xff]
        %v1185 = vld [vmem:[%s1181 + $0x18] sm:$0xff]
        %v1186 = vld [vmem:[%s1181 + $0x20] sm:$0xff]
        %v1187 = vld [vmem:[%s1181 + $0x28] sm:$0xff]
        %v1188 = vld [vmem:[%s1181 + $0x30] sm:$0xff]
        %v1189 = vld [vmem:[%s1181 + $0x38] sm:$0xff]
        %v1190 = vld [vmem:[%s1181 + $0x40] sm:$0xff]
        %v1191 = vld [vmem:[%s1181 + $0x48] sm:$0xff]
        %v1192 = vld [vmem:[%s1181 + $0x50] sm:$0xff]
        %v1193 = vld [vmem:[%s1181 + $0x58] sm:$0xff]
        %v1194 = vld [vmem:[%s1181 + $0x60] sm:$0xff]
        %v1195 = vld [vmem:[%s1181 + $0x68] sm:$0xff]
        %v1196 = vld [vmem:[%s1181 + $0x70] sm:$0xff]
        %v1197 = vld [vmem:[%s1181 + $0x78] sm:$0xff]
        %s1198 = scalar_lea.vmem %s6, 1
        %v1199 = vld [vmem:[%s1198] sm:$0x1]
        %v1201 = vlaneseq
        %v1202 = vshrl.u32 %v1201, 7
        %v1203 = vsub.s32 0, %v1202
        %v1204 = vrot.slane %v1199, %v1203
        %1206 = vmatprep.subr.mxu0 0.0
        %1207 = vmatpush1.msra.mxu0 %v1182
        %1208 = vmatprep.subr.mxu0 0.0
        %1209 = vmatpush1.msra.mxu0 %v1183
        %1210 = vmatprep.subr.mxu0 0.0
        %1211 = vmatpush1.msra.mxu0 %v1184
        %1212 = vmatprep.subr.mxu0 0.0
        %1213 = vmatpush1.msra.mxu0 %v1185
        %1214 = vmatprep.subr.mxu0 0.0
        %1215 = vmatpush1.msra.mxu0 %v1186
        %1216 = vmatprep.subr.mxu0 0.0
        %1217 = vmatpush1.msra.mxu0 %v1187
        %1218 = vmatprep.subr.mxu0 0.0
        %1219 = vmatpush1.msra.mxu0 %v1188
        %1220 = vmatprep.subr.mxu0 0.0
        %1221 = vmatpush1.msra.mxu0 %v1189
        %1222 = vmatprep.subr.mxu0 0.0
        %1223 = vmatpush1.msra.mxu0 %v1190
        %1224 = vmatprep.subr.mxu0 0.0
        %1225 = vmatpush1.msra.mxu0 %v1191
        %1226 = vmatprep.subr.mxu0 0.0
        %1227 = vmatpush1.msra.mxu0 %v1192
        %1228 = vmatprep.subr.mxu0 0.0
        %1229 = vmatpush1.msra.mxu0 %v1193
        %1230 = vmatprep.subr.mxu0 0.0
        %1231 = vmatpush1.msra.mxu0 %v1194
        %1232 = vmatprep.subr.mxu0 0.0
        %1233 = vmatpush1.msra.mxu0 %v1195
        %1234 = vmatprep.subr.mxu0 0.0
        %1235 = vmatpush1.msra.mxu0 %v1196
        %1236 = vmatprep.subr.mxu0 0.0
        %1237 = vmatpush1.msra.mxu0 %v1197
        %1238 = vmatprep.subr.mxu0 0.0
        %1239 = vmatpush1.msra.mxu0 0.0
        %1240 = vmatprep.subr.mxu0 0.0
        %1241 = vmatpush1.msra.mxu0 0.0
        %1242 = vmatprep.subr.mxu0 0.0
        %1243 = vmatpush1.msra.mxu0 0.0
        %1244 = vmatprep.subr.mxu0 0.0
        %1245 = vmatpush1.msra.mxu0 0.0
        %1246 = vmatprep.subr.mxu0 0.0
        %1247 = vmatpush1.msra.mxu0 0.0
        %1248 = vmatprep.subr.mxu0 0.0
        %1249 = vmatpush1.msra.mxu0 0.0
        %1250 = vmatprep.subr.mxu0 0.0
        %1251 = vmatpush1.msra.mxu0 0.0
        %1252 = vmatprep.subr.mxu0 0.0
        %1253 = vmatpush1.msra.mxu0 0.0
        %1254 = vmatprep.subr.mxu0 0.0
        %1255 = vmatpush1.msra.mxu0 0.0
        %1256 = vmatprep.subr.mxu0 0.0
        %1257 = vmatpush1.msra.mxu0 0.0
        %1258 = vmatprep.subr.mxu0 0.0
        %1259 = vmatpush1.msra.mxu0 0.0
        %1260 = vmatprep.subr.mxu0 0.0
        %1261 = vmatpush1.msra.mxu0 0.0
        %1262 = vmatprep.subr.mxu0 0.0
        %1263 = vmatpush1.msra.mxu0 0.0
        %1264 = vmatprep.subr.mxu0 0.0
        %1265 = vmatpush1.msra.mxu0 0.0
        %1266 = vmatprep.subr.mxu0 0.0
        %1267 = vmatpush1.msra.mxu0 0.0
        %1268 = vmatprep.subr.mxu0 0.0
        %1269 = vmatpush1.msra.mxu0 0.0
        %1270 = vmatprep.mubr.f32.mxu0 0.0
        %1271 = vmatmul.mubr.f32.gmra.mrb[0].mxu0 %v544
        %v1272 = vpop.f32.mrb[0].mxu0
        %v1273 = vadd.f32 %v1204, %v1272
        %v1274 = vpop.f32.mrb[0].mxu0
        %1275 = vdwg.mxu0
        %v1277 = vsel %vm824, %v1083, 0
        %v1280 = vsel %vm824, %v1178, 0
        %1282 = vmatprep.subr.mxu0 0.0
        %1283 = vmatpush1.xpose.msra.mxu0 %v1280
        %1284 = vmatprep.subr.mxu0 0.0
        %1285 = vmatpush1.xpose.msra.mxu0 0.0
        %1286 = vmatprep.subr.mxu0 0.0
        %1287 = vmatpush1.xpose.msra.mxu0 0.0
        %1288 = vmatprep.subr.mxu0 0.0
        %1289 = vmatpush1.xpose.msra.mxu0 0.0
        %1290 = vmatprep.subr.mxu0 0.0
        %1291 = vmatpush1.xpose.msra.mxu0 0.0
        %1292 = vmatprep.subr.mxu0 0.0
        %1293 = vmatpush1.xpose.msra.mxu0 0.0
        %1294 = vmatprep.subr.mxu0 0.0
        %1295 = vmatpush1.xpose.msra.mxu0 0.0
        %1296 = vmatprep.subr.mxu0 0.0
        %1297 = vmatpush1.xpose.msra.mxu0 0.0
        %1298 = vmatprep.subr.mxu0 0.0
        %1299 = vmatpush1.xpose.msra.mxu0 0.0
        %1300 = vmatprep.subr.mxu0 0.0
        %1301 = vmatpush1.xpose.msra.mxu0 0.0
        %1302 = vmatprep.subr.mxu0 0.0
        %1303 = vmatpush1.xpose.msra.mxu0 0.0
        %1304 = vmatprep.subr.mxu0 0.0
        %1305 = vmatpush1.xpose.msra.mxu0 0.0
        %1306 = vmatprep.subr.mxu0 0.0
        %1307 = vmatpush1.xpose.msra.mxu0 0.0
        %1308 = vmatprep.subr.mxu0 0.0
        %1309 = vmatpush1.xpose.msra.mxu0 0.0
        %1310 = vmatprep.subr.mxu0 0.0
        %1311 = vmatpush1.xpose.msra.mxu0 0.0
        %1312 = vmatprep.subr.mxu0 0.0
        %1313 = vmatpush1.xpose.msra.mxu0 0.0
        %1314 = vmatprep.subr.mxu0 0.0
        %1315 = vmatpush1.xpose.msra.mxu0 0.0
        %1316 = vmatprep.subr.mxu0 0.0
        %1317 = vmatpush1.xpose.msra.mxu0 0.0
        %1318 = vmatprep.subr.mxu0 0.0
        %1319 = vmatpush1.xpose.msra.mxu0 0.0
        %1320 = vmatprep.subr.mxu0 0.0
        %1321 = vmatpush1.xpose.msra.mxu0 0.0
        %1322 = vmatprep.subr.mxu0 0.0
        %1323 = vmatpush1.xpose.msra.mxu0 0.0
        %1324 = vmatprep.subr.mxu0 0.0
        %1325 = vmatpush1.xpose.msra.mxu0 0.0
        %1326 = vmatprep.subr.mxu0 0.0
        %1327 = vmatpush1.xpose.msra.mxu0 0.0
        %1328 = vmatprep.subr.mxu0 0.0
        %1329 = vmatpush1.xpose.msra.mxu0 0.0
        %1330 = vmatprep.subr.mxu0 0.0
        %1331 = vmatpush1.xpose.msra.mxu0 0.0
        %1332 = vmatprep.subr.mxu0 0.0
        %1333 = vmatpush1.xpose.msra.mxu0 0.0
        %1334 = vmatprep.subr.mxu0 0.0
        %1335 = vmatpush1.xpose.msra.mxu0 0.0
        %1336 = vmatprep.subr.mxu0 0.0
        %1337 = vmatpush1.xpose.msra.mxu0 0.0
        %1338 = vmatprep.subr.mxu0 0.0
        %1339 = vmatpush1.xpose.msra.mxu0 0.0
        %1340 = vmatprep.subr.mxu0 0.0
        %1341 = vmatpush1.xpose.msra.mxu0 0.0
        %1342 = vmatprep.subr.mxu0 0.0
        %1343 = vmatpush1.xpose.msra.mxu0 0.0
        %1344 = vmatprep.subr.mxu0 0.0
        %1345 = vmatpush1.xpose.msra.mxu0 0.0
        %1346 = vmatprep.mubr.f32.mxu0 0.0
        %1347 = vmatmul.mubr.f32.gmra.mrb[0].mxu0 %v1277
        %v1348 = vpop.f32.mrb[0].mxu0
        %v1349 = vadd.f32 0.0, %v1348
        %v1350 = vpop.f32.mrb[0].mxu0
        %1351 = vdwg.mxu0
        %v1352 = vmul.f32 %v1349, 0.17677669
        %v1353 = vsel %vm902, %v1352, -inf
        %1354 = vmax.xlane.f32.xlu0 %v1353
        %v1355 = vpop.xlane.xlu0 %1354
        %v1356 = vsub.f32 %v1352, %v1355
        %v1357 = vmul.f32 %v1356, 1.442695
        %v1358 = vpow.pop %v1357
        %v1359 = vsel %vm902, %v1358, 0.0
        %1360 = vadd.xlane.f32.xlu0 %v1359
        %v1361 = vpop.xlane.xlu0 %1360
        %v1362 = vrcp.pop %v1361
        %v1363 = vmul.f32 %v1358, %v1362
        %v1365 = vsel %vm902, %v1363, 0
        %1367 = vmatprep.subr.mxu0 0.0
        %1368 = vmatpush1.msra.mxu0 %v1273
        %1369 = vmatprep.subr.mxu0 0.0
        %1370 = vmatpush1.msra.mxu0 0.0
        %1371 = vmatprep.subr.mxu0 0.0
        %1372 = vmatpush1.msra.mxu0 0.0
        %1373 = vmatprep.subr.mxu0 0.0
        %1374 = vmatpush1.msra.mxu0 0.0
        %1375 = vmatprep.subr.mxu0 0.0
        %1376 = vmatpush1.msra.mxu0 0.0
        %1377 = vmatprep.subr.mxu0 0.0
        %1378 = vmatpush1.msra.mxu0 0.0
        %1379 = vmatprep.subr.mxu0 0.0
        %1380 = vmatpush1.msra.mxu0 0.0
        %1381 = vmatprep.subr.mxu0 0.0
        %1382 = vmatpush1.msra.mxu0 0.0
        %1383 = vmatprep.subr.mxu0 0.0
        %1384 = vmatpush1.msra.mxu0 0.0
        %1385 = vmatprep.subr.mxu0 0.0
        %1386 = vmatpush1.msra.mxu0 0.0
        %1387 = vmatprep.subr.mxu0 0.0
        %1388 = vmatpush1.msra.mxu0 0.0
        %1389 = vmatprep.subr.mxu0 0.0
        %1390 = vmatpush1.msra.mxu0 0.0
        %1391 = vmatprep.subr.mxu0 0.0
        %1392 = vmatpush1.msra.mxu0 0.0
        %1393 = vmatprep.subr.mxu0 0.0
        %1394 = vmatpush1.msra.mxu0 0.0
        %1395 = vmatprep.subr.mxu0 0.0
        %1396 = vmatpush1.msra.mxu0 0.0
        %1397 = vmatprep.subr.mxu0 0.0
        %1398 = vmatpush1.msra.mxu0 0.0
        %1399 = vmatprep.subr.mxu0 0.0
        %1400 = vmatpush1.msra.mxu0 0.0
        %1401 = vmatprep.subr.mxu0 0.0
        %1402 = vmatpush1.msra.mxu0 0.0
        %1403 = vmatprep.subr.mxu0 0.0
        %1404 = vmatpush1.msra.mxu0 0.0
        %1405 = vmatprep.subr.mxu0 0.0
        %1406 = vmatpush1.msra.mxu0 0.0
        %1407 = vmatprep.subr.mxu0 0.0
        %1408 = vmatpush1.msra.mxu0 0.0
        %1409 = vmatprep.subr.mxu0 0.0
        %1410 = vmatpush1.msra.mxu0 0.0
        %1411 = vmatprep.subr.mxu0 0.0
        %1412 = vmatpush1.msra.mxu0 0.0
        %1413 = vmatprep.subr.mxu0 0.0
        %1414 = vmatpush1.msra.mxu0 0.0
        %1415 = vmatprep.subr.mxu0 0.0
        %1416 = vmatpush1.msra.mxu0 0.0
        %1417 = vmatprep.subr.mxu0 0.0
        %1418 = vmatpush1.msra.mxu0 0.0
        %1419 = vmatprep.subr.mxu0 0.0
        %1420 = vmatpush1.msra.mxu0 0.0
        %1421 = vmatprep.subr.mxu0 0.0
        %1422 = vmatpush1.msra.mxu0 0.0
        %1423 = vmatprep.subr.mxu0 0.0
        %1424 = vmatpush1.msra.mxu0 0.0
        %1425 = vmatprep.subr.mxu0 0.0
        %1426 = vmatpush1.msra.mxu0 0.0
        %1427 = vmatprep.subr.mxu0 0.0
        %1428 = vmatpush1.msra.mxu0 0.0
        %1429 = vmatprep.subr.mxu0 0.0
        %1430 = vmatpush1.msra.mxu0 0.0
        %1431 = vmatprep.mubr.f32.mxu0 0.0
        %1432 = vmatmul.mubr.f32.gmra.mrb[0].mxu0 %v1365
        %v1433 = vpop.f32.mrb[0].mxu0
        %v1434 = vadd.f32 0.0, %v1433
        %v1435 = vpop.f32.mrb[0].mxu0
        %1436 = vdwg.mxu0
        %s1437 = scalar_lea.vmem %s7, 32
        %v1438 = vld [vmem:[%s1437] sm:$0xff]
        %v1439 = vld [vmem:[%s1437 + $0x8] sm:$0xff]
        %v1440 = vld [vmem:[%s1437 + $0x10] sm:$0xff]
        %v1441 = vld [vmem:[%s1437 + $0x18] sm:$0xff]
        %v1443 = vsel %vm824, %v1434, 0
        %1445 = vmatprep.subr.mxu0 0.0
        %1446 = vmatpush1.msra.mxu0 %v1438
        %1447 = vmatprep.subr.mxu0 0.0
        %1448 = vmatpush1.msra.mxu0 %v1439
        %1449 = vmatprep.subr.mxu0 0.0
        %1450 = vmatpush1.msra.mxu0 %v1440
        %1451 = vmatprep.subr.mxu0 0.0
        %1452 = vmatpush1.msra.mxu0 %v1441
        %1453 = vmatprep.subr.mxu0 0.0
        %1454 = vmatpush1.msra.mxu0 0.0
        %1455 = vmatprep.subr.mxu0 0.0
        %1456 = vmatpush1.msra.mxu0 0.0
        %1457 = vmatprep.subr.mxu0 0.0
        %1458 = vmatpush1.msra.mxu0 0.0
        %1459 = vmatprep.subr.mxu0 0.0
        %1460 = vmatpush1.msra.mxu0 0.0
        %1461 = vmatprep.subr.mxu0 0.0
        %1462 = vmatpush1.msra.mxu0 0.0
        %1463 = vmatprep.subr.mxu0 0.0
        %1464 = vmatpush1.msra.mxu0 0.0
        %1465 = vmatprep.subr.mxu0 0.0
        %1466 = vmatpush1.msra.mxu0 0.0
        %1467 = vmatprep.subr.mxu0 0.0
        %1468 = vmatpush1.msra.mxu0 0.0
        %1469 = vmatprep.subr.mxu0 0.0
        %1470 = vmatpush1.msra.mxu0 0.0
        %1471 = vmatprep.subr.mxu0 0.0
        %1472 = vmatpush1.msra.mxu0 0.0
        %1473 = vmatprep.subr.mxu0 0.0
        %1474 = vmatpush1.msra.mxu0 0.0
        %1475 = vmatprep.subr.mxu0 0.0
        %1476 = vmatpush1.msra.mxu0 0.0
        %1477 = vmatprep.subr.mxu0 0.0
        %1478 = vmatpush1.msra.mxu0 0.0
        %1479 = vmatprep.subr.mxu0 0.0
        %1480 = vmatpush1.msra.mxu0 0.0
        %1481 = vmatprep.subr.mxu0 0.0
        %1482 = vmatpush1.msra.mxu0 0.0
        %1483 = vmatprep.subr.mxu0 0.0
        %1484 = vmatpush1.msra.mxu0 0.0
        %1485 = vmatprep.subr.mxu0 0.0
        %1486 = vmatpush1.msra.mxu0 0.0
        %1487 = vmatprep.subr.mxu0 0.0
        %1488 = vmatpush1.msra.mxu0 0.0
        %1489 = vmatprep.subr.mxu0 0.0
        %1490 = vmatpush1.msra.mxu0 0.0
        %1491 = vmatprep.subr.mxu0 0.0
        %1492 = vmatpush1.msra.mxu0 0.0
        %1493 = vmatprep.subr.mxu0 0.0
        %1494 = vmatpush1.msra.mxu0 0.0
        %1495 = vmatprep.subr.mxu0 0.0
        %1496 = vmatpush1.msra.mxu0 0.0
        %1497 = vmatprep.subr.mxu0 0.0
        %1498 = vmatpush1.msra.mxu0 0.0
        %1499 = vmatprep.subr.mxu0 0.0
        %1500 = vmatpush1.msra.mxu0 0.0
        %1501 = vmatprep.subr.mxu0 0.0
        %1502 = vmatpush1.msra.mxu0 0.0
        %1503 = vmatprep.subr.mxu0 0.0
        %1504 = vmatpush1.msra.mxu0 0.0
        %1505 = vmatprep.subr.mxu0 0.0
        %1506 = vmatpush1.msra.mxu0 0.0
        %1507 = vmatprep.subr.mxu0 0.0
        %1508 = vmatpush1.msra.mxu0 0.0
        %1509 = vmatprep.mubr.f32.mxu0 0.0
        %1510 = vmatmul.mubr.f32.gmra.mrb[0].mxu0 %v1443
        %v1511 = vpop.f32.mrb[0].mxu0
        %v1512 = vadd.f32 0.0, %v1511
        %v1513 = vpop.f32.mrb[0].mxu0
        %1514 = vdwg.mxu0
        %v1516 = vsel %vm824, %v984, 0
        %1518 = vmatprep.subr.mxu0 0.0
        %1519 = vmatpush1.msra.mxu0 %v987
        %1520 = vmatprep.subr.mxu0 0.0
        %1521 = vmatpush1.msra.mxu0 %v988
        %1522 = vmatprep.subr.mxu0 0.0
        %1523 = vmatpush1.msra.mxu0 %v989
        %1524 = vmatprep.subr.mxu0 0.0
        %1525 = vmatpush1.msra.mxu0 %v990
        %1526 = vmatprep.subr.mxu0 0.0
        %1527 = vmatpush1.msra.mxu0 0.0
        %1528 = vmatprep.subr.mxu0 0.0
        %1529 = vmatpush1.msra.mxu0 0.0
        %1530 = vmatprep.subr.mxu0 0.0
        %1531 = vmatpush1.msra.mxu0 0.0
        %1532 = vmatprep.subr.mxu0 0.0
        %1533 = vmatpush1.msra.mxu0 0.0
        %1534 = vmatprep.subr.mxu0 0.0
        %1535 = vmatpush1.msra.mxu0 0.0
        %1536 = vmatprep.subr.mxu0 0.0
        %1537 = vmatpush1.msra.mxu0 0.0
        %1538 = vmatprep.subr.mxu0 0.0
        %1539 = vmatpush1.msra.mxu0 0.0
        %1540 = vmatprep.subr.mxu0 0.0
        %1541 = vmatpush1.msra.mxu0 0.0
        %1542 = vmatprep.subr.mxu0 0.0
        %1543 = vmatpush1.msra.mxu0 0.0
        %1544 = vmatprep.subr.mxu0 0.0
        %1545 = vmatpush1.msra.mxu0 0.0
        %1546 = vmatprep.subr.mxu0 0.0
        %1547 = vmatpush1.msra.mxu0 0.0
        %1548 = vmatprep.subr.mxu0 0.0
        %1549 = vmatpush1.msra.mxu0 0.0
        %1550 = vmatprep.subr.mxu0 0.0
        %1551 = vmatpush1.msra.mxu0 0.0
        %1552 = vmatprep.subr.mxu0 0.0
        %1553 = vmatpush1.msra.mxu0 0.0
        %1554 = vmatprep.subr.mxu0 0.0
        %1555 = vmatpush1.msra.mxu0 0.0
        %1556 = vmatprep.subr.mxu0 0.0
        %1557 = vmatpush1.msra.mxu0 0.0
        %1558 = vmatprep.subr.mxu0 0.0
        %1559 = vmatpush1.msra.mxu0 0.0
        %1560 = vmatprep.subr.mxu0 0.0
        %1561 = vmatpush1.msra.mxu0 0.0
        %1562 = vmatprep.subr.mxu0 0.0
        %1563 = vmatpush1.msra.mxu0 0.0
        %1564 = vmatprep.subr.mxu0 0.0
        %1565 = vmatpush1.msra.mxu0 0.0
        %1566 = vmatprep.subr.mxu0 0.0
        %1567 = vmatpush1.msra.mxu0 0.0
        %1568 = vmatprep.subr.mxu0 0.0
        %1569 = vmatpush1.msra.mxu0 0.0
        %1570 = vmatprep.subr.mxu0 0.0
        %1571 = vmatpush1.msra.mxu0 0.0
        %1572 = vmatprep.subr.mxu0 0.0
        %1573 = vmatpush1.msra.mxu0 0.0
        %1574 = vmatprep.subr.mxu0 0.0
        %1575 = vmatpush1.msra.mxu0 0.0
        %1576 = vmatprep.subr.mxu0 0.0
        %1577 = vmatpush1.msra.mxu0 0.0
        %1578 = vmatprep.subr.mxu0 0.0
        %1579 = vmatpush1.msra.mxu0 0.0
        %1580 = vmatprep.subr.mxu0 0.0
        %1581 = vmatpush1.msra.mxu0 0.0
        %1582 = vmatprep.mubr.f32.mxu0 0.0
        %1583 = vmatmul.mubr.f32.gmra.mrb[0].mxu0 %v1516
        %v1584 = vpop.f32.mrb[0].mxu0
        %v1585 = vadd.f32 %v1512, %v1584
        %v1586 = vpop.f32.mrb[0].mxu0
        %1587 = vdwg.mxu0
        %s1588 = scalar_lea.vmem %s1, 256
        %v1589 = vld [vmem:[%s1588] sm:$0xff]
        %v1590 = vld [vmem:[%s1588 + $0x8] sm:$0xff]
        %v1591 = vld [vmem:[%s1588 + $0x10] sm:$0xff]
        %v1592 = vld [vmem:[%s1588 + $0x18] sm:$0xff]
        %v1593 = vld [vmem:[%s1588 + $0x20] sm:$0xff]
        %v1594 = vld [vmem:[%s1588 + $0x28] sm:$0xff]
        %v1595 = vld [vmem:[%s1588 + $0x30] sm:$0xff]
        %v1596 = vld [vmem:[%s1588 + $0x38] sm:$0xff]
        %v1597 = vld [vmem:[%s1588 + $0x40] sm:$0xff]
        %v1598 = vld [vmem:[%s1588 + $0x48] sm:$0xff]
        %v1599 = vld [vmem:[%s1588 + $0x50] sm:$0xff]
        %v1600 = vld [vmem:[%s1588 + $0x58] sm:$0xff]
        %v1601 = vld [vmem:[%s1588 + $0x60] sm:$0xff]
        %v1602 = vld [vmem:[%s1588 + $0x68] sm:$0xff]
        %v1603 = vld [vmem:[%s1588 + $0x70] sm:$0xff]
        %v1604 = vld [vmem:[%s1588 + $0x78] sm:$0xff]
        %s1605 = scalar_lea.vmem %s2, 2
        %v1606 = vld [vmem:[%s1605] sm:$0x1]
        %v1608 = vlaneseq
        %v1609 = vshrl.u32 %v1608, 7
        %v1610 = vsub.s32 0, %v1609
        %v1611 = vrot.slane %v1606, %v1610
        %1613 = vmatprep.subr.mxu0 0.0
        %1614 = vmatpush1.msra.mxu0 %v1589
        %1615 = vmatprep.subr.mxu0 0.0
        %1616 = vmatpush1.msra.mxu0 %v1590
        %1617 = vmatprep.subr.mxu0 0.0
        %1618 = vmatpush1.msra.mxu0 %v1591
        %1619 = vmatprep.subr.mxu0 0.0
        %1620 = vmatpush1.msra.mxu0 %v1592
        %1621 = vmatprep.subr.mxu0 0.0
        %1622 = vmatpush1.msra.mxu0 %v1593
        %1623 = vmatprep.subr.mxu0 0.0
        %1624 = vmatpush1.msra.mxu0 %v1594
        %1625 = vmatprep.subr.mxu0 0.0
        %1626 = vmatpush1.msra.mxu0 %v1595
        %1627 = vmatprep.subr.mxu0 0.0
        %1628 = vmatpush1.msra.mxu0 %v1596
        %1629 = vmatprep.subr.mxu0 0.0
        %1630 = vmatpush1.msra.mxu0 %v1597
        %1631 = vmatprep.subr.mxu0 0.0
        %1632 = vmatpush1.msra.mxu0 %v1598
        %1633 = vmatprep.subr.mxu0 0.0
        %1634 = vmatpush1.msra.mxu0 %v1599
        %1635 = vmatprep.subr.mxu0 0.0
        %1636 = vmatpush1.msra.mxu0 %v1600
        %1637 = vmatprep.subr.mxu0 0.0
        %1638 = vmatpush1.msra.mxu0 %v1601
        %1639 = vmatprep.subr.mxu0 0.0
        %1640 = vmatpush1.msra.mxu0 %v1602
        %1641 = vmatprep.subr.mxu0 0.0
        %1642 = vmatpush1.msra.mxu0 %v1603
        %1643 = vmatprep.subr.mxu0 0.0
        %1644 = vmatpush1.msra.mxu0 %v1604
        %1645 = vmatprep.subr.mxu0 0.0
        %1646 = vmatpush1.msra.mxu0 0.0
        %1647 = vmatprep.subr.mxu0 0.0
        %1648 = vmatpush1.msra.mxu0 0.0
        %1649 = vmatprep.subr.mxu0 0.0
        %1650 = vmatpush1.msra.mxu0 0.0
        %1651 = vmatprep.subr.mxu0 0.0
        %1652 = vmatpush1.msra.mxu0 0.0
        %1653 = vmatprep.subr.mxu0 0.0
        %1654 = vmatpush1.msra.mxu0 0.0
        %1655 = vmatprep.subr.mxu0 0.0
        %1656 = vmatpush1.msra.mxu0 0.0
        %1657 = vmatprep.subr.mxu0 0.0
        %1658 = vmatpush1.msra.mxu0 0.0
        %1659 = vmatprep.subr.mxu0 0.0
        %1660 = vmatpush1.msra.mxu0 0.0
        %1661 = vmatprep.subr.mxu0 0.0
        %1662 = vmatpush1.msra.mxu0 0.0
        %1663 = vmatprep.subr.mxu0 0.0
        %1664 = vmatpush1.msra.mxu0 0.0
        %1665 = vmatprep.subr.mxu0 0.0
        %1666 = vmatpush1.msra.mxu0 0.0
        %1667 = vmatprep.subr.mxu0 0.0
        %1668 = vmatpush1.msra.mxu0 0.0
        %1669 = vmatprep.subr.mxu0 0.0
        %1670 = vmatpush1.msra.mxu0 0.0
        %1671 = vmatprep.subr.mxu0 0.0
        %1672 = vmatpush1.msra.mxu0 0.0
        %1673 = vmatprep.subr.mxu0 0.0
        %1674 = vmatpush1.msra.mxu0 0.0
        %1675 = vmatprep.subr.mxu0 0.0
        %1676 = vmatpush1.msra.mxu0 0.0
        %1677 = vmatprep.mubr.f32.mxu0 0.0
        %1678 = vmatmul.mubr.f32.gmra.mrb[0].mxu0 %v544
        %v1679 = vpop.f32.mrb[0].mxu0
        %v1680 = vadd.f32 %v1611, %v1679
        %v1681 = vpop.f32.mrb[0].mxu0
        %1682 = vdwg.mxu0
        %s1683 = scalar_lea.vmem %s3, 256
        %v1684 = vld [vmem:[%s1683] sm:$0xff]
        %v1685 = vld [vmem:[%s1683 + $0x8] sm:$0xff]
        %v1686 = vld [vmem:[%s1683 + $0x10] sm:$0xff]
        %v1687 = vld [vmem:[%s1683 + $0x18] sm:$0xff]
        %v1688 = vld [vmem:[%s1683 + $0x20] sm:$0xff]
        %v1689 = vld [vmem:[%s1683 + $0x28] sm:$0xff]
        %v1690 = vld [vmem:[%s1683 + $0x30] sm:$0xff]
        %v1691 = vld [vmem:[%s1683 + $0x38] sm:$0xff]
        %v1692 = vld [vmem:[%s1683 + $0x40] sm:$0xff]
        %v1693 = vld [vmem:[%s1683 + $0x48] sm:$0xff]
        %v1694 = vld [vmem:[%s1683 + $0x50] sm:$0xff]
        %v1695 = vld [vmem:[%s1683 + $0x58] sm:$0xff]
        %v1696 = vld [vmem:[%s1683 + $0x60] sm:$0xff]
        %v1697 = vld [vmem:[%s1683 + $0x68] sm:$0xff]
        %v1698 = vld [vmem:[%s1683 + $0x70] sm:$0xff]
        %v1699 = vld [vmem:[%s1683 + $0x78] sm:$0xff]
        %s1700 = scalar_lea.vmem %s4, 2
        %v1701 = vld [vmem:[%s1700] sm:$0x1]
        %v1703 = vlaneseq
        %v1704 = vshrl.u32 %v1703, 7
        %v1705 = vsub.s32 0, %v1704
        %v1706 = vrot.slane %v1701, %v1705
        %1708 = vmatprep.subr.mxu0 0.0
        %1709 = vmatpush1.msra.mxu0 %v1684
        %1710 = vmatprep.subr.mxu0 0.0
        %1711 = vmatpush1.msra.mxu0 %v1685
        %1712 = vmatprep.subr.mxu0 0.0
        %1713 = vmatpush1.msra.mxu0 %v1686
        %1714 = vmatprep.subr.mxu0 0.0
        %1715 = vmatpush1.msra.mxu0 %v1687
        %1716 = vmatprep.subr.mxu0 0.0
        %1717 = vmatpush1.msra.mxu0 %v1688
        %1718 = vmatprep.subr.mxu0 0.0
        %1719 = vmatpush1.msra.mxu0 %v1689
        %1720 = vmatprep.subr.mxu0 0.0
        %1721 = vmatpush1.msra.mxu0 %v1690
        %1722 = vmatprep.subr.mxu0 0.0
        %1723 = vmatpush1.msra.mxu0 %v1691
        %1724 = vmatprep.subr.mxu0 0.0
        %1725 = vmatpush1.msra.mxu0 %v1692
        %1726 = vmatprep.subr.mxu0 0.0
        %1727 = vmatpush1.msra.mxu0 %v1693
        %1728 = vmatprep.subr.mxu0 0.0
        %1729 = vmatpush1.msra.mxu0 %v1694
        %1730 = vmatprep.subr.mxu0 0.0
        %1731 = vmatpush1.msra.mxu0 %v1695
        %1732 = vmatprep.subr.mxu0 0.0
        %1733 = vmatpush1.msra.mxu0 %v1696
        %1734 = vmatprep.subr.mxu0 0.0
        %1735 = vmatpush1.msra.mxu0 %v1697
        %1736 = vmatprep.subr.mxu0 0.0
        %1737 = vmatpush1.msra.mxu0 %v1698
        %1738 = vmatprep.subr.mxu0 0.0
        %1739 = vmatpush1.msra.mxu0 %v1699
        %1740 = vmatprep.subr.mxu0 0.0
        %1741 = vmatpush1.msra.mxu0 0.0
        %1742 = vmatprep.subr.mxu0 0.0
        %1743 = vmatpush1.msra.mxu0 0.0
        %1744 = vmatprep.subr.mxu0 0.0
        %1745 = vmatpush1.msra.mxu0 0.0
        %1746 = vmatprep.subr.mxu0 0.0
        %1747 = vmatpush1.msra.mxu0 0.0
        %1748 = vmatprep.subr.mxu0 0.0
        %1749 = vmatpush1.msra.mxu0 0.0
        %1750 = vmatprep.subr.mxu0 0.0
        %1751 = vmatpush1.msra.mxu0 0.0
        %1752 = vmatprep.subr.mxu0 0.0
        %1753 = vmatpush1.msra.mxu0 0.0
        %1754 = vmatprep.subr.mxu0 0.0
        %1755 = vmatpush1.msra.mxu0 0.0
        %1756 = vmatprep.subr.mxu0 0.0
        %1757 = vmatpush1.msra.mxu0 0.0
        %1758 = vmatprep.subr.mxu0 0.0
        %1759 = vmatpush1.msra.mxu0 0.0
        %1760 = vmatprep.subr.mxu0 0.0
        %1761 = vmatpush1.msra.mxu0 0.0
        %1762 = vmatprep.subr.mxu0 0.0
        %1763 = vmatpush1.msra.mxu0 0.0
        %1764 = vmatprep.subr.mxu0 0.0
        %1765 = vmatpush1.msra.mxu0 0.0
        %1766 = vmatprep.subr.mxu0 0.0
        %1767 = vmatpush1.msra.mxu0 0.0
        %1768 = vmatprep.subr.mxu0 0.0
        %1769 = vmatpush1.msra.mxu0 0.0
        %1770 = vmatprep.subr.mxu0 0.0
        %1771 = vmatpush1.msra.mxu0 0.0
        %1772 = vmatprep.mubr.f32.mxu0 0.0
        %1773 = vmatmul.mubr.f32.gmra.mrb[0].mxu0 %v544
        %v1774 = vpop.f32.mrb[0].mxu0
        %v1775 = vadd.f32 %v1706, %v1774
        %v1776 = vpop.f32.mrb[0].mxu0
        %1777 = vdwg.mxu0
        %s1778 = scalar_lea.vmem %s5, 256
        %v1779 = vld [vmem:[%s1778] sm:$0xff]
        %v1780 = vld [vmem:[%s1778 + $0x8] sm:$0xff]
        %v1781 = vld [vmem:[%s1778 + $0x10] sm:$0xff]
        %v1782 = vld [vmem:[%s1778 + $0x18] sm:$0xff]
        %v1783 = vld [vmem:[%s1778 + $0x20] sm:$0xff]
        %v1784 = vld [vmem:[%s1778 + $0x28] sm:$0xff]
        %v1785 = vld [vmem:[%s1778 + $0x30] sm:$0xff]
        %v1786 = vld [vmem:[%s1778 + $0x38] sm:$0xff]
        %v1787 = vld [vmem:[%s1778 + $0x40] sm:$0xff]
        %v1788 = vld [vmem:[%s1778 + $0x48] sm:$0xff]
        %v1789 = vld [vmem:[%s1778 + $0x50] sm:$0xff]
        %v1790 = vld [vmem:[%s1778 + $0x58] sm:$0xff]
        %v1791 = vld [vmem:[%s1778 + $0x60] sm:$0xff]
        %v1792 = vld [vmem:[%s1778 + $0x68] sm:$0xff]
        %v1793 = vld [vmem:[%s1778 + $0x70] sm:$0xff]
        %v1794 = vld [vmem:[%s1778 + $0x78] sm:$0xff]
        %s1795 = scalar_lea.vmem %s6, 2
        %v1796 = vld [vmem:[%s1795] sm:$0x1]
        %v1798 = vlaneseq
        %v1799 = vshrl.u32 %v1798, 7
        %v1800 = vsub.s32 0, %v1799
        %v1801 = vrot.slane %v1796, %v1800
        %1803 = vmatprep.subr.mxu0 0.0
        %1804 = vmatpush1.msra.mxu0 %v1779
        %1805 = vmatprep.subr.mxu0 0.0
        %1806 = vmatpush1.msra.mxu0 %v1780
        %1807 = vmatprep.subr.mxu0 0.0
        %1808 = vmatpush1.msra.mxu0 %v1781
        %1809 = vmatprep.subr.mxu0 0.0
        %1810 = vmatpush1.msra.mxu0 %v1782
        %1811 = vmatprep.subr.mxu0 0.0
        %1812 = vmatpush1.msra.mxu0 %v1783
        %1813 = vmatprep.subr.mxu0 0.0
        %1814 = vmatpush1.msra.mxu0 %v1784
        %1815 = vmatprep.subr.mxu0 0.0
        %1816 = vmatpush1.msra.mxu0 %v1785
        %1817 = vmatprep.subr.mxu0 0.0
        %1818 = vmatpush1.msra.mxu0 %v1786
        %1819 = vmatprep.subr.mxu0 0.0
        %1820 = vmatpush1.msra.mxu0 %v1787
        %1821 = vmatprep.subr.mxu0 0.0
        %1822 = vmatpush1.msra.mxu0 %v1788
        %1823 = vmatprep.subr.mxu0 0.0
        %1824 = vmatpush1.msra.mxu0 %v1789
        %1825 = vmatprep.subr.mxu0 0.0
        %1826 = vmatpush1.msra.mxu0 %v1790
        %1827 = vmatprep.subr.mxu0 0.0
        %1828 = vmatpush1.msra.mxu0 %v1791
        %1829 = vmatprep.subr.mxu0 0.0
        %1830 = vmatpush1.msra.mxu0 %v1792
        %1831 = vmatprep.subr.mxu0 0.0
        %1832 = vmatpush1.msra.mxu0 %v1793
        %1833 = vmatprep.subr.mxu0 0.0
        %1834 = vmatpush1.msra.mxu0 %v1794
        %1835 = vmatprep.subr.mxu0 0.0
        %1836 = vmatpush1.msra.mxu0 0.0
        %1837 = vmatprep.subr.mxu0 0.0
        %1838 = vmatpush1.msra.mxu0 0.0
        %1839 = vmatprep.subr.mxu0 0.0
        %1840 = vmatpush1.msra.mxu0 0.0
        %1841 = vmatprep.subr.mxu0 0.0
        %1842 = vmatpush1.msra.mxu0 0.0
        %1843 = vmatprep.subr.mxu0 0.0
        %1844 = vmatpush1.msra.mxu0 0.0
        %1845 = vmatprep.subr.mxu0 0.0
        %1846 = vmatpush1.msra.mxu0 0.0
        %1847 = vmatprep.subr.mxu0 0.0
        %1848 = vmatpush1.msra.mxu0 0.0
        %1849 = vmatprep.subr.mxu0 0.0
        %1850 = vmatpush1.msra.mxu0 0.0
        %1851 = vmatprep.subr.mxu0 0.0
        %1852 = vmatpush1.msra.mxu0 0.0
        %1853 = vmatprep.subr.mxu0 0.0
        %1854 = vmatpush1.msra.mxu0 0.0
        %1855 = vmatprep.subr.mxu0 0.0
        %1856 = vmatpush1.msra.mxu0 0.0
        %1857 = vmatprep.subr.mxu0 0.0
        %1858 = vmatpush1.msra.mxu0 0.0
        %1859 = vmatprep.subr.mxu0 0.0
        %1860 = vmatpush1.msra.mxu0 0.0
        %1861 = vmatprep.subr.mxu0 0.0
        %1862 = vmatpush1.msra.mxu0 0.0
        %1863 = vmatprep.subr.mxu0 0.0
        %1864 = vmatpush1.msra.mxu0 0.0
        %1865 = vmatprep.subr.mxu0 0.0
        %1866 = vmatpush1.msra.mxu0 0.0
        %1867 = vmatprep.mubr.f32.mxu0 0.0
        %1868 = vmatmul.mubr.f32.gmra.mrb[0].mxu0 %v544
        %v1869 = vpop.f32.mrb[0].mxu0
        %v1870 = vadd.f32 %v1801, %v1869
        %v1871 = vpop.f32.mrb[0].mxu0
        %1872 = vdwg.mxu0
        %v1874 = vsel %vm824, %v1680, 0
        %v1877 = vsel %vm824, %v1775, 0
        %1879 = vmatprep.subr.mxu0 0.0
        %1880 = vmatpush1.xpose.msra.mxu0 %v1877
        %1881 = vmatprep.subr.mxu0 0.0
        %1882 = vmatpush1.xpose.msra.mxu0 0.0
        %1883 = vmatprep.subr.mxu0 0.0
        %1884 = vmatpush1.xpose.msra.mxu0 0.0
        %1885 = vmatprep.subr.mxu0 0.0
        %1886 = vmatpush1.xpose.msra.mxu0 0.0
        %1887 = vmatprep.subr.mxu0 0.0
        %1888 = vmatpush1.xpose.msra.mxu0 0.0
        %1889 = vmatprep.subr.mxu0 0.0
        %1890 = vmatpush1.xpose.msra.mxu0 0.0
        %1891 = vmatprep.subr.mxu0 0.0
        %1892 = vmatpush1.xpose.msra.mxu0 0.0
        %1893 = vmatprep.subr.mxu0 0.0
        %1894 = vmatpush1.xpose.msra.mxu0 0.0
        %1895 = vmatprep.subr.mxu0 0.0
        %1896 = vmatpush1.xpose.msra.mxu0 0.0
        %1897 = vmatprep.subr.mxu0 0.0
        %1898 = vmatpush1.xpose.msra.mxu0 0.0
        %1899 = vmatprep.subr.mxu0 0.0
        %1900 = vmatpush1.xpose.msra.mxu0 0.0
        %1901 = vmatprep.subr.mxu0 0.0
        %1902 = vmatpush1.xpose.msra.mxu0 0.0
        %1903 = vmatprep.subr.mxu0 0.0
        %1904 = vmatpush1.xpose.msra.mxu0 0.0
        %1905 = vmatprep.subr.mxu0 0.0
        %1906 = vmatpush1.xpose.msra.mxu0 0.0
        %1907 = vmatprep.subr.mxu0 0.0
        %1908 = vmatpush1.xpose.msra.mxu0 0.0
        %1909 = vmatprep.subr.mxu0 0.0
        %1910 = vmatpush1.xpose.msra.mxu0 0.0
        %1911 = vmatprep.subr.mxu0 0.0
        %1912 = vmatpush1.xpose.msra.mxu0 0.0
        %1913 = vmatprep.subr.mxu0 0.0
        %1914 = vmatpush1.xpose.msra.mxu0 0.0
        %1915 = vmatprep.subr.mxu0 0.0
        %1916 = vmatpush1.xpose.msra.mxu0 0.0
        %1917 = vmatprep.subr.mxu0 0.0
        %1918 = vmatpush1.xpose.msra.mxu0 0.0
        %1919 = vmatprep.subr.mxu0 0.0
        %1920 = vmatpush1.xpose.msra.mxu0 0.0
        %1921 = vmatprep.subr.mxu0 0.0
        %1922 = vmatpush1.xpose.msra.mxu0 0.0
        %1923 = vmatprep.subr.mxu0 0.0
        %1924 = vmatpush1.xpose.msra.mxu0 0.0
        %1925 = vmatprep.subr.mxu0 0.0
        %1926 = vmatpush1.xpose.msra.mxu0 0.0
        %1927 = vmatprep.subr.mxu0 0.0
        %1928 = vmatpush1.xpose.msra.mxu0 0.0
        %1929 = vmatprep.subr.mxu0 0.0
        %1930 = vmatpush1.xpose.msra.mxu0 0.0
        %1931 = vmatprep.subr.mxu0 0.0
        %1932 = vmatpush1.xpose.msra.mxu0 0.0
        %1933 = vmatprep.subr.mxu0 0.0
        %1934 = vmatpush1.xpose.msra.mxu0 0.0
        %1935 = vmatprep.subr.mxu0 0.0
        %1936 = vmatpush1.xpose.msra.mxu0 0.0
        %1937 = vmatprep.subr.mxu0 0.0
        %1938 = vmatpush1.xpose.msra.mxu0 0.0
        %1939 = vmatprep.subr.mxu0 0.0
        %1940 = vmatpush1.xpose.msra.mxu0 0.0
        %1941 = vmatprep.subr.mxu0 0.0
        %1942 = vmatpush1.xpose.msra.mxu0 0.0
        %1943 = vmatprep.mubr.f32.mxu0 0.0
        %1944 = vmatmul.mubr.f32.gmra.mrb[0].mxu0 %v1874
        %v1945 = vpop.f32.mrb[0].mxu0
        %v1946 = vadd.f32 0.0, %v1945
        %v1947 = vpop.f32.mrb[0].mxu0
        %1948 = vdwg.mxu0
        %v1949 = vmul.f32 %v1946, 0.17677669
        %v1950 = vsel %vm902, %v1949, -inf
        %1951 = vmax.xlane.f32.xlu0 %v1950
        %v1952 = vpop.xlane.xlu0 %1951
        %v1953 = vsub.f32 %v1949, %v1952
        %v1954 = vmul.f32 %v1953, 1.442695
        %v1955 = vpow.pop %v1954
        %v1956 = vsel %vm902, %v1955, 0.0
        %1957 = vadd.xlane.f32.xlu0 %v1956
        %v1958 = vpop.xlane.xlu0 %1957
        %v1959 = vrcp.pop %v1958
        %v1960 = vmul.f32 %v1955, %v1959
        %v1962 = vsel %vm902, %v1960, 0
        %1964 = vmatprep.subr.mxu0 0.0
        %1965 = vmatpush1.msra.mxu0 %v1870
        %1966 = vmatprep.subr.mxu0 0.0
        %1967 = vmatpush1.msra.mxu0 0.0
        %1968 = vmatprep.subr.mxu0 0.0
        %1969 = vmatpush1.msra.mxu0 0.0
        %1970 = vmatprep.subr.mxu0 0.0
        %1971 = vmatpush1.msra.mxu0 0.0
        %1972 = vmatprep.subr.mxu0 0.0
        %1973 = vmatpush1.msra.mxu0 0.0
        %1974 = vmatprep.subr.mxu0 0.0
        %1975 = vmatpush1.msra.mxu0 0.0
        %1976 = vmatprep.subr.mxu0 0.0
        %1977 = vmatpush1.msra.mxu0 0.0
        %1978 = vmatprep.subr.mxu0 0.0
        %1979 = vmatpush1.msra.mxu0 0.0
        %1980 = vmatprep.subr.mxu0 0.0
        %1981 = vmatpush1.msra.mxu0 0.0
        %1982 = vmatprep.subr.mxu0 0.0
        %1983 = vmatpush1.msra.mxu0 0.0
        %1984 = vmatprep.subr.mxu0 0.0
        %1985 = vmatpush1.msra.mxu0 0.0
        %1986 = vmatprep.subr.mxu0 0.0
        %1987 = vmatpush1.msra.mxu0 0.0
        %1988 = vmatprep.subr.mxu0 0.0
        %1989 = vmatpush1.msra.mxu0 0.0
        %1990 = vmatprep.subr.mxu0 0.0
        %1991 = vmatpush1.msra.mxu0 0.0
        %1992 = vmatprep.subr.mxu0 0.0
        %1993 = vmatpush1.msra.mxu0 0.0
        %1994 = vmatprep.subr.mxu0 0.0
        %1995 = vmatpush1.msra.mxu0 0.0
        %1996 = vmatprep.subr.mxu0 0.0
        %1997 = vmatpush1.msra.mxu0 0.0
        %1998 = vmatprep.subr.mxu0 0.0
        %1999 = vmatpush1.msra.mxu0 0.0
        %2000 = vmatprep.subr.mxu0 0.0
        %2001 = vmatpush1.msra.mxu0 0.0
        %2002 = vmatprep.subr.mxu0 0.0
        %2003 = vmatpush1.msra.mxu0 0.0
        %2004 = vmatprep.subr.mxu0 0.0
        %2005 = vmatpush1.msra.mxu0 0.0
        %2006 = vmatprep.subr.mxu0 0.0
        %2007 = vmatpush1.msra.mxu0 0.0
        %2008 = vmatprep.subr.mxu0 0.0
        %2009 = vmatpush1.msra.mxu0 0.0
        %2010 = vmatprep.subr.mxu0 0.0
        %2011 = vmatpush1.msra.mxu0 0.0
        %2012 = vmatprep.subr.mxu0 0.0
        %2013 = vmatpush1.msra.mxu0 0.0
        %2014 = vmatprep.subr.mxu0 0.0
        %2015 = vmatpush1.msra.mxu0 0.0
        %2016 = vmatprep.subr.mxu0 0.0
        %2017 = vmatpush1.msra.mxu0 0.0
        %2018 = vmatprep.subr.mxu0 0.0
        %2019 = vmatpush1.msra.mxu0 0.0
        %2020 = vmatprep.subr.mxu0 0.0
        %2021 = vmatpush1.msra.mxu0 0.0
        %2022 = vmatprep.subr.mxu0 0.0
        %2023 = vmatpush1.msra.mxu0 0.0
        %2024 = vmatprep.subr.mxu0 0.0
        %2025 = vmatpush1.msra.mxu0 0.0
        %2026 = vmatprep.subr.mxu0 0.0
        %2027 = vmatpush1.msra.mxu0 0.0
        %2028 = vmatprep.mubr.f32.mxu0 0.0
        %2029 = vmatmul.mubr.f32.gmra.mrb[0].mxu0 %v1962
        %v2030 = vpop.f32.mrb[0].mxu0
        %v2031 = vadd.f32 0.0, %v2030
        %v2032 = vpop.f32.mrb[0].mxu0
        %2033 = vdwg.mxu0
        %s2034 = scalar_lea.vmem %s7, 64
        %v2035 = vld [vmem:[%s2034] sm:$0xff]
        %v2036 = vld [vmem:[%s2034 + $0x8] sm:$0xff]
        %v2037 = vld [vmem:[%s2034 + $0x10] sm:$0xff]
        %v2038 = vld [vmem:[%s2034 + $0x18] sm:$0xff]
        %v2040 = vsel %vm824, %v2031, 0
        %2042 = vmatprep.subr.mxu0 0.0
        %2043 = vmatpush1.msra.mxu0 %v2035
        %2044 = vmatprep.subr.mxu0 0.0
        %2045 = vmatpush1.msra.mxu0 %v2036
        %2046 = vmatprep.subr.mxu0 0.0
        %2047 = vmatpush1.msra.mxu0 %v2037
        %2048 = vmatprep.subr.mxu0 0.0
        %2049 = vmatpush1.msra.mxu0 %v2038
        %2050 = vmatprep.subr.mxu0 0.0
        %2051 = vmatpush1.msra.mxu0 0.0
        %2052 = vmatprep.subr.mxu0 0.0
        %2053 = vmatpush1.msra.mxu0 0.0
        %2054 = vmatprep.subr.mxu0 0.0
        %2055 = vmatpush1.msra.mxu0 0.0
        %2056 = vmatprep.subr.mxu0 0.0
        %2057 = vmatpush1.msra.mxu0 0.0
        %2058 = vmatprep.subr.mxu0 0.0
        %2059 = vmatpush1.msra.mxu0 0.0
        %2060 = vmatprep.subr.mxu0 0.0
        %2061 = vmatpush1.msra.mxu0 0.0
        %2062 = vmatprep.subr.mxu0 0.0
        %2063 = vmatpush1.msra.mxu0 0.0
        %2064 = vmatprep.subr.mxu0 0.0
        %2065 = vmatpush1.msra.mxu0 0.0
        %2066 = vmatprep.subr.mxu0 0.0
        %2067 = vmatpush1.msra.mxu0 0.0
        %2068 = vmatprep.subr.mxu0 0.0
        %2069 = vmatpush1.msra.mxu0 0.0
        %2070 = vmatprep.subr.mxu0 0.0
        %2071 = vmatpush1.msra.mxu0 0.0
        %2072 = vmatprep.subr.mxu0 0.0
        %2073 = vmatpush1.msra.mxu0 0.0
        %2074 = vmatprep.subr.mxu0 0.0
        %2075 = vmatpush1.msra.mxu0 0.0
        %2076 = vmatprep.subr.mxu0 0.0
        %2077 = vmatpush1.msra.mxu0 0.0
        %2078 = vmatprep.subr.mxu0 0.0
        %2079 = vmatpush1.msra.mxu0 0.0
        %2080 = vmatprep.subr.mxu0 0.0
        %2081 = vmatpush1.msra.mxu0 0.0
        %2082 = vmatprep.subr.mxu0 0.0
        %2083 = vmatpush1.msra.mxu0 0.0
        %2084 = vmatprep.subr.mxu0 0.0
        %2085 = vmatpush1.msra.mxu0 0.0
        %2086 = vmatprep.subr.mxu0 0.0
        %2087 = vmatpush1.msra.mxu0 0.0
        %2088 = vmatprep.subr.mxu0 0.0
        %2089 = vmatpush1.msra.mxu0 0.0
        %2090 = vmatprep.subr.mxu0 0.0
        %2091 = vmatpush1.msra.mxu0 0.0
        %2092 = vmatprep.subr.mxu0 0.0
        %2093 = vmatpush1.msra.mxu0 0.0
        %2094 = vmatprep.subr.mxu0 0.0
        %2095 = vmatpush1.msra.mxu0 0.0
        %2096 = vmatprep.subr.mxu0 0.0
        %2097 = vmatpush1.msra.mxu0 0.0
        %2098 = vmatprep.subr.mxu0 0.0
        %2099 = vmatpush1.msra.mxu0 0.0
        %2100 = vmatprep.subr.mxu0 0.0
        %2101 = vmatpush1.msra.mxu0 0.0
        %2102 = vmatprep.subr.mxu0 0.0
        %2103 = vmatpush1.msra.mxu0 0.0
        %2104 = vmatprep.subr.mxu0 0.0
        %2105 = vmatpush1.msra.mxu0 0.0
        %2106 = vmatprep.mubr.f32.mxu0 0.0
        %2107 = vmatmul.mubr.f32.gmra.mrb[0].mxu0 %v2040
        %v2108 = vpop.f32.mrb[0].mxu0
        %v2109 = vadd.f32 0.0, %v2108
        %v2110 = vpop.f32.mrb[0].mxu0
        %2111 = vdwg.mxu0
        %v2112 = vadd.f32 %v1585, %v2109
        %s2113 = scalar_lea.vmem %s1, 384
        %v2114 = vld [vmem:[%s2113] sm:$0xff]
        %v2115 = vld [vmem:[%s2113 + $0x8] sm:$0xff]
        %v2116 = vld [vmem:[%s2113 + $0x10] sm:$0xff]
        %v2117 = vld [vmem:[%s2113 + $0x18] sm:$0xff]
        %v2118 = vld [vmem:[%s2113 + $0x20] sm:$0xff]
        %v2119 = vld [vmem:[%s2113 + $0x28] sm:$0xff]
        %v2120 = vld [vmem:[%s2113 + $0x30] sm:$0xff]
        %v2121 = vld [vmem:[%s2113 + $0x38] sm:$0xff]
        %v2122 = vld [vmem:[%s2113 + $0x40] sm:$0xff]
        %v2123 = vld [vmem:[%s2113 + $0x48] sm:$0xff]
        %v2124 = vld [vmem:[%s2113 + $0x50] sm:$0xff]
        %v2125 = vld [vmem:[%s2113 + $0x58] sm:$0xff]
        %v2126 = vld [vmem:[%s2113 + $0x60] sm:$0xff]
        %v2127 = vld [vmem:[%s2113 + $0x68] sm:$0xff]
        %v2128 = vld [vmem:[%s2113 + $0x70] sm:$0xff]
        %v2129 = vld [vmem:[%s2113 + $0x78] sm:$0xff]
        %s2130 = scalar_lea.vmem %s2, 3
        %v2131 = vld [vmem:[%s2130] sm:$0x1]
        %v2133 = vlaneseq
        %v2134 = vshrl.u32 %v2133, 7
        %v2135 = vsub.s32 0, %v2134
        %v2136 = vrot.slane %v2131, %v2135
        %2138 = vmatprep.subr.mxu0 0.0
        %2139 = vmatpush1.msra.mxu0 %v2114
        %2140 = vmatprep.subr.mxu0 0.0
        %2141 = vmatpush1.msra.mxu0 %v2115
        %2142 = vmatprep.subr.mxu0 0.0
        %2143 = vmatpush1.msra.mxu0 %v2116
        %2144 = vmatprep.subr.mxu0 0.0
        %2145 = vmatpush1.msra.mxu0 %v2117
        %2146 = vmatprep.subr.mxu0 0.0
        %2147 = vmatpush1.msra.mxu0 %v2118
        %2148 = vmatprep.subr.mxu0 0.0
        %2149 = vmatpush1.msra.mxu0 %v2119
        %2150 = vmatprep.subr.mxu0 0.0
        %2151 = vmatpush1.msra.mxu0 %v2120
        %2152 = vmatprep.subr.mxu0 0.0
        %2153 = vmatpush1.msra.mxu0 %v2121
        %2154 = vmatprep.subr.mxu0 0.0
        %2155 = vmatpush1.msra.mxu0 %v2122
        %2156 = vmatprep.subr.mxu0 0.0
        %2157 = vmatpush1.msra.mxu0 %v2123
        %2158 = vmatprep.subr.mxu0 0.0
        %2159 = vmatpush1.msra.mxu0 %v2124
        %2160 = vmatprep.subr.mxu0 0.0
        %2161 = vmatpush1.msra.mxu0 %v2125
        %2162 = vmatprep.subr.mxu0 0.0
        %2163 = vmatpush1.msra.mxu0 %v2126
        %2164 = vmatprep.subr.mxu0 0.0
        %2165 = vmatpush1.msra.mxu0 %v2127
        %2166 = vmatprep.subr.mxu0 0.0
        %2167 = vmatpush1.msra.mxu0 %v2128
        %2168 = vmatprep.subr.mxu0 0.0
        %2169 = vmatpush1.msra.mxu0 %v2129
        %2170 = vmatprep.subr.mxu0 0.0
        %2171 = vmatpush1.msra.mxu0 0.0
        %2172 = vmatprep.subr.mxu0 0.0
        %2173 = vmatpush1.msra.mxu0 0.0
        %2174 = vmatprep.subr.mxu0 0.0
        %2175 = vmatpush1.msra.mxu0 0.0
        %2176 = vmatprep.subr.mxu0 0.0
        %2177 = vmatpush1.msra.mxu0 0.0
        %2178 = vmatprep.subr.mxu0 0.0
        %2179 = vmatpush1.msra.mxu0 0.0
        %2180 = vmatprep.subr.mxu0 0.0
        %2181 = vmatpush1.msra.mxu0 0.0
        %2182 = vmatprep.subr.mxu0 0.0
        %2183 = vmatpush1.msra.mxu0 0.0
        %2184 = vmatprep.subr.mxu0 0.0
        %2185 = vmatpush1.msra.mxu0 0.0
        %2186 = vmatprep.subr.mxu0 0.0
        %2187 = vmatpush1.msra.mxu0 0.0
        %2188 = vmatprep.subr.mxu0 0.0
        %2189 = vmatpush1.msra.mxu0 0.0
        %2190 = vmatprep.subr.mxu0 0.0
        %2191 = vmatpush1.msra.mxu0 0.0
        %2192 = vmatprep.subr.mxu0 0.0
        %2193 = vmatpush1.msra.mxu0 0.0
        %2194 = vmatprep.subr.mxu0 0.0
        %2195 = vmatpush1.msra.mxu0 0.0
        %2196 = vmatprep.subr.mxu0 0.0
        %2197 = vmatpush1.msra.mxu0 0.0
        %2198 = vmatprep.subr.mxu0 0.0
        %2199 = vmatpush1.msra.mxu0 0.0
        %2200 = vmatprep.subr.mxu0 0.0
        %2201 = vmatpush1.msra.mxu0 0.0
        %2202 = vmatprep.mubr.f32.mxu0 0.0
        %2203 = vmatmul.mubr.f32.gmra.mrb[0].mxu0 %v544
        %v2204 = vpop.f32.mrb[0].mxu0
        %v2205 = vadd.f32 %v2136, %v2204
        %v2206 = vpop.f32.mrb[0].mxu0
        %2207 = vdwg.mxu0
        %s2208 = scalar_lea.vmem %s3, 384
        %v2209 = vld [vmem:[%s2208] sm:$0xff]
        %v2210 = vld [vmem:[%s2208 + $0x8] sm:$0xff]
        %v2211 = vld [vmem:[%s2208 + $0x10] sm:$0xff]
        %v2212 = vld [vmem:[%s2208 + $0x18] sm:$0xff]
        %v2213 = vld [vmem:[%s2208 + $0x20] sm:$0xff]
        %v2214 = vld [vmem:[%s2208 + $0x28] sm:$0xff]
        %v2215 = vld [vmem:[%s2208 + $0x30] sm:$0xff]
        %v2216 = vld [vmem:[%s2208 + $0x38] sm:$0xff]
        %v2217 = vld [vmem:[%s2208 + $0x40] sm:$0xff]
        %v2218 = vld [vmem:[%s2208 + $0x48] sm:$0xff]
        %v2219 = vld [vmem:[%s2208 + $0x50] sm:$0xff]
        %v2220 = vld [vmem:[%s2208 + $0x58] sm:$0xff]
        %v2221 = vld [vmem:[%s2208 + $0x60] sm:$0xff]
        %v2222 = vld [vmem:[%s2208 + $0x68] sm:$0xff]
        %v2223 = vld [vmem:[%s2208 + $0x70] sm:$0xff]
        %v2224 = vld [vmem:[%s2208 + $0x78] sm:$0xff]
        %s2225 = scalar_lea.vmem %s4, 3
        %v2226 = vld [vmem:[%s2225] sm:$0x1]
        %v2228 = vlaneseq
        %v2229 = vshrl.u32 %v2228, 7
        %v2230 = vsub.s32 0, %v2229
        %v2231 = vrot.slane %v2226, %v2230
        %2233 = vmatprep.subr.mxu0 0.0
        %2234 = vmatpush1.msra.mxu0 %v2209
        %2235 = vmatprep.subr.mxu0 0.0
        %2236 = vmatpush1.msra.mxu0 %v2210
        %2237 = vmatprep.subr.mxu0 0.0
        %2238 = vmatpush1.msra.mxu0 %v2211
        %2239 = vmatprep.subr.mxu0 0.0
        %2240 = vmatpush1.msra.mxu0 %v2212
        %2241 = vmatprep.subr.mxu0 0.0
        %2242 = vmatpush1.msra.mxu0 %v2213
        %2243 = vmatprep.subr.mxu0 0.0
        %2244 = vmatpush1.msra.mxu0 %v2214
        %2245 = vmatprep.subr.mxu0 0.0
        %2246 = vmatpush1.msra.mxu0 %v2215
        %2247 = vmatprep.subr.mxu0 0.0
        %2248 = vmatpush1.msra.mxu0 %v2216
        %2249 = vmatprep.subr.mxu0 0.0
        %2250 = vmatpush1.msra.mxu0 %v2217
        %2251 = vmatprep.subr.mxu0 0.0
        %2252 = vmatpush1.msra.mxu0 %v2218
        %2253 = vmatprep.subr.mxu0 0.0
        %2254 = vmatpush1.msra.mxu0 %v2219
        %2255 = vmatprep.subr.mxu0 0.0
        %2256 = vmatpush1.msra.mxu0 %v2220
        %2257 = vmatprep.subr.mxu0 0.0
        %2258 = vmatpush1.msra.mxu0 %v2221
        %2259 = vmatprep.subr.mxu0 0.0
        %2260 = vmatpush1.msra.mxu0 %v2222
        %2261 = vmatprep.subr.mxu0 0.0
        %2262 = vmatpush1.msra.mxu0 %v2223
        %2263 = vmatprep.subr.mxu0 0.0
        %2264 = vmatpush1.msra.mxu0 %v2224
        %2265 = vmatprep.subr.mxu0 0.0
        %2266 = vmatpush1.msra.mxu0 0.0
        %2267 = vmatprep.subr.mxu0 0.0
        %2268 = vmatpush1.msra.mxu0 0.0
        %2269 = vmatprep.subr.mxu0 0.0
        %2270 = vmatpush1.msra.mxu0 0.0
        %2271 = vmatprep.subr.mxu0 0.0
        %2272 = vmatpush1.msra.mxu0 0.0
        %2273 = vmatprep.subr.mxu0 0.0
        %2274 = vmatpush1.msra.mxu0 0.0
        %2275 = vmatprep.subr.mxu0 0.0
        %2276 = vmatpush1.msra.mxu0 0.0
        %2277 = vmatprep.subr.mxu0 0.0
        %2278 = vmatpush1.msra.mxu0 0.0
        %2279 = vmatprep.subr.mxu0 0.0
        %2280 = vmatpush1.msra.mxu0 0.0
        %2281 = vmatprep.subr.mxu0 0.0
        %2282 = vmatpush1.msra.mxu0 0.0
        %2283 = vmatprep.subr.mxu0 0.0
        %2284 = vmatpush1.msra.mxu0 0.0
        %2285 = vmatprep.subr.mxu0 0.0
        %2286 = vmatpush1.msra.mxu0 0.0
        %2287 = vmatprep.subr.mxu0 0.0
        %2288 = vmatpush1.msra.mxu0 0.0
        %2289 = vmatprep.subr.mxu0 0.0
        %2290 = vmatpush1.msra.mxu0 0.0
        %2291 = vmatprep.subr.mxu0 0.0
        %2292 = vmatpush1.msra.mxu0 0.0
        %2293 = vmatprep.subr.mxu0 0.0
        %2294 = vmatpush1.msra.mxu0 0.0
        %2295 = vmatprep.subr.mxu0 0.0
        %2296 = vmatpush1.msra.mxu0 0.0
        %2297 = vmatprep.mubr.f32.mxu0 0.0
        %2298 = vmatmul.mubr.f32.gmra.mrb[0].mxu0 %v544
        %v2299 = vpop.f32.mrb[0].mxu0
        %v2300 = vadd.f32 %v2231, %v2299
        %v2301 = vpop.f32.mrb[0].mxu0
        %2302 = vdwg.mxu0
        %s2303 = scalar_lea.vmem %s5, 384
        %v2304 = vld [vmem:[%s2303] sm:$0xff]
        %v2305 = vld [vmem:[%s2303 + $0x8] sm:$0xff]
        %v2306 = vld [vmem:[%s2303 + $0x10] sm:$0xff]
        %v2307 = vld [vmem:[%s2303 + $0x18] sm:$0xff]
        %v2308 = vld [vmem:[%s2303 + $0x20] sm:$0xff]
        %v2309 = vld [vmem:[%s2303 + $0x28] sm:$0xff]
        %v2310 = vld [vmem:[%s2303 + $0x30] sm:$0xff]
        %v2311 = vld [vmem:[%s2303 + $0x38] sm:$0xff]
        %v2312 = vld [vmem:[%s2303 + $0x40] sm:$0xff]
        %v2313 = vld [vmem:[%s2303 + $0x48] sm:$0xff]
        %v2314 = vld [vmem:[%s2303 + $0x50] sm:$0xff]
        %v2315 = vld [vmem:[%s2303 + $0x58] sm:$0xff]
        %v2316 = vld [vmem:[%s2303 + $0x60] sm:$0xff]
        %v2317 = vld [vmem:[%s2303 + $0x68] sm:$0xff]
        %v2318 = vld [vmem:[%s2303 + $0x70] sm:$0xff]
        %v2319 = vld [vmem:[%s2303 + $0x78] sm:$0xff]
        %s2320 = scalar_lea.vmem %s6, 3
        %v2321 = vld [vmem:[%s2320] sm:$0x1]
        %v2323 = vlaneseq
        %v2324 = vshrl.u32 %v2323, 7
        %v2325 = vsub.s32 0, %v2324
        %v2326 = vrot.slane %v2321, %v2325
        %2328 = vmatprep.subr.mxu0 0.0
        %2329 = vmatpush1.msra.mxu0 %v2304
        %2330 = vmatprep.subr.mxu0 0.0
        %2331 = vmatpush1.msra.mxu0 %v2305
        %2332 = vmatprep.subr.mxu0 0.0
        %2333 = vmatpush1.msra.mxu0 %v2306
        %2334 = vmatprep.subr.mxu0 0.0
        %2335 = vmatpush1.msra.mxu0 %v2307
        %2336 = vmatprep.subr.mxu0 0.0
        %2337 = vmatpush1.msra.mxu0 %v2308
        %2338 = vmatprep.subr.mxu0 0.0
        %2339 = vmatpush1.msra.mxu0 %v2309
        %2340 = vmatprep.subr.mxu0 0.0
        %2341 = vmatpush1.msra.mxu0 %v2310
        %2342 = vmatprep.subr.mxu0 0.0
        %2343 = vmatpush1.msra.mxu0 %v2311
        %2344 = vmatprep.subr.mxu0 0.0
        %2345 = vmatpush1.msra.mxu0 %v2312
        %2346 = vmatprep.subr.mxu0 0.0
        %2347 = vmatpush1.msra.mxu0 %v2313
        %2348 = vmatprep.subr.mxu0 0.0
        %2349 = vmatpush1.msra.mxu0 %v2314
        %2350 = vmatprep.subr.mxu0 0.0
        %2351 = vmatpush1.msra.mxu0 %v2315
        %2352 = vmatprep.subr.mxu0 0.0
        %2353 = vmatpush1.msra.mxu0 %v2316
        %2354 = vmatprep.subr.mxu0 0.0
        %2355 = vmatpush1.msra.mxu0 %v2317
        %2356 = vmatprep.subr.mxu0 0.0
        %2357 = vmatpush1.msra.mxu0 %v2318
        %2358 = vmatprep.subr.mxu0 0.0
        %2359 = vmatpush1.msra.mxu0 %v2319
        %2360 = vmatprep.subr.mxu0 0.0
        %2361 = vmatpush1.msra.mxu0 0.0
        %2362 = vmatprep.subr.mxu0 0.0
        %2363 = vmatpush1.msra.mxu0 0.0
        %2364 = vmatprep.subr.mxu0 0.0
        %2365 = vmatpush1.msra.mxu0 0.0
        %2366 = vmatprep.subr.mxu0 0.0
        %2367 = vmatpush1.msra.mxu0 0.0
        %2368 = vmatprep.subr.mxu0 0.0
        %2369 = vmatpush1.msra.mxu0 0.0
        %2370 = vmatprep.subr.mxu0 0.0
        %2371 = vmatpush1.msra.mxu0 0.0
        %2372 = vmatprep.subr.mxu0 0.0
        %2373 = vmatpush1.msra.mxu0 0.0
        %2374 = vmatprep.subr.mxu0 0.0
        %2375 = vmatpush1.msra.mxu0 0.0
        %2376 = vmatprep.subr.mxu0 0.0
        %2377 = vmatpush1.msra.mxu0 0.0
        %2378 = vmatprep.subr.mxu0 0.0
        %2379 = vmatpush1.msra.mxu0 0.0
        %2380 = vmatprep.subr.mxu0 0.0
        %2381 = vmatpush1.msra.mxu0 0.0
        %2382 = vmatprep.subr.mxu0 0.0
        %2383 = vmatpush1.msra.mxu0 0.0
        %2384 = vmatprep.subr.mxu0 0.0
        %2385 = vmatpush1.msra.mxu0 0.0
        %2386 = vmatprep.subr.mxu0 0.0
        %2387 = vmatpush1.msra.mxu0 0.0
        %2388 = vmatprep.subr.mxu0 0.0
        %2389 = vmatpush1.msra.mxu0 0.0
        %2390 = vmatprep.subr.mxu0 0.0
        %2391 = vmatpush1.msra.mxu0 0.0
        %2392 = vmatprep.mubr.f32.mxu0 0.0
        %2393 = vmatmul.mubr.f32.gmra.mrb[0].mxu0 %v544
        %v2394 = vpop.f32.mrb[0].mxu0
        %v2395 = vadd.f32 %v2326, %v2394
        %v2396 = vpop.f32.mrb[0].mxu0
        %2397 = vdwg.mxu0
        %v2399 = vsel %vm824, %v2205, 0
        %v2402 = vsel %vm824, %v2300, 0
        %2404 = vmatprep.subr.mxu0 0.0
        %2405 = vmatpush1.xpose.msra.mxu0 %v2402
        %2406 = vmatprep.subr.mxu0 0.0
        %2407 = vmatpush1.xpose.msra.mxu0 0.0
        %2408 = vmatprep.subr.mxu0 0.0
        %2409 = vmatpush1.xpose.msra.mxu0 0.0
        %2410 = vmatprep.subr.mxu0 0.0
        %2411 = vmatpush1.xpose.msra.mxu0 0.0
        %2412 = vmatprep.subr.mxu0 0.0
        %2413 = vmatpush1.xpose.msra.mxu0 0.0
        %2414 = vmatprep.subr.mxu0 0.0
        %2415 = vmatpush1.xpose.msra.mxu0 0.0
        %2416 = vmatprep.subr.mxu0 0.0
        %2417 = vmatpush1.xpose.msra.mxu0 0.0
        %2418 = vmatprep.subr.mxu0 0.0
        %2419 = vmatpush1.xpose.msra.mxu0 0.0
        %2420 = vmatprep.subr.mxu0 0.0
        %2421 = vmatpush1.xpose.msra.mxu0 0.0
        %2422 = vmatprep.subr.mxu0 0.0
        %2423 = vmatpush1.xpose.msra.mxu0 0.0
        %2424 = vmatprep.subr.mxu0 0.0
        %2425 = vmatpush1.xpose.msra.mxu0 0.0
        %2426 = vmatprep.subr.mxu0 0.0
        %2427 = vmatpush1.xpose.msra.mxu0 0.0
        %2428 = vmatprep.subr.mxu0 0.0
        %2429 = vmatpush1.xpose.msra.mxu0 0.0
        %2430 = vmatprep.subr.mxu0 0.0
        %2431 = vmatpush1.xpose.msra.mxu0 0.0
        %2432 = vmatprep.subr.mxu0 0.0
        %2433 = vmatpush1.xpose.msra.mxu0 0.0
        %2434 = vmatprep.subr.mxu0 0.0
        %2435 = vmatpush1.xpose.msra.mxu0 0.0
        %2436 = vmatprep.subr.mxu0 0.0
        %2437 = vmatpush1.xpose.msra.mxu0 0.0
        %2438 = vmatprep.subr.mxu0 0.0
        %2439 = vmatpush1.xpose.msra.mxu0 0.0
        %2440 = vmatprep.subr.mxu0 0.0
        %2441 = vmatpush1.xpose.msra.mxu0 0.0
        %2442 = vmatprep.subr.mxu0 0.0
        %2443 = vmatpush1.xpose.msra.mxu0 0.0
        %2444 = vmatprep.subr.mxu0 0.0
        %2445 = vmatpush1.xpose.msra.mxu0 0.0
        %2446 = vmatprep.subr.mxu0 0.0
        %2447 = vmatpush1.xpose.msra.mxu0 0.0
        %2448 = vmatprep.subr.mxu0 0.0
        %2449 = vmatpush1.xpose.msra.mxu0 0.0
        %2450 = vmatprep.subr.mxu0 0.0
        %2451 = vmatpush1.xpose.msra.mxu0 0.0
        %2452 = vmatprep.subr.mxu0 0.0
        %2453 = vmatpush1.xpose.msra.mxu0 0.0
        %2454 = vmatprep.subr.mxu0 0.0
        %2455 = vmatpush1.xpose.msra.mxu0 0.0
        %2456 = vmatprep.subr.mxu0 0.0
        %2457 = vmatpush1.xpose.msra.mxu0 0.0
        %2458 = vmatprep.subr.mxu0 0.0
        %2459 = vmatpush1.xpose.msra.mxu0 0.0
        %2460 = vmatprep.subr.mxu0 0.0
        %2461 = vmatpush1.xpose.msra.mxu0 0.0
        %2462 = vmatprep.subr.mxu0 0.0
        %2463 = vmatpush1.xpose.msra.mxu0 0.0
        %2464 = vmatprep.subr.mxu0 0.0
        %2465 = vmatpush1.xpose.msra.mxu0 0.0
        %2466 = vmatprep.subr.mxu0 0.0
        %2467 = vmatpush1.xpose.msra.mxu0 0.0
        %2468 = vmatprep.mubr.f32.mxu0 0.0
        %2469 = vmatmul.mubr.f32.gmra.mrb[0].mxu0 %v2399
        %v2470 = vpop.f32.mrb[0].mxu0
        %v2471 = vadd.f32 0.0, %v2470
        %v2472 = vpop.f32.mrb[0].mxu0
        %2473 = vdwg.mxu0
        %v2474 = vmul.f32 %v2471, 0.17677669
        %v2475 = vsel %vm902, %v2474, -inf
        %2476 = vmax.xlane.f32.xlu0 %v2475
        %v2477 = vpop.xlane.xlu0 %2476
        %v2478 = vsub.f32 %v2474, %v2477
        %v2479 = vmul.f32 %v2478, 1.442695
        %v2480 = vpow.pop %v2479
        %v2481 = vsel %vm902, %v2480, 0.0
        %2482 = vadd.xlane.f32.xlu0 %v2481
        %v2483 = vpop.xlane.xlu0 %2482
        %v2484 = vrcp.pop %v2483
        %v2485 = vmul.f32 %v2480, %v2484
        %v2487 = vsel %vm902, %v2485, 0
        %2489 = vmatprep.subr.mxu0 0.0
        %2490 = vmatpush1.msra.mxu0 %v2395
        %2491 = vmatprep.subr.mxu0 0.0
        %2492 = vmatpush1.msra.mxu0 0.0
        %2493 = vmatprep.subr.mxu0 0.0
        %2494 = vmatpush1.msra.mxu0 0.0
        %2495 = vmatprep.subr.mxu0 0.0
        %2496 = vmatpush1.msra.mxu0 0.0
        %2497 = vmatprep.subr.mxu0 0.0
        %2498 = vmatpush1.msra.mxu0 0.0
        %2499 = vmatprep.subr.mxu0 0.0
        %2500 = vmatpush1.msra.mxu0 0.0
        %2501 = vmatprep.subr.mxu0 0.0
        %2502 = vmatpush1.msra.mxu0 0.0
        %2503 = vmatprep.subr.mxu0 0.0
        %2504 = vmatpush1.msra.mxu0 0.0
        %2505 = vmatprep.subr.mxu0 0.0
        %2506 = vmatpush1.msra.mxu0 0.0
        %2507 = vmatprep.subr.mxu0 0.0
        %2508 = vmatpush1.msra.mxu0 0.0
        %2509 = vmatprep.subr.mxu0 0.0
        %2510 = vmatpush1.msra.mxu0 0.0
        %2511 = vmatprep.subr.mxu0 0.0
        %2512 = vmatpush1.msra.mxu0 0.0
        %2513 = vmatprep.subr.mxu0 0.0
        %2514 = vmatpush1.msra.mxu0 0.0
        %2515 = vmatprep.subr.mxu0 0.0
        %2516 = vmatpush1.msra.mxu0 0.0
        %2517 = vmatprep.subr.mxu0 0.0
        %2518 = vmatpush1.msra.mxu0 0.0
        %2519 = vmatprep.subr.mxu0 0.0
        %2520 = vmatpush1.msra.mxu0 0.0
        %2521 = vmatprep.subr.mxu0 0.0
        %2522 = vmatpush1.msra.mxu0 0.0
        %2523 = vmatprep.subr.mxu0 0.0
        %2524 = vmatpush1.msra.mxu0 0.0
        %2525 = vmatprep.subr.mxu0 0.0
        %2526 = vmatpush1.msra.mxu0 0.0
        %2527 = vmatprep.subr.mxu0 0.0
        %2528 = vmatpush1.msra.mxu0 0.0
        %2529 = vmatprep.subr.mxu0 0.0
        %2530 = vmatpush1.msra.mxu0 0.0
        %2531 = vmatprep.subr.mxu0 0.0
        %2532 = vmatpush1.msra.mxu0 0.0
        %2533 = vmatprep.subr.mxu0 0.0
        %2534 = vmatpush1.msra.mxu0 0.0
        %2535 = vmatprep.subr.mxu0 0.0
        %2536 = vmatpush1.msra.mxu0 0.0
        %2537 = vmatprep.subr.mxu0 0.0
        %2538 = vmatpush1.msra.mxu0 0.0
        %2539 = vmatprep.subr.mxu0 0.0
        %2540 = vmatpush1.msra.mxu0 0.0
        %2541 = vmatprep.subr.mxu0 0.0
        %2542 = vmatpush1.msra.mxu0 0.0
        %2543 = vmatprep.subr.mxu0 0.0
        %2544 = vmatpush1.msra.mxu0 0.0
        %2545 = vmatprep.subr.mxu0 0.0
        %2546 = vmatpush1.msra.mxu0 0.0
        %2547 = vmatprep.subr.mxu0 0.0
        %2548 = vmatpush1.msra.mxu0 0.0
        %2549 = vmatprep.subr.mxu0 0.0
        %2550 = vmatpush1.msra.mxu0 0.0
        %2551 = vmatprep.subr.mxu0 0.0
        %2552 = vmatpush1.msra.mxu0 0.0
        %2553 = vmatprep.mubr.f32.mxu0 0.0
        %2554 = vmatmul.mubr.f32.gmra.mrb[0].mxu0 %v2487
        %v2555 = vpop.f32.mrb[0].mxu0
        %v2556 = vadd.f32 0.0, %v2555
        %v2557 = vpop.f32.mrb[0].mxu0
        %2558 = vdwg.mxu0
        %s2559 = scalar_lea.vmem %s7, 96
        %v2560 = vld [vmem:[%s2559] sm:$0xff]
        %v2561 = vld [vmem:[%s2559 + $0x8] sm:$0xff]
        %v2562 = vld [vmem:[%s2559 + $0x10] sm:$0xff]
        %v2563 = vld [vmem:[%s2559 + $0x18] sm:$0xff]
        %v2565 = vsel %vm824, %v2556, 0
        %2567 = vmatprep.subr.mxu0 0.0
        %2568 = vmatpush1.msra.mxu0 %v2560
        %2569 = vmatprep.subr.mxu0 0.0
        %2570 = vmatpush1.msra.mxu0 %v2561
        %2571 = vmatprep.subr.mxu0 0.0
        %2572 = vmatpush1.msra.mxu0 %v2562
        %2573 = vmatprep.subr.mxu0 0.0
        %2574 = vmatpush1.msra.mxu0 %v2563
        %2575 = vmatprep.subr.mxu0 0.0
        %2576 = vmatpush1.msra.mxu0 0.0
        %2577 = vmatprep.subr.mxu0 0.0
        %2578 = vmatpush1.msra.mxu0 0.0
        %2579 = vmatprep.subr.mxu0 0.0
        %2580 = vmatpush1.msra.mxu0 0.0
        %2581 = vmatprep.subr.mxu0 0.0
        %2582 = vmatpush1.msra.mxu0 0.0
        %2583 = vmatprep.subr.mxu0 0.0
        %2584 = vmatpush1.msra.mxu0 0.0
        %2585 = vmatprep.subr.mxu0 0.0
        %2586 = vmatpush1.msra.mxu0 0.0
        %2587 = vmatprep.subr.mxu0 0.0
        %2588 = vmatpush1.msra.mxu0 0.0
        %2589 = vmatprep.subr.mxu0 0.0
        %2590 = vmatpush1.msra.mxu0 0.0
        %2591 = vmatprep.subr.mxu0 0.0
        %2592 = vmatpush1.msra.mxu0 0.0
        %2593 = vmatprep.subr.mxu0 0.0
        %2594 = vmatpush1.msra.mxu0 0.0
        %2595 = vmatprep.subr.mxu0 0.0
        %2596 = vmatpush1.msra.mxu0 0.0
        %2597 = vmatprep.subr.mxu0 0.0
        %2598 = vmatpush1.msra.mxu0 0.0
        %2599 = vmatprep.subr.mxu0 0.0
        %2600 = vmatpush1.msra.mxu0 0.0
        %2601 = vmatprep.subr.mxu0 0.0
        %2602 = vmatpush1.msra.mxu0 0.0
        %2603 = vmatprep.subr.mxu0 0.0
        %2604 = vmatpush1.msra.mxu0 0.0
        %2605 = vmatprep.subr.mxu0 0.0
        %2606 = vmatpush1.msra.mxu0 0.0
        %2607 = vmatprep.subr.mxu0 0.0
        %2608 = vmatpush1.msra.mxu0 0.0
        %2609 = vmatprep.subr.mxu0 0.0
        %2610 = vmatpush1.msra.mxu0 0.0
        %2611 = vmatprep.subr.mxu0 0.0
        %2612 = vmatpush1.msra.mxu0 0.0
        %2613 = vmatprep.subr.mxu0 0.0
        %2614 = vmatpush1.msra.mxu0 0.0
        %2615 = vmatprep.subr.mxu0 0.0
        %2616 = vmatpush1.msra.mxu0 0.0
        %2617 = vmatprep.subr.mxu0 0.0
        %2618 = vmatpush1.msra.mxu0 0.0
        %2619 = vmatprep.subr.mxu0 0.0
        %2620 = vmatpush1.msra.mxu0 0.0
        %2621 = vmatprep.subr.mxu0 0.0
        %2622 = vmatpush1.msra.mxu0 0.0
        %2623 = vmatprep.subr.mxu0 0.0
        %2624 = vmatpush1.msra.mxu0 0.0
        %2625 = vmatprep.subr.mxu0 0.0
        %2626 = vmatpush1.msra.mxu0 0.0
        %2627 = vmatprep.subr.mxu0 0.0
        %2628 = vmatpush1.msra.mxu0 0.0
        %2629 = vmatprep.subr.mxu0 0.0
        %2630 = vmatpush1.msra.mxu0 0.0
        %2631 = vmatprep.mubr.f32.mxu0 0.0
        %2632 = vmatmul.mubr.f32.gmra.mrb[0].mxu0 %v2565
        %v2633 = vpop.f32.mrb[0].mxu0
        %v2634 = vadd.f32 0.0, %v2633
        %v2635 = vpop.f32.mrb[0].mxu0
        %2636 = vdwg.mxu0
        %v2637 = vadd.f32 %v2112, %v2634
        %v2638 = vld [vmem:[%s8] sm:$0x1]
        %v2640 = vlaneseq
        %v2641 = vshrl.u32 %v2640, 7
        %v2642 = vsub.s32 0, %v2641
        %v2643 = vrot.slane %v2638, %v2642
        %v2645 = vadd.f32 %v2637, %v2643
        %v2646 = vadd.f32 %v544, %v2645
        %2647 = vadd.xlane.f32.xlu0 %v2646
        %v2648 = vpop.xlane.xlu0 %2647
        %v2649 = vrcp.pop 128.0
        %v2650 = vmul.f32 %v2648, %v2649
        %v2651 = vsub.f32 %v2646, %v2650
        %v2652 = vmul.f32 %v2651, %v2651
        %2653 = vadd.xlane.f32.xlu0 %v2652
        %v2654 = vpop.xlane.xlu0 %2653
        %v2655 = vmul.f32 %v2654, %v2649
        %v2656 = vadd.f32 %v2655, 1e-05
        %v2657 = vrsqrt.pop %v2656
        %v2658 = vmul.f32 %v2651, %v2657
        %v2659 = vld [vmem:[%s13] sm:$0x1]
        %v2661 = vlaneseq
        %v2662 = vshrl.u32 %v2661, 7
        %v2663 = vsub.s32 0, %v2662
        %v2664 = vrot.slane %v2659, %v2663
        %v2666 = vmul.f32 %v2658, %v2664
        %v2667 = vld [vmem:[%s14] sm:$0x1]
        %v2669 = vlaneseq
        %v2670 = vshrl.u32 %v2669, 7
        %v2671 = vsub.s32 0, %v2670
        %v2672 = vrot.slane %v2667, %v2671
        %v2674 = vadd.f32 %v2666, %v2672
        %v2675 = vld [vmem:[%s9] sm:$0xff]
        %v2676 = vld [vmem:[%s9 + $0x8] sm:$0xff]
        %v2677 = vld [vmem:[%s9 + $0x10] sm:$0xff]
        %v2678 = vld [vmem:[%s9 + $0x18] sm:$0xff]
        %v2679 = vld [vmem:[%s9 + $0x20] sm:$0xff]
        %v2680 = vld [vmem:[%s9 + $0x28] sm:$0xff]
        %v2681 = vld [vmem:[%s9 + $0x30] sm:$0xff]
        %v2682 = vld [vmem:[%s9 + $0x38] sm:$0xff]
        %v2683 = vld [vmem:[%s9 + $0x40] sm:$0xff]
        %v2684 = vld [vmem:[%s9 + $0x48] sm:$0xff]
        %v2685 = vld [vmem:[%s9 + $0x50] sm:$0xff]
        %v2686 = vld [vmem:[%s9 + $0x58] sm:$0xff]
        %v2687 = vld [vmem:[%s9 + $0x60] sm:$0xff]
        %v2688 = vld [vmem:[%s9 + $0x68] sm:$0xff]
        %v2689 = vld [vmem:[%s9 + $0x70] sm:$0xff]
        %v2690 = vld [vmem:[%s9 + $0x78] sm:$0xff]
        %v2691 = vld [vmem:[%s9 + $0x80] sm:$0xff]
        %v2692 = vld [vmem:[%s9 + $0x88] sm:$0xff]
        %v2693 = vld [vmem:[%s9 + $0x90] sm:$0xff]
        %v2694 = vld [vmem:[%s9 + $0x98] sm:$0xff]
        %v2695 = vld [vmem:[%s9 + $0xa0] sm:$0xff]
        %v2696 = vld [vmem:[%s9 + $0xa8] sm:$0xff]
        %v2697 = vld [vmem:[%s9 + $0xb0] sm:$0xff]
        %v2698 = vld [vmem:[%s9 + $0xb8] sm:$0xff]
        %v2699 = vld [vmem:[%s9 + $0xc0] sm:$0xff]
        %v2700 = vld [vmem:[%s9 + $0xc8] sm:$0xff]
        %v2701 = vld [vmem:[%s9 + $0xd0] sm:$0xff]
        %v2702 = vld [vmem:[%s9 + $0xd8] sm:$0xff]
        %v2703 = vld [vmem:[%s9 + $0xe0] sm:$0xff]
        %v2704 = vld [vmem:[%s9 + $0xe8] sm:$0xff]
        %v2705 = vld [vmem:[%s9 + $0xf0] sm:$0xff]
        %v2706 = vld [vmem:[%s9 + $0xf8] sm:$0xff]
        %v2707 = vld [vmem:[%s10] sm:$0x3]
        %v2709 = vlaneseq
        %v2710 = vshrl.u32 %v2709, 7
        %v2711 = vsub.s32 0, %v2710
        %v2712 = vrot.slane %v2707, %v2711
        %v2713 = vlaneseq
        %v2714 = vshrl.u32 %v2713, 7
        %v2715 = vsub.s32 1, %v2714
        %v2716 = vrot.slane %v2707, %v2715
        %2719 = vmatprep.subr.mxu0 %v2676
        %2720 = vmatpush1.msra.mxu0 %v2675
        %2721 = vmatprep.subr.mxu0 %v2678
        %2722 = vmatpush1.msra.mxu0 %v2677
        %2723 = vmatprep.subr.mxu0 %v2680
        %2724 = vmatpush1.msra.mxu0 %v2679
        %2725 = vmatprep.subr.mxu0 %v2682
        %2726 = vmatpush1.msra.mxu0 %v2681
        %2727 = vmatprep.subr.mxu0 %v2684
        %2728 = vmatpush1.msra.mxu0 %v2683
        %2729 = vmatprep.subr.mxu0 %v2686
        %2730 = vmatpush1.msra.mxu0 %v2685
        %2731 = vmatprep.subr.mxu0 %v2688
        %2732 = vmatpush1.msra.mxu0 %v2687
        %2733 = vmatprep.subr.mxu0 %v2690
        %2734 = vmatpush1.msra.mxu0 %v2689
        %2735 = vmatprep.subr.mxu0 %v2692
        %2736 = vmatpush1.msra.mxu0 %v2691
        %2737 = vmatprep.subr.mxu0 %v2694
        %2738 = vmatpush1.msra.mxu0 %v2693
        %2739 = vmatprep.subr.mxu0 %v2696
        %2740 = vmatpush1.msra.mxu0 %v2695
        %2741 = vmatprep.subr.mxu0 %v2698
        %2742 = vmatpush1.msra.mxu0 %v2697
        %2743 = vmatprep.subr.mxu0 %v2700
        %2744 = vmatpush1.msra.mxu0 %v2699
        %2745 = vmatprep.subr.mxu0 %v2702
        %2746 = vmatpush1.msra.mxu0 %v2701
        %2747 = vmatprep.subr.mxu0 %v2704
        %2748 = vmatpush1.msra.mxu0 %v2703
        %2749 = vmatprep.subr.mxu0 %v2706
        %2750 = vmatpush1.msra.mxu0 %v2705
        %2751 = vmatprep.subr.mxu0 0.0
        %2752 = vmatpush1.msra.mxu0 0.0
        %2753 = vmatprep.subr.mxu0 0.0
        %2754 = vmatpush1.msra.mxu0 0.0
        %2755 = vmatprep.subr.mxu0 0.0
        %2756 = vmatpush1.msra.mxu0 0.0
        %2757 = vmatprep.subr.mxu0 0.0
        %2758 = vmatpush1.msra.mxu0 0.0
        %2759 = vmatprep.subr.mxu0 0.0
        %2760 = vmatpush1.msra.mxu0 0.0
        %2761 = vmatprep.subr.mxu0 0.0
        %2762 = vmatpush1.msra.mxu0 0.0
        %2763 = vmatprep.subr.mxu0 0.0
        %2764 = vmatpush1.msra.mxu0 0.0
        %2765 = vmatprep.subr.mxu0 0.0
        %2766 = vmatpush1.msra.mxu0 0.0
        %2767 = vmatprep.subr.mxu0 0.0
        %2768 = vmatpush1.msra.mxu0 0.0
        %2769 = vmatprep.subr.mxu0 0.0
        %2770 = vmatpush1.msra.mxu0 0.0
        %2771 = vmatprep.subr.mxu0 0.0
        %2772 = vmatpush1.msra.mxu0 0.0
        %2773 = vmatprep.subr.mxu0 0.0
        %2774 = vmatpush1.msra.mxu0 0.0
        %2775 = vmatprep.subr.mxu0 0.0
        %2776 = vmatpush1.msra.mxu0 0.0
        %2777 = vmatprep.subr.mxu0 0.0
        %2778 = vmatpush1.msra.mxu0 0.0
        %2779 = vmatprep.subr.mxu0 0.0
        %2780 = vmatpush1.msra.mxu0 0.0
        %2781 = vmatprep.subr.mxu0 0.0
        %2782 = vmatpush1.msra.mxu0 0.0
        %2783 = vmatprep.mubr.f32.mxu0 0.0
        %2784 = vmatmul.mubr.f32.gmra.mrb[0].mxu0 %v2674
        %v2785 = vpop.f32.mrb[0].mxu0
        %v2786 = vadd.f32 %v2712, %v2785
        %v2787 = vpop.f32.mrb[0].mxu0
        %v2788 = vadd.f32 %v2716, %v2787
        %2789 = vdwg.mxu0
        %v2790 = vmax.f32 %v2786, 0.0
        %v2791 = vmax.f32 %v2788, 0.0
        %v2792 = vld [vmem:[%s11] sm:$0xff]
        %v2793 = vld [vmem:[%s11 + $0x8] sm:$0xff]
        %v2794 = vld [vmem:[%s11 + $0x10] sm:$0xff]
        %v2795 = vld [vmem:[%s11 + $0x18] sm:$0xff]
        %v2796 = vld [vmem:[%s11 + $0x20] sm:$0xff]
        %v2797 = vld [vmem:[%s11 + $0x28] sm:$0xff]
        %v2798 = vld [vmem:[%s11 + $0x30] sm:$0xff]
        %v2799 = vld [vmem:[%s11 + $0x38] sm:$0xff]
        %v2800 = vld [vmem:[%s11 + $0x40] sm:$0xff]
        %v2801 = vld [vmem:[%s11 + $0x48] sm:$0xff]
        %v2802 = vld [vmem:[%s11 + $0x50] sm:$0xff]
        %v2803 = vld [vmem:[%s11 + $0x58] sm:$0xff]
        %v2804 = vld [vmem:[%s11 + $0x60] sm:$0xff]
        %v2805 = vld [vmem:[%s11 + $0x68] sm:$0xff]
        %v2806 = vld [vmem:[%s11 + $0x70] sm:$0xff]
        %v2807 = vld [vmem:[%s11 + $0x78] sm:$0xff]
        %v2808 = vld [vmem:[%s11 + $0x80] sm:$0xff]
        %v2809 = vld [vmem:[%s11 + $0x88] sm:$0xff]
        %v2810 = vld [vmem:[%s11 + $0x90] sm:$0xff]
        %v2811 = vld [vmem:[%s11 + $0x98] sm:$0xff]
        %v2812 = vld [vmem:[%s11 + $0xa0] sm:$0xff]
        %v2813 = vld [vmem:[%s11 + $0xa8] sm:$0xff]
        %v2814 = vld [vmem:[%s11 + $0xb0] sm:$0xff]
        %v2815 = vld [vmem:[%s11 + $0xb8] sm:$0xff]
        %v2816 = vld [vmem:[%s11 + $0xc0] sm:$0xff]
        %v2817 = vld [vmem:[%s11 + $0xc8] sm:$0xff]
        %v2818 = vld [vmem:[%s11 + $0xd0] sm:$0xff]
        %v2819 = vld [vmem:[%s11 + $0xd8] sm:$0xff]
        %v2820 = vld [vmem:[%s11 + $0xe0] sm:$0xff]
        %v2821 = vld [vmem:[%s11 + $0xe8] sm:$0xff]
        %v2822 = vld [vmem:[%s11 + $0xf0] sm:$0xff]
        %v2823 = vld [vmem:[%s11 + $0xf8] sm:$0xff]
        %v2824 = vld [vmem:[%s12] sm:$0x1]
        %v2826 = vlaneseq
        %v2827 = vshrl.u32 %v2826, 7
        %v2828 = vsub.s32 0, %v2827
        %v2829 = vrot.slane %v2824, %v2828
        %2831 = vmatprep.subr.mxu0 0.0
        %2832 = vmatpush1.msra.mxu0 %v2792
        %2833 = vmatprep.subr.mxu0 0.0
        %2834 = vmatpush1.msra.mxu0 %v2793
        %2835 = vmatprep.subr.mxu0 0.0
        %2836 = vmatpush1.msra.mxu0 %v2794
        %2837 = vmatprep.subr.mxu0 0.0
        %2838 = vmatpush1.msra.mxu0 %v2795
        %2839 = vmatprep.subr.mxu0 0.0
        %2840 = vmatpush1.msra.mxu0 %v2796
        %2841 = vmatprep.subr.mxu0 0.0
        %2842 = vmatpush1.msra.mxu0 %v2797
        %2843 = vmatprep.subr.mxu0 0.0
        %2844 = vmatpush1.msra.mxu0 %v2798
        %2845 = vmatprep.subr.mxu0 0.0
        %2846 = vmatpush1.msra.mxu0 %v2799
        %2847 = vmatprep.subr.mxu0 0.0
        %2848 = vmatpush1.msra.mxu0 %v2800
        %2849 = vmatprep.subr.mxu0 0.0
        %2850 = vmatpush1.msra.mxu0 %v2801
        %2851 = vmatprep.subr.mxu0 0.0
        %2852 = vmatpush1.msra.mxu0 %v2802
        %2853 = vmatprep.subr.mxu0 0.0
        %2854 = vmatpush1.msra.mxu0 %v2803
        %2855 = vmatprep.subr.mxu0 0.0
        %2856 = vmatpush1.msra.mxu0 %v2804
        %2857 = vmatprep.subr.mxu0 0.0
        %2858 = vmatpush1.msra.mxu0 %v2805
        %2859 = vmatprep.subr.mxu0 0.0
        %2860 = vmatpush1.msra.mxu0 %v2806
        %2861 = vmatprep.subr.mxu0 0.0
        %2862 = vmatpush1.msra.mxu0 %v2807
        %2863 = vmatprep.subr.mxu0 0.0
        %2864 = vmatpush1.msra.mxu0 %v2808
        %2865 = vmatprep.subr.mxu0 0.0
        %2866 = vmatpush1.msra.mxu0 %v2809
        %2867 = vmatprep.subr.mxu0 0.0
        %2868 = vmatpush1.msra.mxu0 %v2810
        %2869 = vmatprep.subr.mxu0 0.0
        %2870 = vmatpush1.msra.mxu0 %v2811
        %2871 = vmatprep.subr.mxu0 0.0
        %2872 = vmatpush1.msra.mxu0 %v2812
        %2873 = vmatprep.subr.mxu0 0.0
        %2874 = vmatpush1.msra.mxu0 %v2813
        %2875 = vmatprep.subr.mxu0 0.0
        %2876 = vmatpush1.msra.mxu0 %v2814
        %2877 = vmatprep.subr.mxu0 0.0
        %2878 = vmatpush1.msra.mxu0 %v2815
        %2879 = vmatprep.subr.mxu0 0.0
        %2880 = vmatpush1.msra.mxu0 %v2816
        %2881 = vmatprep.subr.mxu0 0.0
        %2882 = vmatpush1.msra.mxu0 %v2817
        %2883 = vmatprep.subr.mxu0 0.0
        %2884 = vmatpush1.msra.mxu0 %v2818
        %2885 = vmatprep.subr.mxu0 0.0
        %2886 = vmatpush1.msra.mxu0 %v2819
        %2887 = vmatprep.subr.mxu0 0.0
        %2888 = vmatpush1.msra.mxu0 %v2820
        %2889 = vmatprep.subr.mxu0 0.0
        %2890 = vmatpush1.msra.mxu0 %v2821
        %2891 = vmatprep.subr.mxu0 0.0
        %2892 = vmatpush1.msra.mxu0 %v2822
        %2893 = vmatprep.subr.mxu0 0.0
        %2894 = vmatpush1.msra.mxu0 %v2823
        %2895 = vmatprep.mubr.f32.mxu0 %v2791
        %2896 = vmatmul.mubr.f32.gmra.mrb[0].mxu0 %v2790
        %v2897 = vpop.f32.mrb[0].mxu0
        %v2898 = vadd.f32 %v2829, %v2897
        %v2899 = vpop.f32.mrb[0].mxu0
        %2900 = vdwg.mxu0
        %v2901 = vadd.f32 %v2674, %v2898
        %2902 = vadd.xlane.f32.xlu0 %v2901
        %v2903 = vpop.xlane.xlu0 %2902
        %v2904 = vmul.f32 %v2903, %v2649
        %v2905 = vsub.f32 %v2901, %v2904
        %v2906 = vmul.f32 %v2905, %v2905
        %2907 = vadd.xlane.f32.xlu0 %v2906
        %v2908 = vpop.xlane.xlu0 %2907
        %v2909 = vmul.f32 %v2908, %v2649
        %v2910 = vadd.f32 %v2909, 1e-05
        %v2911 = vrsqrt.pop %v2910
        %v2912 = vmul.f32 %v2905, %v2911
        %v2913 = vld [vmem:[%s15] sm:$0x1]
        %v2915 = vlaneseq
        %v2916 = vshrl.u32 %v2915, 7
        %v2917 = vsub.s32 0, %v2916
        %v2918 = vrot.slane %v2913, %v2917
        %v2920 = vmul.f32 %v2912, %v2918
        %v2921 = vld [vmem:[%s16] sm:$0x1]
        %v2923 = vlaneseq
        %v2924 = vshrl.u32 %v2923, 7
        %v2925 = vsub.s32 0, %v2924
        %v2926 = vrot.slane %v2921, %v2925
        %v2928 = vadd.f32 %v2920, %v2926
        %2929 = vst [vmem:[%s539] sm:$0xff] %v2928
        %s2930 = sand.u32 %s401, 1
        %s2931 = scalar_lea.sflag [#allocation3], %s2930
        %s2932 = sand.u32 %s401, 1
        %s2933 = smul.addr %s2932, 8
        %s2934 = scalar_lea.vmem [#allocation2], %s2933
        // Predicated region
        $region89: #{encoder_forward.11} parent=87 // pred_check
          %p2935 = pneg %p411
        $region90: #{encoder_forward.11} parent=87 // pred_check_branch
          %2937 = sbr.rel (%p2935) target = $region92
        $region91: #{encoder_forward.11} parent=87 // pred_region
          %s2939 = ssub.s32 128, 128
          %2940 = vsyncadd %s2931, %s2939
          %s2941 = smul.addr %s31, 128
          %s2942 = scalar_lea.hbm %s17, %s2941
          %s2944 = sshll.u32 %s2934, 4
          %s2945 = int_to_ptr.vmem [resolvable:$true] %s2944
          %2947 = dma.vmem_to_hbm [thread:$0]  %s2945, 128, %s2942, %s2931
        $region92: #{encoder_forward.11} parent=87 // pred_fallthru
          _
      $region88: #{encoder_forward.11} parent=5 // pred_fallthru
        _
      %p2948 = scmp.le.s32.totalorder 2, %s26
      // Predicated region
      $region93: #{encoder_forward.11} parent=5 // pred_check
        %p2949 = pneg %p2948
      $region94: #{encoder_forward.11} parent=5 // pred_check_branch
        %2951 = sbr.rel (%p2949) target = $region96
      $region95: #{encoder_forward.11} parent=5 // pred_region
        %s2952 = ssub.s32 %s26, 2
        // Predicated region
        $region97: #{encoder_forward.11} parent=95 // pred_check
          %p2953 = pneg %p417
        $region98: #{encoder_forward.11} parent=95 // pred_check_branch
          %2955 = sbr.rel (%p2953) target = $region100
        $region99: #{encoder_forward.11} parent=95 // pred_region
          %s2956 = sand.u32 %s402, 1
          %s2957 = scalar_lea.sflag [#allocation3], %s2956
          %s2958 = sand.u32 %s402, 1
          %s2959 = smul.addr %s2958, 8
          %s2960 = scalar_lea.vmem [#allocation2], %s2959
          %2961 = dma.done %s2957, 128
        $region100: #{encoder_forward.11} parent=95 // pred_fallthru
          _
      $region96: #{encoder_forward.11} parent=5 // pred_fallthru
        _
    $region6: #{encoder_forward.11} parent=1 // loop_footer
      %s30 = sadd.s32 1, %s26
    $region7: #{encoder_forward.11} parent=1 // loop_footer_branch
      %25 = sbr.rel target = $region3
    $region8: #{encoder_forward.11} parent=1 // loop_exit
      _
    %2962 = vsyncpa [#allocation3], 1
    %s2963 = scalar_lea.sflag [#allocation3], 1
    %2964 = vsyncpa %s2963, 1

</llo_original>
